<compile_context>
chip_gen: v5e
topology: v5e:2x2
jax: 0.10.0
libtpu: 0.0.40
codegen_flags: <defaults>
</compile_context>

<pallas_src>
import math
import numpy as np
import jax
import jax.numpy as jnp
from jax.experimental import pallas as pl
from jax.experimental.pallas import tpu as pltpu

CARDINALITY = 32
BN_EPS = 1e-5


def _round_up(x, m):
    return (x + m - 1) // m * m


def _bottleneckx_kernel(x_ref, w1_ref, b1_ref, w2_ref, b2_ref, w3_ref, b3_ref,
                        out_ref, pad_ref):
    Nb, Hp, Wp, Cb = pad_ref.shape
    H = Hp - 2
    M = x_ref.shape[1]
    W = M // H
    Cin = x_ref.shape[2]
    Cout = out_ref.shape[2]

    xb = x_ref[...].reshape(Nb * M, Cin)          # bf16: MXU operand + residual

    # conv1 (1x1): BN1 scale folded into w1; bias + relu in f32.
    h1 = jnp.dot(xb, w1_ref[...], preferred_element_type=jnp.float32)
    h1 = jnp.maximum(h1 + b1_ref[...], 0.0)

    # Zero-halo padded activation in bf16 scratch.  The halo is re-zeroed on
    # every step (persistent scratch + "parallel" grid semantics: the second
    # core's first step is not step 0, so this must not be program_id-gated).
    zero_row = jnp.zeros((Nb, 1, Wp, Cb), jnp.bfloat16)
    pad_ref[:, 0:1, :, :] = zero_row
    pad_ref[:, H + 1:H + 2, :, :] = zero_row
    pad_ref[:, 1:H + 1, 0:1, :] = jnp.zeros((Nb, H, 1, Cb), jnp.bfloat16)
    pad_ref[:, 1:H + 1, W + 1:Wp, :] = jnp.zeros((Nb, H, Wp - W - 1, Cb),
                                                 jnp.bfloat16)
    pad_ref[:, 1:H + 1, 1:W + 1, :] = h1.astype(jnp.bfloat16).reshape(
        Nb, H, W, Cb)

    # conv2 (grouped 3x3, cardinality groups of cpg=2 channels): nine per-tap
    # MXU matmuls against block-diagonal (Cb, Cb) weights, accumulated in f32.
    # No im2col buffer is materialized.
    h2 = jnp.zeros((Nb * M, Cb), jnp.float32)
    for ky in range(3):
        for kx in range(3):
            tap = pad_ref[:, ky:ky + H, kx:kx + W, :].reshape(Nb * M, Cb)
            h2 = h2 + jnp.dot(tap, w2_ref[ky * 3 + kx],
                              preferred_element_type=jnp.float32)
    h2 = jnp.maximum(h2 + b2_ref[...], 0.0)

    # conv3 (1x1): BN3 folded; bias + residual + relu in f32, bf16 store.
    h3 = jnp.dot(h2.astype(jnp.bfloat16), w3_ref[...],
                 preferred_element_type=jnp.float32)
    out = jnp.maximum(h3 + b3_ref[...] + xb.astype(jnp.float32), 0.0)
    out_ref[...] = out.astype(out_ref.dtype).reshape(Nb, M, Cout)


def bottleneckx_forward(x_nhwc, kparams, stride=1, dilation=1, block_n=None,
                        out_dtype=jnp.bfloat16):
    """NHWC-native BottleneckX forward (eval-mode BN folded into kparams)."""
    if stride != 1 or dilation != 1:
        # TODO(synk): strided / dilated 3x3 window gather not implemented.
        raise NotImplementedError("only stride=1, dilation=1 supported")
    N, H, W, Cin = x_nhwc.shape
    Cb = kparams["w1"].shape[1]
    Cout = kparams["w3"].shape[1]
    assert Cin == Cout, "residual add requires inplanes == planes (no downsample path)"
    assert kparams["w1"].shape[0] == Cin
    assert kparams["w2"].shape == (9, Cb, Cb)

    if block_n is None:
        # Batch images per step, but keep >= 2 grid steps for v7x megacore.
        block_n = N // 2 if (N >= 2 and N % 2 == 0) else 1
    assert N % block_n == 0, "batch must be divisible by block_n"

    M = H * W
    Wp = _round_up(W + 2, 8)                       # sublane-aligned padded width
    x2 = x_nhwc.reshape(N, M, Cin).astype(jnp.bfloat16)   # bf16 HBM traffic

    grid_spec = pltpu.PrefetchScalarGridSpec(
        num_scalar_prefetch=0,
        grid=(N // block_n,),
        in_specs=[
            pl.BlockSpec((block_n, M, Cin), lambda n: (n, 0, 0)),
            pl.BlockSpec((Cin, Cb), lambda n: (0, 0)),
            pl.BlockSpec((1, Cb), lambda n: (0, 0)),
            pl.BlockSpec((9, Cb, Cb), lambda n: (0, 0, 0)),
            pl.BlockSpec((1, Cb), lambda n: (0, 0)),
            pl.BlockSpec((Cb, Cout), lambda n: (0, 0)),
            pl.BlockSpec((1, Cout), lambda n: (0, 0)),
        ],
        out_specs=pl.BlockSpec((block_n, M, Cout), lambda n: (n, 0, 0)),
        scratch_shapes=[
            pltpu.VMEM((block_n, H + 2, Wp, Cb), jnp.bfloat16),  # zero-halo act
        ],
    )
    out = pl.pallas_call(
        _bottleneckx_kernel,
        out_shape=jax.ShapeDtypeStruct((N, M, Cout), out_dtype),
        grid_spec=grid_spec,
        compiler_params=pltpu.CompilerParams(
            dimension_semantics=("parallel",),   # batch steps shard across TCs on v7x
        ),
    )(x2, kparams["w1"], kparams["b1"], kparams["w2"], kparams["b2"],
      kparams["w3"], kparams["b3"])
    return out.reshape(N, H, W, Cout)


def bottleneckx_forward_nchw(x_nchw, kparams, **kwargs):
    """Compatibility shim for NCHW (PyTorch-layout) callers.

    Prefer the NHWC entry point: these two transposes are full extra HBM
    passes around a memory-bound kernel.
    """
    x = jnp.transpose(x_nchw, (0, 2, 3, 1))
    out = bottleneckx_forward(x, kparams, **kwargs)
    return jnp.transpose(out, (0, 3, 1, 2))


def _fold_bn(gamma, beta, mean, var):
    scale = gamma / jnp.sqrt(var + BN_EPS)
    bias = beta - mean * scale
    return scale, bias


def init_params(key, inplanes, planes, cardinality=CARDINALITY):
    bottle = planes * cardinality // 32
    assert bottle % cardinality == 0, "bottle_planes must be divisible by cardinality"
    cpg = bottle // cardinality   # in/out channels per group

    ks = jax.random.split(key, 15)
    # PyTorch-layout conv weights (deterministic synthetic init).
    w1_t = jax.random.normal(ks[0], (bottle, inplanes, 1, 1), jnp.float32) / math.sqrt(inplanes)
    w2_t = jax.random.normal(ks[1], (bottle, cpg, 3, 3), jnp.float32) / math.sqrt(9 * cpg)
    w3_t = jax.random.normal(ks[2], (planes, bottle, 1, 1), jnp.float32) / math.sqrt(bottle)

    def bn_params(kg, kb, km, kv, c):
        gamma = 1.0 + 0.1 * jax.random.normal(kg, (c,), jnp.float32)
        beta = 0.1 * jax.random.normal(kb, (c,), jnp.float32)
        mean = 0.1 * jax.random.normal(km, (c,), jnp.float32)
        var = 1.0 + 0.2 * jnp.abs(jax.random.normal(kv, (c,), jnp.float32))
        return gamma, beta, mean, var

    bn1 = bn_params(ks[3], ks[4], ks[5], ks[6], bottle)
    bn2 = bn_params(ks[7], ks[8], ks[9], ks[10], bottle)
    bn3 = bn_params(ks[11], ks[12], ks[13], ks[14], planes)
    return {"w1_t": w1_t, "w2_t": w2_t, "w3_t": w3_t,
            "bn1": bn1, "bn2": bn2, "bn3": bn3, "cardinality": cardinality}


def prepare_kernel_params(params):
    """Fold eval-mode BN into the conv weights and pack them for the kernel."""
    w1_t, w2_t, w3_t = params["w1_t"], params["w2_t"], params["w3_t"]
    bottle, inplanes = w1_t.shape[0], w1_t.shape[1]
    planes = w3_t.shape[0]
    cpg = bottle // params["cardinality"]

    s1, b1 = _fold_bn(*params["bn1"])
    s2, b2 = _fold_bn(*params["bn2"])
    s3, b3 = _fold_bn(*params["bn3"])

    # 1x1 convs -> (Cin, Cout) matmul weights, BN scale folded, bf16 MXU operands.
    w1 = (w1_t.reshape(bottle, inplanes).T * s1[None, :]).astype(jnp.bfloat16)
    w3 = (w3_t.reshape(planes, bottle).T * s3[None, :]).astype(jnp.bfloat16)

    # Grouped 3x3 -> nine per-tap (Cb, Cb) block-diagonal weights (BN2 folded).
    # TODO(synk): at realistic DLA widths (Cb >= 256, multiple MXU K-passes)
    # this block-diagonal packing wastes most MACs; switch to a VPU pair-swap
    # or group-batched formulation there.
    w2_np = np.asarray(w2_t, np.float32)       # (bottle, cpg, 3, 3)
    s2_np = np.asarray(s2, np.float32)
    w2 = np.zeros((9, bottle, bottle), np.float32)
    for oc in range(bottle):
        g = oc // cpg
        for ic in range(cpg):
            cin = g * cpg + ic
            w2[:, cin, oc] = w2_np[oc, ic].reshape(9) * s2_np[oc]   # tap = ky*3+kx
    w2 = jnp.asarray(w2).astype(jnp.bfloat16)

    return {
        "w1": w1, "b1": b1.reshape(1, -1).astype(jnp.float32),
        "w2": w2, "b2": b2.reshape(1, -1).astype(jnp.float32),
        "w3": w3, "b3": b3.reshape(1, -1).astype(jnp.float32),
    }


def reference_forward(x_nchw, params):
    """Pure-JAX f32 golden model (eval-mode BN), highest-precision convs."""
    def bn(y, gamma, beta, mean, var):
        g = gamma[None, :, None, None]
        b = beta[None, :, None, None]
        m = mean[None, :, None, None]
        v = var[None, :, None, None]
        return (y - m) / jnp.sqrt(v + BN_EPS) * g + b

    dn = ("NCHW", "OIHW", "NCHW")
    prec = jax.lax.Precision.HIGHEST
    out = jax.lax.conv_general_dilated(x_nchw, params["w1_t"], (1, 1), "VALID",
                                       dimension_numbers=dn, precision=prec)
    out = jax.nn.relu(bn(out, *params["bn1"]))
    out = jax.lax.conv_general_dilated(out, params["w2_t"], (1, 1),
                                       ((1, 1), (1, 1)), dimension_numbers=dn,
                                       feature_group_count=params["cardinality"],
                                       precision=prec)
    out = jax.nn.relu(bn(out, *params["bn2"]))
    out = jax.lax.conv_general_dilated(out, params["w3_t"], (1, 1), "VALID",
                                       dimension_numbers=dn, precision=prec)
    out = bn(out, *params["bn3"]) + x_nchw   # residual
    return jax.nn.relu(out)


if __name__ == "__main__":
    key = jax.random.PRNGKey(0)
    kx, kp = jax.random.split(key)

    # groups=cardinality=32 requires bottle_planes % 32 == 0, so the smallest
    # meaningful config uses 64 channels; inplanes == planes so the residual
    # add is shape-compatible (the PyTorch module's default use).  N=4 so the
    # kernel exercises Nb=2 images per grid step with a 2-step grid.
    N, C, H, W = 4, 64, 16, 16
    x_nhwc = jax.random.normal(kx, (N, H, W, C), jnp.float32)
    params = init_params(kp, inplanes=C, planes=C)
    kparams = prepare_kernel_params(params)

    out = jax.block_until_ready(
        bottleneckx_forward(x_nhwc, kparams, stride=1, dilation=1))

    ref_nchw = reference_forward(jnp.transpose(x_nhwc, (0, 3, 1, 2)), params)
    ref = jnp.transpose(ref_nchw, (0, 2, 3, 1))
    assert out.shape == ref.shape == (N, H, W, C)
    # bf16 input/output + bf16 MXU operands with f32 accumulation across three
    # chained matmuls vs. an f32 highest-precision reference -> bf16-level
    # tolerance (slightly looser atol for near-zero relu outputs).
    np.testing.assert_allclose(np.asarray(out.astype(jnp.float32)),
                               np.asarray(ref), rtol=3e-2, atol=5e-2)
    print("KERNEL_OK")
</pallas_src>

<mosaic_0001>
module attributes {stable_mosaic.version = 11 : i64} {
  func.func @_bottleneckx_kernel(%arg0: i32, %arg1: memref<2x256x64xbf16, #tpu.memory_space<vmem>>, %arg2: memref<64x64xbf16, #tpu.memory_space<vmem>>, %arg3: memref<1x64xf32, #tpu.memory_space<vmem>>, %arg4: memref<9x64x64xbf16, #tpu.memory_space<vmem>>, %arg5: memref<1x64xf32, #tpu.memory_space<vmem>>, %arg6: memref<64x64xbf16, #tpu.memory_space<vmem>>, %arg7: memref<1x64xf32, #tpu.memory_space<vmem>>, %arg8: memref<2x256x64xbf16, #tpu.memory_space<vmem>>, %arg9: memref<2x18x24x64xbf16, #tpu.memory_space<vmem>>) attributes {dimension_semantics = [#tpu.dimension_semantics<parallel>], iteration_bounds = array<i64: 2>, scalar_prefetch = 0 : i64, scratch_operands = 1 : i64, tpu.core_type = #tpu.core_type<tc>, window_params = [{transform_indices = @transform_0, window_bounds = array<i64: 2, 256, 64>}, {pipeline_mode = #tpu.pipeline_mode<synchronous>, transform_indices = @transform_1, window_bounds = array<i64: 64, 64>}, {pipeline_mode = #tpu.pipeline_mode<synchronous>, transform_indices = @transform_2, window_bounds = array<i64: 1, 64>}, {pipeline_mode = #tpu.pipeline_mode<synchronous>, transform_indices = @transform_3, window_bounds = array<i64: 9, 64, 64>}, {pipeline_mode = #tpu.pipeline_mode<synchronous>, transform_indices = @transform_4, window_bounds = array<i64: 1, 64>}, {pipeline_mode = #tpu.pipeline_mode<synchronous>, transform_indices = @transform_5, window_bounds = array<i64: 64, 64>}, {pipeline_mode = #tpu.pipeline_mode<synchronous>, transform_indices = @transform_6, window_bounds = array<i64: 1, 64>}, {transform_indices = @transform_7, window_bounds = array<i64: 2, 256, 64>}]} {
    %c0 = arith.constant 0 : index
    %c0_0 = arith.constant 0 : index
    %c0_1 = arith.constant 0 : index
    %0 = vector.load %arg1[%c0, %c0_0, %c0_1] : memref<2x256x64xbf16, #tpu.memory_space<vmem>>, vector<2x256x64xbf16>
    %1 = vector.shape_cast %0 : vector<2x256x64xbf16> to vector<512x64xbf16>
    %c0_2 = arith.constant 0 : index
    %c0_3 = arith.constant 0 : index
    %2 = vector.load %arg2[%c0_2, %c0_3] : memref<64x64xbf16, #tpu.memory_space<vmem>>, vector<64x64xbf16>
    %cst = arith.constant dense<0.000000e+00> : vector<512x64xf32>
    %3 = tpu.matmul %1, %2, %cst {dimension_numbers = #tpu.dot_dimension_numbers<[1], [0], [0], [1], [0, 0, 1, 1], [], []>} : vector<512x64xbf16>, vector<64x64xbf16>, vector<512x64xf32> -> vector<512x64xf32>
    %c0_4 = arith.constant 0 : index
    %c0_5 = arith.constant 0 : index
    %4 = vector.load %arg3[%c0_4, %c0_5] : memref<1x64xf32, #tpu.memory_space<vmem>>, vector<1x64xf32>
    %5 = vector.broadcast %4 : vector<1x64xf32> to vector<512x64xf32>
    %6 = arith.addf %3, %5 : vector<512x64xf32>
    %cst_6 = arith.constant 0.000000e+00 : f32
    %7 = vector.broadcast %cst_6 : f32 to vector<512x64xf32>
    %8 = arith.maximumf %6, %7 : vector<512x64xf32>
    %cst_7 = arith.constant 0.000000e+00 : bf16
    %9 = vector.broadcast %cst_7 : bf16 to vector<2x1x24x64xbf16>
    %c0_8 = arith.constant 0 : index
    %c0_9 = arith.constant 0 : index
    %c0_10 = arith.constant 0 : index
    %c0_11 = arith.constant 0 : index
    %10 = vector.load %arg9[%c0_8, %c0_9, %c0_10, %c0_11] : memref<2x18x24x64xbf16, #tpu.memory_space<vmem>>, vector<2x1x24x64xbf16>
    tpu.vector_store %arg9[%c0_8, %c0_9, %c0_10, %c0_11], %9 {strides = array<i32>} : memref<2x18x24x64xbf16, #tpu.memory_space<vmem>>, vector<2x1x24x64xbf16>,
    %c0_12 = arith.constant 0 : index
    %c17 = arith.constant 17 : index
    %c0_13 = arith.constant 0 : index
    %c0_14 = arith.constant 0 : index
    %11 = vector.load %arg9[%c0_12, %c17, %c0_13, %c0_14] : memref<2x18x24x64xbf16, #tpu.memory_space<vmem>>, vector<2x1x24x64xbf16>
    tpu.vector_store %arg9[%c0_12, %c17, %c0_13, %c0_14], %9 {strides = array<i32>} : memref<2x18x24x64xbf16, #tpu.memory_space<vmem>>, vector<2x1x24x64xbf16>,
    %cst_15 = arith.constant 0.000000e+00 : bf16
    %12 = vector.broadcast %cst_15 : bf16 to vector<2x16x1x64xbf16>
    %c0_16 = arith.constant 0 : index
    %c1 = arith.constant 1 : index
    %c0_17 = arith.constant 0 : index
    %c0_18 = arith.constant 0 : index
    %13 = vector.load %arg9[%c0_16, %c1, %c0_17, %c0_18] : memref<2x18x24x64xbf16, #tpu.memory_space<vmem>>, vector<2x16x1x64xbf16>
    tpu.vector_store %arg9[%c0_16, %c1, %c0_17, %c0_18], %12 {strides = array<i32>} : memref<2x18x24x64xbf16, #tpu.memory_space<vmem>>, vector<2x16x1x64xbf16>,
    %cst_19 = arith.constant 0.000000e+00 : bf16
    %14 = vector.broadcast %cst_19 : bf16 to vector<2x16x7x64xbf16>
    %c0_20 = arith.constant 0 : index
    %c1_21 = arith.constant 1 : index
    %c17_22 = arith.constant 17 : index
    %c0_23 = arith.constant 0 : index
    %15 = vector.load %arg9[%c0_20, %c1_21, %c17_22, %c0_23] : memref<2x18x24x64xbf16, #tpu.memory_space<vmem>>, vector<2x16x7x64xbf16>
    tpu.vector_store %arg9[%c0_20, %c1_21, %c17_22, %c0_23], %14 {strides = array<i32>} : memref<2x18x24x64xbf16, #tpu.memory_space<vmem>>, vector<2x16x7x64xbf16>,
    %16 = arith.truncf %8 : vector<512x64xf32> to vector<512x64xbf16>
    %17 = vector.shape_cast %16 : vector<512x64xbf16> to vector<2x16x16x64xbf16>
    %c0_24 = arith.constant 0 : index
    %c1_25 = arith.constant 1 : index
    %c1_26 = arith.constant 1 : index
    %c0_27 = arith.constant 0 : index
    %18 = vector.load %arg9[%c0_24, %c1_25, %c1_26, %c0_27] : memref<2x18x24x64xbf16, #tpu.memory_space<vmem>>, vector<2x16x16x64xbf16>
    tpu.vector_store %arg9[%c0_24, %c1_25, %c1_26, %c0_27], %17 {strides = array<i32>} : memref<2x18x24x64xbf16, #tpu.memory_space<vmem>>, vector<2x16x16x64xbf16>,
    %cst_28 = arith.constant 0.000000e+00 : f32
    %19 = vector.broadcast %cst_28 : f32 to vector<512x64xf32>
    %c0_29 = arith.constant 0 : index
    %c0_30 = arith.constant 0 : index
    %c0_31 = arith.constant 0 : index
    %c0_32 = arith.constant 0 : index
    %20 = vector.load %arg9[%c0_29, %c0_30, %c0_31, %c0_32] : memref<2x18x24x64xbf16, #tpu.memory_space<vmem>>, vector<2x16x16x64xbf16>
    %21 = vector.shape_cast %20 : vector<2x16x16x64xbf16> to vector<512x64xbf16>
    %c0_33 = arith.constant 0 : index
    %c0_34 = arith.constant 0 : index
    %c0_35 = arith.constant 0 : index
    %22 = vector.load %arg4[%c0_33, %c0_34, %c0_35] : memref<9x64x64xbf16, #tpu.memory_space<vmem>>, vector<1x64x64xbf16>
    %23 = vector.shape_cast %22 : vector<1x64x64xbf16> to vector<64x64xbf16>
    %cst_36 = arith.constant dense<0.000000e+00> : vector<512x64xf32>
    %24 = tpu.matmul %21, %23, %cst_36 {dimension_numbers = #tpu.dot_dimension_numbers<[1], [0], [0], [1], [0, 0, 1, 1], [], []>} : vector<512x64xbf16>, vector<64x64xbf16>, vector<512x64xf32> -> vector<512x64xf32>
    %25 = arith.addf %19, %24 : vector<512x64xf32>
    %c0_37 = arith.constant 0 : index
    %c0_38 = arith.constant 0 : index
    %c1_39 = arith.constant 1 : index
    %c0_40 = arith.constant 0 : index
    %26 = vector.load %arg9[%c0_37, %c0_38, %c1_39, %c0_40] : memref<2x18x24x64xbf16, #tpu.memory_space<vmem>>, vector<2x16x16x64xbf16>
    %27 = vector.shape_cast %26 : vector<2x16x16x64xbf16> to vector<512x64xbf16>
    %c1_41 = arith.constant 1 : index
    %c0_42 = arith.constant 0 : index
    %c0_43 = arith.constant 0 : index
    %28 = vector.load %arg4[%c1_41, %c0_42, %c0_43] : memref<9x64x64xbf16, #tpu.memory_space<vmem>>, vector<1x64x64xbf16>
    %29 = vector.shape_cast %28 : vector<1x64x64xbf16> to vector<64x64xbf16>
    %cst_44 = arith.constant dense<0.000000e+00> : vector<512x64xf32>
    %30 = tpu.matmul %27, %29, %cst_44 {dimension_numbers = #tpu.dot_dimension_numbers<[1], [0], [0], [1], [0, 0, 1, 1], [], []>} : vector<512x64xbf16>, vector<64x64xbf16>, vector<512x64xf32> -> vector<512x64xf32>
    %31 = arith.addf %25, %30 : vector<512x64xf32>
    %c0_45 = arith.constant 0 : index
    %c0_46 = arith.constant 0 : index
    %c2 = arith.constant 2 : index
    %c0_47 = arith.constant 0 : index
    %32 = vector.load %arg9[%c0_45, %c0_46, %c2, %c0_47] : memref<2x18x24x64xbf16, #tpu.memory_space<vmem>>, vector<2x16x16x64xbf16>
    %33 = vector.shape_cast %32 : vector<2x16x16x64xbf16> to vector<512x64xbf16>
    %c2_48 = arith.constant 2 : index
    %c0_49 = arith.constant 0 : index
    %c0_50 = arith.constant 0 : index
    %34 = vector.load %arg4[%c2_48, %c0_49, %c0_50] : memref<9x64x64xbf16, #tpu.memory_space<vmem>>, vector<1x64x64xbf16>
    %35 = vector.shape_cast %34 : vector<1x64x64xbf16> to vector<64x64xbf16>
    %cst_51 = arith.constant dense<0.000000e+00> : vector<512x64xf32>
    %36 = tpu.matmul %33, %35, %cst_51 {dimension_numbers = #tpu.dot_dimension_numbers<[1], [0], [0], [1], [0, 0, 1, 1], [], []>} : vector<512x64xbf16>, vector<64x64xbf16>, vector<512x64xf32> -> vector<512x64xf32>
    %37 = arith.addf %31, %36 : vector<512x64xf32>
    %c0_52 = arith.constant 0 : index
    %c1_53 = arith.constant 1 : index
    %c0_54 = arith.constant 0 : index
    %c0_55 = arith.constant 0 : index
    %38 = vector.load %arg9[%c0_52, %c1_53, %c0_54, %c0_55] : memref<2x18x24x64xbf16, #tpu.memory_space<vmem>>, vector<2x16x16x64xbf16>
    %39 = vector.shape_cast %38 : vector<2x16x16x64xbf16> to vector<512x64xbf16>
    %c3 = arith.constant 3 : index
    %c0_56 = arith.constant 0 : index
    %c0_57 = arith.constant 0 : index
    %40 = vector.load %arg4[%c3, %c0_56, %c0_57] : memref<9x64x64xbf16, #tpu.memory_space<vmem>>, vector<1x64x64xbf16>
    %41 = vector.shape_cast %40 : vector<1x64x64xbf16> to vector<64x64xbf16>
    %cst_58 = arith.constant dense<0.000000e+00> : vector<512x64xf32>
    %42 = tpu.matmul %39, %41, %cst_58 {dimension_numbers = #tpu.dot_dimension_numbers<[1], [0], [0], [1], [0, 0, 1, 1], [], []>} : vector<512x64xbf16>, vector<64x64xbf16>, vector<512x64xf32> -> vector<512x64xf32>
    %43 = arith.addf %37, %42 : vector<512x64xf32>
    %c0_59 = arith.constant 0 : index
    %c1_60 = arith.constant 1 : index
    %c1_61 = arith.constant 1 : index
    %c0_62 = arith.constant 0 : index
    %44 = vector.load %arg9[%c0_59, %c1_60, %c1_61, %c0_62] : memref<2x18x24x64xbf16, #tpu.memory_space<vmem>>, vector<2x16x16x64xbf16>
    %45 = vector.shape_cast %44 : vector<2x16x16x64xbf16> to vector<512x64xbf16>
    %c4 = arith.constant 4 : index
    %c0_63 = arith.constant 0 : index
    %c0_64 = arith.constant 0 : index
    %46 = vector.load %arg4[%c4, %c0_63, %c0_64] : memref<9x64x64xbf16, #tpu.memory_space<vmem>>, vector<1x64x64xbf16>
    %47 = vector.shape_cast %46 : vector<1x64x64xbf16> to vector<64x64xbf16>
    %cst_65 = arith.constant dense<0.000000e+00> : vector<512x64xf32>
    %48 = tpu.matmul %45, %47, %cst_65 {dimension_numbers = #tpu.dot_dimension_numbers<[1], [0], [0], [1], [0, 0, 1, 1], [], []>} : vector<512x64xbf16>, vector<64x64xbf16>, vector<512x64xf32> -> vector<512x64xf32>
    %49 = arith.addf %43, %48 : vector<512x64xf32>
    %c0_66 = arith.constant 0 : index
    %c1_67 = arith.constant 1 : index
    %c2_68 = arith.constant 2 : index
    %c0_69 = arith.constant 0 : index
    %50 = vector.load %arg9[%c0_66, %c1_67, %c2_68, %c0_69] : memref<2x18x24x64xbf16, #tpu.memory_space<vmem>>, vector<2x16x16x64xbf16>
    %51 = vector.shape_cast %50 : vector<2x16x16x64xbf16> to vector<512x64xbf16>
    %c5 = arith.constant 5 : index
    %c0_70 = arith.constant 0 : index
    %c0_71 = arith.constant 0 : index
    %52 = vector.load %arg4[%c5, %c0_70, %c0_71] : memref<9x64x64xbf16, #tpu.memory_space<vmem>>, vector<1x64x64xbf16>
    %53 = vector.shape_cast %52 : vector<1x64x64xbf16> to vector<64x64xbf16>
    %cst_72 = arith.constant dense<0.000000e+00> : vector<512x64xf32>
    %54 = tpu.matmul %51, %53, %cst_72 {dimension_numbers = #tpu.dot_dimension_numbers<[1], [0], [0], [1], [0, 0, 1, 1], [], []>} : vector<512x64xbf16>, vector<64x64xbf16>, vector<512x64xf32> -> vector<512x64xf32>
    %55 = arith.addf %49, %54 : vector<512x64xf32>
    %c0_73 = arith.constant 0 : index
    %c2_74 = arith.constant 2 : index
    %c0_75 = arith.constant 0 : index
    %c0_76 = arith.constant 0 : index
    %56 = vector.load %arg9[%c0_73, %c2_74, %c0_75, %c0_76] : memref<2x18x24x64xbf16, #tpu.memory_space<vmem>>, vector<2x16x16x64xbf16>
    %57 = vector.shape_cast %56 : vector<2x16x16x64xbf16> to vector<512x64xbf16>
    %c6 = arith.constant 6 : index
    %c0_77 = arith.constant 0 : index
    %c0_78 = arith.constant 0 : index
    %58 = vector.load %arg4[%c6, %c0_77, %c0_78] : memref<9x64x64xbf16, #tpu.memory_space<vmem>>, vector<1x64x64xbf16>
    %59 = vector.shape_cast %58 : vector<1x64x64xbf16> to vector<64x64xbf16>
    %cst_79 = arith.constant dense<0.000000e+00> : vector<512x64xf32>
    %60 = tpu.matmul %57, %59, %cst_79 {dimension_numbers = #tpu.dot_dimension_numbers<[1], [0], [0], [1], [0, 0, 1, 1], [], []>} : vector<512x64xbf16>, vector<64x64xbf16>, vector<512x64xf32> -> vector<512x64xf32>
    %61 = arith.addf %55, %60 : vector<512x64xf32>
    %c0_80 = arith.constant 0 : index
    %c2_81 = arith.constant 2 : index
    %c1_82 = arith.constant 1 : index
    %c0_83 = arith.constant 0 : index
    %62 = vector.load %arg9[%c0_80, %c2_81, %c1_82, %c0_83] : memref<2x18x24x64xbf16, #tpu.memory_space<vmem>>, vector<2x16x16x64xbf16>
    %63 = vector.shape_cast %62 : vector<2x16x16x64xbf16> to vector<512x64xbf16>
    %c7 = arith.constant 7 : index
    %c0_84 = arith.constant 0 : index
    %c0_85 = arith.constant 0 : index
    %64 = vector.load %arg4[%c7, %c0_84, %c0_85] : memref<9x64x64xbf16, #tpu.memory_space<vmem>>, vector<1x64x64xbf16>
    %65 = vector.shape_cast %64 : vector<1x64x64xbf16> to vector<64x64xbf16>
    %cst_86 = arith.constant dense<0.000000e+00> : vector<512x64xf32>
    %66 = tpu.matmul %63, %65, %cst_86 {dimension_numbers = #tpu.dot_dimension_numbers<[1], [0], [0], [1], [0, 0, 1, 1], [], []>} : vector<512x64xbf16>, vector<64x64xbf16>, vector<512x64xf32> -> vector<512x64xf32>
    %67 = arith.addf %61, %66 : vector<512x64xf32>
    %c0_87 = arith.constant 0 : index
    %c2_88 = arith.constant 2 : index
    %c2_89 = arith.constant 2 : index
    %c0_90 = arith.constant 0 : index
    %68 = vector.load %arg9[%c0_87, %c2_88, %c2_89, %c0_90] : memref<2x18x24x64xbf16, #tpu.memory_space<vmem>>, vector<2x16x16x64xbf16>
    %69 = vector.shape_cast %68 : vector<2x16x16x64xbf16> to vector<512x64xbf16>
    %c8 = arith.constant 8 : index
    %c0_91 = arith.constant 0 : index
    %c0_92 = arith.constant 0 : index
    %70 = vector.load %arg4[%c8, %c0_91, %c0_92] : memref<9x64x64xbf16, #tpu.memory_space<vmem>>, vector<1x64x64xbf16>
    %71 = vector.shape_cast %70 : vector<1x64x64xbf16> to vector<64x64xbf16>
    %cst_93 = arith.constant dense<0.000000e+00> : vector<512x64xf32>
    %72 = tpu.matmul %69, %71, %cst_93 {dimension_numbers = #tpu.dot_dimension_numbers<[1], [0], [0], [1], [0, 0, 1, 1], [], []>} : vector<512x64xbf16>, vector<64x64xbf16>, vector<512x64xf32> -> vector<512x64xf32>
    %73 = arith.addf %67, %72 : vector<512x64xf32>
    %c0_94 = arith.constant 0 : index
    %c0_95 = arith.constant 0 : index
    %74 = vector.load %arg5[%c0_94, %c0_95] : memref<1x64xf32, #tpu.memory_space<vmem>>, vector<1x64xf32>
    %75 = vector.broadcast %74 : vector<1x64xf32> to vector<512x64xf32>
    %76 = arith.addf %73, %75 : vector<512x64xf32>
    %cst_96 = arith.constant 0.000000e+00 : f32
    %77 = vector.broadcast %cst_96 : f32 to vector<512x64xf32>
    %78 = arith.maximumf %76, %77 : vector<512x64xf32>
    %79 = arith.truncf %78 : vector<512x64xf32> to vector<512x64xbf16>
    %c0_97 = arith.constant 0 : index
    %c0_98 = arith.constant 0 : index
    %80 = vector.load %arg6[%c0_97, %c0_98] : memref<64x64xbf16, #tpu.memory_space<vmem>>, vector<64x64xbf16>
    %cst_99 = arith.constant dense<0.000000e+00> : vector<512x64xf32>
    %81 = tpu.matmul %79, %80, %cst_99 {dimension_numbers = #tpu.dot_dimension_numbers<[1], [0], [0], [1], [0, 0, 1, 1], [], []>} : vector<512x64xbf16>, vector<64x64xbf16>, vector<512x64xf32> -> vector<512x64xf32>
    %c0_100 = arith.constant 0 : index
    %c0_101 = arith.constant 0 : index
    %82 = vector.load %arg7[%c0_100, %c0_101] : memref<1x64xf32, #tpu.memory_space<vmem>>, vector<1x64xf32>
    %83 = vector.broadcast %82 : vector<1x64xf32> to vector<512x64xf32>
    %84 = arith.addf %81, %83 : vector<512x64xf32>
    %85 = arith.extf %1 : vector<512x64xbf16> to vector<512x64xf32>
    %86 = arith.addf %84, %85 : vector<512x64xf32>
    %cst_102 = arith.constant 0.000000e+00 : f32
    %87 = vector.broadcast %cst_102 : f32 to vector<512x64xf32>
    %88 = arith.maximumf %86, %87 : vector<512x64xf32>
    %89 = arith.truncf %88 : vector<512x64xf32> to vector<512x64xbf16>
    %90 = vector.shape_cast %89 : vector<512x64xbf16> to vector<2x256x64xbf16>
    %c0_103 = arith.constant 0 : index
    %c0_104 = arith.constant 0 : index
    %c0_105 = arith.constant 0 : index
    %91 = vector.load %arg8[%c0_103, %c0_104, %c0_105] : memref<2x256x64xbf16, #tpu.memory_space<vmem>>, vector<2x256x64xbf16>
    tpu.vector_store %arg8[%c0_103, %c0_104, %c0_105], %90 {strides = array<i32>} : memref<2x256x64xbf16, #tpu.memory_space<vmem>>, vector<2x256x64xbf16>,
    return
  }
  func.func @transform_0(%arg0: i32) -> (i32, i32, i32) {
    %c0_i32 = arith.constant 0 : i32
    %c0_i32_0 = arith.constant 0 : i32
    %c0_i32_1 = arith.constant 0 : i32
    return %arg0, %c0_i32, %c0_i32_0 : i32, i32, i32
  }
  func.func @transform_1(%arg0: i32) -> (i32, i32) {
    %c0_i32 = arith.constant 0 : i32
    %c0_i32_0 = arith.constant 0 : i32
    %c0_i32_1 = arith.constant 0 : i32
    return %c0_i32, %c0_i32_0 : i32, i32
  }
  func.func @transform_2(%arg0: i32) -> (i32, i32) {
    %c0_i32 = arith.constant 0 : i32
    %c0_i32_0 = arith.constant 0 : i32
    %c0_i32_1 = arith.constant 0 : i32
    return %c0_i32, %c0_i32_0 : i32, i32
  }
  func.func @transform_3(%arg0: i32) -> (i32, i32, i32) {
    %c0_i32 = arith.constant 0 : i32
    %c0_i32_0 = arith.constant 0 : i32
    %c0_i32_1 = arith.constant 0 : i32
    %c0_i32_2 = arith.constant 0 : i32
    return %c0_i32, %c0_i32_0, %c0_i32_1 : i32, i32, i32
  }
  func.func @transform_4(%arg0: i32) -> (i32, i32) {
    %c0_i32 = arith.constant 0 : i32
    %c0_i32_0 = arith.constant 0 : i32
    %c0_i32_1 = arith.constant 0 : i32
    return %c0_i32, %c0_i32_0 : i32, i32
  }
  func.func @transform_5(%arg0: i32) -> (i32, i32) {
    %c0_i32 = arith.constant 0 : i32
    %c0_i32_0 = arith.constant 0 : i32
    %c0_i32_1 = arith.constant 0 : i32
    return %c0_i32, %c0_i32_0 : i32, i32
  }
  func.func @transform_6(%arg0: i32) -> (i32, i32) {
    %c0_i32 = arith.constant 0 : i32
    %c0_i32_0 = arith.constant 0 : i32
    %c0_i32_1 = arith.constant 0 : i32
    return %c0_i32, %c0_i32_0 : i32, i32
  }
  func.func @transform_7(%arg0: i32) -> (i32, i32, i32) {
    %c0_i32 = arith.constant 0 : i32
    %c0_i32_0 = arith.constant 0 : i32
    %c0_i32_1 = arith.constant 0 : i32
    return %arg0, %c0_i32, %c0_i32_0 : i32, i32, i32
  }
}

</mosaic_0001>

<llo_original>
// kernel: tpu_custom_call.1
$region0: #{tpu_custom_call.1}
  #allocation0 [shape = 'u32[]', space=smem, size = 0x4, offset = 0x4, fixed_abs, tag = 'smem constant byte address 0x4 - core index']
  #allocation1 [shape = 'u32[72,128]{1,0:T(1,128)}', space=vmem, size = 0x9000, scoped, tag = 'internal scratch']
  #allocation2 [shape = 'bf16[2,18,24,64]{3,2,1,0:T(8,128)(2,1)}', space=vmem, size = 0x36000, scoped, tag = 'scratch operand']
  %s0 = inlined_call_operand.vmem [shape: bf16[4,256,64], index: 0, kind: input, shape index: {}]
  %s1 = inlined_call_operand.vmem [shape: bf16[64,64], index: 1, kind: input, shape index: {}]
  %s2 = inlined_call_operand.vmem [shape: f32[1,64], index: 2, kind: input, shape index: {}]
  %s3 = inlined_call_operand.vmem [shape: bf16[9,64,64], index: 3, kind: input, shape index: {}]
  %s4 = inlined_call_operand.vmem [shape: f32[1,64], index: 4, kind: input, shape index: {}]
  %s5 = inlined_call_operand.vmem [shape: bf16[64,64], index: 5, kind: input, shape index: {}]
  %s6 = inlined_call_operand.vmem [shape: f32[1,64], index: 6, kind: input, shape index: {}]
  %s7 = inlined_call_operand.vmem [shape: bf16[4,256,64], index: 7, kind: output, shape index: {}]
  %s8 = sld [smem:[#allocation0]]
  $region61: #{tpu_custom_call.1} parent=0
    _
  %s10 = ssub.s32 1, %s8
  %s11 = scalar_select 0, %s10, %s8
  loop: start=0, step=1, limit=4
  $region2: #{tpu_custom_call.1} parent=0 // loop_pre_header
    _
  $region3: #{tpu_custom_call.1} parent=0 // loop_header
    %s13 = sphi 0, %s17
    %p14 = scmp.ge.s32.totalorder %s13, 4
    %s23 = sphi 0, %s25
    %s26 = sphi 0, %s23
    %s27 = sphi 0, %s26
    %s43 = sphi 0, %s27
    %s47 = sphi 0, %s47
    %s49 = sphi 0, %s47
    %s50 = sphi 0, %s49
    %s64 = sphi 0, %s50
    %s68 = sphi 0, %s68
    %s70 = sphi 0, %s68
    %s71 = sphi 0, %s70
    %s85 = sphi 0, %s71
    %s89 = sphi 0, %s89
    %s91 = sphi 0, %s89
    %s92 = sphi 0, %s91
    %s106 = sphi 0, %s92
    %s110 = sphi 0, %s110
    %s112 = sphi 0, %s110
    %s113 = sphi 0, %s112
    %s127 = sphi 0, %s113
    %s131 = sphi 0, %s131
    %s133 = sphi 0, %s131
    %s134 = sphi 0, %s133
    %s148 = sphi 0, %s134
    %s152 = sphi 0, %s152
    %s154 = sphi 0, %s152
    %s155 = sphi 0, %s154
    %s169 = sphi 0, %s155
    %s175 = sphi 0, %s177
    %s178 = sphi 0, %s175
    %s179 = sphi 0, %s178
    %s195 = sphi 0, %s179
  $region4: #{tpu_custom_call.1} parent=0 // loop_header_branch
    %16 = sbr.rel (%p14) target = $region8
  $region5: #{tpu_custom_call.1} parent=0 // loop_body
    %s18 = ssub.s32 %s13, 1
    %s19 = ssub.s32 %s13, 2
    %s20 = sadd.s32 %s13, 1
    %s21 = ssub.s32 %s13, %s20
    %p22 = scmp.eq.s32.totalorder %s21, 0
    %s24 = sadd.s32 %s23, 1
    %s25 = scalar_select %p22, %s23, %s24
    %p28 = pneg %p22
    %p29 = scmp.eq.s32.totalorder %s13, 1
    %p30 = por %p28, %p29
    %p31 = scmp.ne.s32.totalorder %s23, %s26
    %p32 = scmp.eq.s32.totalorder %s13, 0
    %p33 = por %p31, %p32
    %p34 = scmp.ne.s32.totalorder %s23, %s26
    %p35 = scmp.eq.s32.totalorder %s18, 1
    %p36 = por %p34, %p35
    %p37 = scmp.ne.s32.totalorder %s26, %s27
    %p38 = scmp.eq.s32.totalorder %s18, 0
    %p39 = por %p37, %p38
    %p40 = scmp.ne.s32.totalorder %s26, %s27
    %p41 = scmp.eq.s32.totalorder %s19, 1
    %p42 = por %p40, %p41
    %p44 = scmp.ne.s32.totalorder %s27, %s43
    %p45 = scmp.eq.s32.totalorder %s19, 0
    %p46 = por %p44, %p45
    %s48 = sadd.s32 %s47, 1
    %p51 = scmp.eq.s32.totalorder %s13, 1
    %p52 = scmp.ne.s32.totalorder %s47, %s49
    %p53 = scmp.eq.s32.totalorder %s13, 0
    %p54 = por %p52, %p53
    %p55 = scmp.ne.s32.totalorder %s47, %s49
    %p56 = scmp.eq.s32.totalorder %s18, 1
    %p57 = por %p55, %p56
    %p58 = scmp.ne.s32.totalorder %s49, %s50
    %p59 = scmp.eq.s32.totalorder %s18, 0
    %p60 = por %p58, %p59
    %p61 = scmp.ne.s32.totalorder %s49, %s50
    %p62 = scmp.eq.s32.totalorder %s19, 1
    %p63 = por %p61, %p62
    %p65 = scmp.ne.s32.totalorder %s50, %s64
    %p66 = scmp.eq.s32.totalorder %s19, 0
    %p67 = por %p65, %p66
    %s69 = sadd.s32 %s68, 1
    %p72 = scmp.eq.s32.totalorder %s13, 1
    %p73 = scmp.ne.s32.totalorder %s68, %s70
    %p74 = scmp.eq.s32.totalorder %s13, 0
    %p75 = por %p73, %p74
    %p76 = scmp.ne.s32.totalorder %s68, %s70
    %p77 = scmp.eq.s32.totalorder %s18, 1
    %p78 = por %p76, %p77
    %p79 = scmp.ne.s32.totalorder %s70, %s71
    %p80 = scmp.eq.s32.totalorder %s18, 0
    %p81 = por %p79, %p80
    %p82 = scmp.ne.s32.totalorder %s70, %s71
    %p83 = scmp.eq.s32.totalorder %s19, 1
    %p84 = por %p82, %p83
    %p86 = scmp.ne.s32.totalorder %s71, %s85
    %p87 = scmp.eq.s32.totalorder %s19, 0
    %p88 = por %p86, %p87
    %s90 = sadd.s32 %s89, 1
    %p93 = scmp.eq.s32.totalorder %s13, 1
    %p94 = scmp.ne.s32.totalorder %s89, %s91
    %p95 = scmp.eq.s32.totalorder %s13, 0
    %p96 = por %p94, %p95
    %p97 = scmp.ne.s32.totalorder %s89, %s91
    %p98 = scmp.eq.s32.totalorder %s18, 1
    %p99 = por %p97, %p98
    %p100 = scmp.ne.s32.totalorder %s91, %s92
    %p101 = scmp.eq.s32.totalorder %s18, 0
    %p102 = por %p100, %p101
    %p103 = scmp.ne.s32.totalorder %s91, %s92
    %p104 = scmp.eq.s32.totalorder %s19, 1
    %p105 = por %p103, %p104
    %p107 = scmp.ne.s32.totalorder %s92, %s106
    %p108 = scmp.eq.s32.totalorder %s19, 0
    %p109 = por %p107, %p108
    %s111 = sadd.s32 %s110, 1
    %p114 = scmp.eq.s32.totalorder %s13, 1
    %p115 = scmp.ne.s32.totalorder %s110, %s112
    %p116 = scmp.eq.s32.totalorder %s13, 0
    %p117 = por %p115, %p116
    %p118 = scmp.ne.s32.totalorder %s110, %s112
    %p119 = scmp.eq.s32.totalorder %s18, 1
    %p120 = por %p118, %p119
    %p121 = scmp.ne.s32.totalorder %s112, %s113
    %p122 = scmp.eq.s32.totalorder %s18, 0
    %p123 = por %p121, %p122
    %p124 = scmp.ne.s32.totalorder %s112, %s113
    %p125 = scmp.eq.s32.totalorder %s19, 1
    %p126 = por %p124, %p125
    %p128 = scmp.ne.s32.totalorder %s113, %s127
    %p129 = scmp.eq.s32.totalorder %s19, 0
    %p130 = por %p128, %p129
    %s132 = sadd.s32 %s131, 1
    %p135 = scmp.eq.s32.totalorder %s13, 1
    %p136 = scmp.ne.s32.totalorder %s131, %s133
    %p137 = scmp.eq.s32.totalorder %s13, 0
    %p138 = por %p136, %p137
    %p139 = scmp.ne.s32.totalorder %s131, %s133
    %p140 = scmp.eq.s32.totalorder %s18, 1
    %p141 = por %p139, %p140
    %p142 = scmp.ne.s32.totalorder %s133, %s134
    %p143 = scmp.eq.s32.totalorder %s18, 0
    %p144 = por %p142, %p143
    %p145 = scmp.ne.s32.totalorder %s133, %s134
    %p146 = scmp.eq.s32.totalorder %s19, 1
    %p147 = por %p145, %p146
    %p149 = scmp.ne.s32.totalorder %s134, %s148
    %p150 = scmp.eq.s32.totalorder %s19, 0
    %p151 = por %p149, %p150
    %s153 = sadd.s32 %s152, 1
    %p156 = scmp.eq.s32.totalorder %s13, 1
    %p157 = scmp.ne.s32.totalorder %s152, %s154
    %p158 = scmp.eq.s32.totalorder %s13, 0
    %p159 = por %p157, %p158
    %p160 = scmp.ne.s32.totalorder %s152, %s154
    %p161 = scmp.eq.s32.totalorder %s18, 1
    %p162 = por %p160, %p161
    %p163 = scmp.ne.s32.totalorder %s154, %s155
    %p164 = scmp.eq.s32.totalorder %s18, 0
    %p165 = por %p163, %p164
    %p166 = scmp.ne.s32.totalorder %s154, %s155
    %p167 = scmp.eq.s32.totalorder %s19, 1
    %p168 = por %p166, %p167
    %p170 = scmp.ne.s32.totalorder %s155, %s169
    %p171 = scmp.eq.s32.totalorder %s19, 0
    %p172 = por %p170, %p171
    %s173 = ssub.s32 %s13, %s20
    %p174 = scmp.eq.s32.totalorder %s173, 0
    %s176 = sadd.s32 %s175, 1
    %s177 = scalar_select %p174, %s175, %s176
    %p180 = pneg %p174
    %p181 = scmp.eq.s32.totalorder %s13, 1
    %p182 = por %p180, %p181
    %p183 = scmp.ne.s32.totalorder %s175, %s178
    %p184 = scmp.eq.s32.totalorder %s13, 0
    %p185 = por %p183, %p184
    %p186 = scmp.ne.s32.totalorder %s175, %s178
    %p187 = scmp.eq.s32.totalorder %s18, 1
    %p188 = por %p186, %p187
    %p189 = scmp.ne.s32.totalorder %s178, %s179
    %p190 = scmp.eq.s32.totalorder %s18, 0
    %p191 = por %p189, %p190
    %p192 = scmp.ne.s32.totalorder %s178, %s179
    %p193 = scmp.eq.s32.totalorder %s19, 1
    %p194 = por %p192, %p193
    %p196 = scmp.ne.s32.totalorder %s179, %s195
    %p197 = scmp.eq.s32.totalorder %s19, 0
    %p198 = por %p196, %p197
    %p199 = scmp.le.s32.totalorder 1, %s13
    %p200 = scmp.lt.s32.totalorder %s13, 3
    %p201 = pnand %p199, %p200
    %p202 = pneg %p201
    // Predicated region
    $region9: #{tpu_custom_call.1} parent=5 // pred_check
      _
    $region10: #{tpu_custom_call.1} parent=5 // pred_check_branch
      %204 = sbr.rel (%p201) target = $region12
    $region11: #{tpu_custom_call.1} parent=5 // pred_region
      %s205 = ssub.s32 %s13, 1
      // Predicated region
      $region13: #{tpu_custom_call.1} parent=11 // pred_check
        %p206 = pneg %p60
      $region14: #{tpu_custom_call.1} parent=11 // pred_check_branch
        %208 = sbr.rel (%p206) target = $region16
      $region15: #{tpu_custom_call.1} parent=11 // pred_region
        _
      $region16: #{tpu_custom_call.1} parent=11 // pred_fallthru
        _
      // Predicated region
      $region17: #{tpu_custom_call.1} parent=11 // pred_check
        %p209 = pneg %p81
      $region18: #{tpu_custom_call.1} parent=11 // pred_check_branch
        %211 = sbr.rel (%p209) target = $region20
      $region19: #{tpu_custom_call.1} parent=11 // pred_region
        _
      $region20: #{tpu_custom_call.1} parent=11 // pred_fallthru
        _
      // Predicated region
      $region21: #{tpu_custom_call.1} parent=11 // pred_check
        %p212 = pneg %p102
      $region22: #{tpu_custom_call.1} parent=11 // pred_check_branch
        %214 = sbr.rel (%p212) target = $region24
      $region23: #{tpu_custom_call.1} parent=11 // pred_region
        _
      $region24: #{tpu_custom_call.1} parent=11 // pred_fallthru
        _
      // Predicated region
      $region25: #{tpu_custom_call.1} parent=11 // pred_check
        %p215 = pneg %p123
      $region26: #{tpu_custom_call.1} parent=11 // pred_check_branch
        %217 = sbr.rel (%p215) target = $region28
      $region27: #{tpu_custom_call.1} parent=11 // pred_region
        _
      $region28: #{tpu_custom_call.1} parent=11 // pred_fallthru
        _
      // Predicated region
      $region29: #{tpu_custom_call.1} parent=11 // pred_check
        %p218 = pneg %p144
      $region30: #{tpu_custom_call.1} parent=11 // pred_check_branch
        %220 = sbr.rel (%p218) target = $region32
      $region31: #{tpu_custom_call.1} parent=11 // pred_region
        _
      $region32: #{tpu_custom_call.1} parent=11 // pred_fallthru
        _
      // Predicated region
      $region33: #{tpu_custom_call.1} parent=11 // pred_check
        %p221 = pneg %p165
      $region34: #{tpu_custom_call.1} parent=11 // pred_check_branch
        %223 = sbr.rel (%p221) target = $region36
      $region35: #{tpu_custom_call.1} parent=11 // pred_region
        _
      $region36: #{tpu_custom_call.1} parent=11 // pred_fallthru
        _
    $region12: #{tpu_custom_call.1} parent=5 // pred_fallthru
      _
    %p224 = scmp.lt.s32.totalorder %s13, 2
    // Predicated region
    $region37: #{tpu_custom_call.1} parent=5 // pred_check
      %p225 = pneg %p224
    $region38: #{tpu_custom_call.1} parent=5 // pred_check_branch
      %227 = sbr.rel (%p225) target = $region40
    $region39: #{tpu_custom_call.1} parent=5 // pred_region
      // Predicated region
      $region41: #{tpu_custom_call.1} parent=39 // pred_check
        %p228 = pneg %p33
      $region42: #{tpu_custom_call.1} parent=39 // pred_check_branch
        %230 = sbr.rel (%p228) target = $region44
      $region43: #{tpu_custom_call.1} parent=39 // pred_region
        %s231 = smul.u32 2, %s13
        %p232 = scmp.lt.s32.totalorder %s231, 3
        %s233 = scalar_select %p232, %s231, 3
        %s234 = smul.addr %s233, 32
        %s235 = smul.addr %s234, 4
        %s236 = scalar_lea.vmem %s0, %s235
        %s237 = smul.u32 2, %s13
      $region44: #{tpu_custom_call.1} parent=39 // pred_fallthru
        _
    $region40: #{tpu_custom_call.1} parent=5 // pred_fallthru
      _
    %p238 = scmp.le.s32.totalorder 1, %s13
    %p239 = scmp.lt.s32.totalorder %s13, 3
    %p240 = pnand %p238, %p239
    %p241 = pneg %p240
    // Predicated region
    $region45: #{tpu_custom_call.1} parent=5 // pred_check
      _
    $region46: #{tpu_custom_call.1} parent=5 // pred_check_branch
      %243 = sbr.rel (%p240) target = $region48
    $region47: #{tpu_custom_call.1} parent=5 // pred_region
      %s244 = ssub.s32 %s13, 1
      %s245 = smul.u32 2, %s18
      %p246 = scmp.lt.s32.totalorder %s245, 3
      %s247 = scalar_select %p246, %s245, 3
      %s248 = smul.addr %s247, 32
      %s249 = smul.addr %s248, 4
      %s250 = scalar_lea.vmem %s0, %s249
      %p251 = pneg %p39
      %p252 = pneg %p36
      %p253 = pneg %p60
      %p254 = pneg %p57
      %p255 = pneg %p81
      %p256 = pneg %p78
      %p257 = pneg %p102
      %p258 = pneg %p99
      %p259 = pneg %p123
      %p260 = pneg %p120
      %p261 = pneg %p144
      %p262 = pneg %p141
      %p263 = pneg %p165
      %p264 = pneg %p162
      %p265 = pneg %p191
      %p266 = pneg %p188
      %s267 = smul.u32 2, %s18
      %p268 = scmp.lt.s32.totalorder %s267, 3
      %s269 = scalar_select %p268, %s267, 3
      %s270 = smul.addr %s269, 32
      %s271 = smul.addr %s270, 4
      %s272 = scalar_lea.vmem %s7, %s271
      %s273 = smul.u32 2, %s18
      %p274 = scmp.lt.s32.totalorder %s273, 3
      %s275 = scalar_select %p274, %s273, 3
      %s276 = smul.addr %s275, 32
      %s277 = smul.addr %s276, 4
      %s278 = scalar_lea.vmem %s0, %s277
      %s279 = smul.u32 2, %s18
      %s280 = smul.u32 2, %s18
      %p281 = scmp.lt.s32.totalorder %s280, 3
      %s282 = scalar_select %p281, %s280, 3
      %s283 = smul.addr %s282, 32
      %s284 = smul.addr %s283, 4
      %s285 = scalar_lea.vmem %s7, %s284
      %s286 = smul.u32 2, %s18
      %v288 = vld [vmem:[%s278] sm:$0xf]
      %v289 = vld [vmem:[%s278 + $0x4] sm:$0xf]
      %v290 = vld [vmem:[%s278 + $0x8] sm:$0xf]
      %v291 = vld [vmem:[%s278 + $0xc] sm:$0xf]
      %v292 = vld [vmem:[%s278 + $0x10] sm:$0xf]
      %v293 = vld [vmem:[%s278 + $0x14] sm:$0xf]
      %v294 = vld [vmem:[%s278 + $0x18] sm:$0xf]
      %v295 = vld [vmem:[%s278 + $0x1c] sm:$0xf]
      %v296 = vld [vmem:[%s278 + $0x20] sm:$0xf]
      %v297 = vld [vmem:[%s278 + $0x24] sm:$0xf]
      %v298 = vld [vmem:[%s278 + $0x28] sm:$0xf]
      %v299 = vld [vmem:[%s278 + $0x2c] sm:$0xf]
      %v300 = vld [vmem:[%s278 + $0x30] sm:$0xf]
      %v301 = vld [vmem:[%s278 + $0x34] sm:$0xf]
      %v302 = vld [vmem:[%s278 + $0x38] sm:$0xf]
      %v303 = vld [vmem:[%s278 + $0x3c] sm:$0xf]
      %v304 = vld [vmem:[%s278 + $0x40] sm:$0xf]
      %v305 = vld [vmem:[%s278 + $0x44] sm:$0xf]
      %v306 = vld [vmem:[%s278 + $0x48] sm:$0xf]
      %v307 = vld [vmem:[%s278 + $0x4c] sm:$0xf]
      %v308 = vld [vmem:[%s278 + $0x50] sm:$0xf]
      %v309 = vld [vmem:[%s278 + $0x54] sm:$0xf]
      %v310 = vld [vmem:[%s278 + $0x58] sm:$0xf]
      %v311 = vld [vmem:[%s278 + $0x5c] sm:$0xf]
      %v312 = vld [vmem:[%s278 + $0x60] sm:$0xf]
      %v313 = vld [vmem:[%s278 + $0x64] sm:$0xf]
      %v314 = vld [vmem:[%s278 + $0x68] sm:$0xf]
      %v315 = vld [vmem:[%s278 + $0x6c] sm:$0xf]
      %v316 = vld [vmem:[%s278 + $0x70] sm:$0xf]
      %v317 = vld [vmem:[%s278 + $0x74] sm:$0xf]
      %v318 = vld [vmem:[%s278 + $0x78] sm:$0xf]
      %v319 = vld [vmem:[%s278 + $0x7c] sm:$0xf]
      %v320 = vld [vmem:[%s278 + $0x80] sm:$0xf]
      %v321 = vld [vmem:[%s278 + $0x84] sm:$0xf]
      %v322 = vld [vmem:[%s278 + $0x88] sm:$0xf]
      %v323 = vld [vmem:[%s278 + $0x8c] sm:$0xf]
      %v324 = vld [vmem:[%s278 + $0x90] sm:$0xf]
      %v325 = vld [vmem:[%s278 + $0x94] sm:$0xf]
      %v326 = vld [vmem:[%s278 + $0x98] sm:$0xf]
      %v327 = vld [vmem:[%s278 + $0x9c] sm:$0xf]
      %v328 = vld [vmem:[%s278 + $0xa0] sm:$0xf]
      %v329 = vld [vmem:[%s278 + $0xa4] sm:$0xf]
      %v330 = vld [vmem:[%s278 + $0xa8] sm:$0xf]
      %v331 = vld [vmem:[%s278 + $0xac] sm:$0xf]
      %v332 = vld [vmem:[%s278 + $0xb0] sm:$0xf]
      %v333 = vld [vmem:[%s278 + $0xb4] sm:$0xf]
      %v334 = vld [vmem:[%s278 + $0xb8] sm:$0xf]
      %v335 = vld [vmem:[%s278 + $0xbc] sm:$0xf]
      %v336 = vld [vmem:[%s278 + $0xc0] sm:$0xf]
      %v337 = vld [vmem:[%s278 + $0xc4] sm:$0xf]
      %v338 = vld [vmem:[%s278 + $0xc8] sm:$0xf]
      %v339 = vld [vmem:[%s278 + $0xcc] sm:$0xf]
      %v340 = vld [vmem:[%s278 + $0xd0] sm:$0xf]
      %v341 = vld [vmem:[%s278 + $0xd4] sm:$0xf]
      %v342 = vld [vmem:[%s278 + $0xd8] sm:$0xf]
      %v343 = vld [vmem:[%s278 + $0xdc] sm:$0xf]
      %v344 = vld [vmem:[%s278 + $0xe0] sm:$0xf]
      %v345 = vld [vmem:[%s278 + $0xe4] sm:$0xf]
      %v346 = vld [vmem:[%s278 + $0xe8] sm:$0xf]
      %v347 = vld [vmem:[%s278 + $0xec] sm:$0xf]
      %v348 = vld [vmem:[%s278 + $0xf0] sm:$0xf]
      %v349 = vld [vmem:[%s278 + $0xf4] sm:$0xf]
      %v350 = vld [vmem:[%s278 + $0xf8] sm:$0xf]
      %v351 = vld [vmem:[%s278 + $0xfc] sm:$0xf]
      %v352 = vld [vmem:[%s1] sm:$0xf]
      %v353 = vld [vmem:[%s1 + $0x4] sm:$0xf]
      %v354 = vld [vmem:[%s1 + $0x8] sm:$0xf]
      %v355 = vld [vmem:[%s1 + $0xc] sm:$0xf]
      %v356 = vld [vmem:[%s1 + $0x10] sm:$0xf]
      %v357 = vld [vmem:[%s1 + $0x14] sm:$0xf]
      %v358 = vld [vmem:[%s1 + $0x18] sm:$0xf]
      %v359 = vld [vmem:[%s1 + $0x1c] sm:$0xf]
      %v360 = vld [vmem:[%s2] sm:$0x1]
      %v362 = vperm.slane %v360, 0
      %v428 = vunpack.c.l.b16 %v288
      %v429 = vunpack.c.l.b16 %v289
      %v430 = vunpack.c.l.b16 %v290
      %v431 = vunpack.c.l.b16 %v291
      %v432 = vunpack.c.l.b16 %v292
      %v433 = vunpack.c.l.b16 %v293
      %v434 = vunpack.c.l.b16 %v294
      %v435 = vunpack.c.l.b16 %v295
      %v436 = vunpack.c.l.b16 %v296
      %v437 = vunpack.c.l.b16 %v297
      %v438 = vunpack.c.l.b16 %v298
      %v439 = vunpack.c.l.b16 %v299
      %v440 = vunpack.c.l.b16 %v300
      %v441 = vunpack.c.l.b16 %v301
      %v442 = vunpack.c.l.b16 %v302
      %v443 = vunpack.c.l.b16 %v303
      %v444 = vunpack.c.l.b16 %v304
      %v445 = vunpack.c.l.b16 %v305
      %v446 = vunpack.c.l.b16 %v306
      %v447 = vunpack.c.l.b16 %v307
      %v448 = vunpack.c.l.b16 %v308
      %v449 = vunpack.c.l.b16 %v309
      %v450 = vunpack.c.l.b16 %v310
      %v451 = vunpack.c.l.b16 %v311
      %v452 = vunpack.c.l.b16 %v312
      %v453 = vunpack.c.l.b16 %v313
      %v454 = vunpack.c.l.b16 %v314
      %v455 = vunpack.c.l.b16 %v315
      %v456 = vunpack.c.l.b16 %v316
      %v457 = vunpack.c.l.b16 %v317
      %v458 = vunpack.c.l.b16 %v318
      %v459 = vunpack.c.l.b16 %v319
      %v460 = vunpack.c.l.b16 %v320
      %v461 = vunpack.c.l.b16 %v321
      %v462 = vunpack.c.l.b16 %v322
      %v463 = vunpack.c.l.b16 %v323
      %v464 = vunpack.c.l.b16 %v324
      %v465 = vunpack.c.l.b16 %v325
      %v466 = vunpack.c.l.b16 %v326
      %v467 = vunpack.c.l.b16 %v327
      %v468 = vunpack.c.l.b16 %v328
      %v469 = vunpack.c.l.b16 %v329
      %v470 = vunpack.c.l.b16 %v330
      %v471 = vunpack.c.l.b16 %v331
      %v472 = vunpack.c.l.b16 %v332
      %v473 = vunpack.c.l.b16 %v333
      %v474 = vunpack.c.l.b16 %v334
      %v475 = vunpack.c.l.b16 %v335
      %v476 = vunpack.c.l.b16 %v336
      %v477 = vunpack.c.l.b16 %v337
      %v478 = vunpack.c.l.b16 %v338
      %v479 = vunpack.c.l.b16 %v339
      %v480 = vunpack.c.l.b16 %v340
      %v481 = vunpack.c.l.b16 %v341
      %v482 = vunpack.c.l.b16 %v342
      %v483 = vunpack.c.l.b16 %v343
      %v484 = vunpack.c.l.b16 %v344
      %v485 = vunpack.c.l.b16 %v345
      %v486 = vunpack.c.l.b16 %v346
      %v487 = vunpack.c.l.b16 %v347
      %v488 = vunpack.c.l.b16 %v348
      %v489 = vunpack.c.l.b16 %v349
      %v490 = vunpack.c.l.b16 %v350
      %v491 = vunpack.c.l.b16 %v351
      %v492 = vpack.c.b16 %v429, %v428
      %v493 = vpack.c.b16 %v431, %v430
      %v494 = vpack.c.b16 %v433, %v432
      %v495 = vpack.c.b16 %v435, %v434
      %v496 = vpack.c.b16 %v437, %v436
      %v497 = vpack.c.b16 %v439, %v438
      %v498 = vpack.c.b16 %v441, %v440
      %v499 = vpack.c.b16 %v443, %v442
      %v500 = vpack.c.b16 %v445, %v444
      %v501 = vpack.c.b16 %v447, %v446
      %v502 = vpack.c.b16 %v449, %v448
      %v503 = vpack.c.b16 %v451, %v450
      %v504 = vpack.c.b16 %v453, %v452
      %v505 = vpack.c.b16 %v455, %v454
      %v506 = vpack.c.b16 %v457, %v456
      %v507 = vpack.c.b16 %v459, %v458
      %v508 = vpack.c.b16 %v461, %v460
      %v509 = vpack.c.b16 %v463, %v462
      %v510 = vpack.c.b16 %v465, %v464
      %v511 = vpack.c.b16 %v467, %v466
      %v512 = vpack.c.b16 %v469, %v468
      %v513 = vpack.c.b16 %v471, %v470
      %v514 = vpack.c.b16 %v473, %v472
      %v515 = vpack.c.b16 %v475, %v474
      %v516 = vpack.c.b16 %v477, %v476
      %v517 = vpack.c.b16 %v479, %v478
      %v518 = vpack.c.b16 %v481, %v480
      %v519 = vpack.c.b16 %v483, %v482
      %v520 = vpack.c.b16 %v485, %v484
      %v521 = vpack.c.b16 %v487, %v486
      %v522 = vpack.c.b16 %v489, %v488
      %v523 = vpack.c.b16 %v491, %v490
      %v532 = vunpack.c.l.b16 %v352
      %v533 = vunpack.c.l.b16 %v353
      %v534 = vunpack.c.l.b16 %v354
      %v535 = vunpack.c.l.b16 %v355
      %v536 = vunpack.c.l.b16 %v356
      %v537 = vunpack.c.l.b16 %v357
      %v538 = vunpack.c.l.b16 %v358
      %v539 = vunpack.c.l.b16 %v359
      %v540 = vpack.c.b16 %v533, %v532
      %v541 = vpack.c.b16 %v535, %v534
      %v542 = vpack.c.b16 %v537, %v536
      %v543 = vpack.c.b16 %v539, %v538
      %vm548 = vcmask 523264
      %v550 = vsel %vm548, %v492, 0
      %v553 = vsel %vm548, %v493, 0
      %v556 = vsel %vm548, %v494, 0
      %v559 = vsel %vm548, %v495, 0
      %v562 = vsel %vm548, %v496, 0
      %v565 = vsel %vm548, %v497, 0
      %v568 = vsel %vm548, %v498, 0
      %v571 = vsel %vm548, %v499, 0
      %v574 = vsel %vm548, %v500, 0
      %v577 = vsel %vm548, %v501, 0
      %v580 = vsel %vm548, %v502, 0
      %v583 = vsel %vm548, %v503, 0
      %v586 = vsel %vm548, %v504, 0
      %v589 = vsel %vm548, %v505, 0
      %v592 = vsel %vm548, %v506, 0
      %v595 = vsel %vm548, %v507, 0
      %v598 = vsel %vm548, %v508, 0
      %v601 = vsel %vm548, %v509, 0
      %v604 = vsel %vm548, %v510, 0
      %v607 = vsel %vm548, %v511, 0
      %v610 = vsel %vm548, %v512, 0
      %v613 = vsel %vm548, %v513, 0
      %v616 = vsel %vm548, %v514, 0
      %v619 = vsel %vm548, %v515, 0
      %v622 = vsel %vm548, %v516, 0
      %v625 = vsel %vm548, %v517, 0
      %v628 = vsel %vm548, %v518, 0
      %v631 = vsel %vm548, %v519, 0
      %v634 = vsel %vm548, %v520, 0
      %v637 = vsel %vm548, %v521, 0
      %v640 = vsel %vm548, %v522, 0
      %v643 = vsel %vm548, %v523, 0
      %645 = vmatpush.bf16.msra.mxu0 0
      %646 = vmatpush.bf16.msra.mxu0 0
      %647 = vmatpush.bf16.msra.mxu0 0
      %648 = vmatpush.bf16.msra.mxu0 0
      %649 = vmatpush.bf16.msra.mxu0 %v543
      %650 = vmatpush.bf16.msra.mxu0 %v542
      %651 = vmatpush.bf16.msra.mxu0 %v541
      %652 = vmatpush.bf16.msra.mxu0 %v540
      %653 = vmatmul.bf16.gmra.mxu0 %v550
      %v654 = vpop.f32.mrf.mxu0
      %v655 = vadd.f32 %v362, %v654
      %v656 = vpop.f32.mrf.mxu0
      %v657 = vadd.f32 %v362, %v656
      %658 = vmatmul.bf16.gmra.mxu0 %v553
      %v659 = vpop.f32.mrf.mxu0
      %v660 = vadd.f32 %v362, %v659
      %v661 = vpop.f32.mrf.mxu0
      %v662 = vadd.f32 %v362, %v661
      %663 = vmatmul.bf16.gmra.mxu0 %v556
      %v664 = vpop.f32.mrf.mxu0
      %v665 = vadd.f32 %v362, %v664
      %v666 = vpop.f32.mrf.mxu0
      %v667 = vadd.f32 %v362, %v666
      %668 = vmatmul.bf16.gmra.mxu0 %v559
      %v669 = vpop.f32.mrf.mxu0
      %v670 = vadd.f32 %v362, %v669
      %v671 = vpop.f32.mrf.mxu0
      %v672 = vadd.f32 %v362, %v671
      %673 = vmatmul.bf16.gmra.mxu0 %v562
      %v674 = vpop.f32.mrf.mxu0
      %v675 = vadd.f32 %v362, %v674
      %v676 = vpop.f32.mrf.mxu0
      %v677 = vadd.f32 %v362, %v676
      %678 = vmatmul.bf16.gmra.mxu0 %v565
      %v679 = vpop.f32.mrf.mxu0
      %v680 = vadd.f32 %v362, %v679
      %v681 = vpop.f32.mrf.mxu0
      %v682 = vadd.f32 %v362, %v681
      %683 = vmatmul.bf16.gmra.mxu0 %v568
      %v684 = vpop.f32.mrf.mxu0
      %v685 = vadd.f32 %v362, %v684
      %v686 = vpop.f32.mrf.mxu0
      %v687 = vadd.f32 %v362, %v686
      %688 = vmatmul.bf16.gmra.mxu0 %v571
      %v689 = vpop.f32.mrf.mxu0
      %v690 = vadd.f32 %v362, %v689
      %v691 = vpop.f32.mrf.mxu0
      %v692 = vadd.f32 %v362, %v691
      %693 = vmatmul.bf16.gmra.mxu0 %v574
      %v694 = vpop.f32.mrf.mxu0
      %v695 = vadd.f32 %v362, %v694
      %v696 = vpop.f32.mrf.mxu0
      %v697 = vadd.f32 %v362, %v696
      %698 = vmatmul.bf16.gmra.mxu0 %v577
      %v699 = vpop.f32.mrf.mxu0
      %v700 = vadd.f32 %v362, %v699
      %v701 = vpop.f32.mrf.mxu0
      %v702 = vadd.f32 %v362, %v701
      %703 = vmatmul.bf16.gmra.mxu0 %v580
      %v704 = vpop.f32.mrf.mxu0
      %v705 = vadd.f32 %v362, %v704
      %v706 = vpop.f32.mrf.mxu0
      %v707 = vadd.f32 %v362, %v706
      %708 = vmatmul.bf16.gmra.mxu0 %v583
      %v709 = vpop.f32.mrf.mxu0
      %v710 = vadd.f32 %v362, %v709
      %v711 = vpop.f32.mrf.mxu0
      %v712 = vadd.f32 %v362, %v711
      %713 = vmatmul.bf16.gmra.mxu0 %v586
      %v714 = vpop.f32.mrf.mxu0
      %v715 = vadd.f32 %v362, %v714
      %v716 = vpop.f32.mrf.mxu0
      %v717 = vadd.f32 %v362, %v716
      %718 = vmatmul.bf16.gmra.mxu0 %v589
      %v719 = vpop.f32.mrf.mxu0
      %v720 = vadd.f32 %v362, %v719
      %v721 = vpop.f32.mrf.mxu0
      %v722 = vadd.f32 %v362, %v721
      %723 = vmatmul.bf16.gmra.mxu0 %v592
      %v724 = vpop.f32.mrf.mxu0
      %v725 = vadd.f32 %v362, %v724
      %v726 = vpop.f32.mrf.mxu0
      %v727 = vadd.f32 %v362, %v726
      %728 = vmatmul.bf16.gmra.mxu0 %v595
      %v729 = vpop.f32.mrf.mxu0
      %v730 = vadd.f32 %v362, %v729
      %v731 = vpop.f32.mrf.mxu0
      %v732 = vadd.f32 %v362, %v731
      %733 = vmatmul.bf16.gmra.mxu0 %v598
      %v734 = vpop.f32.mrf.mxu0
      %v735 = vadd.f32 %v362, %v734
      %v736 = vpop.f32.mrf.mxu0
      %v737 = vadd.f32 %v362, %v736
      %738 = vmatmul.bf16.gmra.mxu0 %v601
      %v739 = vpop.f32.mrf.mxu0
      %v740 = vadd.f32 %v362, %v739
      %v741 = vpop.f32.mrf.mxu0
      %v742 = vadd.f32 %v362, %v741
      %743 = vmatmul.bf16.gmra.mxu0 %v604
      %v744 = vpop.f32.mrf.mxu0
      %v745 = vadd.f32 %v362, %v744
      %v746 = vpop.f32.mrf.mxu0
      %v747 = vadd.f32 %v362, %v746
      %748 = vmatmul.bf16.gmra.mxu0 %v607
      %v749 = vpop.f32.mrf.mxu0
      %v750 = vadd.f32 %v362, %v749
      %v751 = vpop.f32.mrf.mxu0
      %v752 = vadd.f32 %v362, %v751
      %753 = vmatmul.bf16.gmra.mxu0 %v610
      %v754 = vpop.f32.mrf.mxu0
      %v755 = vadd.f32 %v362, %v754
      %v756 = vpop.f32.mrf.mxu0
      %v757 = vadd.f32 %v362, %v756
      %758 = vmatmul.bf16.gmra.mxu0 %v613
      %v759 = vpop.f32.mrf.mxu0
      %v760 = vadd.f32 %v362, %v759
      %v761 = vpop.f32.mrf.mxu0
      %v762 = vadd.f32 %v362, %v761
      %763 = vmatmul.bf16.gmra.mxu0 %v616
      %v764 = vpop.f32.mrf.mxu0
      %v765 = vadd.f32 %v362, %v764
      %v766 = vpop.f32.mrf.mxu0
      %v767 = vadd.f32 %v362, %v766
      %768 = vmatmul.bf16.gmra.mxu0 %v619
      %v769 = vpop.f32.mrf.mxu0
      %v770 = vadd.f32 %v362, %v769
      %v771 = vpop.f32.mrf.mxu0
      %v772 = vadd.f32 %v362, %v771
      %773 = vmatmul.bf16.gmra.mxu0 %v622
      %v774 = vpop.f32.mrf.mxu0
      %v775 = vadd.f32 %v362, %v774
      %v776 = vpop.f32.mrf.mxu0
      %v777 = vadd.f32 %v362, %v776
      %778 = vmatmul.bf16.gmra.mxu0 %v625
      %v779 = vpop.f32.mrf.mxu0
      %v780 = vadd.f32 %v362, %v779
      %v781 = vpop.f32.mrf.mxu0
      %v782 = vadd.f32 %v362, %v781
      %783 = vmatmul.bf16.gmra.mxu0 %v628
      %v784 = vpop.f32.mrf.mxu0
      %v785 = vadd.f32 %v362, %v784
      %v786 = vpop.f32.mrf.mxu0
      %v787 = vadd.f32 %v362, %v786
      %788 = vmatmul.bf16.gmra.mxu0 %v631
      %v789 = vpop.f32.mrf.mxu0
      %v790 = vadd.f32 %v362, %v789
      %v791 = vpop.f32.mrf.mxu0
      %v792 = vadd.f32 %v362, %v791
      %793 = vmatmul.bf16.gmra.mxu0 %v634
      %v794 = vpop.f32.mrf.mxu0
      %v795 = vadd.f32 %v362, %v794
      %v796 = vpop.f32.mrf.mxu0
      %v797 = vadd.f32 %v362, %v796
      %798 = vmatmul.bf16.gmra.mxu0 %v637
      %v799 = vpop.f32.mrf.mxu0
      %v800 = vadd.f32 %v362, %v799
      %v801 = vpop.f32.mrf.mxu0
      %v802 = vadd.f32 %v362, %v801
      %803 = vmatmul.bf16.gmra.mxu0 %v640
      %v804 = vpop.f32.mrf.mxu0
      %v805 = vadd.f32 %v362, %v804
      %v806 = vpop.f32.mrf.mxu0
      %v807 = vadd.f32 %v362, %v806
      %808 = vmatmul.bf16.gmra.mxu0 %v643
      %v809 = vpop.f32.mrf.mxu0
      %v810 = vadd.f32 %v362, %v809
      %v811 = vpop.f32.mrf.mxu0
      %v812 = vadd.f32 %v362, %v811
      %813 = vdwg.mxu0
      %v814 = vmax.f32 %v655, 0.0
      %v815 = vmax.f32 %v657, 0.0
      %v816 = vmax.f32 %v660, 0.0
      %v817 = vmax.f32 %v662, 0.0
      %v818 = vmax.f32 %v665, 0.0
      %v819 = vmax.f32 %v667, 0.0
      %v820 = vmax.f32 %v670, 0.0
      %v821 = vmax.f32 %v672, 0.0
      %v822 = vmax.f32 %v675, 0.0
      %v823 = vmax.f32 %v677, 0.0
      %v824 = vmax.f32 %v680, 0.0
      %v825 = vmax.f32 %v682, 0.0
      %v826 = vmax.f32 %v685, 0.0
      %v827 = vmax.f32 %v687, 0.0
      %v828 = vmax.f32 %v690, 0.0
      %v829 = vmax.f32 %v692, 0.0
      %v830 = vmax.f32 %v695, 0.0
      %v831 = vmax.f32 %v697, 0.0
      %v832 = vmax.f32 %v700, 0.0
      %v833 = vmax.f32 %v702, 0.0
      %v834 = vmax.f32 %v705, 0.0
      %v835 = vmax.f32 %v707, 0.0
      %v836 = vmax.f32 %v710, 0.0
      %v837 = vmax.f32 %v712, 0.0
      %v838 = vmax.f32 %v715, 0.0
      %v839 = vmax.f32 %v717, 0.0
      %v840 = vmax.f32 %v720, 0.0
      %v841 = vmax.f32 %v722, 0.0
      %v842 = vmax.f32 %v725, 0.0
      %v843 = vmax.f32 %v727, 0.0
      %v844 = vmax.f32 %v730, 0.0
      %v845 = vmax.f32 %v732, 0.0
      %v846 = vmax.f32 %v735, 0.0
      %v847 = vmax.f32 %v737, 0.0
      %v848 = vmax.f32 %v740, 0.0
      %v849 = vmax.f32 %v742, 0.0
      %v850 = vmax.f32 %v745, 0.0
      %v851 = vmax.f32 %v747, 0.0
      %v852 = vmax.f32 %v750, 0.0
      %v853 = vmax.f32 %v752, 0.0
      %v854 = vmax.f32 %v755, 0.0
      %v855 = vmax.f32 %v757, 0.0
      %v856 = vmax.f32 %v760, 0.0
      %v857 = vmax.f32 %v762, 0.0
      %v858 = vmax.f32 %v765, 0.0
      %v859 = vmax.f32 %v767, 0.0
      %v860 = vmax.f32 %v770, 0.0
      %v861 = vmax.f32 %v772, 0.0
      %v862 = vmax.f32 %v775, 0.0
      %v863 = vmax.f32 %v777, 0.0
      %v864 = vmax.f32 %v780, 0.0
      %v865 = vmax.f32 %v782, 0.0
      %v866 = vmax.f32 %v785, 0.0
      %v867 = vmax.f32 %v787, 0.0
      %v868 = vmax.f32 %v790, 0.0
      %v869 = vmax.f32 %v792, 0.0
      %v870 = vmax.f32 %v795, 0.0
      %v871 = vmax.f32 %v797, 0.0
      %v872 = vmax.f32 %v800, 0.0
      %v873 = vmax.f32 %v802, 0.0
      %v874 = vmax.f32 %v805, 0.0
      %v875 = vmax.f32 %v807, 0.0
      %v876 = vmax.f32 %v810, 0.0
      %v877 = vmax.f32 %v812, 0.0
      %vm878 = vcmask 519168
      %879 = vst.msk [vmem:[#allocation2] sm:$0xf] %vm878, 0
      %880 = vst.msk [vmem:[#allocation2 + $0x4] sm:$0xf] %vm878, 0
      %881 = vst.msk [vmem:[#allocation2 + $0x8] sm:$0xf] %vm878, 0
      %882 = vst.msk [vmem:[#allocation2 + $0xd8] sm:$0xf] %vm878, 0
      %883 = vst.msk [vmem:[#allocation2 + $0xdc] sm:$0xf] %vm878, 0
      %884 = vst.msk [vmem:[#allocation2 + $0xe0] sm:$0xf] %vm878, 0
      %s885 = scalar_lea.vmem [#allocation2], 204
      %886 = vst.msk [vmem:[%s885] sm:$0xf] %vm878, 0
      %887 = vst.msk [vmem:[%s885 + $0x4] sm:$0xf] %vm878, 0
      %888 = vst.msk [vmem:[%s885 + $0x8] sm:$0xf] %vm878, 0
      %889 = vst.msk [vmem:[%s885 + $0xd8] sm:$0xf] %vm878, 0
      %890 = vst.msk [vmem:[%s885 + $0xdc] sm:$0xf] %vm878, 0
      %891 = vst.msk [vmem:[%s885 + $0xe0] sm:$0xf] %vm878, 0
      %s892 = scalar_lea.vmem [#allocation2], 12
      %vm893 = vcmask 516096
      %vm894 = vsmask.f32 256
      %vm895 = vmand %vm893, %vm894
      %v896 = vld [vmem:[%s892] sm:$0x1]
      %v897 = vsel %vm895, 0, %v896
      %898 = vst [vmem:[%s892] sm:$0x1] %v897
      %v899 = vld [vmem:[%s892 + $0xc] sm:$0x1]
      %v900 = vsel %vm895, 0, %v899
      %901 = vst [vmem:[%s892 + $0xc] sm:$0x1] %v900
      %v902 = vld [vmem:[%s892 + $0x18] sm:$0x1]
      %v903 = vsel %vm895, 0, %v902
      %904 = vst [vmem:[%s892 + $0x18] sm:$0x1] %v903
      %v905 = vld [vmem:[%s892 + $0x24] sm:$0x1]
      %v906 = vsel %vm895, 0, %v905
      %907 = vst [vmem:[%s892 + $0x24] sm:$0x1] %v906
      %v908 = vld [vmem:[%s892 + $0x30] sm:$0x1]
      %v909 = vsel %vm895, 0, %v908
      %910 = vst [vmem:[%s892 + $0x30] sm:$0x1] %v909
      %v911 = vld [vmem:[%s892 + $0x3c] sm:$0x1]
      %v912 = vsel %vm895, 0, %v911
      %913 = vst [vmem:[%s892 + $0x3c] sm:$0x1] %v912
      %v914 = vld [vmem:[%s892 + $0x48] sm:$0x1]
      %v915 = vsel %vm895, 0, %v914
      %916 = vst [vmem:[%s892 + $0x48] sm:$0x1] %v915
      %v917 = vld [vmem:[%s892 + $0x54] sm:$0x1]
      %v918 = vsel %vm895, 0, %v917
      %919 = vst [vmem:[%s892 + $0x54] sm:$0x1] %v918
      %v920 = vld [vmem:[%s892 + $0x60] sm:$0x1]
      %v921 = vsel %vm895, 0, %v920
      %922 = vst [vmem:[%s892 + $0x60] sm:$0x1] %v921
      %v923 = vld [vmem:[%s892 + $0x6c] sm:$0x1]
      %v924 = vsel %vm895, 0, %v923
      %925 = vst [vmem:[%s892 + $0x6c] sm:$0x1] %v924
      %v926 = vld [vmem:[%s892 + $0x78] sm:$0x1]
      %v927 = vsel %vm895, 0, %v926
      %928 = vst [vmem:[%s892 + $0x78] sm:$0x1] %v927
      %v929 = vld [vmem:[%s892 + $0x84] sm:$0x1]
      %v930 = vsel %vm895, 0, %v929
      %931 = vst [vmem:[%s892 + $0x84] sm:$0x1] %v930
      %v932 = vld [vmem:[%s892 + $0x90] sm:$0x1]
      %v933 = vsel %vm895, 0, %v932
      %934 = vst [vmem:[%s892 + $0x90] sm:$0x1] %v933
      %v935 = vld [vmem:[%s892 + $0x9c] sm:$0x1]
      %v936 = vsel %vm895, 0, %v935
      %937 = vst [vmem:[%s892 + $0x9c] sm:$0x1] %v936
      %v938 = vld [vmem:[%s892 + $0xa8] sm:$0x1]
      %v939 = vsel %vm895, 0, %v938
      %940 = vst [vmem:[%s892 + $0xa8] sm:$0x1] %v939
      %v941 = vld [vmem:[%s892 + $0xb4] sm:$0x1]
      %v942 = vsel %vm895, 0, %v941
      %943 = vst [vmem:[%s892 + $0xb4] sm:$0x1] %v942
      %v944 = vld [vmem:[%s892 + $0xd8] sm:$0x1]
      %v945 = vsel %vm895, 0, %v944
      %946 = vst [vmem:[%s892 + $0xd8] sm:$0x1] %v945
      %v947 = vld [vmem:[%s892 + $0xe4] sm:$0x1]
      %v948 = vsel %vm895, 0, %v947
      %949 = vst [vmem:[%s892 + $0xe4] sm:$0x1] %v948
      %v950 = vld [vmem:[%s892 + $0xf0] sm:$0x1]
      %v951 = vsel %vm895, 0, %v950
      %952 = vst [vmem:[%s892 + $0xf0] sm:$0x1] %v951
      %v953 = vld [vmem:[%s892 + $0xfc] sm:$0x1]
      %v954 = vsel %vm895, 0, %v953
      %955 = vst [vmem:[%s892 + $0xfc] sm:$0x1] %v954
      %v956 = vld [vmem:[%s892 + $0x108] sm:$0x1]
      %v957 = vsel %vm895, 0, %v956
      %958 = vst [vmem:[%s892 + $0x108] sm:$0x1] %v957
      %v959 = vld [vmem:[%s892 + $0x114] sm:$0x1]
      %v960 = vsel %vm895, 0, %v959
      %961 = vst [vmem:[%s892 + $0x114] sm:$0x1] %v960
      %v962 = vld [vmem:[%s892 + $0x120] sm:$0x1]
      %v963 = vsel %vm895, 0, %v962
      %964 = vst [vmem:[%s892 + $0x120] sm:$0x1] %v963
      %v965 = vld [vmem:[%s892 + $0x12c] sm:$0x1]
      %v966 = vsel %vm895, 0, %v965
      %967 = vst [vmem:[%s892 + $0x12c] sm:$0x1] %v966
      %v968 = vld [vmem:[%s892 + $0x138] sm:$0x1]
      %v969 = vsel %vm895, 0, %v968
      %970 = vst [vmem:[%s892 + $0x138] sm:$0x1] %v969
      %v971 = vld [vmem:[%s892 + $0x144] sm:$0x1]
      %v972 = vsel %vm895, 0, %v971
      %973 = vst [vmem:[%s892 + $0x144] sm:$0x1] %v972
      %v974 = vld [vmem:[%s892 + $0x150] sm:$0x1]
      %v975 = vsel %vm895, 0, %v974
      %976 = vst [vmem:[%s892 + $0x150] sm:$0x1] %v975
      %v977 = vld [vmem:[%s892 + $0x15c] sm:$0x1]
      %v978 = vsel %vm895, 0, %v977
      %979 = vst [vmem:[%s892 + $0x15c] sm:$0x1] %v978
      %v980 = vld [vmem:[%s892 + $0x168] sm:$0x1]
      %v981 = vsel %vm895, 0, %v980
      %982 = vst [vmem:[%s892 + $0x168] sm:$0x1] %v981
      %v983 = vld [vmem:[%s892 + $0x174] sm:$0x1]
      %v984 = vsel %vm895, 0, %v983
      %985 = vst [vmem:[%s892 + $0x174] sm:$0x1] %v984
      %v986 = vld [vmem:[%s892 + $0x180] sm:$0x1]
      %v987 = vsel %vm895, 0, %v986
      %988 = vst [vmem:[%s892 + $0x180] sm:$0x1] %v987
      %v989 = vld [vmem:[%s892 + $0x18c] sm:$0x1]
      %v990 = vsel %vm895, 0, %v989
      %991 = vst [vmem:[%s892 + $0x18c] sm:$0x1] %v990
      %vm992 = vcmask 519168
      %vm993 = vsmask.f32 7938
      %vm994 = vmand %vm992, %vm993
      %v995 = vld [vmem:[%s892 + $0x8] sm:$0xf]
      %v996 = vsel %vm994, 0, %v995
      %997 = vst [vmem:[%s892 + $0x8] sm:$0xf] %v996
      %v998 = vld [vmem:[%s892 + $0x14] sm:$0xf]
      %v999 = vsel %vm994, 0, %v998
      %1000 = vst [vmem:[%s892 + $0x14] sm:$0xf] %v999
      %v1001 = vld [vmem:[%s892 + $0x20] sm:$0xf]
      %v1002 = vsel %vm994, 0, %v1001
      %1003 = vst [vmem:[%s892 + $0x20] sm:$0xf] %v1002
      %v1004 = vld [vmem:[%s892 + $0x2c] sm:$0xf]
      %v1005 = vsel %vm994, 0, %v1004
      %1006 = vst [vmem:[%s892 + $0x2c] sm:$0xf] %v1005
      %v1007 = vld [vmem:[%s892 + $0x38] sm:$0xf]
      %v1008 = vsel %vm994, 0, %v1007
      %1009 = vst [vmem:[%s892 + $0x38] sm:$0xf] %v1008
      %v1010 = vld [vmem:[%s892 + $0x44] sm:$0xf]
      %v1011 = vsel %vm994, 0, %v1010
      %1012 = vst [vmem:[%s892 + $0x44] sm:$0xf] %v1011
      %v1013 = vld [vmem:[%s892 + $0x50] sm:$0xf]
      %v1014 = vsel %vm994, 0, %v1013
      %1015 = vst [vmem:[%s892 + $0x50] sm:$0xf] %v1014
      %v1016 = vld [vmem:[%s892 + $0x5c] sm:$0xf]
      %v1017 = vsel %vm994, 0, %v1016
      %1018 = vst [vmem:[%s892 + $0x5c] sm:$0xf] %v1017
      %v1019 = vld [vmem:[%s892 + $0x68] sm:$0xf]
      %v1020 = vsel %vm994, 0, %v1019
      %1021 = vst [vmem:[%s892 + $0x68] sm:$0xf] %v1020
      %v1022 = vld [vmem:[%s892 + $0x74] sm:$0xf]
      %v1023 = vsel %vm994, 0, %v1022
      %1024 = vst [vmem:[%s892 + $0x74] sm:$0xf] %v1023
      %v1025 = vld [vmem:[%s892 + $0x80] sm:$0xf]
      %v1026 = vsel %vm994, 0, %v1025
      %1027 = vst [vmem:[%s892 + $0x80] sm:$0xf] %v1026
      %v1028 = vld [vmem:[%s892 + $0x8c] sm:$0xf]
      %v1029 = vsel %vm994, 0, %v1028
      %1030 = vst [vmem:[%s892 + $0x8c] sm:$0xf] %v1029
      %v1031 = vld [vmem:[%s892 + $0x98] sm:$0xf]
      %v1032 = vsel %vm994, 0, %v1031
      %1033 = vst [vmem:[%s892 + $0x98] sm:$0xf] %v1032
      %v1034 = vld [vmem:[%s892 + $0xa4] sm:$0xf]
      %v1035 = vsel %vm994, 0, %v1034
      %1036 = vst [vmem:[%s892 + $0xa4] sm:$0xf] %v1035
      %v1037 = vld [vmem:[%s892 + $0xb0] sm:$0xf]
      %v1038 = vsel %vm994, 0, %v1037
      %1039 = vst [vmem:[%s892 + $0xb0] sm:$0xf] %v1038
      %v1040 = vld [vmem:[%s892 + $0xbc] sm:$0xf]
      %v1041 = vsel %vm994, 0, %v1040
      %1042 = vst [vmem:[%s892 + $0xbc] sm:$0xf] %v1041
      %v1043 = vld [vmem:[%s892 + $0xe0] sm:$0xf]
      %v1044 = vsel %vm994, 0, %v1043
      %1045 = vst [vmem:[%s892 + $0xe0] sm:$0xf] %v1044
      %v1046 = vld [vmem:[%s892 + $0xec] sm:$0xf]
      %v1047 = vsel %vm994, 0, %v1046
      %1048 = vst [vmem:[%s892 + $0xec] sm:$0xf] %v1047
      %v1049 = vld [vmem:[%s892 + $0xf8] sm:$0xf]
      %v1050 = vsel %vm994, 0, %v1049
      %1051 = vst [vmem:[%s892 + $0xf8] sm:$0xf] %v1050
      %v1052 = vld [vmem:[%s892 + $0x104] sm:$0xf]
      %v1053 = vsel %vm994, 0, %v1052
      %1054 = vst [vmem:[%s892 + $0x104] sm:$0xf] %v1053
      %v1055 = vld [vmem:[%s892 + $0x110] sm:$0xf]
      %v1056 = vsel %vm994, 0, %v1055
      %1057 = vst [vmem:[%s892 + $0x110] sm:$0xf] %v1056
      %v1058 = vld [vmem:[%s892 + $0x11c] sm:$0xf]
      %v1059 = vsel %vm994, 0, %v1058
      %1060 = vst [vmem:[%s892 + $0x11c] sm:$0xf] %v1059
      %v1061 = vld [vmem:[%s892 + $0x128] sm:$0xf]
      %v1062 = vsel %vm994, 0, %v1061
      %1063 = vst [vmem:[%s892 + $0x128] sm:$0xf] %v1062
      %v1064 = vld [vmem:[%s892 + $0x134] sm:$0xf]
      %v1065 = vsel %vm994, 0, %v1064
      %1066 = vst [vmem:[%s892 + $0x134] sm:$0xf] %v1065
      %v1067 = vld [vmem:[%s892 + $0x140] sm:$0xf]
      %v1068 = vsel %vm994, 0, %v1067
      %1069 = vst [vmem:[%s892 + $0x140] sm:$0xf] %v1068
      %v1070 = vld [vmem:[%s892 + $0x14c] sm:$0xf]
      %v1071 = vsel %vm994, 0, %v1070
      %1072 = vst [vmem:[%s892 + $0x14c] sm:$0xf] %v1071
      %v1073 = vld [vmem:[%s892 + $0x158] sm:$0xf]
      %v1074 = vsel %vm994, 0, %v1073
      %1075 = vst [vmem:[%s892 + $0x158] sm:$0xf] %v1074
      %v1076 = vld [vmem:[%s892 + $0x164] sm:$0xf]
      %v1077 = vsel %vm994, 0, %v1076
      %1078 = vst [vmem:[%s892 + $0x164] sm:$0xf] %v1077
      %v1079 = vld [vmem:[%s892 + $0x170] sm:$0xf]
      %v1080 = vsel %vm994, 0, %v1079
      %1081 = vst [vmem:[%s892 + $0x170] sm:$0xf] %v1080
      %v1082 = vld [vmem:[%s892 + $0x17c] sm:$0xf]
      %v1083 = vsel %vm994, 0, %v1082
      %1084 = vst [vmem:[%s892 + $0x17c] sm:$0xf] %v1083
      %v1085 = vld [vmem:[%s892 + $0x188] sm:$0xf]
      %v1086 = vsel %vm994, 0, %v1085
      %1087 = vst [vmem:[%s892 + $0x188] sm:$0xf] %v1086
      %v1088 = vld [vmem:[%s892 + $0x194] sm:$0xf]
      %v1089 = vsel %vm994, 0, %v1088
      %1090 = vst [vmem:[%s892 + $0x194] sm:$0xf] %v1089
      %v1091 = vpack.c.bf16 %v814, %v814
      %v1092 = vpack.c.bf16 %v815, %v815
      %v1093 = vpack.c.bf16 %v816, %v816
      %v1094 = vpack.c.bf16 %v817, %v817
      %v1095 = vpack.c.bf16 %v818, %v818
      %v1096 = vpack.c.bf16 %v819, %v819
      %v1097 = vpack.c.bf16 %v820, %v820
      %v1098 = vpack.c.bf16 %v821, %v821
      %v1099 = vpack.c.bf16 %v822, %v822
      %v1100 = vpack.c.bf16 %v823, %v823
      %v1101 = vpack.c.bf16 %v824, %v824
      %v1102 = vpack.c.bf16 %v825, %v825
      %v1103 = vpack.c.bf16 %v826, %v826
      %v1104 = vpack.c.bf16 %v827, %v827
      %v1105 = vpack.c.bf16 %v828, %v828
      %v1106 = vpack.c.bf16 %v829, %v829
      %v1107 = vpack.c.bf16 %v830, %v830
      %v1108 = vpack.c.bf16 %v831, %v831
      %v1109 = vpack.c.bf16 %v832, %v832
      %v1110 = vpack.c.bf16 %v833, %v833
      %v1111 = vpack.c.bf16 %v834, %v834
      %v1112 = vpack.c.bf16 %v835, %v835
      %v1113 = vpack.c.bf16 %v836, %v836
      %v1114 = vpack.c.bf16 %v837, %v837
      %v1115 = vpack.c.bf16 %v838, %v838
      %v1116 = vpack.c.bf16 %v839, %v839
      %v1117 = vpack.c.bf16 %v840, %v840
      %v1118 = vpack.c.bf16 %v841, %v841
      %v1119 = vpack.c.bf16 %v842, %v842
      %v1120 = vpack.c.bf16 %v843, %v843
      %v1121 = vpack.c.bf16 %v844, %v844
      %v1122 = vpack.c.bf16 %v845, %v845
      %v1123 = vpack.c.bf16 %v846, %v846
      %v1124 = vpack.c.bf16 %v847, %v847
      %v1125 = vpack.c.bf16 %v848, %v848
      %v1126 = vpack.c.bf16 %v849, %v849
      %v1127 = vpack.c.bf16 %v850, %v850
      %v1128 = vpack.c.bf16 %v851, %v851
      %v1129 = vpack.c.bf16 %v852, %v852
      %v1130 = vpack.c.bf16 %v853, %v853
      %v1131 = vpack.c.bf16 %v854, %v854
      %v1132 = vpack.c.bf16 %v855, %v855
      %v1133 = vpack.c.bf16 %v856, %v856
      %v1134 = vpack.c.bf16 %v857, %v857
      %v1135 = vpack.c.bf16 %v858, %v858
      %v1136 = vpack.c.bf16 %v859, %v859
      %v1137 = vpack.c.bf16 %v860, %v860
      %v1138 = vpack.c.bf16 %v861, %v861
      %v1139 = vpack.c.bf16 %v862, %v862
      %v1140 = vpack.c.bf16 %v863, %v863
      %v1141 = vpack.c.bf16 %v864, %v864
      %v1142 = vpack.c.bf16 %v865, %v865
      %v1143 = vpack.c.bf16 %v866, %v866
      %v1144 = vpack.c.bf16 %v867, %v867
      %v1145 = vpack.c.bf16 %v868, %v868
      %v1146 = vpack.c.bf16 %v869, %v869
      %v1147 = vpack.c.bf16 %v870, %v870
      %v1148 = vpack.c.bf16 %v871, %v871
      %v1149 = vpack.c.bf16 %v872, %v872
      %v1150 = vpack.c.bf16 %v873, %v873
      %v1151 = vpack.c.bf16 %v874, %v874
      %v1152 = vpack.c.bf16 %v875, %v875
      %v1153 = vpack.c.bf16 %v876, %v876
      %v1154 = vpack.c.bf16 %v877, %v877
      %vm1155 = vsmask.f32 4368
      %vm1156 = vmor %vm894, %vm1155
      %v1158 = vshrl.u32 %v1091, 16
      %v1160 = vrot.slane %v1158, 7
      %v1161 = vshll.u32 %v1091, 16
      %v1163 = vor.u32 %v1160, %v1161
      %v1164 = vrot.slane %v1160, 4
      %v1166 = vshrl.u32 %v1092, 16
      %v1168 = vrot.slane %v1166, 7
      %v1169 = vshll.u32 %v1092, 16
      %v1171 = vor.u32 %v1168, %v1169
      %v1172 = vsel %vm1156, %v1164, %v1171
      %v1173 = vrot.slane %v1168, 4
      %v1175 = vshrl.u32 %v1093, 16
      %v1177 = vrot.slane %v1175, 7
      %v1178 = vshll.u32 %v1093, 16
      %v1180 = vor.u32 %v1177, %v1178
      %v1181 = vrot.slane %v1177, 4
      %v1183 = vshrl.u32 %v1094, 16
      %v1185 = vrot.slane %v1183, 7
      %v1186 = vshll.u32 %v1094, 16
      %v1188 = vor.u32 %v1185, %v1186
      %v1189 = vsel %vm1156, %v1181, %v1188
      %v1190 = vrot.slane %v1185, 4
      %v1192 = vshrl.u32 %v1095, 16
      %v1194 = vrot.slane %v1192, 7
      %v1195 = vshll.u32 %v1095, 16
      %v1197 = vor.u32 %v1194, %v1195
      %v1198 = vrot.slane %v1194, 4
      %v1200 = vshrl.u32 %v1096, 16
      %v1202 = vrot.slane %v1200, 7
      %v1203 = vshll.u32 %v1096, 16
      %v1205 = vor.u32 %v1202, %v1203
      %v1206 = vsel %vm1156, %v1198, %v1205
      %v1207 = vrot.slane %v1202, 4
      %v1209 = vshrl.u32 %v1097, 16
      %v1211 = vrot.slane %v1209, 7
      %v1212 = vshll.u32 %v1097, 16
      %v1214 = vor.u32 %v1211, %v1212
      %v1215 = vrot.slane %v1211, 4
      %v1217 = vshrl.u32 %v1098, 16
      %v1219 = vrot.slane %v1217, 7
      %v1220 = vshll.u32 %v1098, 16
      %v1222 = vor.u32 %v1219, %v1220
      %v1223 = vsel %vm1156, %v1215, %v1222
      %v1224 = vrot.slane %v1219, 4
      %v1226 = vshrl.u32 %v1099, 16
      %v1228 = vrot.slane %v1226, 7
      %v1229 = vshll.u32 %v1099, 16
      %v1231 = vor.u32 %v1228, %v1229
      %v1232 = vrot.slane %v1228, 4
      %v1234 = vshrl.u32 %v1100, 16
      %v1236 = vrot.slane %v1234, 7
      %v1237 = vshll.u32 %v1100, 16
      %v1239 = vor.u32 %v1236, %v1237
      %v1240 = vsel %vm1156, %v1232, %v1239
      %v1241 = vrot.slane %v1236, 4
      %v1243 = vshrl.u32 %v1101, 16
      %v1245 = vrot.slane %v1243, 7
      %v1246 = vshll.u32 %v1101, 16
      %v1248 = vor.u32 %v1245, %v1246
      %v1249 = vrot.slane %v1245, 4
      %v1251 = vshrl.u32 %v1102, 16
      %v1253 = vrot.slane %v1251, 7
      %v1254 = vshll.u32 %v1102, 16
      %v1256 = vor.u32 %v1253, %v1254
      %v1257 = vsel %vm1156, %v1249, %v1256
      %v1258 = vrot.slane %v1253, 4
      %v1260 = vshrl.u32 %v1103, 16
      %v1262 = vrot.slane %v1260, 7
      %v1263 = vshll.u32 %v1103, 16
      %v1265 = vor.u32 %v1262, %v1263
      %v1266 = vrot.slane %v1262, 4
      %v1268 = vshrl.u32 %v1104, 16
      %v1270 = vrot.slane %v1268, 7
      %v1271 = vshll.u32 %v1104, 16
      %v1273 = vor.u32 %v1270, %v1271
      %v1274 = vsel %vm1156, %v1266, %v1273
      %v1275 = vrot.slane %v1270, 4
      %v1277 = vshrl.u32 %v1105, 16
      %v1279 = vrot.slane %v1277, 7
      %v1280 = vshll.u32 %v1105, 16
      %v1282 = vor.u32 %v1279, %v1280
      %v1283 = vrot.slane %v1279, 4
      %v1285 = vshrl.u32 %v1106, 16
      %v1287 = vrot.slane %v1285, 7
      %v1288 = vshll.u32 %v1106, 16
      %v1290 = vor.u32 %v1287, %v1288
      %v1291 = vsel %vm1156, %v1283, %v1290
      %v1292 = vrot.slane %v1287, 4
      %v1294 = vshrl.u32 %v1107, 16
      %v1296 = vrot.slane %v1294, 7
      %v1297 = vshll.u32 %v1107, 16
      %v1299 = vor.u32 %v1296, %v1297
      %v1300 = vrot.slane %v1296, 4
      %v1302 = vshrl.u32 %v1108, 16
      %v1304 = vrot.slane %v1302, 7
      %v1305 = vshll.u32 %v1108, 16
      %v1307 = vor.u32 %v1304, %v1305
      %v1308 = vsel %vm1156, %v1300, %v1307
      %v1309 = vrot.slane %v1304, 4
      %v1311 = vshrl.u32 %v1109, 16
      %v1313 = vrot.slane %v1311, 7
      %v1314 = vshll.u32 %v1109, 16
      %v1316 = vor.u32 %v1313, %v1314
      %v1317 = vrot.slane %v1313, 4
      %v1319 = vshrl.u32 %v1110, 16
      %v1321 = vrot.slane %v1319, 7
      %v1322 = vshll.u32 %v1110, 16
      %v1324 = vor.u32 %v1321, %v1322
      %v1325 = vsel %vm1156, %v1317, %v1324
      %v1326 = vrot.slane %v1321, 4
      %v1328 = vshrl.u32 %v1111, 16
      %v1330 = vrot.slane %v1328, 7
      %v1331 = vshll.u32 %v1111, 16
      %v1333 = vor.u32 %v1330, %v1331
      %v1334 = vrot.slane %v1330, 4
      %v1336 = vshrl.u32 %v1112, 16
      %v1338 = vrot.slane %v1336, 7
      %v1339 = vshll.u32 %v1112, 16
      %v1341 = vor.u32 %v1338, %v1339
      %v1342 = vsel %vm1156, %v1334, %v1341
      %v1343 = vrot.slane %v1338, 4
      %v1345 = vshrl.u32 %v1113, 16
      %v1347 = vrot.slane %v1345, 7
      %v1348 = vshll.u32 %v1113, 16
      %v1350 = vor.u32 %v1347, %v1348
      %v1351 = vrot.slane %v1347, 4
      %v1353 = vshrl.u32 %v1114, 16
      %v1355 = vrot.slane %v1353, 7
      %v1356 = vshll.u32 %v1114, 16
      %v1358 = vor.u32 %v1355, %v1356
      %v1359 = vsel %vm1156, %v1351, %v1358
      %v1360 = vrot.slane %v1355, 4
      %v1362 = vshrl.u32 %v1115, 16
      %v1364 = vrot.slane %v1362, 7
      %v1365 = vshll.u32 %v1115, 16
      %v1367 = vor.u32 %v1364, %v1365
      %v1368 = vrot.slane %v1364, 4
      %v1370 = vshrl.u32 %v1116, 16
      %v1372 = vrot.slane %v1370, 7
      %v1373 = vshll.u32 %v1116, 16
      %v1375 = vor.u32 %v1372, %v1373
      %v1376 = vsel %vm1156, %v1368, %v1375
      %v1377 = vrot.slane %v1372, 4
      %v1379 = vshrl.u32 %v1117, 16
      %v1381 = vrot.slane %v1379, 7
      %v1382 = vshll.u32 %v1117, 16
      %v1384 = vor.u32 %v1381, %v1382
      %v1385 = vrot.slane %v1381, 4
      %v1387 = vshrl.u32 %v1118, 16
      %v1389 = vrot.slane %v1387, 7
      %v1390 = vshll.u32 %v1118, 16
      %v1392 = vor.u32 %v1389, %v1390
      %v1393 = vsel %vm1156, %v1385, %v1392
      %v1394 = vrot.slane %v1389, 4
      %v1396 = vshrl.u32 %v1119, 16
      %v1398 = vrot.slane %v1396, 7
      %v1399 = vshll.u32 %v1119, 16
      %v1401 = vor.u32 %v1398, %v1399
      %v1402 = vrot.slane %v1398, 4
      %v1404 = vshrl.u32 %v1120, 16
      %v1406 = vrot.slane %v1404, 7
      %v1407 = vshll.u32 %v1120, 16
      %v1409 = vor.u32 %v1406, %v1407
      %v1410 = vsel %vm1156, %v1402, %v1409
      %v1411 = vrot.slane %v1406, 4
      %v1413 = vshrl.u32 %v1121, 16
      %v1415 = vrot.slane %v1413, 7
      %v1416 = vshll.u32 %v1121, 16
      %v1418 = vor.u32 %v1415, %v1416
      %v1419 = vrot.slane %v1415, 4
      %v1421 = vshrl.u32 %v1122, 16
      %v1423 = vrot.slane %v1421, 7
      %v1424 = vshll.u32 %v1122, 16
      %v1426 = vor.u32 %v1423, %v1424
      %v1427 = vsel %vm1156, %v1419, %v1426
      %v1428 = vrot.slane %v1423, 4
      %v1430 = vshrl.u32 %v1123, 16
      %v1432 = vrot.slane %v1430, 7
      %v1433 = vshll.u32 %v1123, 16
      %v1435 = vor.u32 %v1432, %v1433
      %v1436 = vrot.slane %v1432, 4
      %v1438 = vshrl.u32 %v1124, 16
      %v1440 = vrot.slane %v1438, 7
      %v1441 = vshll.u32 %v1124, 16
      %v1443 = vor.u32 %v1440, %v1441
      %v1444 = vsel %vm1156, %v1436, %v1443
      %v1445 = vrot.slane %v1440, 4
      %v1447 = vshrl.u32 %v1125, 16
      %v1449 = vrot.slane %v1447, 7
      %v1450 = vshll.u32 %v1125, 16
      %v1452 = vor.u32 %v1449, %v1450
      %v1453 = vrot.slane %v1449, 4
      %v1455 = vshrl.u32 %v1126, 16
      %v1457 = vrot.slane %v1455, 7
      %v1458 = vshll.u32 %v1126, 16
      %v1460 = vor.u32 %v1457, %v1458
      %v1461 = vsel %vm1156, %v1453, %v1460
      %v1462 = vrot.slane %v1457, 4
      %v1464 = vshrl.u32 %v1127, 16
      %v1466 = vrot.slane %v1464, 7
      %v1467 = vshll.u32 %v1127, 16
      %v1469 = vor.u32 %v1466, %v1467
      %v1470 = vrot.slane %v1466, 4
      %v1472 = vshrl.u32 %v1128, 16
      %v1474 = vrot.slane %v1472, 7
      %v1475 = vshll.u32 %v1128, 16
      %v1477 = vor.u32 %v1474, %v1475
      %v1478 = vsel %vm1156, %v1470, %v1477
      %v1479 = vrot.slane %v1474, 4
      %v1481 = vshrl.u32 %v1129, 16
      %v1483 = vrot.slane %v1481, 7
      %v1484 = vshll.u32 %v1129, 16
      %v1486 = vor.u32 %v1483, %v1484
      %v1487 = vrot.slane %v1483, 4
      %v1489 = vshrl.u32 %v1130, 16
      %v1491 = vrot.slane %v1489, 7
      %v1492 = vshll.u32 %v1130, 16
      %v1494 = vor.u32 %v1491, %v1492
      %v1495 = vsel %vm1156, %v1487, %v1494
      %v1496 = vrot.slane %v1491, 4
      %v1498 = vshrl.u32 %v1131, 16
      %v1500 = vrot.slane %v1498, 7
      %v1501 = vshll.u32 %v1131, 16
      %v1503 = vor.u32 %v1500, %v1501
      %v1504 = vrot.slane %v1500, 4
      %v1506 = vshrl.u32 %v1132, 16
      %v1508 = vrot.slane %v1506, 7
      %v1509 = vshll.u32 %v1132, 16
      %v1511 = vor.u32 %v1508, %v1509
      %v1512 = vsel %vm1156, %v1504, %v1511
      %v1513 = vrot.slane %v1508, 4
      %v1515 = vshrl.u32 %v1133, 16
      %v1517 = vrot.slane %v1515, 7
      %v1518 = vshll.u32 %v1133, 16
      %v1520 = vor.u32 %v1517, %v1518
      %v1521 = vrot.slane %v1517, 4
      %v1523 = vshrl.u32 %v1134, 16
      %v1525 = vrot.slane %v1523, 7
      %v1526 = vshll.u32 %v1134, 16
      %v1528 = vor.u32 %v1525, %v1526
      %v1529 = vsel %vm1156, %v1521, %v1528
      %v1530 = vrot.slane %v1525, 4
      %v1532 = vshrl.u32 %v1135, 16
      %v1534 = vrot.slane %v1532, 7
      %v1535 = vshll.u32 %v1135, 16
      %v1537 = vor.u32 %v1534, %v1535
      %v1538 = vrot.slane %v1534, 4
      %v1540 = vshrl.u32 %v1136, 16
      %v1542 = vrot.slane %v1540, 7
      %v1543 = vshll.u32 %v1136, 16
      %v1545 = vor.u32 %v1542, %v1543
      %v1546 = vsel %vm1156, %v1538, %v1545
      %v1547 = vrot.slane %v1542, 4
      %v1549 = vshrl.u32 %v1137, 16
      %v1551 = vrot.slane %v1549, 7
      %v1552 = vshll.u32 %v1137, 16
      %v1554 = vor.u32 %v1551, %v1552
      %v1555 = vrot.slane %v1551, 4
      %v1557 = vshrl.u32 %v1138, 16
      %v1559 = vrot.slane %v1557, 7
      %v1560 = vshll.u32 %v1138, 16
      %v1562 = vor.u32 %v1559, %v1560
      %v1563 = vsel %vm1156, %v1555, %v1562
      %v1564 = vrot.slane %v1559, 4
      %v1566 = vshrl.u32 %v1139, 16
      %v1568 = vrot.slane %v1566, 7
      %v1569 = vshll.u32 %v1139, 16
      %v1571 = vor.u32 %v1568, %v1569
      %v1572 = vrot.slane %v1568, 4
      %v1574 = vshrl.u32 %v1140, 16
      %v1576 = vrot.slane %v1574, 7
      %v1577 = vshll.u32 %v1140, 16
      %v1579 = vor.u32 %v1576, %v1577
      %v1580 = vsel %vm1156, %v1572, %v1579
      %v1581 = vrot.slane %v1576, 4
      %v1583 = vshrl.u32 %v1141, 16
      %v1585 = vrot.slane %v1583, 7
      %v1586 = vshll.u32 %v1141, 16
      %v1588 = vor.u32 %v1585, %v1586
      %v1589 = vrot.slane %v1585, 4
      %v1591 = vshrl.u32 %v1142, 16
      %v1593 = vrot.slane %v1591, 7
      %v1594 = vshll.u32 %v1142, 16
      %v1596 = vor.u32 %v1593, %v1594
      %v1597 = vsel %vm1156, %v1589, %v1596
      %v1598 = vrot.slane %v1593, 4
      %v1600 = vshrl.u32 %v1143, 16
      %v1602 = vrot.slane %v1600, 7
      %v1603 = vshll.u32 %v1143, 16
      %v1605 = vor.u32 %v1602, %v1603
      %v1606 = vrot.slane %v1602, 4
      %v1608 = vshrl.u32 %v1144, 16
      %v1610 = vrot.slane %v1608, 7
      %v1611 = vshll.u32 %v1144, 16
      %v1613 = vor.u32 %v1610, %v1611
      %v1614 = vsel %vm1156, %v1606, %v1613
      %v1615 = vrot.slane %v1610, 4
      %v1617 = vshrl.u32 %v1145, 16
      %v1619 = vrot.slane %v1617, 7
      %v1620 = vshll.u32 %v1145, 16
      %v1622 = vor.u32 %v1619, %v1620
      %v1623 = vrot.slane %v1619, 4
      %v1625 = vshrl.u32 %v1146, 16
      %v1627 = vrot.slane %v1625, 7
      %v1628 = vshll.u32 %v1146, 16
      %v1630 = vor.u32 %v1627, %v1628
      %v1631 = vsel %vm1156, %v1623, %v1630
      %v1632 = vrot.slane %v1627, 4
      %v1634 = vshrl.u32 %v1147, 16
      %v1636 = vrot.slane %v1634, 7
      %v1637 = vshll.u32 %v1147, 16
      %v1639 = vor.u32 %v1636, %v1637
      %v1640 = vrot.slane %v1636, 4
      %v1642 = vshrl.u32 %v1148, 16
      %v1644 = vrot.slane %v1642, 7
      %v1645 = vshll.u32 %v1148, 16
      %v1647 = vor.u32 %v1644, %v1645
      %v1648 = vsel %vm1156, %v1640, %v1647
      %v1649 = vrot.slane %v1644, 4
      %v1651 = vshrl.u32 %v1149, 16
      %v1653 = vrot.slane %v1651, 7
      %v1654 = vshll.u32 %v1149, 16
      %v1656 = vor.u32 %v1653, %v1654
      %v1657 = vrot.slane %v1653, 4
      %v1659 = vshrl.u32 %v1150, 16
      %v1661 = vrot.slane %v1659, 7
      %v1662 = vshll.u32 %v1150, 16
      %v1664 = vor.u32 %v1661, %v1662
      %v1665 = vsel %vm1156, %v1657, %v1664
      %v1666 = vrot.slane %v1661, 4
      %v1668 = vshrl.u32 %v1151, 16
      %v1670 = vrot.slane %v1668, 7
      %v1671 = vshll.u32 %v1151, 16
      %v1673 = vor.u32 %v1670, %v1671
      %v1674 = vrot.slane %v1670, 4
      %v1676 = vshrl.u32 %v1152, 16
      %v1678 = vrot.slane %v1676, 7
      %v1679 = vshll.u32 %v1152, 16
      %v1681 = vor.u32 %v1678, %v1679
      %v1682 = vsel %vm1156, %v1674, %v1681
      %v1683 = vrot.slane %v1678, 4
      %v1685 = vshrl.u32 %v1153, 16
      %v1687 = vrot.slane %v1685, 7
      %v1688 = vshll.u32 %v1153, 16
      %v1690 = vor.u32 %v1687, %v1688
      %v1691 = vrot.slane %v1687, 4
      %v1693 = vshrl.u32 %v1154, 16
      %v1695 = vrot.slane %v1693, 7
      %v1696 = vshll.u32 %v1154, 16
      %v1698 = vor.u32 %v1695, %v1696
      %v1699 = vsel %vm1156, %v1691, %v1698
      %v1700 = vrot.slane %v1695, 4
      %v1797 = vld [vmem:[%s892] sm:$0xf]
      %v1798 = vsel %vm994, %v1163, %v1797
      %1799 = vst [vmem:[%s892] sm:$0xf] %v1798
      %1800 = vst.msk [vmem:[%s892 + $0x4] sm:$0xf] %vm878, %v1172
      %v1801 = vld [vmem:[%s892 + $0x8] sm:$0x1]
      %v1802 = vsel %vm895, %v1173, %v1801
      %1803 = vst [vmem:[%s892 + $0x8] sm:$0x1] %v1802
      %v1804 = vld [vmem:[%s892 + $0xc] sm:$0xf]
      %v1805 = vsel %vm994, %v1180, %v1804
      %1806 = vst [vmem:[%s892 + $0xc] sm:$0xf] %v1805
      %1807 = vst.msk [vmem:[%s892 + $0x10] sm:$0xf] %vm878, %v1189
      %v1808 = vld [vmem:[%s892 + $0x14] sm:$0x1]
      %v1809 = vsel %vm895, %v1190, %v1808
      %1810 = vst [vmem:[%s892 + $0x14] sm:$0x1] %v1809
      %v1811 = vld [vmem:[%s892 + $0x18] sm:$0xf]
      %v1812 = vsel %vm994, %v1197, %v1811
      %1813 = vst [vmem:[%s892 + $0x18] sm:$0xf] %v1812
      %1814 = vst.msk [vmem:[%s892 + $0x1c] sm:$0xf] %vm878, %v1206
      %v1815 = vld [vmem:[%s892 + $0x20] sm:$0x1]
      %v1816 = vsel %vm895, %v1207, %v1815
      %1817 = vst [vmem:[%s892 + $0x20] sm:$0x1] %v1816
      %v1818 = vld [vmem:[%s892 + $0x24] sm:$0xf]
      %v1819 = vsel %vm994, %v1214, %v1818
      %1820 = vst [vmem:[%s892 + $0x24] sm:$0xf] %v1819
      %1821 = vst.msk [vmem:[%s892 + $0x28] sm:$0xf] %vm878, %v1223
      %v1822 = vld [vmem:[%s892 + $0x2c] sm:$0x1]
      %v1823 = vsel %vm895, %v1224, %v1822
      %1824 = vst [vmem:[%s892 + $0x2c] sm:$0x1] %v1823
      %v1825 = vld [vmem:[%s892 + $0x30] sm:$0xf]
      %v1826 = vsel %vm994, %v1231, %v1825
      %1827 = vst [vmem:[%s892 + $0x30] sm:$0xf] %v1826
      %1828 = vst.msk [vmem:[%s892 + $0x34] sm:$0xf] %vm878, %v1240
      %v1829 = vld [vmem:[%s892 + $0x38] sm:$0x1]
      %v1830 = vsel %vm895, %v1241, %v1829
      %1831 = vst [vmem:[%s892 + $0x38] sm:$0x1] %v1830
      %v1832 = vld [vmem:[%s892 + $0x3c] sm:$0xf]
      %v1833 = vsel %vm994, %v1248, %v1832
      %1834 = vst [vmem:[%s892 + $0x3c] sm:$0xf] %v1833
      %1835 = vst.msk [vmem:[%s892 + $0x40] sm:$0xf] %vm878, %v1257
      %v1836 = vld [vmem:[%s892 + $0x44] sm:$0x1]
      %v1837 = vsel %vm895, %v1258, %v1836
      %1838 = vst [vmem:[%s892 + $0x44] sm:$0x1] %v1837
      %v1839 = vld [vmem:[%s892 + $0x48] sm:$0xf]
      %v1840 = vsel %vm994, %v1265, %v1839
      %1841 = vst [vmem:[%s892 + $0x48] sm:$0xf] %v1840
      %1842 = vst.msk [vmem:[%s892 + $0x4c] sm:$0xf] %vm878, %v1274
      %v1843 = vld [vmem:[%s892 + $0x50] sm:$0x1]
      %v1844 = vsel %vm895, %v1275, %v1843
      %1845 = vst [vmem:[%s892 + $0x50] sm:$0x1] %v1844
      %v1846 = vld [vmem:[%s892 + $0x54] sm:$0xf]
      %v1847 = vsel %vm994, %v1282, %v1846
      %1848 = vst [vmem:[%s892 + $0x54] sm:$0xf] %v1847
      %1849 = vst.msk [vmem:[%s892 + $0x58] sm:$0xf] %vm878, %v1291
      %v1850 = vld [vmem:[%s892 + $0x5c] sm:$0x1]
      %v1851 = vsel %vm895, %v1292, %v1850
      %1852 = vst [vmem:[%s892 + $0x5c] sm:$0x1] %v1851
      %v1853 = vld [vmem:[%s892 + $0x60] sm:$0xf]
      %v1854 = vsel %vm994, %v1299, %v1853
      %1855 = vst [vmem:[%s892 + $0x60] sm:$0xf] %v1854
      %1856 = vst.msk [vmem:[%s892 + $0x64] sm:$0xf] %vm878, %v1308
      %v1857 = vld [vmem:[%s892 + $0x68] sm:$0x1]
      %v1858 = vsel %vm895, %v1309, %v1857
      %1859 = vst [vmem:[%s892 + $0x68] sm:$0x1] %v1858
      %v1860 = vld [vmem:[%s892 + $0x6c] sm:$0xf]
      %v1861 = vsel %vm994, %v1316, %v1860
      %1862 = vst [vmem:[%s892 + $0x6c] sm:$0xf] %v1861
      %1863 = vst.msk [vmem:[%s892 + $0x70] sm:$0xf] %vm878, %v1325
      %v1864 = vld [vmem:[%s892 + $0x74] sm:$0x1]
      %v1865 = vsel %vm895, %v1326, %v1864
      %1866 = vst [vmem:[%s892 + $0x74] sm:$0x1] %v1865
      %v1867 = vld [vmem:[%s892 + $0x78] sm:$0xf]
      %v1868 = vsel %vm994, %v1333, %v1867
      %1869 = vst [vmem:[%s892 + $0x78] sm:$0xf] %v1868
      %1870 = vst.msk [vmem:[%s892 + $0x7c] sm:$0xf] %vm878, %v1342
      %v1871 = vld [vmem:[%s892 + $0x80] sm:$0x1]
      %v1872 = vsel %vm895, %v1343, %v1871
      %1873 = vst [vmem:[%s892 + $0x80] sm:$0x1] %v1872
      %v1874 = vld [vmem:[%s892 + $0x84] sm:$0xf]
      %v1875 = vsel %vm994, %v1350, %v1874
      %1876 = vst [vmem:[%s892 + $0x84] sm:$0xf] %v1875
      %1877 = vst.msk [vmem:[%s892 + $0x88] sm:$0xf] %vm878, %v1359
      %v1878 = vld [vmem:[%s892 + $0x8c] sm:$0x1]
      %v1879 = vsel %vm895, %v1360, %v1878
      %1880 = vst [vmem:[%s892 + $0x8c] sm:$0x1] %v1879
      %v1881 = vld [vmem:[%s892 + $0x90] sm:$0xf]
      %v1882 = vsel %vm994, %v1367, %v1881
      %1883 = vst [vmem:[%s892 + $0x90] sm:$0xf] %v1882
      %1884 = vst.msk [vmem:[%s892 + $0x94] sm:$0xf] %vm878, %v1376
      %v1885 = vld [vmem:[%s892 + $0x98] sm:$0x1]
      %v1886 = vsel %vm895, %v1377, %v1885
      %1887 = vst [vmem:[%s892 + $0x98] sm:$0x1] %v1886
      %v1888 = vld [vmem:[%s892 + $0x9c] sm:$0xf]
      %v1889 = vsel %vm994, %v1384, %v1888
      %1890 = vst [vmem:[%s892 + $0x9c] sm:$0xf] %v1889
      %1891 = vst.msk [vmem:[%s892 + $0xa0] sm:$0xf] %vm878, %v1393
      %v1892 = vld [vmem:[%s892 + $0xa4] sm:$0x1]
      %v1893 = vsel %vm895, %v1394, %v1892
      %1894 = vst [vmem:[%s892 + $0xa4] sm:$0x1] %v1893
      %v1895 = vld [vmem:[%s892 + $0xa8] sm:$0xf]
      %v1896 = vsel %vm994, %v1401, %v1895
      %1897 = vst [vmem:[%s892 + $0xa8] sm:$0xf] %v1896
      %1898 = vst.msk [vmem:[%s892 + $0xac] sm:$0xf] %vm878, %v1410
      %v1899 = vld [vmem:[%s892 + $0xb0] sm:$0x1]
      %v1900 = vsel %vm895, %v1411, %v1899
      %1901 = vst [vmem:[%s892 + $0xb0] sm:$0x1] %v1900
      %v1902 = vld [vmem:[%s892 + $0xb4] sm:$0xf]
      %v1903 = vsel %vm994, %v1418, %v1902
      %1904 = vst [vmem:[%s892 + $0xb4] sm:$0xf] %v1903
      %1905 = vst.msk [vmem:[%s892 + $0xb8] sm:$0xf] %vm878, %v1427
      %v1906 = vld [vmem:[%s892 + $0xbc] sm:$0x1]
      %v1907 = vsel %vm895, %v1428, %v1906
      %1908 = vst [vmem:[%s892 + $0xbc] sm:$0x1] %v1907
      %v1909 = vld [vmem:[%s892 + $0xd8] sm:$0xf]
      %v1910 = vsel %vm994, %v1435, %v1909
      %1911 = vst [vmem:[%s892 + $0xd8] sm:$0xf] %v1910
      %1912 = vst.msk [vmem:[%s892 + $0xdc] sm:$0xf] %vm878, %v1444
      %v1913 = vld [vmem:[%s892 + $0xe0] sm:$0x1]
      %v1914 = vsel %vm895, %v1445, %v1913
      %1915 = vst [vmem:[%s892 + $0xe0] sm:$0x1] %v1914
      %v1916 = vld [vmem:[%s892 + $0xe4] sm:$0xf]
      %v1917 = vsel %vm994, %v1452, %v1916
      %1918 = vst [vmem:[%s892 + $0xe4] sm:$0xf] %v1917
      %1919 = vst.msk [vmem:[%s892 + $0xe8] sm:$0xf] %vm878, %v1461
      %v1920 = vld [vmem:[%s892 + $0xec] sm:$0x1]
      %v1921 = vsel %vm895, %v1462, %v1920
      %1922 = vst [vmem:[%s892 + $0xec] sm:$0x1] %v1921
      %v1923 = vld [vmem:[%s892 + $0xf0] sm:$0xf]
      %v1924 = vsel %vm994, %v1469, %v1923
      %1925 = vst [vmem:[%s892 + $0xf0] sm:$0xf] %v1924
      %1926 = vst.msk [vmem:[%s892 + $0xf4] sm:$0xf] %vm878, %v1478
      %v1927 = vld [vmem:[%s892 + $0xf8] sm:$0x1]
      %v1928 = vsel %vm895, %v1479, %v1927
      %1929 = vst [vmem:[%s892 + $0xf8] sm:$0x1] %v1928
      %v1930 = vld [vmem:[%s892 + $0xfc] sm:$0xf]
      %v1931 = vsel %vm994, %v1486, %v1930
      %1932 = vst [vmem:[%s892 + $0xfc] sm:$0xf] %v1931
      %1933 = vst.msk [vmem:[%s892 + $0x100] sm:$0xf] %vm878, %v1495
      %v1934 = vld [vmem:[%s892 + $0x104] sm:$0x1]
      %v1935 = vsel %vm895, %v1496, %v1934
      %1936 = vst [vmem:[%s892 + $0x104] sm:$0x1] %v1935
      %v1937 = vld [vmem:[%s892 + $0x108] sm:$0xf]
      %v1938 = vsel %vm994, %v1503, %v1937
      %1939 = vst [vmem:[%s892 + $0x108] sm:$0xf] %v1938
      %1940 = vst.msk [vmem:[%s892 + $0x10c] sm:$0xf] %vm878, %v1512
      %v1941 = vld [vmem:[%s892 + $0x110] sm:$0x1]
      %v1942 = vsel %vm895, %v1513, %v1941
      %1943 = vst [vmem:[%s892 + $0x110] sm:$0x1] %v1942
      %v1944 = vld [vmem:[%s892 + $0x114] sm:$0xf]
      %v1945 = vsel %vm994, %v1520, %v1944
      %1946 = vst [vmem:[%s892 + $0x114] sm:$0xf] %v1945
      %1947 = vst.msk [vmem:[%s892 + $0x118] sm:$0xf] %vm878, %v1529
      %v1948 = vld [vmem:[%s892 + $0x11c] sm:$0x1]
      %v1949 = vsel %vm895, %v1530, %v1948
      %1950 = vst [vmem:[%s892 + $0x11c] sm:$0x1] %v1949
      %v1951 = vld [vmem:[%s892 + $0x120] sm:$0xf]
      %v1952 = vsel %vm994, %v1537, %v1951
      %1953 = vst [vmem:[%s892 + $0x120] sm:$0xf] %v1952
      %1954 = vst.msk [vmem:[%s892 + $0x124] sm:$0xf] %vm878, %v1546
      %v1955 = vld [vmem:[%s892 + $0x128] sm:$0x1]
      %v1956 = vsel %vm895, %v1547, %v1955
      %1957 = vst [vmem:[%s892 + $0x128] sm:$0x1] %v1956
      %v1958 = vld [vmem:[%s892 + $0x12c] sm:$0xf]
      %v1959 = vsel %vm994, %v1554, %v1958
      %1960 = vst [vmem:[%s892 + $0x12c] sm:$0xf] %v1959
      %1961 = vst.msk [vmem:[%s892 + $0x130] sm:$0xf] %vm878, %v1563
      %v1962 = vld [vmem:[%s892 + $0x134] sm:$0x1]
      %v1963 = vsel %vm895, %v1564, %v1962
      %1964 = vst [vmem:[%s892 + $0x134] sm:$0x1] %v1963
      %v1965 = vld [vmem:[%s892 + $0x138] sm:$0xf]
      %v1966 = vsel %vm994, %v1571, %v1965
      %1967 = vst [vmem:[%s892 + $0x138] sm:$0xf] %v1966
      %1968 = vst.msk [vmem:[%s892 + $0x13c] sm:$0xf] %vm878, %v1580
      %v1969 = vld [vmem:[%s892 + $0x140] sm:$0x1]
      %v1970 = vsel %vm895, %v1581, %v1969
      %1971 = vst [vmem:[%s892 + $0x140] sm:$0x1] %v1970
      %v1972 = vld [vmem:[%s892 + $0x144] sm:$0xf]
      %v1973 = vsel %vm994, %v1588, %v1972
      %1974 = vst [vmem:[%s892 + $0x144] sm:$0xf] %v1973
      %1975 = vst.msk [vmem:[%s892 + $0x148] sm:$0xf] %vm878, %v1597
      %v1976 = vld [vmem:[%s892 + $0x14c] sm:$0x1]
      %v1977 = vsel %vm895, %v1598, %v1976
      %1978 = vst [vmem:[%s892 + $0x14c] sm:$0x1] %v1977
      %v1979 = vld [vmem:[%s892 + $0x150] sm:$0xf]
      %v1980 = vsel %vm994, %v1605, %v1979
      %1981 = vst [vmem:[%s892 + $0x150] sm:$0xf] %v1980
      %1982 = vst.msk [vmem:[%s892 + $0x154] sm:$0xf] %vm878, %v1614
      %v1983 = vld [vmem:[%s892 + $0x158] sm:$0x1]
      %v1984 = vsel %vm895, %v1615, %v1983
      %1985 = vst [vmem:[%s892 + $0x158] sm:$0x1] %v1984
      %v1986 = vld [vmem:[%s892 + $0x15c] sm:$0xf]
      %v1987 = vsel %vm994, %v1622, %v1986
      %1988 = vst [vmem:[%s892 + $0x15c] sm:$0xf] %v1987
      %1989 = vst.msk [vmem:[%s892 + $0x160] sm:$0xf] %vm878, %v1631
      %v1990 = vld [vmem:[%s892 + $0x164] sm:$0x1]
      %v1991 = vsel %vm895, %v1632, %v1990
      %1992 = vst [vmem:[%s892 + $0x164] sm:$0x1] %v1991
      %v1993 = vld [vmem:[%s892 + $0x168] sm:$0xf]
      %v1994 = vsel %vm994, %v1639, %v1993
      %1995 = vst [vmem:[%s892 + $0x168] sm:$0xf] %v1994
      %1996 = vst.msk [vmem:[%s892 + $0x16c] sm:$0xf] %vm878, %v1648
      %v1997 = vld [vmem:[%s892 + $0x170] sm:$0x1]
      %v1998 = vsel %vm895, %v1649, %v1997
      %1999 = vst [vmem:[%s892 + $0x170] sm:$0x1] %v1998
      %v2000 = vld [vmem:[%s892 + $0x174] sm:$0xf]
      %v2001 = vsel %vm994, %v1656, %v2000
      %2002 = vst [vmem:[%s892 + $0x174] sm:$0xf] %v2001
      %2003 = vst.msk [vmem:[%s892 + $0x178] sm:$0xf] %vm878, %v1665
      %v2004 = vld [vmem:[%s892 + $0x17c] sm:$0x1]
      %v2005 = vsel %vm895, %v1666, %v2004
      %2006 = vst [vmem:[%s892 + $0x17c] sm:$0x1] %v2005
      %v2007 = vld [vmem:[%s892 + $0x180] sm:$0xf]
      %v2008 = vsel %vm994, %v1673, %v2007
      %2009 = vst [vmem:[%s892 + $0x180] sm:$0xf] %v2008
      %2010 = vst.msk [vmem:[%s892 + $0x184] sm:$0xf] %vm878, %v1682
      %v2011 = vld [vmem:[%s892 + $0x188] sm:$0x1]
      %v2012 = vsel %vm895, %v1683, %v2011
      %2013 = vst [vmem:[%s892 + $0x188] sm:$0x1] %v2012
      %v2014 = vld [vmem:[%s892 + $0x18c] sm:$0xf]
      %v2015 = vsel %vm994, %v1690, %v2014
      %2016 = vst [vmem:[%s892 + $0x18c] sm:$0xf] %v2015
      %2017 = vst.msk [vmem:[%s892 + $0x190] sm:$0xf] %vm878, %v1699
      %v2018 = vld [vmem:[%s892 + $0x194] sm:$0x1]
      %v2019 = vsel %vm895, %v1700, %v2018
      %2020 = vst [vmem:[%s892 + $0x194] sm:$0x1] %v2019
      %v2021 = vld [vmem:[#allocation2] sm:$0xf]
      %v2022 = vld [vmem:[#allocation2 + $0x4] sm:$0xf]
      %v2023 = vld [vmem:[#allocation2 + $0xc] sm:$0xf]
      %v2024 = vld [vmem:[#allocation2 + $0x10] sm:$0xf]
      %v2025 = vld [vmem:[#allocation2 + $0x18] sm:$0xf]
      %v2026 = vld [vmem:[#allocation2 + $0x1c] sm:$0xf]
      %v2027 = vld [vmem:[#allocation2 + $0x24] sm:$0xf]
      %v2028 = vld [vmem:[#allocation2 + $0x28] sm:$0xf]
      %v2029 = vld [vmem:[#allocation2 + $0x30] sm:$0xf]
      %v2030 = vld [vmem:[#allocation2 + $0x34] sm:$0xf]
      %v2031 = vld [vmem:[#allocation2 + $0x3c] sm:$0xf]
      %v2032 = vld [vmem:[#allocation2 + $0x40] sm:$0xf]
      %v2033 = vld [vmem:[#allocation2 + $0x48] sm:$0xf]
      %v2034 = vld [vmem:[#allocation2 + $0x4c] sm:$0xf]
      %v2035 = vld [vmem:[#allocation2 + $0x54] sm:$0xf]
      %v2036 = vld [vmem:[#allocation2 + $0x58] sm:$0xf]
      %v2037 = vld [vmem:[#allocation2 + $0x60] sm:$0xf]
      %v2038 = vld [vmem:[#allocation2 + $0x64] sm:$0xf]
      %v2039 = vld [vmem:[#allocation2 + $0x6c] sm:$0xf]
      %v2040 = vld [vmem:[#allocation2 + $0x70] sm:$0xf]
      %v2041 = vld [vmem:[#allocation2 + $0x78] sm:$0xf]
      %v2042 = vld [vmem:[#allocation2 + $0x7c] sm:$0xf]
      %v2043 = vld [vmem:[#allocation2 + $0x84] sm:$0xf]
      %v2044 = vld [vmem:[#allocation2 + $0x88] sm:$0xf]
      %v2045 = vld [vmem:[#allocation2 + $0x90] sm:$0xf]
      %v2046 = vld [vmem:[#allocation2 + $0x94] sm:$0xf]
      %v2047 = vld [vmem:[#allocation2 + $0x9c] sm:$0xf]
      %v2048 = vld [vmem:[#allocation2 + $0xa0] sm:$0xf]
      %v2049 = vld [vmem:[#allocation2 + $0xa8] sm:$0xf]
      %v2050 = vld [vmem:[#allocation2 + $0xac] sm:$0xf]
      %v2051 = vld [vmem:[#allocation2 + $0xb4] sm:$0xf]
      %v2052 = vld [vmem:[#allocation2 + $0xb8] sm:$0xf]
      %v2053 = vld [vmem:[#allocation2 + $0xd8] sm:$0xf]
      %v2054 = vld [vmem:[#allocation2 + $0xdc] sm:$0xf]
      %v2055 = vld [vmem:[#allocation2 + $0xe4] sm:$0xf]
      %v2056 = vld [vmem:[#allocation2 + $0xe8] sm:$0xf]
      %v2057 = vld [vmem:[#allocation2 + $0xf0] sm:$0xf]
      %v2058 = vld [vmem:[#allocation2 + $0xf4] sm:$0xf]
      %v2059 = vld [vmem:[#allocation2 + $0xfc] sm:$0xf]
      %v2060 = vld [vmem:[#allocation2 + $0x100] sm:$0xf]
      %v2061 = vld [vmem:[#allocation2 + $0x108] sm:$0xf]
      %v2062 = vld [vmem:[#allocation2 + $0x10c] sm:$0xf]
      %v2063 = vld [vmem:[#allocation2 + $0x114] sm:$0xf]
      %v2064 = vld [vmem:[#allocation2 + $0x118] sm:$0xf]
      %v2065 = vld [vmem:[#allocation2 + $0x120] sm:$0xf]
      %v2066 = vld [vmem:[#allocation2 + $0x124] sm:$0xf]
      %v2067 = vld [vmem:[#allocation2 + $0x12c] sm:$0xf]
      %v2068 = vld [vmem:[#allocation2 + $0x130] sm:$0xf]
      %v2069 = vld [vmem:[#allocation2 + $0x138] sm:$0xf]
      %v2070 = vld [vmem:[#allocation2 + $0x13c] sm:$0xf]
      %v2071 = vld [vmem:[#allocation2 + $0x144] sm:$0xf]
      %v2072 = vld [vmem:[#allocation2 + $0x148] sm:$0xf]
      %v2073 = vld [vmem:[#allocation2 + $0x150] sm:$0xf]
      %v2074 = vld [vmem:[#allocation2 + $0x154] sm:$0xf]
      %v2075 = vld [vmem:[#allocation2 + $0x15c] sm:$0xf]
      %v2076 = vld [vmem:[#allocation2 + $0x160] sm:$0xf]
      %v2077 = vld [vmem:[#allocation2 + $0x168] sm:$0xf]
      %v2078 = vld [vmem:[#allocation2 + $0x16c] sm:$0xf]
      %v2079 = vld [vmem:[#allocation2 + $0x174] sm:$0xf]
      %v2080 = vld [vmem:[#allocation2 + $0x178] sm:$0xf]
      %v2081 = vld [vmem:[#allocation2 + $0x180] sm:$0xf]
      %v2082 = vld [vmem:[#allocation2 + $0x184] sm:$0xf]
      %v2083 = vld [vmem:[#allocation2 + $0x18c] sm:$0xf]
      %v2084 = vld [vmem:[#allocation2 + $0x190] sm:$0xf]
      %v2085 = vld [vmem:[%s3] sm:$0xf]
      %v2086 = vld [vmem:[%s3 + $0x4] sm:$0xf]
      %v2087 = vld [vmem:[%s3 + $0x8] sm:$0xf]
      %v2088 = vld [vmem:[%s3 + $0xc] sm:$0xf]
      %v2089 = vld [vmem:[%s3 + $0x10] sm:$0xf]
      %v2090 = vld [vmem:[%s3 + $0x14] sm:$0xf]
      %v2091 = vld [vmem:[%s3 + $0x18] sm:$0xf]
      %v2092 = vld [vmem:[%s3 + $0x1c] sm:$0xf]
      %v2093 = vld [vmem:[#allocation2 + $0x8] sm:$0x1]
      %v2094 = vld [vmem:[#allocation2 + $0x14] sm:$0x1]
      %v2095 = vld [vmem:[#allocation2 + $0x20] sm:$0x1]
      %v2096 = vld [vmem:[#allocation2 + $0x2c] sm:$0x1]
      %v2097 = vld [vmem:[#allocation2 + $0x38] sm:$0x1]
      %v2098 = vld [vmem:[#allocation2 + $0x44] sm:$0x1]
      %v2099 = vld [vmem:[#allocation2 + $0x50] sm:$0x1]
      %v2100 = vld [vmem:[#allocation2 + $0x5c] sm:$0x1]
      %v2101 = vld [vmem:[#allocation2 + $0x68] sm:$0x1]
      %v2102 = vld [vmem:[#allocation2 + $0x74] sm:$0x1]
      %v2103 = vld [vmem:[#allocation2 + $0x80] sm:$0x1]
      %v2104 = vld [vmem:[#allocation2 + $0x8c] sm:$0x1]
      %v2105 = vld [vmem:[#allocation2 + $0x98] sm:$0x1]
      %v2106 = vld [vmem:[#allocation2 + $0xa4] sm:$0x1]
      %v2107 = vld [vmem:[#allocation2 + $0xb0] sm:$0x1]
      %v2108 = vld [vmem:[#allocation2 + $0xbc] sm:$0x1]
      %v2109 = vld [vmem:[#allocation2 + $0xe0] sm:$0x1]
      %v2110 = vld [vmem:[#allocation2 + $0xec] sm:$0x1]
      %v2111 = vld [vmem:[#allocation2 + $0xf8] sm:$0x1]
      %v2112 = vld [vmem:[#allocation2 + $0x104] sm:$0x1]
      %v2113 = vld [vmem:[#allocation2 + $0x110] sm:$0x1]
      %v2114 = vld [vmem:[#allocation2 + $0x11c] sm:$0x1]
      %v2115 = vld [vmem:[#allocation2 + $0x128] sm:$0x1]
      %v2116 = vld [vmem:[#allocation2 + $0x134] sm:$0x1]
      %v2117 = vld [vmem:[#allocation2 + $0x140] sm:$0x1]
      %v2118 = vld [vmem:[#allocation2 + $0x14c] sm:$0x1]
      %v2119 = vld [vmem:[#allocation2 + $0x158] sm:$0x1]
      %v2120 = vld [vmem:[#allocation2 + $0x164] sm:$0x1]
      %v2121 = vld [vmem:[#allocation2 + $0x170] sm:$0x1]
      %v2122 = vld [vmem:[#allocation2 + $0x17c] sm:$0x1]
      %v2123 = vld [vmem:[#allocation2 + $0x188] sm:$0x1]
      %v2124 = vld [vmem:[#allocation2 + $0x194] sm:$0x1]
      %vm2125 = vsmask.f32 3328
      %vm2126 = vsmask.f32 7440
      %vm2127 = vmor %vm2125, %vm2126
      %v2129 = vshrl.u32 %v2021, 16
      %v2131 = vrot.slane %v2129, 4
      %v2132 = vshll.u32 %v2021, 16
      %v2134 = vrot.slane %v2132, 5
      %v2135 = vor.u32 %v2131, %v2134
      %v2136 = vrot.slane %v2135, 4
      %v2138 = vshll.u32 %v2022, 16
      %v2140 = vrot.slane %v2138, 5
      %v2141 = vsel %vm2127, %v2136, %v2140
      %v2142 = vshrl.u32 %v2022, 16
      %v2144 = vrot.slane %v2142, 4
      %v2145 = vor.u32 %v2144, %v2140
      %v2146 = vrot.slane %v2145, 4
      %v2148 = vshll.u32 %v2093, 16
      %v2150 = vrot.slane %v2148, 5
      %v2151 = vsel %vm2127, %v2146, %v2150
      %v2153 = vshrl.u32 %v2023, 16
      %v2155 = vrot.slane %v2153, 4
      %v2156 = vshll.u32 %v2023, 16
      %v2158 = vrot.slane %v2156, 5
      %v2159 = vor.u32 %v2155, %v2158
      %v2160 = vrot.slane %v2159, 4
      %v2162 = vshll.u32 %v2024, 16
      %v2164 = vrot.slane %v2162, 5
      %v2165 = vsel %vm2127, %v2160, %v2164
      %v2166 = vshrl.u32 %v2024, 16
      %v2168 = vrot.slane %v2166, 4
      %v2169 = vor.u32 %v2168, %v2164
      %v2170 = vrot.slane %v2169, 4
      %v2172 = vshll.u32 %v2094, 16
      %v2174 = vrot.slane %v2172, 5
      %v2175 = vsel %vm2127, %v2170, %v2174
      %v2177 = vshrl.u32 %v2025, 16
      %v2179 = vrot.slane %v2177, 4
      %v2180 = vshll.u32 %v2025, 16
      %v2182 = vrot.slane %v2180, 5
      %v2183 = vor.u32 %v2179, %v2182
      %v2184 = vrot.slane %v2183, 4
      %v2186 = vshll.u32 %v2026, 16
      %v2188 = vrot.slane %v2186, 5
      %v2189 = vsel %vm2127, %v2184, %v2188
      %v2190 = vshrl.u32 %v2026, 16
      %v2192 = vrot.slane %v2190, 4
      %v2193 = vor.u32 %v2192, %v2188
      %v2194 = vrot.slane %v2193, 4
      %v2196 = vshll.u32 %v2095, 16
      %v2198 = vrot.slane %v2196, 5
      %v2199 = vsel %vm2127, %v2194, %v2198
      %v2201 = vshrl.u32 %v2027, 16
      %v2203 = vrot.slane %v2201, 4
      %v2204 = vshll.u32 %v2027, 16
      %v2206 = vrot.slane %v2204, 5
      %v2207 = vor.u32 %v2203, %v2206
      %v2208 = vrot.slane %v2207, 4
      %v2210 = vshll.u32 %v2028, 16
      %v2212 = vrot.slane %v2210, 5
      %v2213 = vsel %vm2127, %v2208, %v2212
      %v2214 = vshrl.u32 %v2028, 16
      %v2216 = vrot.slane %v2214, 4
      %v2217 = vor.u32 %v2216, %v2212
      %v2218 = vrot.slane %v2217, 4
      %v2220 = vshll.u32 %v2096, 16
      %v2222 = vrot.slane %v2220, 5
      %v2223 = vsel %vm2127, %v2218, %v2222
      %v2225 = vshrl.u32 %v2029, 16
      %v2227 = vrot.slane %v2225, 4
      %v2228 = vshll.u32 %v2029, 16
      %v2230 = vrot.slane %v2228, 5
      %v2231 = vor.u32 %v2227, %v2230
      %v2232 = vrot.slane %v2231, 4
      %v2234 = vshll.u32 %v2030, 16
      %v2236 = vrot.slane %v2234, 5
      %v2237 = vsel %vm2127, %v2232, %v2236
      %v2238 = vshrl.u32 %v2030, 16
      %v2240 = vrot.slane %v2238, 4
      %v2241 = vor.u32 %v2240, %v2236
      %v2242 = vrot.slane %v2241, 4
      %v2244 = vshll.u32 %v2097, 16
      %v2246 = vrot.slane %v2244, 5
      %v2247 = vsel %vm2127, %v2242, %v2246
      %v2249 = vshrl.u32 %v2031, 16
      %v2251 = vrot.slane %v2249, 4
      %v2252 = vshll.u32 %v2031, 16
      %v2254 = vrot.slane %v2252, 5
      %v2255 = vor.u32 %v2251, %v2254
      %v2256 = vrot.slane %v2255, 4
      %v2258 = vshll.u32 %v2032, 16
      %v2260 = vrot.slane %v2258, 5
      %v2261 = vsel %vm2127, %v2256, %v2260
      %v2262 = vshrl.u32 %v2032, 16
      %v2264 = vrot.slane %v2262, 4
      %v2265 = vor.u32 %v2264, %v2260
      %v2266 = vrot.slane %v2265, 4
      %v2268 = vshll.u32 %v2098, 16
      %v2270 = vrot.slane %v2268, 5
      %v2271 = vsel %vm2127, %v2266, %v2270
      %v2273 = vshrl.u32 %v2033, 16
      %v2275 = vrot.slane %v2273, 4
      %v2276 = vshll.u32 %v2033, 16
      %v2278 = vrot.slane %v2276, 5
      %v2279 = vor.u32 %v2275, %v2278
      %v2280 = vrot.slane %v2279, 4
      %v2282 = vshll.u32 %v2034, 16
      %v2284 = vrot.slane %v2282, 5
      %v2285 = vsel %vm2127, %v2280, %v2284
      %v2286 = vshrl.u32 %v2034, 16
      %v2288 = vrot.slane %v2286, 4
      %v2289 = vor.u32 %v2288, %v2284
      %v2290 = vrot.slane %v2289, 4
      %v2292 = vshll.u32 %v2099, 16
      %v2294 = vrot.slane %v2292, 5
      %v2295 = vsel %vm2127, %v2290, %v2294
      %v2297 = vshrl.u32 %v2035, 16
      %v2299 = vrot.slane %v2297, 4
      %v2300 = vshll.u32 %v2035, 16
      %v2302 = vrot.slane %v2300, 5
      %v2303 = vor.u32 %v2299, %v2302
      %v2304 = vrot.slane %v2303, 4
      %v2306 = vshll.u32 %v2036, 16
      %v2308 = vrot.slane %v2306, 5
      %v2309 = vsel %vm2127, %v2304, %v2308
      %v2310 = vshrl.u32 %v2036, 16
      %v2312 = vrot.slane %v2310, 4
      %v2313 = vor.u32 %v2312, %v2308
      %v2314 = vrot.slane %v2313, 4
      %v2316 = vshll.u32 %v2100, 16
      %v2318 = vrot.slane %v2316, 5
      %v2319 = vsel %vm2127, %v2314, %v2318
      %v2321 = vshrl.u32 %v2037, 16
      %v2323 = vrot.slane %v2321, 4
      %v2324 = vshll.u32 %v2037, 16
      %v2326 = vrot.slane %v2324, 5
      %v2327 = vor.u32 %v2323, %v2326
      %v2328 = vrot.slane %v2327, 4
      %v2330 = vshll.u32 %v2038, 16
      %v2332 = vrot.slane %v2330, 5
      %v2333 = vsel %vm2127, %v2328, %v2332
      %v2334 = vshrl.u32 %v2038, 16
      %v2336 = vrot.slane %v2334, 4
      %v2337 = vor.u32 %v2336, %v2332
      %v2338 = vrot.slane %v2337, 4
      %v2340 = vshll.u32 %v2101, 16
      %v2342 = vrot.slane %v2340, 5
      %v2343 = vsel %vm2127, %v2338, %v2342
      %v2345 = vshrl.u32 %v2039, 16
      %v2347 = vrot.slane %v2345, 4
      %v2348 = vshll.u32 %v2039, 16
      %v2350 = vrot.slane %v2348, 5
      %v2351 = vor.u32 %v2347, %v2350
      %v2352 = vrot.slane %v2351, 4
      %v2354 = vshll.u32 %v2040, 16
      %v2356 = vrot.slane %v2354, 5
      %v2357 = vsel %vm2127, %v2352, %v2356
      %v2358 = vshrl.u32 %v2040, 16
      %v2360 = vrot.slane %v2358, 4
      %v2361 = vor.u32 %v2360, %v2356
      %v2362 = vrot.slane %v2361, 4
      %v2364 = vshll.u32 %v2102, 16
      %v2366 = vrot.slane %v2364, 5
      %v2367 = vsel %vm2127, %v2362, %v2366
      %v2369 = vshrl.u32 %v2041, 16
      %v2371 = vrot.slane %v2369, 4
      %v2372 = vshll.u32 %v2041, 16
      %v2374 = vrot.slane %v2372, 5
      %v2375 = vor.u32 %v2371, %v2374
      %v2376 = vrot.slane %v2375, 4
      %v2378 = vshll.u32 %v2042, 16
      %v2380 = vrot.slane %v2378, 5
      %v2381 = vsel %vm2127, %v2376, %v2380
      %v2382 = vshrl.u32 %v2042, 16
      %v2384 = vrot.slane %v2382, 4
      %v2385 = vor.u32 %v2384, %v2380
      %v2386 = vrot.slane %v2385, 4
      %v2388 = vshll.u32 %v2103, 16
      %v2390 = vrot.slane %v2388, 5
      %v2391 = vsel %vm2127, %v2386, %v2390
      %v2393 = vshrl.u32 %v2043, 16
      %v2395 = vrot.slane %v2393, 4
      %v2396 = vshll.u32 %v2043, 16
      %v2398 = vrot.slane %v2396, 5
      %v2399 = vor.u32 %v2395, %v2398
      %v2400 = vrot.slane %v2399, 4
      %v2402 = vshll.u32 %v2044, 16
      %v2404 = vrot.slane %v2402, 5
      %v2405 = vsel %vm2127, %v2400, %v2404
      %v2406 = vshrl.u32 %v2044, 16
      %v2408 = vrot.slane %v2406, 4
      %v2409 = vor.u32 %v2408, %v2404
      %v2410 = vrot.slane %v2409, 4
      %v2412 = vshll.u32 %v2104, 16
      %v2414 = vrot.slane %v2412, 5
      %v2415 = vsel %vm2127, %v2410, %v2414
      %v2417 = vshrl.u32 %v2045, 16
      %v2419 = vrot.slane %v2417, 4
      %v2420 = vshll.u32 %v2045, 16
      %v2422 = vrot.slane %v2420, 5
      %v2423 = vor.u32 %v2419, %v2422
      %v2424 = vrot.slane %v2423, 4
      %v2426 = vshll.u32 %v2046, 16
      %v2428 = vrot.slane %v2426, 5
      %v2429 = vsel %vm2127, %v2424, %v2428
      %v2430 = vshrl.u32 %v2046, 16
      %v2432 = vrot.slane %v2430, 4
      %v2433 = vor.u32 %v2432, %v2428
      %v2434 = vrot.slane %v2433, 4
      %v2436 = vshll.u32 %v2105, 16
      %v2438 = vrot.slane %v2436, 5
      %v2439 = vsel %vm2127, %v2434, %v2438
      %v2441 = vshrl.u32 %v2047, 16
      %v2443 = vrot.slane %v2441, 4
      %v2444 = vshll.u32 %v2047, 16
      %v2446 = vrot.slane %v2444, 5
      %v2447 = vor.u32 %v2443, %v2446
      %v2448 = vrot.slane %v2447, 4
      %v2450 = vshll.u32 %v2048, 16
      %v2452 = vrot.slane %v2450, 5
      %v2453 = vsel %vm2127, %v2448, %v2452
      %v2454 = vshrl.u32 %v2048, 16
      %v2456 = vrot.slane %v2454, 4
      %v2457 = vor.u32 %v2456, %v2452
      %v2458 = vrot.slane %v2457, 4
      %v2460 = vshll.u32 %v2106, 16
      %v2462 = vrot.slane %v2460, 5
      %v2463 = vsel %vm2127, %v2458, %v2462
      %v2465 = vshrl.u32 %v2049, 16
      %v2467 = vrot.slane %v2465, 4
      %v2468 = vshll.u32 %v2049, 16
      %v2470 = vrot.slane %v2468, 5
      %v2471 = vor.u32 %v2467, %v2470
      %v2472 = vrot.slane %v2471, 4
      %v2474 = vshll.u32 %v2050, 16
      %v2476 = vrot.slane %v2474, 5
      %v2477 = vsel %vm2127, %v2472, %v2476
      %v2478 = vshrl.u32 %v2050, 16
      %v2480 = vrot.slane %v2478, 4
      %v2481 = vor.u32 %v2480, %v2476
      %v2482 = vrot.slane %v2481, 4
      %v2484 = vshll.u32 %v2107, 16
      %v2486 = vrot.slane %v2484, 5
      %v2487 = vsel %vm2127, %v2482, %v2486
      %v2489 = vshrl.u32 %v2051, 16
      %v2491 = vrot.slane %v2489, 4
      %v2492 = vshll.u32 %v2051, 16
      %v2494 = vrot.slane %v2492, 5
      %v2495 = vor.u32 %v2491, %v2494
      %v2496 = vrot.slane %v2495, 4
      %v2498 = vshll.u32 %v2052, 16
      %v2500 = vrot.slane %v2498, 5
      %v2501 = vsel %vm2127, %v2496, %v2500
      %v2502 = vshrl.u32 %v2052, 16
      %v2504 = vrot.slane %v2502, 4
      %v2505 = vor.u32 %v2504, %v2500
      %v2506 = vrot.slane %v2505, 4
      %v2508 = vshll.u32 %v2108, 16
      %v2510 = vrot.slane %v2508, 5
      %v2511 = vsel %vm2127, %v2506, %v2510
      %v2513 = vshrl.u32 %v2053, 16
      %v2515 = vrot.slane %v2513, 4
      %v2516 = vshll.u32 %v2053, 16
      %v2518 = vrot.slane %v2516, 5
      %v2519 = vor.u32 %v2515, %v2518
      %v2520 = vrot.slane %v2519, 4
      %v2522 = vshll.u32 %v2054, 16
      %v2524 = vrot.slane %v2522, 5
      %v2525 = vsel %vm2127, %v2520, %v2524
      %v2526 = vshrl.u32 %v2054, 16
      %v2528 = vrot.slane %v2526, 4
      %v2529 = vor.u32 %v2528, %v2524
      %v2530 = vrot.slane %v2529, 4
      %v2532 = vshll.u32 %v2109, 16
      %v2534 = vrot.slane %v2532, 5
      %v2535 = vsel %vm2127, %v2530, %v2534
      %v2537 = vshrl.u32 %v2055, 16
      %v2539 = vrot.slane %v2537, 4
      %v2540 = vshll.u32 %v2055, 16
      %v2542 = vrot.slane %v2540, 5
      %v2543 = vor.u32 %v2539, %v2542
      %v2544 = vrot.slane %v2543, 4
      %v2546 = vshll.u32 %v2056, 16
      %v2548 = vrot.slane %v2546, 5
      %v2549 = vsel %vm2127, %v2544, %v2548
      %v2550 = vshrl.u32 %v2056, 16
      %v2552 = vrot.slane %v2550, 4
      %v2553 = vor.u32 %v2552, %v2548
      %v2554 = vrot.slane %v2553, 4
      %v2556 = vshll.u32 %v2110, 16
      %v2558 = vrot.slane %v2556, 5
      %v2559 = vsel %vm2127, %v2554, %v2558
      %v2561 = vshrl.u32 %v2057, 16
      %v2563 = vrot.slane %v2561, 4
      %v2564 = vshll.u32 %v2057, 16
      %v2566 = vrot.slane %v2564, 5
      %v2567 = vor.u32 %v2563, %v2566
      %v2568 = vrot.slane %v2567, 4
      %v2570 = vshll.u32 %v2058, 16
      %v2572 = vrot.slane %v2570, 5
      %v2573 = vsel %vm2127, %v2568, %v2572
      %v2574 = vshrl.u32 %v2058, 16
      %v2576 = vrot.slane %v2574, 4
      %v2577 = vor.u32 %v2576, %v2572
      %v2578 = vrot.slane %v2577, 4
      %v2580 = vshll.u32 %v2111, 16
      %v2582 = vrot.slane %v2580, 5
      %v2583 = vsel %vm2127, %v2578, %v2582
      %v2585 = vshrl.u32 %v2059, 16
      %v2587 = vrot.slane %v2585, 4
      %v2588 = vshll.u32 %v2059, 16
      %v2590 = vrot.slane %v2588, 5
      %v2591 = vor.u32 %v2587, %v2590
      %v2592 = vrot.slane %v2591, 4
      %v2594 = vshll.u32 %v2060, 16
      %v2596 = vrot.slane %v2594, 5
      %v2597 = vsel %vm2127, %v2592, %v2596
      %v2598 = vshrl.u32 %v2060, 16
      %v2600 = vrot.slane %v2598, 4
      %v2601 = vor.u32 %v2600, %v2596
      %v2602 = vrot.slane %v2601, 4
      %v2604 = vshll.u32 %v2112, 16
      %v2606 = vrot.slane %v2604, 5
      %v2607 = vsel %vm2127, %v2602, %v2606
      %v2609 = vshrl.u32 %v2061, 16
      %v2611 = vrot.slane %v2609, 4
      %v2612 = vshll.u32 %v2061, 16
      %v2614 = vrot.slane %v2612, 5
      %v2615 = vor.u32 %v2611, %v2614
      %v2616 = vrot.slane %v2615, 4
      %v2618 = vshll.u32 %v2062, 16
      %v2620 = vrot.slane %v2618, 5
      %v2621 = vsel %vm2127, %v2616, %v2620
      %v2622 = vshrl.u32 %v2062, 16
      %v2624 = vrot.slane %v2622, 4
      %v2625 = vor.u32 %v2624, %v2620
      %v2626 = vrot.slane %v2625, 4
      %v2628 = vshll.u32 %v2113, 16
      %v2630 = vrot.slane %v2628, 5
      %v2631 = vsel %vm2127, %v2626, %v2630
      %v2633 = vshrl.u32 %v2063, 16
      %v2635 = vrot.slane %v2633, 4
      %v2636 = vshll.u32 %v2063, 16
      %v2638 = vrot.slane %v2636, 5
      %v2639 = vor.u32 %v2635, %v2638
      %v2640 = vrot.slane %v2639, 4
      %v2642 = vshll.u32 %v2064, 16
      %v2644 = vrot.slane %v2642, 5
      %v2645 = vsel %vm2127, %v2640, %v2644
      %v2646 = vshrl.u32 %v2064, 16
      %v2648 = vrot.slane %v2646, 4
      %v2649 = vor.u32 %v2648, %v2644
      %v2650 = vrot.slane %v2649, 4
      %v2652 = vshll.u32 %v2114, 16
      %v2654 = vrot.slane %v2652, 5
      %v2655 = vsel %vm2127, %v2650, %v2654
      %v2657 = vshrl.u32 %v2065, 16
      %v2659 = vrot.slane %v2657, 4
      %v2660 = vshll.u32 %v2065, 16
      %v2662 = vrot.slane %v2660, 5
      %v2663 = vor.u32 %v2659, %v2662
      %v2664 = vrot.slane %v2663, 4
      %v2666 = vshll.u32 %v2066, 16
      %v2668 = vrot.slane %v2666, 5
      %v2669 = vsel %vm2127, %v2664, %v2668
      %v2670 = vshrl.u32 %v2066, 16
      %v2672 = vrot.slane %v2670, 4
      %v2673 = vor.u32 %v2672, %v2668
      %v2674 = vrot.slane %v2673, 4
      %v2676 = vshll.u32 %v2115, 16
      %v2678 = vrot.slane %v2676, 5
      %v2679 = vsel %vm2127, %v2674, %v2678
      %v2681 = vshrl.u32 %v2067, 16
      %v2683 = vrot.slane %v2681, 4
      %v2684 = vshll.u32 %v2067, 16
      %v2686 = vrot.slane %v2684, 5
      %v2687 = vor.u32 %v2683, %v2686
      %v2688 = vrot.slane %v2687, 4
      %v2690 = vshll.u32 %v2068, 16
      %v2692 = vrot.slane %v2690, 5
      %v2693 = vsel %vm2127, %v2688, %v2692
      %v2694 = vshrl.u32 %v2068, 16
      %v2696 = vrot.slane %v2694, 4
      %v2697 = vor.u32 %v2696, %v2692
      %v2698 = vrot.slane %v2697, 4
      %v2700 = vshll.u32 %v2116, 16
      %v2702 = vrot.slane %v2700, 5
      %v2703 = vsel %vm2127, %v2698, %v2702
      %v2705 = vshrl.u32 %v2069, 16
      %v2707 = vrot.slane %v2705, 4
      %v2708 = vshll.u32 %v2069, 16
      %v2710 = vrot.slane %v2708, 5
      %v2711 = vor.u32 %v2707, %v2710
      %v2712 = vrot.slane %v2711, 4
      %v2714 = vshll.u32 %v2070, 16
      %v2716 = vrot.slane %v2714, 5
      %v2717 = vsel %vm2127, %v2712, %v2716
      %v2718 = vshrl.u32 %v2070, 16
      %v2720 = vrot.slane %v2718, 4
      %v2721 = vor.u32 %v2720, %v2716
      %v2722 = vrot.slane %v2721, 4
      %v2724 = vshll.u32 %v2117, 16
      %v2726 = vrot.slane %v2724, 5
      %v2727 = vsel %vm2127, %v2722, %v2726
      %v2729 = vshrl.u32 %v2071, 16
      %v2731 = vrot.slane %v2729, 4
      %v2732 = vshll.u32 %v2071, 16
      %v2734 = vrot.slane %v2732, 5
      %v2735 = vor.u32 %v2731, %v2734
      %v2736 = vrot.slane %v2735, 4
      %v2738 = vshll.u32 %v2072, 16
      %v2740 = vrot.slane %v2738, 5
      %v2741 = vsel %vm2127, %v2736, %v2740
      %v2742 = vshrl.u32 %v2072, 16
      %v2744 = vrot.slane %v2742, 4
      %v2745 = vor.u32 %v2744, %v2740
      %v2746 = vrot.slane %v2745, 4
      %v2748 = vshll.u32 %v2118, 16
      %v2750 = vrot.slane %v2748, 5
      %v2751 = vsel %vm2127, %v2746, %v2750
      %v2753 = vshrl.u32 %v2073, 16
      %v2755 = vrot.slane %v2753, 4
      %v2756 = vshll.u32 %v2073, 16
      %v2758 = vrot.slane %v2756, 5
      %v2759 = vor.u32 %v2755, %v2758
      %v2760 = vrot.slane %v2759, 4
      %v2762 = vshll.u32 %v2074, 16
      %v2764 = vrot.slane %v2762, 5
      %v2765 = vsel %vm2127, %v2760, %v2764
      %v2766 = vshrl.u32 %v2074, 16
      %v2768 = vrot.slane %v2766, 4
      %v2769 = vor.u32 %v2768, %v2764
      %v2770 = vrot.slane %v2769, 4
      %v2772 = vshll.u32 %v2119, 16
      %v2774 = vrot.slane %v2772, 5
      %v2775 = vsel %vm2127, %v2770, %v2774
      %v2777 = vshrl.u32 %v2075, 16
      %v2779 = vrot.slane %v2777, 4
      %v2780 = vshll.u32 %v2075, 16
      %v2782 = vrot.slane %v2780, 5
      %v2783 = vor.u32 %v2779, %v2782
      %v2784 = vrot.slane %v2783, 4
      %v2786 = vshll.u32 %v2076, 16
      %v2788 = vrot.slane %v2786, 5
      %v2789 = vsel %vm2127, %v2784, %v2788
      %v2790 = vshrl.u32 %v2076, 16
      %v2792 = vrot.slane %v2790, 4
      %v2793 = vor.u32 %v2792, %v2788
      %v2794 = vrot.slane %v2793, 4
      %v2796 = vshll.u32 %v2120, 16
      %v2798 = vrot.slane %v2796, 5
      %v2799 = vsel %vm2127, %v2794, %v2798
      %v2801 = vshrl.u32 %v2077, 16
      %v2803 = vrot.slane %v2801, 4
      %v2804 = vshll.u32 %v2077, 16
      %v2806 = vrot.slane %v2804, 5
      %v2807 = vor.u32 %v2803, %v2806
      %v2808 = vrot.slane %v2807, 4
      %v2810 = vshll.u32 %v2078, 16
      %v2812 = vrot.slane %v2810, 5
      %v2813 = vsel %vm2127, %v2808, %v2812
      %v2814 = vshrl.u32 %v2078, 16
      %v2816 = vrot.slane %v2814, 4
      %v2817 = vor.u32 %v2816, %v2812
      %v2818 = vrot.slane %v2817, 4
      %v2820 = vshll.u32 %v2121, 16
      %v2822 = vrot.slane %v2820, 5
      %v2823 = vsel %vm2127, %v2818, %v2822
      %v2825 = vshrl.u32 %v2079, 16
      %v2827 = vrot.slane %v2825, 4
      %v2828 = vshll.u32 %v2079, 16
      %v2830 = vrot.slane %v2828, 5
      %v2831 = vor.u32 %v2827, %v2830
      %v2832 = vrot.slane %v2831, 4
      %v2834 = vshll.u32 %v2080, 16
      %v2836 = vrot.slane %v2834, 5
      %v2837 = vsel %vm2127, %v2832, %v2836
      %v2838 = vshrl.u32 %v2080, 16
      %v2840 = vrot.slane %v2838, 4
      %v2841 = vor.u32 %v2840, %v2836
      %v2842 = vrot.slane %v2841, 4
      %v2844 = vshll.u32 %v2122, 16
      %v2846 = vrot.slane %v2844, 5
      %v2847 = vsel %vm2127, %v2842, %v2846
      %v2849 = vshrl.u32 %v2081, 16
      %v2851 = vrot.slane %v2849, 4
      %v2852 = vshll.u32 %v2081, 16
      %v2854 = vrot.slane %v2852, 5
      %v2855 = vor.u32 %v2851, %v2854
      %v2856 = vrot.slane %v2855, 4
      %v2858 = vshll.u32 %v2082, 16
      %v2860 = vrot.slane %v2858, 5
      %v2861 = vsel %vm2127, %v2856, %v2860
      %v2862 = vshrl.u32 %v2082, 16
      %v2864 = vrot.slane %v2862, 4
      %v2865 = vor.u32 %v2864, %v2860
      %v2866 = vrot.slane %v2865, 4
      %v2868 = vshll.u32 %v2123, 16
      %v2870 = vrot.slane %v2868, 5
      %v2871 = vsel %vm2127, %v2866, %v2870
      %v2873 = vshrl.u32 %v2083, 16
      %v2875 = vrot.slane %v2873, 4
      %v2876 = vshll.u32 %v2083, 16
      %v2878 = vrot.slane %v2876, 5
      %v2879 = vor.u32 %v2875, %v2878
      %v2880 = vrot.slane %v2879, 4
      %v2882 = vshll.u32 %v2084, 16
      %v2884 = vrot.slane %v2882, 5
      %v2885 = vsel %vm2127, %v2880, %v2884
      %v2886 = vshrl.u32 %v2084, 16
      %v2888 = vrot.slane %v2886, 4
      %v2889 = vor.u32 %v2888, %v2884
      %v2890 = vrot.slane %v2889, 4
      %v2892 = vshll.u32 %v2124, 16
      %v2894 = vrot.slane %v2892, 5
      %v2895 = vsel %vm2127, %v2890, %v2894
      %s2896 = scalar_lea.vmem %s3, 32
      %v2897 = vld [vmem:[%s2896] sm:$0xf]
      %v2898 = vld [vmem:[%s2896 + $0x4] sm:$0xf]
      %v2899 = vld [vmem:[%s2896 + $0x8] sm:$0xf]
      %v2900 = vld [vmem:[%s2896 + $0xc] sm:$0xf]
      %v2901 = vld [vmem:[%s2896 + $0x10] sm:$0xf]
      %v2902 = vld [vmem:[%s2896 + $0x14] sm:$0xf]
      %v2903 = vld [vmem:[%s2896 + $0x18] sm:$0xf]
      %v2904 = vld [vmem:[%s2896 + $0x1c] sm:$0xf]
      %v2905 = vunpack.c.l.b16 %v2141
      %v2906 = vunpack.c.l.b16 %v2151
      %v2907 = vunpack.c.l.b16 %v2165
      %v2908 = vunpack.c.l.b16 %v2175
      %v2909 = vunpack.c.l.b16 %v2189
      %v2910 = vunpack.c.l.b16 %v2199
      %v2911 = vunpack.c.l.b16 %v2213
      %v2912 = vunpack.c.l.b16 %v2223
      %v2913 = vunpack.c.l.b16 %v2237
      %v2914 = vunpack.c.l.b16 %v2247
      %v2915 = vunpack.c.l.b16 %v2261
      %v2916 = vunpack.c.l.b16 %v2271
      %v2917 = vunpack.c.l.b16 %v2285
      %v2918 = vunpack.c.l.b16 %v2295
      %v2919 = vunpack.c.l.b16 %v2309
      %v2920 = vunpack.c.l.b16 %v2319
      %v2921 = vunpack.c.l.b16 %v2333
      %v2922 = vunpack.c.l.b16 %v2343
      %v2923 = vunpack.c.l.b16 %v2357
      %v2924 = vunpack.c.l.b16 %v2367
      %v2925 = vunpack.c.l.b16 %v2381
      %v2926 = vunpack.c.l.b16 %v2391
      %v2927 = vunpack.c.l.b16 %v2405
      %v2928 = vunpack.c.l.b16 %v2415
      %v2929 = vunpack.c.l.b16 %v2429
      %v2930 = vunpack.c.l.b16 %v2439
      %v2931 = vunpack.c.l.b16 %v2453
      %v2932 = vunpack.c.l.b16 %v2463
      %v2933 = vunpack.c.l.b16 %v2477
      %v2934 = vunpack.c.l.b16 %v2487
      %v2935 = vunpack.c.l.b16 %v2501
      %v2936 = vunpack.c.l.b16 %v2511
      %v2937 = vunpack.c.l.b16 %v2525
      %v2938 = vunpack.c.l.b16 %v2535
      %v2939 = vunpack.c.l.b16 %v2549
      %v2940 = vunpack.c.l.b16 %v2559
      %v2941 = vunpack.c.l.b16 %v2573
      %v2942 = vunpack.c.l.b16 %v2583
      %v2943 = vunpack.c.l.b16 %v2597
      %v2944 = vunpack.c.l.b16 %v2607
      %v2945 = vunpack.c.l.b16 %v2621
      %v2946 = vunpack.c.l.b16 %v2631
      %v2947 = vunpack.c.l.b16 %v2645
      %v2948 = vunpack.c.l.b16 %v2655
      %v2949 = vunpack.c.l.b16 %v2669
      %v2950 = vunpack.c.l.b16 %v2679
      %v2951 = vunpack.c.l.b16 %v2693
      %v2952 = vunpack.c.l.b16 %v2703
      %v2953 = vunpack.c.l.b16 %v2717
      %v2954 = vunpack.c.l.b16 %v2727
      %v2955 = vunpack.c.l.b16 %v2741
      %v2956 = vunpack.c.l.b16 %v2751
      %v2957 = vunpack.c.l.b16 %v2765
      %v2958 = vunpack.c.l.b16 %v2775
      %v2959 = vunpack.c.l.b16 %v2789
      %v2960 = vunpack.c.l.b16 %v2799
      %v2961 = vunpack.c.l.b16 %v2813
      %v2962 = vunpack.c.l.b16 %v2823
      %v2963 = vunpack.c.l.b16 %v2837
      %v2964 = vunpack.c.l.b16 %v2847
      %v2965 = vunpack.c.l.b16 %v2861
      %v2966 = vunpack.c.l.b16 %v2871
      %v2967 = vunpack.c.l.b16 %v2885
      %v2968 = vunpack.c.l.b16 %v2895
      %v2969 = vpack.c.b16 %v2906, %v2905
      %v2970 = vpack.c.b16 %v2908, %v2907
      %v2971 = vpack.c.b16 %v2910, %v2909
      %v2972 = vpack.c.b16 %v2912, %v2911
      %v2973 = vpack.c.b16 %v2914, %v2913
      %v2974 = vpack.c.b16 %v2916, %v2915
      %v2975 = vpack.c.b16 %v2918, %v2917
      %v2976 = vpack.c.b16 %v2920, %v2919
      %v2977 = vpack.c.b16 %v2922, %v2921
      %v2978 = vpack.c.b16 %v2924, %v2923
      %v2979 = vpack.c.b16 %v2926, %v2925
      %v2980 = vpack.c.b16 %v2928, %v2927
      %v2981 = vpack.c.b16 %v2930, %v2929
      %v2982 = vpack.c.b16 %v2932, %v2931
      %v2983 = vpack.c.b16 %v2934, %v2933
      %v2984 = vpack.c.b16 %v2936, %v2935
      %v2985 = vpack.c.b16 %v2938, %v2937
      %v2986 = vpack.c.b16 %v2940, %v2939
      %v2987 = vpack.c.b16 %v2942, %v2941
      %v2988 = vpack.c.b16 %v2944, %v2943
      %v2989 = vpack.c.b16 %v2946, %v2945
      %v2990 = vpack.c.b16 %v2948, %v2947
      %v2991 = vpack.c.b16 %v2950, %v2949
      %v2992 = vpack.c.b16 %v2952, %v2951
      %v2993 = vpack.c.b16 %v2954, %v2953
      %v2994 = vpack.c.b16 %v2956, %v2955
      %v2995 = vpack.c.b16 %v2958, %v2957
      %v2996 = vpack.c.b16 %v2960, %v2959
      %v2997 = vpack.c.b16 %v2962, %v2961
      %v2998 = vpack.c.b16 %v2964, %v2963
      %v2999 = vpack.c.b16 %v2966, %v2965
      %v3000 = vpack.c.b16 %v2968, %v2967
      %v3009 = vunpack.c.l.b16 %v2897
      %v3010 = vunpack.c.l.b16 %v2898
      %v3011 = vunpack.c.l.b16 %v2899
      %v3012 = vunpack.c.l.b16 %v2900
      %v3013 = vunpack.c.l.b16 %v2901
      %v3014 = vunpack.c.l.b16 %v2902
      %v3015 = vunpack.c.l.b16 %v2903
      %v3016 = vunpack.c.l.b16 %v2904
      %v3017 = vpack.c.b16 %v3010, %v3009
      %v3018 = vpack.c.b16 %v3012, %v3011
      %v3019 = vpack.c.b16 %v3014, %v3013
      %v3020 = vpack.c.b16 %v3016, %v3015
      %v3026 = vsel %vm548, %v2969, 0
      %v3029 = vsel %vm548, %v2970, 0
      %v3032 = vsel %vm548, %v2971, 0
      %v3035 = vsel %vm548, %v2972, 0
      %v3038 = vsel %vm548, %v2973, 0
      %v3041 = vsel %vm548, %v2974, 0
      %v3044 = vsel %vm548, %v2975, 0
      %v3047 = vsel %vm548, %v2976, 0
      %v3050 = vsel %vm548, %v2977, 0
      %v3053 = vsel %vm548, %v2978, 0
      %v3056 = vsel %vm548, %v2979, 0
      %v3059 = vsel %vm548, %v2980, 0
      %v3062 = vsel %vm548, %v2981, 0
      %v3065 = vsel %vm548, %v2982, 0
      %v3068 = vsel %vm548, %v2983, 0
      %v3071 = vsel %vm548, %v2984, 0
      %v3074 = vsel %vm548, %v2985, 0
      %v3077 = vsel %vm548, %v2986, 0
      %v3080 = vsel %vm548, %v2987, 0
      %v3083 = vsel %vm548, %v2988, 0
      %v3086 = vsel %vm548, %v2989, 0
      %v3089 = vsel %vm548, %v2990, 0
      %v3092 = vsel %vm548, %v2991, 0
      %v3095 = vsel %vm548, %v2992, 0
      %v3098 = vsel %vm548, %v2993, 0
      %v3101 = vsel %vm548, %v2994, 0
      %v3104 = vsel %vm548, %v2995, 0
      %v3107 = vsel %vm548, %v2996, 0
      %v3110 = vsel %vm548, %v2997, 0
      %v3113 = vsel %vm548, %v2998, 0
      %v3116 = vsel %vm548, %v2999, 0
      %v3119 = vsel %vm548, %v3000, 0
      %3121 = vmatpush.bf16.msra.mxu0 0
      %3122 = vmatpush.bf16.msra.mxu0 0
      %3123 = vmatpush.bf16.msra.mxu0 0
      %3124 = vmatpush.bf16.msra.mxu0 0
      %3125 = vmatpush.bf16.msra.mxu0 %v3020
      %3126 = vmatpush.bf16.msra.mxu0 %v3019
      %3127 = vmatpush.bf16.msra.mxu0 %v3018
      %3128 = vmatpush.bf16.msra.mxu0 %v3017
      %3129 = vmatmul.bf16.gmra.mxu0 %v3026
      %v3130 = vpop.f32.mrf.mxu0
      %v3131 = vadd.f32 0.0, %v3130
      %v3132 = vpop.f32.mrf.mxu0
      %v3133 = vadd.f32 0.0, %v3132
      %3134 = vmatmul.bf16.gmra.mxu0 %v3029
      %v3135 = vpop.f32.mrf.mxu0
      %v3136 = vadd.f32 0.0, %v3135
      %v3137 = vpop.f32.mrf.mxu0
      %v3138 = vadd.f32 0.0, %v3137
      %3139 = vmatmul.bf16.gmra.mxu0 %v3032
      %v3140 = vpop.f32.mrf.mxu0
      %v3141 = vadd.f32 0.0, %v3140
      %v3142 = vpop.f32.mrf.mxu0
      %v3143 = vadd.f32 0.0, %v3142
      %3144 = vmatmul.bf16.gmra.mxu0 %v3035
      %v3145 = vpop.f32.mrf.mxu0
      %v3146 = vadd.f32 0.0, %v3145
      %v3147 = vpop.f32.mrf.mxu0
      %v3148 = vadd.f32 0.0, %v3147
      %3149 = vmatmul.bf16.gmra.mxu0 %v3038
      %v3150 = vpop.f32.mrf.mxu0
      %v3151 = vadd.f32 0.0, %v3150
      %v3152 = vpop.f32.mrf.mxu0
      %v3153 = vadd.f32 0.0, %v3152
      %3154 = vmatmul.bf16.gmra.mxu0 %v3041
      %v3155 = vpop.f32.mrf.mxu0
      %v3156 = vadd.f32 0.0, %v3155
      %v3157 = vpop.f32.mrf.mxu0
      %v3158 = vadd.f32 0.0, %v3157
      %3159 = vmatmul.bf16.gmra.mxu0 %v3044
      %v3160 = vpop.f32.mrf.mxu0
      %v3161 = vadd.f32 0.0, %v3160
      %v3162 = vpop.f32.mrf.mxu0
      %v3163 = vadd.f32 0.0, %v3162
      %3164 = vmatmul.bf16.gmra.mxu0 %v3047
      %v3165 = vpop.f32.mrf.mxu0
      %v3166 = vadd.f32 0.0, %v3165
      %v3167 = vpop.f32.mrf.mxu0
      %v3168 = vadd.f32 0.0, %v3167
      %3169 = vmatmul.bf16.gmra.mxu0 %v3050
      %v3170 = vpop.f32.mrf.mxu0
      %v3171 = vadd.f32 0.0, %v3170
      %v3172 = vpop.f32.mrf.mxu0
      %v3173 = vadd.f32 0.0, %v3172
      %3174 = vmatmul.bf16.gmra.mxu0 %v3053
      %v3175 = vpop.f32.mrf.mxu0
      %v3176 = vadd.f32 0.0, %v3175
      %v3177 = vpop.f32.mrf.mxu0
      %v3178 = vadd.f32 0.0, %v3177
      %3179 = vmatmul.bf16.gmra.mxu0 %v3056
      %v3180 = vpop.f32.mrf.mxu0
      %v3181 = vadd.f32 0.0, %v3180
      %v3182 = vpop.f32.mrf.mxu0
      %v3183 = vadd.f32 0.0, %v3182
      %3184 = vmatmul.bf16.gmra.mxu0 %v3059
      %v3185 = vpop.f32.mrf.mxu0
      %v3186 = vadd.f32 0.0, %v3185
      %v3187 = vpop.f32.mrf.mxu0
      %v3188 = vadd.f32 0.0, %v3187
      %3189 = vmatmul.bf16.gmra.mxu0 %v3062
      %v3190 = vpop.f32.mrf.mxu0
      %v3191 = vadd.f32 0.0, %v3190
      %v3192 = vpop.f32.mrf.mxu0
      %v3193 = vadd.f32 0.0, %v3192
      %3194 = vmatmul.bf16.gmra.mxu0 %v3065
      %v3195 = vpop.f32.mrf.mxu0
      %v3196 = vadd.f32 0.0, %v3195
      %v3197 = vpop.f32.mrf.mxu0
      %v3198 = vadd.f32 0.0, %v3197
      %3199 = vmatmul.bf16.gmra.mxu0 %v3068
      %v3200 = vpop.f32.mrf.mxu0
      %v3201 = vadd.f32 0.0, %v3200
      %v3202 = vpop.f32.mrf.mxu0
      %v3203 = vadd.f32 0.0, %v3202
      %3204 = vmatmul.bf16.gmra.mxu0 %v3071
      %v3205 = vpop.f32.mrf.mxu0
      %v3206 = vadd.f32 0.0, %v3205
      %v3207 = vpop.f32.mrf.mxu0
      %v3208 = vadd.f32 0.0, %v3207
      %3209 = vmatmul.bf16.gmra.mxu0 %v3074
      %v3210 = vpop.f32.mrf.mxu0
      %v3211 = vadd.f32 0.0, %v3210
      %v3212 = vpop.f32.mrf.mxu0
      %v3213 = vadd.f32 0.0, %v3212
      %3214 = vmatmul.bf16.gmra.mxu0 %v3077
      %v3215 = vpop.f32.mrf.mxu0
      %v3216 = vadd.f32 0.0, %v3215
      %v3217 = vpop.f32.mrf.mxu0
      %v3218 = vadd.f32 0.0, %v3217
      %3219 = vmatmul.bf16.gmra.mxu0 %v3080
      %v3220 = vpop.f32.mrf.mxu0
      %v3221 = vadd.f32 0.0, %v3220
      %v3222 = vpop.f32.mrf.mxu0
      %v3223 = vadd.f32 0.0, %v3222
      %3224 = vmatmul.bf16.gmra.mxu0 %v3083
      %v3225 = vpop.f32.mrf.mxu0
      %v3226 = vadd.f32 0.0, %v3225
      %v3227 = vpop.f32.mrf.mxu0
      %v3228 = vadd.f32 0.0, %v3227
      %3229 = vmatmul.bf16.gmra.mxu0 %v3086
      %v3230 = vpop.f32.mrf.mxu0
      %v3231 = vadd.f32 0.0, %v3230
      %v3232 = vpop.f32.mrf.mxu0
      %v3233 = vadd.f32 0.0, %v3232
      %3234 = vmatmul.bf16.gmra.mxu0 %v3089
      %v3235 = vpop.f32.mrf.mxu0
      %v3236 = vadd.f32 0.0, %v3235
      %v3237 = vpop.f32.mrf.mxu0
      %v3238 = vadd.f32 0.0, %v3237
      %3239 = vmatmul.bf16.gmra.mxu0 %v3092
      %v3240 = vpop.f32.mrf.mxu0
      %v3241 = vadd.f32 0.0, %v3240
      %v3242 = vpop.f32.mrf.mxu0
      %v3243 = vadd.f32 0.0, %v3242
      %3244 = vmatmul.bf16.gmra.mxu0 %v3095
      %v3245 = vpop.f32.mrf.mxu0
      %v3246 = vadd.f32 0.0, %v3245
      %v3247 = vpop.f32.mrf.mxu0
      %v3248 = vadd.f32 0.0, %v3247
      %3249 = vmatmul.bf16.gmra.mxu0 %v3098
      %v3250 = vpop.f32.mrf.mxu0
      %v3251 = vadd.f32 0.0, %v3250
      %v3252 = vpop.f32.mrf.mxu0
      %v3253 = vadd.f32 0.0, %v3252
      %3254 = vmatmul.bf16.gmra.mxu0 %v3101
      %v3255 = vpop.f32.mrf.mxu0
      %v3256 = vadd.f32 0.0, %v3255
      %v3257 = vpop.f32.mrf.mxu0
      %v3258 = vadd.f32 0.0, %v3257
      %3259 = vmatmul.bf16.gmra.mxu0 %v3104
      %v3260 = vpop.f32.mrf.mxu0
      %v3261 = vadd.f32 0.0, %v3260
      %v3262 = vpop.f32.mrf.mxu0
      %v3263 = vadd.f32 0.0, %v3262
      %3264 = vmatmul.bf16.gmra.mxu0 %v3107
      %v3265 = vpop.f32.mrf.mxu0
      %v3266 = vadd.f32 0.0, %v3265
      %v3267 = vpop.f32.mrf.mxu0
      %v3268 = vadd.f32 0.0, %v3267
      %3269 = vmatmul.bf16.gmra.mxu0 %v3110
      %v3270 = vpop.f32.mrf.mxu0
      %v3271 = vadd.f32 0.0, %v3270
      %v3272 = vpop.f32.mrf.mxu0
      %v3273 = vadd.f32 0.0, %v3272
      %3274 = vmatmul.bf16.gmra.mxu0 %v3113
      %v3275 = vpop.f32.mrf.mxu0
      %v3276 = vadd.f32 0.0, %v3275
      %v3277 = vpop.f32.mrf.mxu0
      %v3278 = vadd.f32 0.0, %v3277
      %3279 = vmatmul.bf16.gmra.mxu0 %v3116
      %v3280 = vpop.f32.mrf.mxu0
      %v3281 = vadd.f32 0.0, %v3280
      %v3282 = vpop.f32.mrf.mxu0
      %v3283 = vadd.f32 0.0, %v3282
      %3284 = vmatmul.bf16.gmra.mxu0 %v3119
      %v3285 = vpop.f32.mrf.mxu0
      %v3286 = vadd.f32 0.0, %v3285
      %v3287 = vpop.f32.mrf.mxu0
      %v3288 = vadd.f32 0.0, %v3287
      %3289 = vdwg.mxu0
      %v3354 = vunpack.c.l.b16 %v2021
      %v3355 = vunpack.c.l.b16 %v2022
      %v3356 = vunpack.c.l.b16 %v2023
      %v3357 = vunpack.c.l.b16 %v2024
      %v3358 = vunpack.c.l.b16 %v2025
      %v3359 = vunpack.c.l.b16 %v2026
      %v3360 = vunpack.c.l.b16 %v2027
      %v3361 = vunpack.c.l.b16 %v2028
      %v3362 = vunpack.c.l.b16 %v2029
      %v3363 = vunpack.c.l.b16 %v2030
      %v3364 = vunpack.c.l.b16 %v2031
      %v3365 = vunpack.c.l.b16 %v2032
      %v3366 = vunpack.c.l.b16 %v2033
      %v3367 = vunpack.c.l.b16 %v2034
      %v3368 = vunpack.c.l.b16 %v2035
      %v3369 = vunpack.c.l.b16 %v2036
      %v3370 = vunpack.c.l.b16 %v2037
      %v3371 = vunpack.c.l.b16 %v2038
      %v3372 = vunpack.c.l.b16 %v2039
      %v3373 = vunpack.c.l.b16 %v2040
      %v3374 = vunpack.c.l.b16 %v2041
      %v3375 = vunpack.c.l.b16 %v2042
      %v3376 = vunpack.c.l.b16 %v2043
      %v3377 = vunpack.c.l.b16 %v2044
      %v3378 = vunpack.c.l.b16 %v2045
      %v3379 = vunpack.c.l.b16 %v2046
      %v3380 = vunpack.c.l.b16 %v2047
      %v3381 = vunpack.c.l.b16 %v2048
      %v3382 = vunpack.c.l.b16 %v2049
      %v3383 = vunpack.c.l.b16 %v2050
      %v3384 = vunpack.c.l.b16 %v2051
      %v3385 = vunpack.c.l.b16 %v2052
      %v3386 = vunpack.c.l.b16 %v2053
      %v3387 = vunpack.c.l.b16 %v2054
      %v3388 = vunpack.c.l.b16 %v2055
      %v3389 = vunpack.c.l.b16 %v2056
      %v3390 = vunpack.c.l.b16 %v2057
      %v3391 = vunpack.c.l.b16 %v2058
      %v3392 = vunpack.c.l.b16 %v2059
      %v3393 = vunpack.c.l.b16 %v2060
      %v3394 = vunpack.c.l.b16 %v2061
      %v3395 = vunpack.c.l.b16 %v2062
      %v3396 = vunpack.c.l.b16 %v2063
      %v3397 = vunpack.c.l.b16 %v2064
      %v3398 = vunpack.c.l.b16 %v2065
      %v3399 = vunpack.c.l.b16 %v2066
      %v3400 = vunpack.c.l.b16 %v2067
      %v3401 = vunpack.c.l.b16 %v2068
      %v3402 = vunpack.c.l.b16 %v2069
      %v3403 = vunpack.c.l.b16 %v2070
      %v3404 = vunpack.c.l.b16 %v2071
      %v3405 = vunpack.c.l.b16 %v2072
      %v3406 = vunpack.c.l.b16 %v2073
      %v3407 = vunpack.c.l.b16 %v2074
      %v3408 = vunpack.c.l.b16 %v2075
      %v3409 = vunpack.c.l.b16 %v2076
      %v3410 = vunpack.c.l.b16 %v2077
      %v3411 = vunpack.c.l.b16 %v2078
      %v3412 = vunpack.c.l.b16 %v2079
      %v3413 = vunpack.c.l.b16 %v2080
      %v3414 = vunpack.c.l.b16 %v2081
      %v3415 = vunpack.c.l.b16 %v2082
      %v3416 = vunpack.c.l.b16 %v2083
      %v3417 = vunpack.c.l.b16 %v2084
      %v3418 = vpack.c.b16 %v3355, %v3354
      %v3419 = vpack.c.b16 %v3357, %v3356
      %v3420 = vpack.c.b16 %v3359, %v3358
      %v3421 = vpack.c.b16 %v3361, %v3360
      %v3422 = vpack.c.b16 %v3363, %v3362
      %v3423 = vpack.c.b16 %v3365, %v3364
      %v3424 = vpack.c.b16 %v3367, %v3366
      %v3425 = vpack.c.b16 %v3369, %v3368
      %v3426 = vpack.c.b16 %v3371, %v3370
      %v3427 = vpack.c.b16 %v3373, %v3372
      %v3428 = vpack.c.b16 %v3375, %v3374
      %v3429 = vpack.c.b16 %v3377, %v3376
      %v3430 = vpack.c.b16 %v3379, %v3378
      %v3431 = vpack.c.b16 %v3381, %v3380
      %v3432 = vpack.c.b16 %v3383, %v3382
      %v3433 = vpack.c.b16 %v3385, %v3384
      %v3434 = vpack.c.b16 %v3387, %v3386
      %v3435 = vpack.c.b16 %v3389, %v3388
      %v3436 = vpack.c.b16 %v3391, %v3390
      %v3437 = vpack.c.b16 %v3393, %v3392
      %v3438 = vpack.c.b16 %v3395, %v3394
      %v3439 = vpack.c.b16 %v3397, %v3396
      %v3440 = vpack.c.b16 %v3399, %v3398
      %v3441 = vpack.c.b16 %v3401, %v3400
      %v3442 = vpack.c.b16 %v3403, %v3402
      %v3443 = vpack.c.b16 %v3405, %v3404
      %v3444 = vpack.c.b16 %v3407, %v3406
      %v3445 = vpack.c.b16 %v3409, %v3408
      %v3446 = vpack.c.b16 %v3411, %v3410
      %v3447 = vpack.c.b16 %v3413, %v3412
      %v3448 = vpack.c.b16 %v3415, %v3414
      %v3449 = vpack.c.b16 %v3417, %v3416
      %v3458 = vunpack.c.l.b16 %v2085
      %v3459 = vunpack.c.l.b16 %v2086
      %v3460 = vunpack.c.l.b16 %v2087
      %v3461 = vunpack.c.l.b16 %v2088
      %v3462 = vunpack.c.l.b16 %v2089
      %v3463 = vunpack.c.l.b16 %v2090
      %v3464 = vunpack.c.l.b16 %v2091
      %v3465 = vunpack.c.l.b16 %v2092
      %v3466 = vpack.c.b16 %v3459, %v3458
      %v3467 = vpack.c.b16 %v3461, %v3460
      %v3468 = vpack.c.b16 %v3463, %v3462
      %v3469 = vpack.c.b16 %v3465, %v3464
      %v3475 = vsel %vm548, %v3418, 0
      %v3478 = vsel %vm548, %v3419, 0
      %v3481 = vsel %vm548, %v3420, 0
      %v3484 = vsel %vm548, %v3421, 0
      %v3487 = vsel %vm548, %v3422, 0
      %v3490 = vsel %vm548, %v3423, 0
      %v3493 = vsel %vm548, %v3424, 0
      %v3496 = vsel %vm548, %v3425, 0
      %v3499 = vsel %vm548, %v3426, 0
      %v3502 = vsel %vm548, %v3427, 0
      %v3505 = vsel %vm548, %v3428, 0
      %v3508 = vsel %vm548, %v3429, 0
      %v3511 = vsel %vm548, %v3430, 0
      %v3514 = vsel %vm548, %v3431, 0
      %v3517 = vsel %vm548, %v3432, 0
      %v3520 = vsel %vm548, %v3433, 0
      %v3523 = vsel %vm548, %v3434, 0
      %v3526 = vsel %vm548, %v3435, 0
      %v3529 = vsel %vm548, %v3436, 0
      %v3532 = vsel %vm548, %v3437, 0
      %v3535 = vsel %vm548, %v3438, 0
      %v3538 = vsel %vm548, %v3439, 0
      %v3541 = vsel %vm548, %v3440, 0
      %v3544 = vsel %vm548, %v3441, 0
      %v3547 = vsel %vm548, %v3442, 0
      %v3550 = vsel %vm548, %v3443, 0
      %v3553 = vsel %vm548, %v3444, 0
      %v3556 = vsel %vm548, %v3445, 0
      %v3559 = vsel %vm548, %v3446, 0
      %v3562 = vsel %vm548, %v3447, 0
      %v3565 = vsel %vm548, %v3448, 0
      %v3568 = vsel %vm548, %v3449, 0
      %3570 = vmatpush.bf16.msra.mxu0 0
      %3571 = vmatpush.bf16.msra.mxu0 0
      %3572 = vmatpush.bf16.msra.mxu0 0
      %3573 = vmatpush.bf16.msra.mxu0 0
      %3574 = vmatpush.bf16.msra.mxu0 %v3469
      %3575 = vmatpush.bf16.msra.mxu0 %v3468
      %3576 = vmatpush.bf16.msra.mxu0 %v3467
      %3577 = vmatpush.bf16.msra.mxu0 %v3466
      %3578 = vmatmul.bf16.gmra.mxu0 %v3475
      %v3579 = vpop.f32.mrf.mxu0
      %v3580 = vadd.f32 %v3131, %v3579
      %v3581 = vpop.f32.mrf.mxu0
      %v3582 = vadd.f32 %v3133, %v3581
      %3583 = vmatmul.bf16.gmra.mxu0 %v3478
      %v3584 = vpop.f32.mrf.mxu0
      %v3585 = vadd.f32 %v3136, %v3584
      %v3586 = vpop.f32.mrf.mxu0
      %v3587 = vadd.f32 %v3138, %v3586
      %3588 = vmatmul.bf16.gmra.mxu0 %v3481
      %v3589 = vpop.f32.mrf.mxu0
      %v3590 = vadd.f32 %v3141, %v3589
      %v3591 = vpop.f32.mrf.mxu0
      %v3592 = vadd.f32 %v3143, %v3591
      %3593 = vmatmul.bf16.gmra.mxu0 %v3484
      %v3594 = vpop.f32.mrf.mxu0
      %v3595 = vadd.f32 %v3146, %v3594
      %v3596 = vpop.f32.mrf.mxu0
      %v3597 = vadd.f32 %v3148, %v3596
      %3598 = vmatmul.bf16.gmra.mxu0 %v3487
      %v3599 = vpop.f32.mrf.mxu0
      %v3600 = vadd.f32 %v3151, %v3599
      %v3601 = vpop.f32.mrf.mxu0
      %v3602 = vadd.f32 %v3153, %v3601
      %3603 = vmatmul.bf16.gmra.mxu0 %v3490
      %v3604 = vpop.f32.mrf.mxu0
      %v3605 = vadd.f32 %v3156, %v3604
      %v3606 = vpop.f32.mrf.mxu0
      %v3607 = vadd.f32 %v3158, %v3606
      %3608 = vmatmul.bf16.gmra.mxu0 %v3493
      %v3609 = vpop.f32.mrf.mxu0
      %v3610 = vadd.f32 %v3161, %v3609
      %v3611 = vpop.f32.mrf.mxu0
      %v3612 = vadd.f32 %v3163, %v3611
      %3613 = vmatmul.bf16.gmra.mxu0 %v3496
      %v3614 = vpop.f32.mrf.mxu0
      %v3615 = vadd.f32 %v3166, %v3614
      %v3616 = vpop.f32.mrf.mxu0
      %v3617 = vadd.f32 %v3168, %v3616
      %3618 = vmatmul.bf16.gmra.mxu0 %v3499
      %v3619 = vpop.f32.mrf.mxu0
      %v3620 = vadd.f32 %v3171, %v3619
      %v3621 = vpop.f32.mrf.mxu0
      %v3622 = vadd.f32 %v3173, %v3621
      %3623 = vmatmul.bf16.gmra.mxu0 %v3502
      %v3624 = vpop.f32.mrf.mxu0
      %v3625 = vadd.f32 %v3176, %v3624
      %v3626 = vpop.f32.mrf.mxu0
      %v3627 = vadd.f32 %v3178, %v3626
      %3628 = vmatmul.bf16.gmra.mxu0 %v3505
      %v3629 = vpop.f32.mrf.mxu0
      %v3630 = vadd.f32 %v3181, %v3629
      %v3631 = vpop.f32.mrf.mxu0
      %v3632 = vadd.f32 %v3183, %v3631
      %3633 = vmatmul.bf16.gmra.mxu0 %v3508
      %v3634 = vpop.f32.mrf.mxu0
      %v3635 = vadd.f32 %v3186, %v3634
      %v3636 = vpop.f32.mrf.mxu0
      %v3637 = vadd.f32 %v3188, %v3636
      %3638 = vmatmul.bf16.gmra.mxu0 %v3511
      %v3639 = vpop.f32.mrf.mxu0
      %v3640 = vadd.f32 %v3191, %v3639
      %v3641 = vpop.f32.mrf.mxu0
      %v3642 = vadd.f32 %v3193, %v3641
      %3643 = vmatmul.bf16.gmra.mxu0 %v3514
      %v3644 = vpop.f32.mrf.mxu0
      %v3645 = vadd.f32 %v3196, %v3644
      %v3646 = vpop.f32.mrf.mxu0
      %v3647 = vadd.f32 %v3198, %v3646
      %3648 = vmatmul.bf16.gmra.mxu0 %v3517
      %v3649 = vpop.f32.mrf.mxu0
      %v3650 = vadd.f32 %v3201, %v3649
      %v3651 = vpop.f32.mrf.mxu0
      %v3652 = vadd.f32 %v3203, %v3651
      %3653 = vmatmul.bf16.gmra.mxu0 %v3520
      %v3654 = vpop.f32.mrf.mxu0
      %v3655 = vadd.f32 %v3206, %v3654
      %v3656 = vpop.f32.mrf.mxu0
      %v3657 = vadd.f32 %v3208, %v3656
      %3658 = vmatmul.bf16.gmra.mxu0 %v3523
      %v3659 = vpop.f32.mrf.mxu0
      %v3660 = vadd.f32 %v3211, %v3659
      %v3661 = vpop.f32.mrf.mxu0
      %v3662 = vadd.f32 %v3213, %v3661
      %3663 = vmatmul.bf16.gmra.mxu0 %v3526
      %v3664 = vpop.f32.mrf.mxu0
      %v3665 = vadd.f32 %v3216, %v3664
      %v3666 = vpop.f32.mrf.mxu0
      %v3667 = vadd.f32 %v3218, %v3666
      %3668 = vmatmul.bf16.gmra.mxu0 %v3529
      %v3669 = vpop.f32.mrf.mxu0
      %v3670 = vadd.f32 %v3221, %v3669
      %v3671 = vpop.f32.mrf.mxu0
      %v3672 = vadd.f32 %v3223, %v3671
      %3673 = vmatmul.bf16.gmra.mxu0 %v3532
      %v3674 = vpop.f32.mrf.mxu0
      %v3675 = vadd.f32 %v3226, %v3674
      %v3676 = vpop.f32.mrf.mxu0
      %v3677 = vadd.f32 %v3228, %v3676
      %3678 = vmatmul.bf16.gmra.mxu0 %v3535
      %v3679 = vpop.f32.mrf.mxu0
      %v3680 = vadd.f32 %v3231, %v3679
      %v3681 = vpop.f32.mrf.mxu0
      %v3682 = vadd.f32 %v3233, %v3681
      %3683 = vmatmul.bf16.gmra.mxu0 %v3538
      %v3684 = vpop.f32.mrf.mxu0
      %v3685 = vadd.f32 %v3236, %v3684
      %v3686 = vpop.f32.mrf.mxu0
      %v3687 = vadd.f32 %v3238, %v3686
      %3688 = vmatmul.bf16.gmra.mxu0 %v3541
      %v3689 = vpop.f32.mrf.mxu0
      %v3690 = vadd.f32 %v3241, %v3689
      %v3691 = vpop.f32.mrf.mxu0
      %v3692 = vadd.f32 %v3243, %v3691
      %3693 = vmatmul.bf16.gmra.mxu0 %v3544
      %v3694 = vpop.f32.mrf.mxu0
      %v3695 = vadd.f32 %v3246, %v3694
      %v3696 = vpop.f32.mrf.mxu0
      %v3697 = vadd.f32 %v3248, %v3696
      %3698 = vmatmul.bf16.gmra.mxu0 %v3547
      %v3699 = vpop.f32.mrf.mxu0
      %v3700 = vadd.f32 %v3251, %v3699
      %v3701 = vpop.f32.mrf.mxu0
      %v3702 = vadd.f32 %v3253, %v3701
      %3703 = vmatmul.bf16.gmra.mxu0 %v3550
      %v3704 = vpop.f32.mrf.mxu0
      %v3705 = vadd.f32 %v3256, %v3704
      %v3706 = vpop.f32.mrf.mxu0
      %v3707 = vadd.f32 %v3258, %v3706
      %3708 = vmatmul.bf16.gmra.mxu0 %v3553
      %v3709 = vpop.f32.mrf.mxu0
      %v3710 = vadd.f32 %v3261, %v3709
      %v3711 = vpop.f32.mrf.mxu0
      %v3712 = vadd.f32 %v3263, %v3711
      %3713 = vmatmul.bf16.gmra.mxu0 %v3556
      %v3714 = vpop.f32.mrf.mxu0
      %v3715 = vadd.f32 %v3266, %v3714
      %v3716 = vpop.f32.mrf.mxu0
      %v3717 = vadd.f32 %v3268, %v3716
      %3718 = vmatmul.bf16.gmra.mxu0 %v3559
      %v3719 = vpop.f32.mrf.mxu0
      %v3720 = vadd.f32 %v3271, %v3719
      %v3721 = vpop.f32.mrf.mxu0
      %v3722 = vadd.f32 %v3273, %v3721
      %3723 = vmatmul.bf16.gmra.mxu0 %v3562
      %v3724 = vpop.f32.mrf.mxu0
      %v3725 = vadd.f32 %v3276, %v3724
      %v3726 = vpop.f32.mrf.mxu0
      %v3727 = vadd.f32 %v3278, %v3726
      %3728 = vmatmul.bf16.gmra.mxu0 %v3565
      %v3729 = vpop.f32.mrf.mxu0
      %v3730 = vadd.f32 %v3281, %v3729
      %v3731 = vpop.f32.mrf.mxu0
      %v3732 = vadd.f32 %v3283, %v3731
      %3733 = vmatmul.bf16.gmra.mxu0 %v3568
      %v3734 = vpop.f32.mrf.mxu0
      %v3735 = vadd.f32 %v3286, %v3734
      %v3736 = vpop.f32.mrf.mxu0
      %v3737 = vadd.f32 %v3288, %v3736
      %3738 = vdwg.mxu0
      %v3739 = vld [vmem:[#allocation2] sm:$0xe]
      %v3740 = vld [vmem:[#allocation2 + $0xc] sm:$0xe]
      %v3741 = vld [vmem:[#allocation2 + $0x18] sm:$0xe]
      %v3742 = vld [vmem:[#allocation2 + $0x24] sm:$0xe]
      %v3743 = vld [vmem:[#allocation2 + $0x30] sm:$0xe]
      %v3744 = vld [vmem:[#allocation2 + $0x3c] sm:$0xe]
      %v3745 = vld [vmem:[#allocation2 + $0x48] sm:$0xe]
      %v3746 = vld [vmem:[#allocation2 + $0x54] sm:$0xe]
      %v3747 = vld [vmem:[#allocation2 + $0x60] sm:$0xe]
      %v3748 = vld [vmem:[#allocation2 + $0x6c] sm:$0xe]
      %v3749 = vld [vmem:[#allocation2 + $0x78] sm:$0xe]
      %v3750 = vld [vmem:[#allocation2 + $0x84] sm:$0xe]
      %v3751 = vld [vmem:[#allocation2 + $0x90] sm:$0xe]
      %v3752 = vld [vmem:[#allocation2 + $0x9c] sm:$0xe]
      %v3753 = vld [vmem:[#allocation2 + $0xa8] sm:$0xe]
      %v3754 = vld [vmem:[#allocation2 + $0xb4] sm:$0xe]
      %v3755 = vld [vmem:[#allocation2 + $0xd8] sm:$0xe]
      %v3756 = vld [vmem:[#allocation2 + $0xe4] sm:$0xe]
      %v3757 = vld [vmem:[#allocation2 + $0xf0] sm:$0xe]
      %v3758 = vld [vmem:[#allocation2 + $0xfc] sm:$0xe]
      %v3759 = vld [vmem:[#allocation2 + $0x108] sm:$0xe]
      %v3760 = vld [vmem:[#allocation2 + $0x114] sm:$0xe]
      %v3761 = vld [vmem:[#allocation2 + $0x120] sm:$0xe]
      %v3762 = vld [vmem:[#allocation2 + $0x12c] sm:$0xe]
      %v3763 = vld [vmem:[#allocation2 + $0x138] sm:$0xe]
      %v3764 = vld [vmem:[#allocation2 + $0x144] sm:$0xe]
      %v3765 = vld [vmem:[#allocation2 + $0x150] sm:$0xe]
      %v3766 = vld [vmem:[#allocation2 + $0x15c] sm:$0xe]
      %v3767 = vld [vmem:[#allocation2 + $0x168] sm:$0xe]
      %v3768 = vld [vmem:[#allocation2 + $0x174] sm:$0xe]
      %v3769 = vld [vmem:[#allocation2 + $0x180] sm:$0xe]
      %v3770 = vld [vmem:[#allocation2 + $0x18c] sm:$0xe]
      %vm3835 = vcmask 1042432
      %vm3836 = vcmask 1046532
      %vm3837 = vmor %vm3835, %vm3836
      %v3838 = vrot.slane %v3739, 5
      %v3839 = vrot.slane %v3838, 4
      %v3840 = vrot.slane %v2022, 5
      %v3841 = vsel %vm3837, %v3839, %v3840
      %v3842 = vrot.slane %v3840, 4
      %v3843 = vrot.slane %v2093, 5
      %v3844 = vsel %vm3837, %v3842, %v3843
      %v3845 = vrot.slane %v3740, 5
      %v3846 = vrot.slane %v3845, 4
      %v3847 = vrot.slane %v2024, 5
      %v3848 = vsel %vm3837, %v3846, %v3847
      %v3849 = vrot.slane %v3847, 4
      %v3850 = vrot.slane %v2094, 5
      %v3851 = vsel %vm3837, %v3849, %v3850
      %v3852 = vrot.slane %v3741, 5
      %v3853 = vrot.slane %v3852, 4
      %v3854 = vrot.slane %v2026, 5
      %v3855 = vsel %vm3837, %v3853, %v3854
      %v3856 = vrot.slane %v3854, 4
      %v3857 = vrot.slane %v2095, 5
      %v3858 = vsel %vm3837, %v3856, %v3857
      %v3859 = vrot.slane %v3742, 5
      %v3860 = vrot.slane %v3859, 4
      %v3861 = vrot.slane %v2028, 5
      %v3862 = vsel %vm3837, %v3860, %v3861
      %v3863 = vrot.slane %v3861, 4
      %v3864 = vrot.slane %v2096, 5
      %v3865 = vsel %vm3837, %v3863, %v3864
      %v3866 = vrot.slane %v3743, 5
      %v3867 = vrot.slane %v3866, 4
      %v3868 = vrot.slane %v2030, 5
      %v3869 = vsel %vm3837, %v3867, %v3868
      %v3870 = vrot.slane %v3868, 4
      %v3871 = vrot.slane %v2097, 5
      %v3872 = vsel %vm3837, %v3870, %v3871
      %v3873 = vrot.slane %v3744, 5
      %v3874 = vrot.slane %v3873, 4
      %v3875 = vrot.slane %v2032, 5
      %v3876 = vsel %vm3837, %v3874, %v3875
      %v3877 = vrot.slane %v3875, 4
      %v3878 = vrot.slane %v2098, 5
      %v3879 = vsel %vm3837, %v3877, %v3878
      %v3880 = vrot.slane %v3745, 5
      %v3881 = vrot.slane %v3880, 4
      %v3882 = vrot.slane %v2034, 5
      %v3883 = vsel %vm3837, %v3881, %v3882
      %v3884 = vrot.slane %v3882, 4
      %v3885 = vrot.slane %v2099, 5
      %v3886 = vsel %vm3837, %v3884, %v3885
      %v3887 = vrot.slane %v3746, 5
      %v3888 = vrot.slane %v3887, 4
      %v3889 = vrot.slane %v2036, 5
      %v3890 = vsel %vm3837, %v3888, %v3889
      %v3891 = vrot.slane %v3889, 4
      %v3892 = vrot.slane %v2100, 5
      %v3893 = vsel %vm3837, %v3891, %v3892
      %v3894 = vrot.slane %v3747, 5
      %v3895 = vrot.slane %v3894, 4
      %v3896 = vrot.slane %v2038, 5
      %v3897 = vsel %vm3837, %v3895, %v3896
      %v3898 = vrot.slane %v3896, 4
      %v3899 = vrot.slane %v2101, 5
      %v3900 = vsel %vm3837, %v3898, %v3899
      %v3901 = vrot.slane %v3748, 5
      %v3902 = vrot.slane %v3901, 4
      %v3903 = vrot.slane %v2040, 5
      %v3904 = vsel %vm3837, %v3902, %v3903
      %v3905 = vrot.slane %v3903, 4
      %v3906 = vrot.slane %v2102, 5
      %v3907 = vsel %vm3837, %v3905, %v3906
      %v3908 = vrot.slane %v3749, 5
      %v3909 = vrot.slane %v3908, 4
      %v3910 = vrot.slane %v2042, 5
      %v3911 = vsel %vm3837, %v3909, %v3910
      %v3912 = vrot.slane %v3910, 4
      %v3913 = vrot.slane %v2103, 5
      %v3914 = vsel %vm3837, %v3912, %v3913
      %v3915 = vrot.slane %v3750, 5
      %v3916 = vrot.slane %v3915, 4
      %v3917 = vrot.slane %v2044, 5
      %v3918 = vsel %vm3837, %v3916, %v3917
      %v3919 = vrot.slane %v3917, 4
      %v3920 = vrot.slane %v2104, 5
      %v3921 = vsel %vm3837, %v3919, %v3920
      %v3922 = vrot.slane %v3751, 5
      %v3923 = vrot.slane %v3922, 4
      %v3924 = vrot.slane %v2046, 5
      %v3925 = vsel %vm3837, %v3923, %v3924
      %v3926 = vrot.slane %v3924, 4
      %v3927 = vrot.slane %v2105, 5
      %v3928 = vsel %vm3837, %v3926, %v3927
      %v3929 = vrot.slane %v3752, 5
      %v3930 = vrot.slane %v3929, 4
      %v3931 = vrot.slane %v2048, 5
      %v3932 = vsel %vm3837, %v3930, %v3931
      %v3933 = vrot.slane %v3931, 4
      %v3934 = vrot.slane %v2106, 5
      %v3935 = vsel %vm3837, %v3933, %v3934
      %v3936 = vrot.slane %v3753, 5
      %v3937 = vrot.slane %v3936, 4
      %v3938 = vrot.slane %v2050, 5
      %v3939 = vsel %vm3837, %v3937, %v3938
      %v3940 = vrot.slane %v3938, 4
      %v3941 = vrot.slane %v2107, 5
      %v3942 = vsel %vm3837, %v3940, %v3941
      %v3943 = vrot.slane %v3754, 5
      %v3944 = vrot.slane %v3943, 4
      %v3945 = vrot.slane %v2052, 5
      %v3946 = vsel %vm3837, %v3944, %v3945
      %v3947 = vrot.slane %v3945, 4
      %v3948 = vrot.slane %v2108, 5
      %v3949 = vsel %vm3837, %v3947, %v3948
      %v3950 = vrot.slane %v3755, 5
      %v3951 = vrot.slane %v3950, 4
      %v3952 = vrot.slane %v2054, 5
      %v3953 = vsel %vm3837, %v3951, %v3952
      %v3954 = vrot.slane %v3952, 4
      %v3955 = vrot.slane %v2109, 5
      %v3956 = vsel %vm3837, %v3954, %v3955
      %v3957 = vrot.slane %v3756, 5
      %v3958 = vrot.slane %v3957, 4
      %v3959 = vrot.slane %v2056, 5
      %v3960 = vsel %vm3837, %v3958, %v3959
      %v3961 = vrot.slane %v3959, 4
      %v3962 = vrot.slane %v2110, 5
      %v3963 = vsel %vm3837, %v3961, %v3962
      %v3964 = vrot.slane %v3757, 5
      %v3965 = vrot.slane %v3964, 4
      %v3966 = vrot.slane %v2058, 5
      %v3967 = vsel %vm3837, %v3965, %v3966
      %v3968 = vrot.slane %v3966, 4
      %v3969 = vrot.slane %v2111, 5
      %v3970 = vsel %vm3837, %v3968, %v3969
      %v3971 = vrot.slane %v3758, 5
      %v3972 = vrot.slane %v3971, 4
      %v3973 = vrot.slane %v2060, 5
      %v3974 = vsel %vm3837, %v3972, %v3973
      %v3975 = vrot.slane %v3973, 4
      %v3976 = vrot.slane %v2112, 5
      %v3977 = vsel %vm3837, %v3975, %v3976
      %v3978 = vrot.slane %v3759, 5
      %v3979 = vrot.slane %v3978, 4
      %v3980 = vrot.slane %v2062, 5
      %v3981 = vsel %vm3837, %v3979, %v3980
      %v3982 = vrot.slane %v3980, 4
      %v3983 = vrot.slane %v2113, 5
      %v3984 = vsel %vm3837, %v3982, %v3983
      %v3985 = vrot.slane %v3760, 5
      %v3986 = vrot.slane %v3985, 4
      %v3987 = vrot.slane %v2064, 5
      %v3988 = vsel %vm3837, %v3986, %v3987
      %v3989 = vrot.slane %v3987, 4
      %v3990 = vrot.slane %v2114, 5
      %v3991 = vsel %vm3837, %v3989, %v3990
      %v3992 = vrot.slane %v3761, 5
      %v3993 = vrot.slane %v3992, 4
      %v3994 = vrot.slane %v2066, 5
      %v3995 = vsel %vm3837, %v3993, %v3994
      %v3996 = vrot.slane %v3994, 4
      %v3997 = vrot.slane %v2115, 5
      %v3998 = vsel %vm3837, %v3996, %v3997
      %v3999 = vrot.slane %v3762, 5
      %v4000 = vrot.slane %v3999, 4
      %v4001 = vrot.slane %v2068, 5
      %v4002 = vsel %vm3837, %v4000, %v4001
      %v4003 = vrot.slane %v4001, 4
      %v4004 = vrot.slane %v2116, 5
      %v4005 = vsel %vm3837, %v4003, %v4004
      %v4006 = vrot.slane %v3763, 5
      %v4007 = vrot.slane %v4006, 4
      %v4008 = vrot.slane %v2070, 5
      %v4009 = vsel %vm3837, %v4007, %v4008
      %v4010 = vrot.slane %v4008, 4
      %v4011 = vrot.slane %v2117, 5
      %v4012 = vsel %vm3837, %v4010, %v4011
      %v4013 = vrot.slane %v3764, 5
      %v4014 = vrot.slane %v4013, 4
      %v4015 = vrot.slane %v2072, 5
      %v4016 = vsel %vm3837, %v4014, %v4015
      %v4017 = vrot.slane %v4015, 4
      %v4018 = vrot.slane %v2118, 5
      %v4019 = vsel %vm3837, %v4017, %v4018
      %v4020 = vrot.slane %v3765, 5
      %v4021 = vrot.slane %v4020, 4
      %v4022 = vrot.slane %v2074, 5
      %v4023 = vsel %vm3837, %v4021, %v4022
      %v4024 = vrot.slane %v4022, 4
      %v4025 = vrot.slane %v2119, 5
      %v4026 = vsel %vm3837, %v4024, %v4025
      %v4027 = vrot.slane %v3766, 5
      %v4028 = vrot.slane %v4027, 4
      %v4029 = vrot.slane %v2076, 5
      %v4030 = vsel %vm3837, %v4028, %v4029
      %v4031 = vrot.slane %v4029, 4
      %v4032 = vrot.slane %v2120, 5
      %v4033 = vsel %vm3837, %v4031, %v4032
      %v4034 = vrot.slane %v3767, 5
      %v4035 = vrot.slane %v4034, 4
      %v4036 = vrot.slane %v2078, 5
      %v4037 = vsel %vm3837, %v4035, %v4036
      %v4038 = vrot.slane %v4036, 4
      %v4039 = vrot.slane %v2121, 5
      %v4040 = vsel %vm3837, %v4038, %v4039
      %v4041 = vrot.slane %v3768, 5
      %v4042 = vrot.slane %v4041, 4
      %v4043 = vrot.slane %v2080, 5
      %v4044 = vsel %vm3837, %v4042, %v4043
      %v4045 = vrot.slane %v4043, 4
      %v4046 = vrot.slane %v2122, 5
      %v4047 = vsel %vm3837, %v4045, %v4046
      %v4048 = vrot.slane %v3769, 5
      %v4049 = vrot.slane %v4048, 4
      %v4050 = vrot.slane %v2082, 5
      %v4051 = vsel %vm3837, %v4049, %v4050
      %v4052 = vrot.slane %v4050, 4
      %v4053 = vrot.slane %v2123, 5
      %v4054 = vsel %vm3837, %v4052, %v4053
      %v4055 = vrot.slane %v3770, 5
      %v4056 = vrot.slane %v4055, 4
      %v4057 = vrot.slane %v2084, 5
      %v4058 = vsel %vm3837, %v4056, %v4057
      %v4059 = vrot.slane %v4057, 4
      %v4060 = vrot.slane %v2124, 5
      %v4061 = vsel %vm3837, %v4059, %v4060
      %s4062 = scalar_lea.vmem %s3, 64
      %v4063 = vld [vmem:[%s4062] sm:$0xf]
      %v4064 = vld [vmem:[%s4062 + $0x4] sm:$0xf]
      %v4065 = vld [vmem:[%s4062 + $0x8] sm:$0xf]
      %v4066 = vld [vmem:[%s4062 + $0xc] sm:$0xf]
      %v4067 = vld [vmem:[%s4062 + $0x10] sm:$0xf]
      %v4068 = vld [vmem:[%s4062 + $0x14] sm:$0xf]
      %v4069 = vld [vmem:[%s4062 + $0x18] sm:$0xf]
      %v4070 = vld [vmem:[%s4062 + $0x1c] sm:$0xf]
      %v4071 = vunpack.c.l.b16 %v3841
      %v4072 = vunpack.c.l.b16 %v3844
      %v4073 = vunpack.c.l.b16 %v3848
      %v4074 = vunpack.c.l.b16 %v3851
      %v4075 = vunpack.c.l.b16 %v3855
      %v4076 = vunpack.c.l.b16 %v3858
      %v4077 = vunpack.c.l.b16 %v3862
      %v4078 = vunpack.c.l.b16 %v3865
      %v4079 = vunpack.c.l.b16 %v3869
      %v4080 = vunpack.c.l.b16 %v3872
      %v4081 = vunpack.c.l.b16 %v3876
      %v4082 = vunpack.c.l.b16 %v3879
      %v4083 = vunpack.c.l.b16 %v3883
      %v4084 = vunpack.c.l.b16 %v3886
      %v4085 = vunpack.c.l.b16 %v3890
      %v4086 = vunpack.c.l.b16 %v3893
      %v4087 = vunpack.c.l.b16 %v3897
      %v4088 = vunpack.c.l.b16 %v3900
      %v4089 = vunpack.c.l.b16 %v3904
      %v4090 = vunpack.c.l.b16 %v3907
      %v4091 = vunpack.c.l.b16 %v3911
      %v4092 = vunpack.c.l.b16 %v3914
      %v4093 = vunpack.c.l.b16 %v3918
      %v4094 = vunpack.c.l.b16 %v3921
      %v4095 = vunpack.c.l.b16 %v3925
      %v4096 = vunpack.c.l.b16 %v3928
      %v4097 = vunpack.c.l.b16 %v3932
      %v4098 = vunpack.c.l.b16 %v3935
      %v4099 = vunpack.c.l.b16 %v3939
      %v4100 = vunpack.c.l.b16 %v3942
      %v4101 = vunpack.c.l.b16 %v3946
      %v4102 = vunpack.c.l.b16 %v3949
      %v4103 = vunpack.c.l.b16 %v3953
      %v4104 = vunpack.c.l.b16 %v3956
      %v4105 = vunpack.c.l.b16 %v3960
      %v4106 = vunpack.c.l.b16 %v3963
      %v4107 = vunpack.c.l.b16 %v3967
      %v4108 = vunpack.c.l.b16 %v3970
      %v4109 = vunpack.c.l.b16 %v3974
      %v4110 = vunpack.c.l.b16 %v3977
      %v4111 = vunpack.c.l.b16 %v3981
      %v4112 = vunpack.c.l.b16 %v3984
      %v4113 = vunpack.c.l.b16 %v3988
      %v4114 = vunpack.c.l.b16 %v3991
      %v4115 = vunpack.c.l.b16 %v3995
      %v4116 = vunpack.c.l.b16 %v3998
      %v4117 = vunpack.c.l.b16 %v4002
      %v4118 = vunpack.c.l.b16 %v4005
      %v4119 = vunpack.c.l.b16 %v4009
      %v4120 = vunpack.c.l.b16 %v4012
      %v4121 = vunpack.c.l.b16 %v4016
      %v4122 = vunpack.c.l.b16 %v4019
      %v4123 = vunpack.c.l.b16 %v4023
      %v4124 = vunpack.c.l.b16 %v4026
      %v4125 = vunpack.c.l.b16 %v4030
      %v4126 = vunpack.c.l.b16 %v4033
      %v4127 = vunpack.c.l.b16 %v4037
      %v4128 = vunpack.c.l.b16 %v4040
      %v4129 = vunpack.c.l.b16 %v4044
      %v4130 = vunpack.c.l.b16 %v4047
      %v4131 = vunpack.c.l.b16 %v4051
      %v4132 = vunpack.c.l.b16 %v4054
      %v4133 = vunpack.c.l.b16 %v4058
      %v4134 = vunpack.c.l.b16 %v4061
      %v4135 = vpack.c.b16 %v4072, %v4071
      %v4136 = vpack.c.b16 %v4074, %v4073
      %v4137 = vpack.c.b16 %v4076, %v4075
      %v4138 = vpack.c.b16 %v4078, %v4077
      %v4139 = vpack.c.b16 %v4080, %v4079
      %v4140 = vpack.c.b16 %v4082, %v4081
      %v4141 = vpack.c.b16 %v4084, %v4083
      %v4142 = vpack.c.b16 %v4086, %v4085
      %v4143 = vpack.c.b16 %v4088, %v4087
      %v4144 = vpack.c.b16 %v4090, %v4089
      %v4145 = vpack.c.b16 %v4092, %v4091
      %v4146 = vpack.c.b16 %v4094, %v4093
      %v4147 = vpack.c.b16 %v4096, %v4095
      %v4148 = vpack.c.b16 %v4098, %v4097
      %v4149 = vpack.c.b16 %v4100, %v4099
      %v4150 = vpack.c.b16 %v4102, %v4101
      %v4151 = vpack.c.b16 %v4104, %v4103
      %v4152 = vpack.c.b16 %v4106, %v4105
      %v4153 = vpack.c.b16 %v4108, %v4107
      %v4154 = vpack.c.b16 %v4110, %v4109
      %v4155 = vpack.c.b16 %v4112, %v4111
      %v4156 = vpack.c.b16 %v4114, %v4113
      %v4157 = vpack.c.b16 %v4116, %v4115
      %v4158 = vpack.c.b16 %v4118, %v4117
      %v4159 = vpack.c.b16 %v4120, %v4119
      %v4160 = vpack.c.b16 %v4122, %v4121
      %v4161 = vpack.c.b16 %v4124, %v4123
      %v4162 = vpack.c.b16 %v4126, %v4125
      %v4163 = vpack.c.b16 %v4128, %v4127
      %v4164 = vpack.c.b16 %v4130, %v4129
      %v4165 = vpack.c.b16 %v4132, %v4131
      %v4166 = vpack.c.b16 %v4134, %v4133
      %v4175 = vunpack.c.l.b16 %v4063
      %v4176 = vunpack.c.l.b16 %v4064
      %v4177 = vunpack.c.l.b16 %v4065
      %v4178 = vunpack.c.l.b16 %v4066
      %v4179 = vunpack.c.l.b16 %v4067
      %v4180 = vunpack.c.l.b16 %v4068
      %v4181 = vunpack.c.l.b16 %v4069
      %v4182 = vunpack.c.l.b16 %v4070
      %v4183 = vpack.c.b16 %v4176, %v4175
      %v4184 = vpack.c.b16 %v4178, %v4177
      %v4185 = vpack.c.b16 %v4180, %v4179
      %v4186 = vpack.c.b16 %v4182, %v4181
      %v4192 = vsel %vm548, %v4135, 0
      %v4195 = vsel %vm548, %v4136, 0
      %v4198 = vsel %vm548, %v4137, 0
      %v4201 = vsel %vm548, %v4138, 0
      %v4204 = vsel %vm548, %v4139, 0
      %v4207 = vsel %vm548, %v4140, 0
      %v4210 = vsel %vm548, %v4141, 0
      %v4213 = vsel %vm548, %v4142, 0
      %v4216 = vsel %vm548, %v4143, 0
      %v4219 = vsel %vm548, %v4144, 0
      %v4222 = vsel %vm548, %v4145, 0
      %v4225 = vsel %vm548, %v4146, 0
      %v4228 = vsel %vm548, %v4147, 0
      %v4231 = vsel %vm548, %v4148, 0
      %v4234 = vsel %vm548, %v4149, 0
      %v4237 = vsel %vm548, %v4150, 0
      %v4240 = vsel %vm548, %v4151, 0
      %v4243 = vsel %vm548, %v4152, 0
      %v4246 = vsel %vm548, %v4153, 0
      %v4249 = vsel %vm548, %v4154, 0
      %v4252 = vsel %vm548, %v4155, 0
      %v4255 = vsel %vm548, %v4156, 0
      %v4258 = vsel %vm548, %v4157, 0
      %v4261 = vsel %vm548, %v4158, 0
      %v4264 = vsel %vm548, %v4159, 0
      %v4267 = vsel %vm548, %v4160, 0
      %v4270 = vsel %vm548, %v4161, 0
      %v4273 = vsel %vm548, %v4162, 0
      %v4276 = vsel %vm548, %v4163, 0
      %v4279 = vsel %vm548, %v4164, 0
      %v4282 = vsel %vm548, %v4165, 0
      %v4285 = vsel %vm548, %v4166, 0
      %4287 = vmatpush.bf16.msra.mxu0 0
      %4288 = vmatpush.bf16.msra.mxu0 0
      %4289 = vmatpush.bf16.msra.mxu0 0
      %4290 = vmatpush.bf16.msra.mxu0 0
      %4291 = vmatpush.bf16.msra.mxu0 %v4186
      %4292 = vmatpush.bf16.msra.mxu0 %v4185
      %4293 = vmatpush.bf16.msra.mxu0 %v4184
      %4294 = vmatpush.bf16.msra.mxu0 %v4183
      %4295 = vmatmul.bf16.gmra.mxu0 %v4192
      %v4296 = vpop.f32.mrf.mxu0
      %v4297 = vadd.f32 0.0, %v4296
      %v4298 = vpop.f32.mrf.mxu0
      %v4299 = vadd.f32 0.0, %v4298
      %4300 = vmatmul.bf16.gmra.mxu0 %v4195
      %v4301 = vpop.f32.mrf.mxu0
      %v4302 = vadd.f32 0.0, %v4301
      %v4303 = vpop.f32.mrf.mxu0
      %v4304 = vadd.f32 0.0, %v4303
      %4305 = vmatmul.bf16.gmra.mxu0 %v4198
      %v4306 = vpop.f32.mrf.mxu0
      %v4307 = vadd.f32 0.0, %v4306
      %v4308 = vpop.f32.mrf.mxu0
      %v4309 = vadd.f32 0.0, %v4308
      %4310 = vmatmul.bf16.gmra.mxu0 %v4201
      %v4311 = vpop.f32.mrf.mxu0
      %v4312 = vadd.f32 0.0, %v4311
      %v4313 = vpop.f32.mrf.mxu0
      %v4314 = vadd.f32 0.0, %v4313
      %4315 = vmatmul.bf16.gmra.mxu0 %v4204
      %v4316 = vpop.f32.mrf.mxu0
      %v4317 = vadd.f32 0.0, %v4316
      %v4318 = vpop.f32.mrf.mxu0
      %v4319 = vadd.f32 0.0, %v4318
      %4320 = vmatmul.bf16.gmra.mxu0 %v4207
      %v4321 = vpop.f32.mrf.mxu0
      %v4322 = vadd.f32 0.0, %v4321
      %v4323 = vpop.f32.mrf.mxu0
      %v4324 = vadd.f32 0.0, %v4323
      %4325 = vmatmul.bf16.gmra.mxu0 %v4210
      %v4326 = vpop.f32.mrf.mxu0
      %v4327 = vadd.f32 0.0, %v4326
      %v4328 = vpop.f32.mrf.mxu0
      %v4329 = vadd.f32 0.0, %v4328
      %4330 = vmatmul.bf16.gmra.mxu0 %v4213
      %v4331 = vpop.f32.mrf.mxu0
      %v4332 = vadd.f32 0.0, %v4331
      %v4333 = vpop.f32.mrf.mxu0
      %v4334 = vadd.f32 0.0, %v4333
      %4335 = vmatmul.bf16.gmra.mxu0 %v4216
      %v4336 = vpop.f32.mrf.mxu0
      %v4337 = vadd.f32 0.0, %v4336
      %v4338 = vpop.f32.mrf.mxu0
      %v4339 = vadd.f32 0.0, %v4338
      %4340 = vmatmul.bf16.gmra.mxu0 %v4219
      %v4341 = vpop.f32.mrf.mxu0
      %v4342 = vadd.f32 0.0, %v4341
      %v4343 = vpop.f32.mrf.mxu0
      %v4344 = vadd.f32 0.0, %v4343
      %4345 = vmatmul.bf16.gmra.mxu0 %v4222
      %v4346 = vpop.f32.mrf.mxu0
      %v4347 = vadd.f32 0.0, %v4346
      %v4348 = vpop.f32.mrf.mxu0
      %v4349 = vadd.f32 0.0, %v4348
      %4350 = vmatmul.bf16.gmra.mxu0 %v4225
      %v4351 = vpop.f32.mrf.mxu0
      %v4352 = vadd.f32 0.0, %v4351
      %v4353 = vpop.f32.mrf.mxu0
      %v4354 = vadd.f32 0.0, %v4353
      %4355 = vmatmul.bf16.gmra.mxu0 %v4228
      %v4356 = vpop.f32.mrf.mxu0
      %v4357 = vadd.f32 0.0, %v4356
      %v4358 = vpop.f32.mrf.mxu0
      %v4359 = vadd.f32 0.0, %v4358
      %4360 = vmatmul.bf16.gmra.mxu0 %v4231
      %v4361 = vpop.f32.mrf.mxu0
      %v4362 = vadd.f32 0.0, %v4361
      %v4363 = vpop.f32.mrf.mxu0
      %v4364 = vadd.f32 0.0, %v4363
      %4365 = vmatmul.bf16.gmra.mxu0 %v4234
      %v4366 = vpop.f32.mrf.mxu0
      %v4367 = vadd.f32 0.0, %v4366
      %v4368 = vpop.f32.mrf.mxu0
      %v4369 = vadd.f32 0.0, %v4368
      %4370 = vmatmul.bf16.gmra.mxu0 %v4237
      %v4371 = vpop.f32.mrf.mxu0
      %v4372 = vadd.f32 0.0, %v4371
      %v4373 = vpop.f32.mrf.mxu0
      %v4374 = vadd.f32 0.0, %v4373
      %4375 = vmatmul.bf16.gmra.mxu0 %v4240
      %v4376 = vpop.f32.mrf.mxu0
      %v4377 = vadd.f32 0.0, %v4376
      %v4378 = vpop.f32.mrf.mxu0
      %v4379 = vadd.f32 0.0, %v4378
      %4380 = vmatmul.bf16.gmra.mxu0 %v4243
      %v4381 = vpop.f32.mrf.mxu0
      %v4382 = vadd.f32 0.0, %v4381
      %v4383 = vpop.f32.mrf.mxu0
      %v4384 = vadd.f32 0.0, %v4383
      %4385 = vmatmul.bf16.gmra.mxu0 %v4246
      %v4386 = vpop.f32.mrf.mxu0
      %v4387 = vadd.f32 0.0, %v4386
      %v4388 = vpop.f32.mrf.mxu0
      %v4389 = vadd.f32 0.0, %v4388
      %4390 = vmatmul.bf16.gmra.mxu0 %v4249
      %v4391 = vpop.f32.mrf.mxu0
      %v4392 = vadd.f32 0.0, %v4391
      %v4393 = vpop.f32.mrf.mxu0
      %v4394 = vadd.f32 0.0, %v4393
      %4395 = vmatmul.bf16.gmra.mxu0 %v4252
      %v4396 = vpop.f32.mrf.mxu0
      %v4397 = vadd.f32 0.0, %v4396
      %v4398 = vpop.f32.mrf.mxu0
      %v4399 = vadd.f32 0.0, %v4398
      %4400 = vmatmul.bf16.gmra.mxu0 %v4255
      %v4401 = vpop.f32.mrf.mxu0
      %v4402 = vadd.f32 0.0, %v4401
      %v4403 = vpop.f32.mrf.mxu0
      %v4404 = vadd.f32 0.0, %v4403
      %4405 = vmatmul.bf16.gmra.mxu0 %v4258
      %v4406 = vpop.f32.mrf.mxu0
      %v4407 = vadd.f32 0.0, %v4406
      %v4408 = vpop.f32.mrf.mxu0
      %v4409 = vadd.f32 0.0, %v4408
      %4410 = vmatmul.bf16.gmra.mxu0 %v4261
      %v4411 = vpop.f32.mrf.mxu0
      %v4412 = vadd.f32 0.0, %v4411
      %v4413 = vpop.f32.mrf.mxu0
      %v4414 = vadd.f32 0.0, %v4413
      %4415 = vmatmul.bf16.gmra.mxu0 %v4264
      %v4416 = vpop.f32.mrf.mxu0
      %v4417 = vadd.f32 0.0, %v4416
      %v4418 = vpop.f32.mrf.mxu0
      %v4419 = vadd.f32 0.0, %v4418
      %4420 = vmatmul.bf16.gmra.mxu0 %v4267
      %v4421 = vpop.f32.mrf.mxu0
      %v4422 = vadd.f32 0.0, %v4421
      %v4423 = vpop.f32.mrf.mxu0
      %v4424 = vadd.f32 0.0, %v4423
      %4425 = vmatmul.bf16.gmra.mxu0 %v4270
      %v4426 = vpop.f32.mrf.mxu0
      %v4427 = vadd.f32 0.0, %v4426
      %v4428 = vpop.f32.mrf.mxu0
      %v4429 = vadd.f32 0.0, %v4428
      %4430 = vmatmul.bf16.gmra.mxu0 %v4273
      %v4431 = vpop.f32.mrf.mxu0
      %v4432 = vadd.f32 0.0, %v4431
      %v4433 = vpop.f32.mrf.mxu0
      %v4434 = vadd.f32 0.0, %v4433
      %4435 = vmatmul.bf16.gmra.mxu0 %v4276
      %v4436 = vpop.f32.mrf.mxu0
      %v4437 = vadd.f32 0.0, %v4436
      %v4438 = vpop.f32.mrf.mxu0
      %v4439 = vadd.f32 0.0, %v4438
      %4440 = vmatmul.bf16.gmra.mxu0 %v4279
      %v4441 = vpop.f32.mrf.mxu0
      %v4442 = vadd.f32 0.0, %v4441
      %v4443 = vpop.f32.mrf.mxu0
      %v4444 = vadd.f32 0.0, %v4443
      %4445 = vmatmul.bf16.gmra.mxu0 %v4282
      %v4446 = vpop.f32.mrf.mxu0
      %v4447 = vadd.f32 0.0, %v4446
      %v4448 = vpop.f32.mrf.mxu0
      %v4449 = vadd.f32 0.0, %v4448
      %4450 = vmatmul.bf16.gmra.mxu0 %v4285
      %v4451 = vpop.f32.mrf.mxu0
      %v4452 = vadd.f32 0.0, %v4451
      %v4453 = vpop.f32.mrf.mxu0
      %v4454 = vadd.f32 0.0, %v4453
      %4455 = vdwg.mxu0
      %v4456 = vadd.f32 %v3580, %v4297
      %v4457 = vadd.f32 %v3582, %v4299
      %v4458 = vadd.f32 %v3585, %v4302
      %v4459 = vadd.f32 %v3587, %v4304
      %v4460 = vadd.f32 %v3590, %v4307
      %v4461 = vadd.f32 %v3592, %v4309
      %v4462 = vadd.f32 %v3595, %v4312
      %v4463 = vadd.f32 %v3597, %v4314
      %v4464 = vadd.f32 %v3600, %v4317
      %v4465 = vadd.f32 %v3602, %v4319
      %v4466 = vadd.f32 %v3605, %v4322
      %v4467 = vadd.f32 %v3607, %v4324
      %v4468 = vadd.f32 %v3610, %v4327
      %v4469 = vadd.f32 %v3612, %v4329
      %v4470 = vadd.f32 %v3615, %v4332
      %v4471 = vadd.f32 %v3617, %v4334
      %v4472 = vadd.f32 %v3620, %v4337
      %v4473 = vadd.f32 %v3622, %v4339
      %v4474 = vadd.f32 %v3625, %v4342
      %v4475 = vadd.f32 %v3627, %v4344
      %v4476 = vadd.f32 %v3630, %v4347
      %v4477 = vadd.f32 %v3632, %v4349
      %v4478 = vadd.f32 %v3635, %v4352
      %v4479 = vadd.f32 %v3637, %v4354
      %v4480 = vadd.f32 %v3640, %v4357
      %v4481 = vadd.f32 %v3642, %v4359
      %v4482 = vadd.f32 %v3645, %v4362
      %v4483 = vadd.f32 %v3647, %v4364
      %v4484 = vadd.f32 %v3650, %v4367
      %v4485 = vadd.f32 %v3652, %v4369
      %v4486 = vadd.f32 %v3655, %v4372
      %v4487 = vadd.f32 %v3657, %v4374
      %v4488 = vadd.f32 %v3660, %v4377
      %v4489 = vadd.f32 %v3662, %v4379
      %v4490 = vadd.f32 %v3665, %v4382
      %v4491 = vadd.f32 %v3667, %v4384
      %v4492 = vadd.f32 %v3670, %v4387
      %v4493 = vadd.f32 %v3672, %v4389
      %v4494 = vadd.f32 %v3675, %v4392
      %v4495 = vadd.f32 %v3677, %v4394
      %v4496 = vadd.f32 %v3680, %v4397
      %v4497 = vadd.f32 %v3682, %v4399
      %v4498 = vadd.f32 %v3685, %v4402
      %v4499 = vadd.f32 %v3687, %v4404
      %v4500 = vadd.f32 %v3690, %v4407
      %v4501 = vadd.f32 %v3692, %v4409
      %v4502 = vadd.f32 %v3695, %v4412
      %v4503 = vadd.f32 %v3697, %v4414
      %v4504 = vadd.f32 %v3700, %v4417
      %v4505 = vadd.f32 %v3702, %v4419
      %v4506 = vadd.f32 %v3705, %v4422
      %v4507 = vadd.f32 %v3707, %v4424
      %v4508 = vadd.f32 %v3710, %v4427
      %v4509 = vadd.f32 %v3712, %v4429
      %v4510 = vadd.f32 %v3715, %v4432
      %v4511 = vadd.f32 %v3717, %v4434
      %v4512 = vadd.f32 %v3720, %v4437
      %v4513 = vadd.f32 %v3722, %v4439
      %v4514 = vadd.f32 %v3725, %v4442
      %v4515 = vadd.f32 %v3727, %v4444
      %v4516 = vadd.f32 %v3730, %v4447
      %v4517 = vadd.f32 %v3732, %v4449
      %v4518 = vadd.f32 %v3735, %v4452
      %v4519 = vadd.f32 %v3737, %v4454
      %v4520 = vld [vmem:[%s892] sm:$0xf]
      %v4521 = vld [vmem:[%s892 + $0x4] sm:$0xf]
      %v4522 = vld [vmem:[%s892 + $0xc] sm:$0xf]
      %v4523 = vld [vmem:[%s892 + $0x10] sm:$0xf]
      %v4524 = vld [vmem:[%s892 + $0x18] sm:$0xf]
      %v4525 = vld [vmem:[%s892 + $0x1c] sm:$0xf]
      %v4526 = vld [vmem:[%s892 + $0x24] sm:$0xf]
      %v4527 = vld [vmem:[%s892 + $0x28] sm:$0xf]
      %v4528 = vld [vmem:[%s892 + $0x30] sm:$0xf]
      %v4529 = vld [vmem:[%s892 + $0x34] sm:$0xf]
      %v4530 = vld [vmem:[%s892 + $0x3c] sm:$0xf]
      %v4531 = vld [vmem:[%s892 + $0x40] sm:$0xf]
      %v4532 = vld [vmem:[%s892 + $0x48] sm:$0xf]
      %v4533 = vld [vmem:[%s892 + $0x4c] sm:$0xf]
      %v4534 = vld [vmem:[%s892 + $0x54] sm:$0xf]
      %v4535 = vld [vmem:[%s892 + $0x58] sm:$0xf]
      %v4536 = vld [vmem:[%s892 + $0x60] sm:$0xf]
      %v4537 = vld [vmem:[%s892 + $0x64] sm:$0xf]
      %v4538 = vld [vmem:[%s892 + $0x6c] sm:$0xf]
      %v4539 = vld [vmem:[%s892 + $0x70] sm:$0xf]
      %v4540 = vld [vmem:[%s892 + $0x78] sm:$0xf]
      %v4541 = vld [vmem:[%s892 + $0x7c] sm:$0xf]
      %v4542 = vld [vmem:[%s892 + $0x84] sm:$0xf]
      %v4543 = vld [vmem:[%s892 + $0x88] sm:$0xf]
      %v4544 = vld [vmem:[%s892 + $0x90] sm:$0xf]
      %v4545 = vld [vmem:[%s892 + $0x94] sm:$0xf]
      %v4546 = vld [vmem:[%s892 + $0x9c] sm:$0xf]
      %v4547 = vld [vmem:[%s892 + $0xa0] sm:$0xf]
      %v4548 = vld [vmem:[%s892 + $0xa8] sm:$0xf]
      %v4549 = vld [vmem:[%s892 + $0xac] sm:$0xf]
      %v4550 = vld [vmem:[%s892 + $0xb4] sm:$0xf]
      %v4551 = vld [vmem:[%s892 + $0xb8] sm:$0xf]
      %v4552 = vld [vmem:[%s892 + $0xd8] sm:$0xf]
      %v4553 = vld [vmem:[%s892 + $0xdc] sm:$0xf]
      %v4554 = vld [vmem:[%s892 + $0xe4] sm:$0xf]
      %v4555 = vld [vmem:[%s892 + $0xe8] sm:$0xf]
      %v4556 = vld [vmem:[%s892 + $0xf0] sm:$0xf]
      %v4557 = vld [vmem:[%s892 + $0xf4] sm:$0xf]
      %v4558 = vld [vmem:[%s892 + $0xfc] sm:$0xf]
      %v4559 = vld [vmem:[%s892 + $0x100] sm:$0xf]
      %v4560 = vld [vmem:[%s892 + $0x108] sm:$0xf]
      %v4561 = vld [vmem:[%s892 + $0x10c] sm:$0xf]
      %v4562 = vld [vmem:[%s892 + $0x114] sm:$0xf]
      %v4563 = vld [vmem:[%s892 + $0x118] sm:$0xf]
      %v4564 = vld [vmem:[%s892 + $0x120] sm:$0xf]
      %v4565 = vld [vmem:[%s892 + $0x124] sm:$0xf]
      %v4566 = vld [vmem:[%s892 + $0x12c] sm:$0xf]
      %v4567 = vld [vmem:[%s892 + $0x130] sm:$0xf]
      %v4568 = vld [vmem:[%s892 + $0x138] sm:$0xf]
      %v4569 = vld [vmem:[%s892 + $0x13c] sm:$0xf]
      %v4570 = vld [vmem:[%s892 + $0x144] sm:$0xf]
      %v4571 = vld [vmem:[%s892 + $0x148] sm:$0xf]
      %v4572 = vld [vmem:[%s892 + $0x150] sm:$0xf]
      %v4573 = vld [vmem:[%s892 + $0x154] sm:$0xf]
      %v4574 = vld [vmem:[%s892 + $0x15c] sm:$0xf]
      %v4575 = vld [vmem:[%s892 + $0x160] sm:$0xf]
      %v4576 = vld [vmem:[%s892 + $0x168] sm:$0xf]
      %v4577 = vld [vmem:[%s892 + $0x16c] sm:$0xf]
      %v4578 = vld [vmem:[%s892 + $0x174] sm:$0xf]
      %v4579 = vld [vmem:[%s892 + $0x178] sm:$0xf]
      %v4580 = vld [vmem:[%s892 + $0x180] sm:$0xf]
      %v4581 = vld [vmem:[%s892 + $0x184] sm:$0xf]
      %v4582 = vld [vmem:[%s892 + $0x18c] sm:$0xf]
      %v4583 = vld [vmem:[%s892 + $0x190] sm:$0xf]
      %s4584 = scalar_lea.vmem %s3, 96
      %v4585 = vld [vmem:[%s4584] sm:$0xf]
      %v4586 = vld [vmem:[%s4584 + $0x4] sm:$0xf]
      %v4587 = vld [vmem:[%s4584 + $0x8] sm:$0xf]
      %v4588 = vld [vmem:[%s4584 + $0xc] sm:$0xf]
      %v4589 = vld [vmem:[%s4584 + $0x10] sm:$0xf]
      %v4590 = vld [vmem:[%s4584 + $0x14] sm:$0xf]
      %v4591 = vld [vmem:[%s4584 + $0x18] sm:$0xf]
      %v4592 = vld [vmem:[%s4584 + $0x1c] sm:$0xf]
      %v4657 = vunpack.c.l.b16 %v4520
      %v4658 = vunpack.c.l.b16 %v4521
      %v4659 = vunpack.c.l.b16 %v4522
      %v4660 = vunpack.c.l.b16 %v4523
      %v4661 = vunpack.c.l.b16 %v4524
      %v4662 = vunpack.c.l.b16 %v4525
      %v4663 = vunpack.c.l.b16 %v4526
      %v4664 = vunpack.c.l.b16 %v4527
      %v4665 = vunpack.c.l.b16 %v4528
      %v4666 = vunpack.c.l.b16 %v4529
      %v4667 = vunpack.c.l.b16 %v4530
      %v4668 = vunpack.c.l.b16 %v4531
      %v4669 = vunpack.c.l.b16 %v4532
      %v4670 = vunpack.c.l.b16 %v4533
      %v4671 = vunpack.c.l.b16 %v4534
      %v4672 = vunpack.c.l.b16 %v4535
      %v4673 = vunpack.c.l.b16 %v4536
      %v4674 = vunpack.c.l.b16 %v4537
      %v4675 = vunpack.c.l.b16 %v4538
      %v4676 = vunpack.c.l.b16 %v4539
      %v4677 = vunpack.c.l.b16 %v4540
      %v4678 = vunpack.c.l.b16 %v4541
      %v4679 = vunpack.c.l.b16 %v4542
      %v4680 = vunpack.c.l.b16 %v4543
      %v4681 = vunpack.c.l.b16 %v4544
      %v4682 = vunpack.c.l.b16 %v4545
      %v4683 = vunpack.c.l.b16 %v4546
      %v4684 = vunpack.c.l.b16 %v4547
      %v4685 = vunpack.c.l.b16 %v4548
      %v4686 = vunpack.c.l.b16 %v4549
      %v4687 = vunpack.c.l.b16 %v4550
      %v4688 = vunpack.c.l.b16 %v4551
      %v4689 = vunpack.c.l.b16 %v4552
      %v4690 = vunpack.c.l.b16 %v4553
      %v4691 = vunpack.c.l.b16 %v4554
      %v4692 = vunpack.c.l.b16 %v4555
      %v4693 = vunpack.c.l.b16 %v4556
      %v4694 = vunpack.c.l.b16 %v4557
      %v4695 = vunpack.c.l.b16 %v4558
      %v4696 = vunpack.c.l.b16 %v4559
      %v4697 = vunpack.c.l.b16 %v4560
      %v4698 = vunpack.c.l.b16 %v4561
      %v4699 = vunpack.c.l.b16 %v4562
      %v4700 = vunpack.c.l.b16 %v4563
      %v4701 = vunpack.c.l.b16 %v4564
      %v4702 = vunpack.c.l.b16 %v4565
      %v4703 = vunpack.c.l.b16 %v4566
      %v4704 = vunpack.c.l.b16 %v4567
      %v4705 = vunpack.c.l.b16 %v4568
      %v4706 = vunpack.c.l.b16 %v4569
      %v4707 = vunpack.c.l.b16 %v4570
      %v4708 = vunpack.c.l.b16 %v4571
      %v4709 = vunpack.c.l.b16 %v4572
      %v4710 = vunpack.c.l.b16 %v4573
      %v4711 = vunpack.c.l.b16 %v4574
      %v4712 = vunpack.c.l.b16 %v4575
      %v4713 = vunpack.c.l.b16 %v4576
      %v4714 = vunpack.c.l.b16 %v4577
      %v4715 = vunpack.c.l.b16 %v4578
      %v4716 = vunpack.c.l.b16 %v4579
      %v4717 = vunpack.c.l.b16 %v4580
      %v4718 = vunpack.c.l.b16 %v4581
      %v4719 = vunpack.c.l.b16 %v4582
      %v4720 = vunpack.c.l.b16 %v4583
      %v4721 = vpack.c.b16 %v4658, %v4657
      %v4722 = vpack.c.b16 %v4660, %v4659
      %v4723 = vpack.c.b16 %v4662, %v4661
      %v4724 = vpack.c.b16 %v4664, %v4663
      %v4725 = vpack.c.b16 %v4666, %v4665
      %v4726 = vpack.c.b16 %v4668, %v4667
      %v4727 = vpack.c.b16 %v4670, %v4669
      %v4728 = vpack.c.b16 %v4672, %v4671
      %v4729 = vpack.c.b16 %v4674, %v4673
      %v4730 = vpack.c.b16 %v4676, %v4675
      %v4731 = vpack.c.b16 %v4678, %v4677
      %v4732 = vpack.c.b16 %v4680, %v4679
      %v4733 = vpack.c.b16 %v4682, %v4681
      %v4734 = vpack.c.b16 %v4684, %v4683
      %v4735 = vpack.c.b16 %v4686, %v4685
      %v4736 = vpack.c.b16 %v4688, %v4687
      %v4737 = vpack.c.b16 %v4690, %v4689
      %v4738 = vpack.c.b16 %v4692, %v4691
      %v4739 = vpack.c.b16 %v4694, %v4693
      %v4740 = vpack.c.b16 %v4696, %v4695
      %v4741 = vpack.c.b16 %v4698, %v4697
      %v4742 = vpack.c.b16 %v4700, %v4699
      %v4743 = vpack.c.b16 %v4702, %v4701
      %v4744 = vpack.c.b16 %v4704, %v4703
      %v4745 = vpack.c.b16 %v4706, %v4705
      %v4746 = vpack.c.b16 %v4708, %v4707
      %v4747 = vpack.c.b16 %v4710, %v4709
      %v4748 = vpack.c.b16 %v4712, %v4711
      %v4749 = vpack.c.b16 %v4714, %v4713
      %v4750 = vpack.c.b16 %v4716, %v4715
      %v4751 = vpack.c.b16 %v4718, %v4717
      %v4752 = vpack.c.b16 %v4720, %v4719
      %v4761 = vunpack.c.l.b16 %v4585
      %v4762 = vunpack.c.l.b16 %v4586
      %v4763 = vunpack.c.l.b16 %v4587
      %v4764 = vunpack.c.l.b16 %v4588
      %v4765 = vunpack.c.l.b16 %v4589
      %v4766 = vunpack.c.l.b16 %v4590
      %v4767 = vunpack.c.l.b16 %v4591
      %v4768 = vunpack.c.l.b16 %v4592
      %v4769 = vpack.c.b16 %v4762, %v4761
      %v4770 = vpack.c.b16 %v4764, %v4763
      %v4771 = vpack.c.b16 %v4766, %v4765
      %v4772 = vpack.c.b16 %v4768, %v4767
      %v4778 = vsel %vm548, %v4721, 0
      %v4781 = vsel %vm548, %v4722, 0
      %v4784 = vsel %vm548, %v4723, 0
      %v4787 = vsel %vm548, %v4724, 0
      %v4790 = vsel %vm548, %v4725, 0
      %v4793 = vsel %vm548, %v4726, 0
      %v4796 = vsel %vm548, %v4727, 0
      %v4799 = vsel %vm548, %v4728, 0
      %v4802 = vsel %vm548, %v4729, 0
      %v4805 = vsel %vm548, %v4730, 0
      %v4808 = vsel %vm548, %v4731, 0
      %v4811 = vsel %vm548, %v4732, 0
      %v4814 = vsel %vm548, %v4733, 0
      %v4817 = vsel %vm548, %v4734, 0
      %v4820 = vsel %vm548, %v4735, 0
      %v4823 = vsel %vm548, %v4736, 0
      %v4826 = vsel %vm548, %v4737, 0
      %v4829 = vsel %vm548, %v4738, 0
      %v4832 = vsel %vm548, %v4739, 0
      %v4835 = vsel %vm548, %v4740, 0
      %v4838 = vsel %vm548, %v4741, 0
      %v4841 = vsel %vm548, %v4742, 0
      %v4844 = vsel %vm548, %v4743, 0
      %v4847 = vsel %vm548, %v4744, 0
      %v4850 = vsel %vm548, %v4745, 0
      %v4853 = vsel %vm548, %v4746, 0
      %v4856 = vsel %vm548, %v4747, 0
      %v4859 = vsel %vm548, %v4748, 0
      %v4862 = vsel %vm548, %v4749, 0
      %v4865 = vsel %vm548, %v4750, 0
      %v4868 = vsel %vm548, %v4751, 0
      %v4871 = vsel %vm548, %v4752, 0
      %4873 = vmatpush.bf16.msra.mxu0 0
      %4874 = vmatpush.bf16.msra.mxu0 0
      %4875 = vmatpush.bf16.msra.mxu0 0
      %4876 = vmatpush.bf16.msra.mxu0 0
      %4877 = vmatpush.bf16.msra.mxu0 %v4772
      %4878 = vmatpush.bf16.msra.mxu0 %v4771
      %4879 = vmatpush.bf16.msra.mxu0 %v4770
      %4880 = vmatpush.bf16.msra.mxu0 %v4769
      %4881 = vmatmul.bf16.gmra.mxu0 %v4778
      %v4882 = vpop.f32.mrf.mxu0
      %v4883 = vadd.f32 0.0, %v4882
      %v4884 = vpop.f32.mrf.mxu0
      %v4885 = vadd.f32 0.0, %v4884
      %4886 = vmatmul.bf16.gmra.mxu0 %v4781
      %v4887 = vpop.f32.mrf.mxu0
      %v4888 = vadd.f32 0.0, %v4887
      %v4889 = vpop.f32.mrf.mxu0
      %v4890 = vadd.f32 0.0, %v4889
      %4891 = vmatmul.bf16.gmra.mxu0 %v4784
      %v4892 = vpop.f32.mrf.mxu0
      %v4893 = vadd.f32 0.0, %v4892
      %v4894 = vpop.f32.mrf.mxu0
      %v4895 = vadd.f32 0.0, %v4894
      %4896 = vmatmul.bf16.gmra.mxu0 %v4787
      %v4897 = vpop.f32.mrf.mxu0
      %v4898 = vadd.f32 0.0, %v4897
      %v4899 = vpop.f32.mrf.mxu0
      %v4900 = vadd.f32 0.0, %v4899
      %4901 = vmatmul.bf16.gmra.mxu0 %v4790
      %v4902 = vpop.f32.mrf.mxu0
      %v4903 = vadd.f32 0.0, %v4902
      %v4904 = vpop.f32.mrf.mxu0
      %v4905 = vadd.f32 0.0, %v4904
      %4906 = vmatmul.bf16.gmra.mxu0 %v4793
      %v4907 = vpop.f32.mrf.mxu0
      %v4908 = vadd.f32 0.0, %v4907
      %v4909 = vpop.f32.mrf.mxu0
      %v4910 = vadd.f32 0.0, %v4909
      %4911 = vmatmul.bf16.gmra.mxu0 %v4796
      %v4912 = vpop.f32.mrf.mxu0
      %v4913 = vadd.f32 0.0, %v4912
      %v4914 = vpop.f32.mrf.mxu0
      %v4915 = vadd.f32 0.0, %v4914
      %4916 = vmatmul.bf16.gmra.mxu0 %v4799
      %v4917 = vpop.f32.mrf.mxu0
      %v4918 = vadd.f32 0.0, %v4917
      %v4919 = vpop.f32.mrf.mxu0
      %v4920 = vadd.f32 0.0, %v4919
      %4921 = vmatmul.bf16.gmra.mxu0 %v4802
      %v4922 = vpop.f32.mrf.mxu0
      %v4923 = vadd.f32 0.0, %v4922
      %v4924 = vpop.f32.mrf.mxu0
      %v4925 = vadd.f32 0.0, %v4924
      %4926 = vmatmul.bf16.gmra.mxu0 %v4805
      %v4927 = vpop.f32.mrf.mxu0
      %v4928 = vadd.f32 0.0, %v4927
      %v4929 = vpop.f32.mrf.mxu0
      %v4930 = vadd.f32 0.0, %v4929
      %4931 = vmatmul.bf16.gmra.mxu0 %v4808
      %v4932 = vpop.f32.mrf.mxu0
      %v4933 = vadd.f32 0.0, %v4932
      %v4934 = vpop.f32.mrf.mxu0
      %v4935 = vadd.f32 0.0, %v4934
      %4936 = vmatmul.bf16.gmra.mxu0 %v4811
      %v4937 = vpop.f32.mrf.mxu0
      %v4938 = vadd.f32 0.0, %v4937
      %v4939 = vpop.f32.mrf.mxu0
      %v4940 = vadd.f32 0.0, %v4939
      %4941 = vmatmul.bf16.gmra.mxu0 %v4814
      %v4942 = vpop.f32.mrf.mxu0
      %v4943 = vadd.f32 0.0, %v4942
      %v4944 = vpop.f32.mrf.mxu0
      %v4945 = vadd.f32 0.0, %v4944
      %4946 = vmatmul.bf16.gmra.mxu0 %v4817
      %v4947 = vpop.f32.mrf.mxu0
      %v4948 = vadd.f32 0.0, %v4947
      %v4949 = vpop.f32.mrf.mxu0
      %v4950 = vadd.f32 0.0, %v4949
      %4951 = vmatmul.bf16.gmra.mxu0 %v4820
      %v4952 = vpop.f32.mrf.mxu0
      %v4953 = vadd.f32 0.0, %v4952
      %v4954 = vpop.f32.mrf.mxu0
      %v4955 = vadd.f32 0.0, %v4954
      %4956 = vmatmul.bf16.gmra.mxu0 %v4823
      %v4957 = vpop.f32.mrf.mxu0
      %v4958 = vadd.f32 0.0, %v4957
      %v4959 = vpop.f32.mrf.mxu0
      %v4960 = vadd.f32 0.0, %v4959
      %4961 = vmatmul.bf16.gmra.mxu0 %v4826
      %v4962 = vpop.f32.mrf.mxu0
      %v4963 = vadd.f32 0.0, %v4962
      %v4964 = vpop.f32.mrf.mxu0
      %v4965 = vadd.f32 0.0, %v4964
      %4966 = vmatmul.bf16.gmra.mxu0 %v4829
      %v4967 = vpop.f32.mrf.mxu0
      %v4968 = vadd.f32 0.0, %v4967
      %v4969 = vpop.f32.mrf.mxu0
      %v4970 = vadd.f32 0.0, %v4969
      %4971 = vmatmul.bf16.gmra.mxu0 %v4832
      %v4972 = vpop.f32.mrf.mxu0
      %v4973 = vadd.f32 0.0, %v4972
      %v4974 = vpop.f32.mrf.mxu0
      %v4975 = vadd.f32 0.0, %v4974
      %4976 = vmatmul.bf16.gmra.mxu0 %v4835
      %v4977 = vpop.f32.mrf.mxu0
      %v4978 = vadd.f32 0.0, %v4977
      %v4979 = vpop.f32.mrf.mxu0
      %v4980 = vadd.f32 0.0, %v4979
      %4981 = vmatmul.bf16.gmra.mxu0 %v4838
      %v4982 = vpop.f32.mrf.mxu0
      %v4983 = vadd.f32 0.0, %v4982
      %v4984 = vpop.f32.mrf.mxu0
      %v4985 = vadd.f32 0.0, %v4984
      %4986 = vmatmul.bf16.gmra.mxu0 %v4841
      %v4987 = vpop.f32.mrf.mxu0
      %v4988 = vadd.f32 0.0, %v4987
      %v4989 = vpop.f32.mrf.mxu0
      %v4990 = vadd.f32 0.0, %v4989
      %4991 = vmatmul.bf16.gmra.mxu0 %v4844
      %v4992 = vpop.f32.mrf.mxu0
      %v4993 = vadd.f32 0.0, %v4992
      %v4994 = vpop.f32.mrf.mxu0
      %v4995 = vadd.f32 0.0, %v4994
      %4996 = vmatmul.bf16.gmra.mxu0 %v4847
      %v4997 = vpop.f32.mrf.mxu0
      %v4998 = vadd.f32 0.0, %v4997
      %v4999 = vpop.f32.mrf.mxu0
      %v5000 = vadd.f32 0.0, %v4999
      %5001 = vmatmul.bf16.gmra.mxu0 %v4850
      %v5002 = vpop.f32.mrf.mxu0
      %v5003 = vadd.f32 0.0, %v5002
      %v5004 = vpop.f32.mrf.mxu0
      %v5005 = vadd.f32 0.0, %v5004
      %5006 = vmatmul.bf16.gmra.mxu0 %v4853
      %v5007 = vpop.f32.mrf.mxu0
      %v5008 = vadd.f32 0.0, %v5007
      %v5009 = vpop.f32.mrf.mxu0
      %v5010 = vadd.f32 0.0, %v5009
      %5011 = vmatmul.bf16.gmra.mxu0 %v4856
      %v5012 = vpop.f32.mrf.mxu0
      %v5013 = vadd.f32 0.0, %v5012
      %v5014 = vpop.f32.mrf.mxu0
      %v5015 = vadd.f32 0.0, %v5014
      %5016 = vmatmul.bf16.gmra.mxu0 %v4859
      %v5017 = vpop.f32.mrf.mxu0
      %v5018 = vadd.f32 0.0, %v5017
      %v5019 = vpop.f32.mrf.mxu0
      %v5020 = vadd.f32 0.0, %v5019
      %5021 = vmatmul.bf16.gmra.mxu0 %v4862
      %v5022 = vpop.f32.mrf.mxu0
      %v5023 = vadd.f32 0.0, %v5022
      %v5024 = vpop.f32.mrf.mxu0
      %v5025 = vadd.f32 0.0, %v5024
      %5026 = vmatmul.bf16.gmra.mxu0 %v4865
      %v5027 = vpop.f32.mrf.mxu0
      %v5028 = vadd.f32 0.0, %v5027
      %v5029 = vpop.f32.mrf.mxu0
      %v5030 = vadd.f32 0.0, %v5029
      %5031 = vmatmul.bf16.gmra.mxu0 %v4868
      %v5032 = vpop.f32.mrf.mxu0
      %v5033 = vadd.f32 0.0, %v5032
      %v5034 = vpop.f32.mrf.mxu0
      %v5035 = vadd.f32 0.0, %v5034
      %5036 = vmatmul.bf16.gmra.mxu0 %v4871
      %v5037 = vpop.f32.mrf.mxu0
      %v5038 = vadd.f32 0.0, %v5037
      %v5039 = vpop.f32.mrf.mxu0
      %v5040 = vadd.f32 0.0, %v5039
      %5041 = vdwg.mxu0
      %v5042 = vadd.f32 %v4456, %v4883
      %v5043 = vadd.f32 %v4457, %v4885
      %v5044 = vadd.f32 %v4458, %v4888
      %v5045 = vadd.f32 %v4459, %v4890
      %v5046 = vadd.f32 %v4460, %v4893
      %v5047 = vadd.f32 %v4461, %v4895
      %v5048 = vadd.f32 %v4462, %v4898
      %v5049 = vadd.f32 %v4463, %v4900
      %v5050 = vadd.f32 %v4464, %v4903
      %v5051 = vadd.f32 %v4465, %v4905
      %v5052 = vadd.f32 %v4466, %v4908
      %v5053 = vadd.f32 %v4467, %v4910
      %v5054 = vadd.f32 %v4468, %v4913
      %v5055 = vadd.f32 %v4469, %v4915
      %v5056 = vadd.f32 %v4470, %v4918
      %v5057 = vadd.f32 %v4471, %v4920
      %v5058 = vadd.f32 %v4472, %v4923
      %v5059 = vadd.f32 %v4473, %v4925
      %v5060 = vadd.f32 %v4474, %v4928
      %v5061 = vadd.f32 %v4475, %v4930
      %v5062 = vadd.f32 %v4476, %v4933
      %v5063 = vadd.f32 %v4477, %v4935
      %v5064 = vadd.f32 %v4478, %v4938
      %v5065 = vadd.f32 %v4479, %v4940
      %v5066 = vadd.f32 %v4480, %v4943
      %v5067 = vadd.f32 %v4481, %v4945
      %v5068 = vadd.f32 %v4482, %v4948
      %v5069 = vadd.f32 %v4483, %v4950
      %v5070 = vadd.f32 %v4484, %v4953
      %v5071 = vadd.f32 %v4485, %v4955
      %v5072 = vadd.f32 %v4486, %v4958
      %v5073 = vadd.f32 %v4487, %v4960
      %v5074 = vadd.f32 %v4488, %v4963
      %v5075 = vadd.f32 %v4489, %v4965
      %v5076 = vadd.f32 %v4490, %v4968
      %v5077 = vadd.f32 %v4491, %v4970
      %v5078 = vadd.f32 %v4492, %v4973
      %v5079 = vadd.f32 %v4493, %v4975
      %v5080 = vadd.f32 %v4494, %v4978
      %v5081 = vadd.f32 %v4495, %v4980
      %v5082 = vadd.f32 %v4496, %v4983
      %v5083 = vadd.f32 %v4497, %v4985
      %v5084 = vadd.f32 %v4498, %v4988
      %v5085 = vadd.f32 %v4499, %v4990
      %v5086 = vadd.f32 %v4500, %v4993
      %v5087 = vadd.f32 %v4501, %v4995
      %v5088 = vadd.f32 %v4502, %v4998
      %v5089 = vadd.f32 %v4503, %v5000
      %v5090 = vadd.f32 %v4504, %v5003
      %v5091 = vadd.f32 %v4505, %v5005
      %v5092 = vadd.f32 %v4506, %v5008
      %v5093 = vadd.f32 %v4507, %v5010
      %v5094 = vadd.f32 %v4508, %v5013
      %v5095 = vadd.f32 %v4509, %v5015
      %v5096 = vadd.f32 %v4510, %v5018
      %v5097 = vadd.f32 %v4511, %v5020
      %v5098 = vadd.f32 %v4512, %v5023
      %v5099 = vadd.f32 %v4513, %v5025
      %v5100 = vadd.f32 %v4514, %v5028
      %v5101 = vadd.f32 %v4515, %v5030
      %v5102 = vadd.f32 %v4516, %v5033
      %v5103 = vadd.f32 %v4517, %v5035
      %v5104 = vadd.f32 %v4518, %v5038
      %v5105 = vadd.f32 %v4519, %v5040
      %v5106 = vld [vmem:[%s892] sm:$0xf]
      %v5107 = vld [vmem:[%s892 + $0x4] sm:$0xf]
      %v5108 = vld [vmem:[%s892 + $0x8] sm:$0x1]
      %v5109 = vld [vmem:[%s892 + $0xc] sm:$0xf]
      %v5110 = vld [vmem:[%s892 + $0x10] sm:$0xf]
      %v5111 = vld [vmem:[%s892 + $0x14] sm:$0x1]
      %v5112 = vld [vmem:[%s892 + $0x18] sm:$0xf]
      %v5113 = vld [vmem:[%s892 + $0x1c] sm:$0xf]
      %v5114 = vld [vmem:[%s892 + $0x20] sm:$0x1]
      %v5115 = vld [vmem:[%s892 + $0x24] sm:$0xf]
      %v5116 = vld [vmem:[%s892 + $0x28] sm:$0xf]
      %v5117 = vld [vmem:[%s892 + $0x2c] sm:$0x1]
      %v5118 = vld [vmem:[%s892 + $0x30] sm:$0xf]
      %v5119 = vld [vmem:[%s892 + $0x34] sm:$0xf]
      %v5120 = vld [vmem:[%s892 + $0x38] sm:$0x1]
      %v5121 = vld [vmem:[%s892 + $0x3c] sm:$0xf]
      %v5122 = vld [vmem:[%s892 + $0x40] sm:$0xf]
      %v5123 = vld [vmem:[%s892 + $0x44] sm:$0x1]
      %v5124 = vld [vmem:[%s892 + $0x48] sm:$0xf]
      %v5125 = vld [vmem:[%s892 + $0x4c] sm:$0xf]
      %v5126 = vld [vmem:[%s892 + $0x50] sm:$0x1]
      %v5127 = vld [vmem:[%s892 + $0x54] sm:$0xf]
      %v5128 = vld [vmem:[%s892 + $0x58] sm:$0xf]
      %v5129 = vld [vmem:[%s892 + $0x5c] sm:$0x1]
      %v5130 = vld [vmem:[%s892 + $0x60] sm:$0xf]
      %v5131 = vld [vmem:[%s892 + $0x64] sm:$0xf]
      %v5132 = vld [vmem:[%s892 + $0x68] sm:$0x1]
      %v5133 = vld [vmem:[%s892 + $0x6c] sm:$0xf]
      %v5134 = vld [vmem:[%s892 + $0x70] sm:$0xf]
      %v5135 = vld [vmem:[%s892 + $0x74] sm:$0x1]
      %v5136 = vld [vmem:[%s892 + $0x78] sm:$0xf]
      %v5137 = vld [vmem:[%s892 + $0x7c] sm:$0xf]
      %v5138 = vld [vmem:[%s892 + $0x80] sm:$0x1]
      %v5139 = vld [vmem:[%s892 + $0x84] sm:$0xf]
      %v5140 = vld [vmem:[%s892 + $0x88] sm:$0xf]
      %v5141 = vld [vmem:[%s892 + $0x8c] sm:$0x1]
      %v5142 = vld [vmem:[%s892 + $0x90] sm:$0xf]
      %v5143 = vld [vmem:[%s892 + $0x94] sm:$0xf]
      %v5144 = vld [vmem:[%s892 + $0x98] sm:$0x1]
      %v5145 = vld [vmem:[%s892 + $0x9c] sm:$0xf]
      %v5146 = vld [vmem:[%s892 + $0xa0] sm:$0xf]
      %v5147 = vld [vmem:[%s892 + $0xa4] sm:$0x1]
      %v5148 = vld [vmem:[%s892 + $0xa8] sm:$0xf]
      %v5149 = vld [vmem:[%s892 + $0xac] sm:$0xf]
      %v5150 = vld [vmem:[%s892 + $0xb0] sm:$0x1]
      %v5151 = vld [vmem:[%s892 + $0xb4] sm:$0xf]
      %v5152 = vld [vmem:[%s892 + $0xb8] sm:$0xf]
      %v5153 = vld [vmem:[%s892 + $0xbc] sm:$0x1]
      %v5154 = vld [vmem:[%s892 + $0xd8] sm:$0xf]
      %v5155 = vld [vmem:[%s892 + $0xdc] sm:$0xf]
      %v5156 = vld [vmem:[%s892 + $0xe0] sm:$0x1]
      %v5157 = vld [vmem:[%s892 + $0xe4] sm:$0xf]
      %v5158 = vld [vmem:[%s892 + $0xe8] sm:$0xf]
      %v5159 = vld [vmem:[%s892 + $0xec] sm:$0x1]
      %v5160 = vld [vmem:[%s892 + $0xf0] sm:$0xf]
      %v5161 = vld [vmem:[%s892 + $0xf4] sm:$0xf]
      %v5162 = vld [vmem:[%s892 + $0xf8] sm:$0x1]
      %v5163 = vld [vmem:[%s892 + $0xfc] sm:$0xf]
      %v5164 = vld [vmem:[%s892 + $0x100] sm:$0xf]
      %v5165 = vld [vmem:[%s892 + $0x104] sm:$0x1]
      %v5166 = vld [vmem:[%s892 + $0x108] sm:$0xf]
      %v5167 = vld [vmem:[%s892 + $0x10c] sm:$0xf]
      %v5168 = vld [vmem:[%s892 + $0x110] sm:$0x1]
      %v5169 = vld [vmem:[%s892 + $0x114] sm:$0xf]
      %v5170 = vld [vmem:[%s892 + $0x118] sm:$0xf]
      %v5171 = vld [vmem:[%s892 + $0x11c] sm:$0x1]
      %v5172 = vld [vmem:[%s892 + $0x120] sm:$0xf]
      %v5173 = vld [vmem:[%s892 + $0x124] sm:$0xf]
      %v5174 = vld [vmem:[%s892 + $0x128] sm:$0x1]
      %v5175 = vld [vmem:[%s892 + $0x12c] sm:$0xf]
      %v5176 = vld [vmem:[%s892 + $0x130] sm:$0xf]
      %v5177 = vld [vmem:[%s892 + $0x134] sm:$0x1]
      %v5178 = vld [vmem:[%s892 + $0x138] sm:$0xf]
      %v5179 = vld [vmem:[%s892 + $0x13c] sm:$0xf]
      %v5180 = vld [vmem:[%s892 + $0x140] sm:$0x1]
      %v5181 = vld [vmem:[%s892 + $0x144] sm:$0xf]
      %v5182 = vld [vmem:[%s892 + $0x148] sm:$0xf]
      %v5183 = vld [vmem:[%s892 + $0x14c] sm:$0x1]
      %v5184 = vld [vmem:[%s892 + $0x150] sm:$0xf]
      %v5185 = vld [vmem:[%s892 + $0x154] sm:$0xf]
      %v5186 = vld [vmem:[%s892 + $0x158] sm:$0x1]
      %v5187 = vld [vmem:[%s892 + $0x15c] sm:$0xf]
      %v5188 = vld [vmem:[%s892 + $0x160] sm:$0xf]
      %v5189 = vld [vmem:[%s892 + $0x164] sm:$0x1]
      %v5190 = vld [vmem:[%s892 + $0x168] sm:$0xf]
      %v5191 = vld [vmem:[%s892 + $0x16c] sm:$0xf]
      %v5192 = vld [vmem:[%s892 + $0x170] sm:$0x1]
      %v5193 = vld [vmem:[%s892 + $0x174] sm:$0xf]
      %v5194 = vld [vmem:[%s892 + $0x178] sm:$0xf]
      %v5195 = vld [vmem:[%s892 + $0x17c] sm:$0x1]
      %v5196 = vld [vmem:[%s892 + $0x180] sm:$0xf]
      %v5197 = vld [vmem:[%s892 + $0x184] sm:$0xf]
      %v5198 = vld [vmem:[%s892 + $0x188] sm:$0x1]
      %v5199 = vld [vmem:[%s892 + $0x18c] sm:$0xf]
      %v5200 = vld [vmem:[%s892 + $0x190] sm:$0xf]
      %v5201 = vld [vmem:[%s892 + $0x194] sm:$0x1]
      %v5203 = vshrl.u32 %v5106, 16
      %v5205 = vrot.slane %v5203, 4
      %v5206 = vshll.u32 %v5106, 16
      %v5208 = vrot.slane %v5206, 5
      %v5209 = vor.u32 %v5205, %v5208
      %v5210 = vrot.slane %v5209, 4
      %v5212 = vshll.u32 %v5107, 16
      %v5214 = vrot.slane %v5212, 5
      %v5215 = vsel %vm2127, %v5210, %v5214
      %v5216 = vshrl.u32 %v5107, 16
      %v5218 = vrot.slane %v5216, 4
      %v5219 = vor.u32 %v5218, %v5214
      %v5220 = vrot.slane %v5219, 4
      %v5222 = vshll.u32 %v5108, 16
      %v5224 = vrot.slane %v5222, 5
      %v5225 = vsel %vm2127, %v5220, %v5224
      %v5227 = vshrl.u32 %v5109, 16
      %v5229 = vrot.slane %v5227, 4
      %v5230 = vshll.u32 %v5109, 16
      %v5232 = vrot.slane %v5230, 5
      %v5233 = vor.u32 %v5229, %v5232
      %v5234 = vrot.slane %v5233, 4
      %v5236 = vshll.u32 %v5110, 16
      %v5238 = vrot.slane %v5236, 5
      %v5239 = vsel %vm2127, %v5234, %v5238
      %v5240 = vshrl.u32 %v5110, 16
      %v5242 = vrot.slane %v5240, 4
      %v5243 = vor.u32 %v5242, %v5238
      %v5244 = vrot.slane %v5243, 4
      %v5246 = vshll.u32 %v5111, 16
      %v5248 = vrot.slane %v5246, 5
      %v5249 = vsel %vm2127, %v5244, %v5248
      %v5251 = vshrl.u32 %v5112, 16
      %v5253 = vrot.slane %v5251, 4
      %v5254 = vshll.u32 %v5112, 16
      %v5256 = vrot.slane %v5254, 5
      %v5257 = vor.u32 %v5253, %v5256
      %v5258 = vrot.slane %v5257, 4
      %v5260 = vshll.u32 %v5113, 16
      %v5262 = vrot.slane %v5260, 5
      %v5263 = vsel %vm2127, %v5258, %v5262
      %v5264 = vshrl.u32 %v5113, 16
      %v5266 = vrot.slane %v5264, 4
      %v5267 = vor.u32 %v5266, %v5262
      %v5268 = vrot.slane %v5267, 4
      %v5270 = vshll.u32 %v5114, 16
      %v5272 = vrot.slane %v5270, 5
      %v5273 = vsel %vm2127, %v5268, %v5272
      %v5275 = vshrl.u32 %v5115, 16
      %v5277 = vrot.slane %v5275, 4
      %v5278 = vshll.u32 %v5115, 16
      %v5280 = vrot.slane %v5278, 5
      %v5281 = vor.u32 %v5277, %v5280
      %v5282 = vrot.slane %v5281, 4
      %v5284 = vshll.u32 %v5116, 16
      %v5286 = vrot.slane %v5284, 5
      %v5287 = vsel %vm2127, %v5282, %v5286
      %v5288 = vshrl.u32 %v5116, 16
      %v5290 = vrot.slane %v5288, 4
      %v5291 = vor.u32 %v5290, %v5286
      %v5292 = vrot.slane %v5291, 4
      %v5294 = vshll.u32 %v5117, 16
      %v5296 = vrot.slane %v5294, 5
      %v5297 = vsel %vm2127, %v5292, %v5296
      %v5299 = vshrl.u32 %v5118, 16
      %v5301 = vrot.slane %v5299, 4
      %v5302 = vshll.u32 %v5118, 16
      %v5304 = vrot.slane %v5302, 5
      %v5305 = vor.u32 %v5301, %v5304
      %v5306 = vrot.slane %v5305, 4
      %v5308 = vshll.u32 %v5119, 16
      %v5310 = vrot.slane %v5308, 5
      %v5311 = vsel %vm2127, %v5306, %v5310
      %v5312 = vshrl.u32 %v5119, 16
      %v5314 = vrot.slane %v5312, 4
      %v5315 = vor.u32 %v5314, %v5310
      %v5316 = vrot.slane %v5315, 4
      %v5318 = vshll.u32 %v5120, 16
      %v5320 = vrot.slane %v5318, 5
      %v5321 = vsel %vm2127, %v5316, %v5320
      %v5323 = vshrl.u32 %v5121, 16
      %v5325 = vrot.slane %v5323, 4
      %v5326 = vshll.u32 %v5121, 16
      %v5328 = vrot.slane %v5326, 5
      %v5329 = vor.u32 %v5325, %v5328
      %v5330 = vrot.slane %v5329, 4
      %v5332 = vshll.u32 %v5122, 16
      %v5334 = vrot.slane %v5332, 5
      %v5335 = vsel %vm2127, %v5330, %v5334
      %v5336 = vshrl.u32 %v5122, 16
      %v5338 = vrot.slane %v5336, 4
      %v5339 = vor.u32 %v5338, %v5334
      %v5340 = vrot.slane %v5339, 4
      %v5342 = vshll.u32 %v5123, 16
      %v5344 = vrot.slane %v5342, 5
      %v5345 = vsel %vm2127, %v5340, %v5344
      %v5347 = vshrl.u32 %v5124, 16
      %v5349 = vrot.slane %v5347, 4
      %v5350 = vshll.u32 %v5124, 16
      %v5352 = vrot.slane %v5350, 5
      %v5353 = vor.u32 %v5349, %v5352
      %v5354 = vrot.slane %v5353, 4
      %v5356 = vshll.u32 %v5125, 16
      %v5358 = vrot.slane %v5356, 5
      %v5359 = vsel %vm2127, %v5354, %v5358
      %v5360 = vshrl.u32 %v5125, 16
      %v5362 = vrot.slane %v5360, 4
      %v5363 = vor.u32 %v5362, %v5358
      %v5364 = vrot.slane %v5363, 4
      %v5366 = vshll.u32 %v5126, 16
      %v5368 = vrot.slane %v5366, 5
      %v5369 = vsel %vm2127, %v5364, %v5368
      %v5371 = vshrl.u32 %v5127, 16
      %v5373 = vrot.slane %v5371, 4
      %v5374 = vshll.u32 %v5127, 16
      %v5376 = vrot.slane %v5374, 5
      %v5377 = vor.u32 %v5373, %v5376
      %v5378 = vrot.slane %v5377, 4
      %v5380 = vshll.u32 %v5128, 16
      %v5382 = vrot.slane %v5380, 5
      %v5383 = vsel %vm2127, %v5378, %v5382
      %v5384 = vshrl.u32 %v5128, 16
      %v5386 = vrot.slane %v5384, 4
      %v5387 = vor.u32 %v5386, %v5382
      %v5388 = vrot.slane %v5387, 4
      %v5390 = vshll.u32 %v5129, 16
      %v5392 = vrot.slane %v5390, 5
      %v5393 = vsel %vm2127, %v5388, %v5392
      %v5395 = vshrl.u32 %v5130, 16
      %v5397 = vrot.slane %v5395, 4
      %v5398 = vshll.u32 %v5130, 16
      %v5400 = vrot.slane %v5398, 5
      %v5401 = vor.u32 %v5397, %v5400
      %v5402 = vrot.slane %v5401, 4
      %v5404 = vshll.u32 %v5131, 16
      %v5406 = vrot.slane %v5404, 5
      %v5407 = vsel %vm2127, %v5402, %v5406
      %v5408 = vshrl.u32 %v5131, 16
      %v5410 = vrot.slane %v5408, 4
      %v5411 = vor.u32 %v5410, %v5406
      %v5412 = vrot.slane %v5411, 4
      %v5414 = vshll.u32 %v5132, 16
      %v5416 = vrot.slane %v5414, 5
      %v5417 = vsel %vm2127, %v5412, %v5416
      %v5419 = vshrl.u32 %v5133, 16
      %v5421 = vrot.slane %v5419, 4
      %v5422 = vshll.u32 %v5133, 16
      %v5424 = vrot.slane %v5422, 5
      %v5425 = vor.u32 %v5421, %v5424
      %v5426 = vrot.slane %v5425, 4
      %v5428 = vshll.u32 %v5134, 16
      %v5430 = vrot.slane %v5428, 5
      %v5431 = vsel %vm2127, %v5426, %v5430
      %v5432 = vshrl.u32 %v5134, 16
      %v5434 = vrot.slane %v5432, 4
      %v5435 = vor.u32 %v5434, %v5430
      %v5436 = vrot.slane %v5435, 4
      %v5438 = vshll.u32 %v5135, 16
      %v5440 = vrot.slane %v5438, 5
      %v5441 = vsel %vm2127, %v5436, %v5440
      %v5443 = vshrl.u32 %v5136, 16
      %v5445 = vrot.slane %v5443, 4
      %v5446 = vshll.u32 %v5136, 16
      %v5448 = vrot.slane %v5446, 5
      %v5449 = vor.u32 %v5445, %v5448
      %v5450 = vrot.slane %v5449, 4
      %v5452 = vshll.u32 %v5137, 16
      %v5454 = vrot.slane %v5452, 5
      %v5455 = vsel %vm2127, %v5450, %v5454
      %v5456 = vshrl.u32 %v5137, 16
      %v5458 = vrot.slane %v5456, 4
      %v5459 = vor.u32 %v5458, %v5454
      %v5460 = vrot.slane %v5459, 4
      %v5462 = vshll.u32 %v5138, 16
      %v5464 = vrot.slane %v5462, 5
      %v5465 = vsel %vm2127, %v5460, %v5464
      %v5467 = vshrl.u32 %v5139, 16
      %v5469 = vrot.slane %v5467, 4
      %v5470 = vshll.u32 %v5139, 16
      %v5472 = vrot.slane %v5470, 5
      %v5473 = vor.u32 %v5469, %v5472
      %v5474 = vrot.slane %v5473, 4
      %v5476 = vshll.u32 %v5140, 16
      %v5478 = vrot.slane %v5476, 5
      %v5479 = vsel %vm2127, %v5474, %v5478
      %v5480 = vshrl.u32 %v5140, 16
      %v5482 = vrot.slane %v5480, 4
      %v5483 = vor.u32 %v5482, %v5478
      %v5484 = vrot.slane %v5483, 4
      %v5486 = vshll.u32 %v5141, 16
      %v5488 = vrot.slane %v5486, 5
      %v5489 = vsel %vm2127, %v5484, %v5488
      %v5491 = vshrl.u32 %v5142, 16
      %v5493 = vrot.slane %v5491, 4
      %v5494 = vshll.u32 %v5142, 16
      %v5496 = vrot.slane %v5494, 5
      %v5497 = vor.u32 %v5493, %v5496
      %v5498 = vrot.slane %v5497, 4
      %v5500 = vshll.u32 %v5143, 16
      %v5502 = vrot.slane %v5500, 5
      %v5503 = vsel %vm2127, %v5498, %v5502
      %v5504 = vshrl.u32 %v5143, 16
      %v5506 = vrot.slane %v5504, 4
      %v5507 = vor.u32 %v5506, %v5502
      %v5508 = vrot.slane %v5507, 4
      %v5510 = vshll.u32 %v5144, 16
      %v5512 = vrot.slane %v5510, 5
      %v5513 = vsel %vm2127, %v5508, %v5512
      %v5515 = vshrl.u32 %v5145, 16
      %v5517 = vrot.slane %v5515, 4
      %v5518 = vshll.u32 %v5145, 16
      %v5520 = vrot.slane %v5518, 5
      %v5521 = vor.u32 %v5517, %v5520
      %v5522 = vrot.slane %v5521, 4
      %v5524 = vshll.u32 %v5146, 16
      %v5526 = vrot.slane %v5524, 5
      %v5527 = vsel %vm2127, %v5522, %v5526
      %v5528 = vshrl.u32 %v5146, 16
      %v5530 = vrot.slane %v5528, 4
      %v5531 = vor.u32 %v5530, %v5526
      %v5532 = vrot.slane %v5531, 4
      %v5534 = vshll.u32 %v5147, 16
      %v5536 = vrot.slane %v5534, 5
      %v5537 = vsel %vm2127, %v5532, %v5536
      %v5539 = vshrl.u32 %v5148, 16
      %v5541 = vrot.slane %v5539, 4
      %v5542 = vshll.u32 %v5148, 16
      %v5544 = vrot.slane %v5542, 5
      %v5545 = vor.u32 %v5541, %v5544
      %v5546 = vrot.slane %v5545, 4
      %v5548 = vshll.u32 %v5149, 16
      %v5550 = vrot.slane %v5548, 5
      %v5551 = vsel %vm2127, %v5546, %v5550
      %v5552 = vshrl.u32 %v5149, 16
      %v5554 = vrot.slane %v5552, 4
      %v5555 = vor.u32 %v5554, %v5550
      %v5556 = vrot.slane %v5555, 4
      %v5558 = vshll.u32 %v5150, 16
      %v5560 = vrot.slane %v5558, 5
      %v5561 = vsel %vm2127, %v5556, %v5560
      %v5563 = vshrl.u32 %v5151, 16
      %v5565 = vrot.slane %v5563, 4
      %v5566 = vshll.u32 %v5151, 16
      %v5568 = vrot.slane %v5566, 5
      %v5569 = vor.u32 %v5565, %v5568
      %v5570 = vrot.slane %v5569, 4
      %v5572 = vshll.u32 %v5152, 16
      %v5574 = vrot.slane %v5572, 5
      %v5575 = vsel %vm2127, %v5570, %v5574
      %v5576 = vshrl.u32 %v5152, 16
      %v5578 = vrot.slane %v5576, 4
      %v5579 = vor.u32 %v5578, %v5574
      %v5580 = vrot.slane %v5579, 4
      %v5582 = vshll.u32 %v5153, 16
      %v5584 = vrot.slane %v5582, 5
      %v5585 = vsel %vm2127, %v5580, %v5584
      %v5587 = vshrl.u32 %v5154, 16
      %v5589 = vrot.slane %v5587, 4
      %v5590 = vshll.u32 %v5154, 16
      %v5592 = vrot.slane %v5590, 5
      %v5593 = vor.u32 %v5589, %v5592
      %v5594 = vrot.slane %v5593, 4
      %v5596 = vshll.u32 %v5155, 16
      %v5598 = vrot.slane %v5596, 5
      %v5599 = vsel %vm2127, %v5594, %v5598
      %v5600 = vshrl.u32 %v5155, 16
      %v5602 = vrot.slane %v5600, 4
      %v5603 = vor.u32 %v5602, %v5598
      %v5604 = vrot.slane %v5603, 4
      %v5606 = vshll.u32 %v5156, 16
      %v5608 = vrot.slane %v5606, 5
      %v5609 = vsel %vm2127, %v5604, %v5608
      %v5611 = vshrl.u32 %v5157, 16
      %v5613 = vrot.slane %v5611, 4
      %v5614 = vshll.u32 %v5157, 16
      %v5616 = vrot.slane %v5614, 5
      %v5617 = vor.u32 %v5613, %v5616
      %v5618 = vrot.slane %v5617, 4
      %v5620 = vshll.u32 %v5158, 16
      %v5622 = vrot.slane %v5620, 5
      %v5623 = vsel %vm2127, %v5618, %v5622
      %v5624 = vshrl.u32 %v5158, 16
      %v5626 = vrot.slane %v5624, 4
      %v5627 = vor.u32 %v5626, %v5622
      %v5628 = vrot.slane %v5627, 4
      %v5630 = vshll.u32 %v5159, 16
      %v5632 = vrot.slane %v5630, 5
      %v5633 = vsel %vm2127, %v5628, %v5632
      %v5635 = vshrl.u32 %v5160, 16
      %v5637 = vrot.slane %v5635, 4
      %v5638 = vshll.u32 %v5160, 16
      %v5640 = vrot.slane %v5638, 5
      %v5641 = vor.u32 %v5637, %v5640
      %v5642 = vrot.slane %v5641, 4
      %v5644 = vshll.u32 %v5161, 16
      %v5646 = vrot.slane %v5644, 5
      %v5647 = vsel %vm2127, %v5642, %v5646
      %v5648 = vshrl.u32 %v5161, 16
      %v5650 = vrot.slane %v5648, 4
      %v5651 = vor.u32 %v5650, %v5646
      %v5652 = vrot.slane %v5651, 4
      %v5654 = vshll.u32 %v5162, 16
      %v5656 = vrot.slane %v5654, 5
      %v5657 = vsel %vm2127, %v5652, %v5656
      %v5659 = vshrl.u32 %v5163, 16
      %v5661 = vrot.slane %v5659, 4
      %v5662 = vshll.u32 %v5163, 16
      %v5664 = vrot.slane %v5662, 5
      %v5665 = vor.u32 %v5661, %v5664
      %v5666 = vrot.slane %v5665, 4
      %v5668 = vshll.u32 %v5164, 16
      %v5670 = vrot.slane %v5668, 5
      %v5671 = vsel %vm2127, %v5666, %v5670
      %v5672 = vshrl.u32 %v5164, 16
      %v5674 = vrot.slane %v5672, 4
      %v5675 = vor.u32 %v5674, %v5670
      %v5676 = vrot.slane %v5675, 4
      %v5678 = vshll.u32 %v5165, 16
      %v5680 = vrot.slane %v5678, 5
      %v5681 = vsel %vm2127, %v5676, %v5680
      %v5683 = vshrl.u32 %v5166, 16
      %v5685 = vrot.slane %v5683, 4
      %v5686 = vshll.u32 %v5166, 16
      %v5688 = vrot.slane %v5686, 5
      %v5689 = vor.u32 %v5685, %v5688
      %v5690 = vrot.slane %v5689, 4
      %v5692 = vshll.u32 %v5167, 16
      %v5694 = vrot.slane %v5692, 5
      %v5695 = vsel %vm2127, %v5690, %v5694
      %v5696 = vshrl.u32 %v5167, 16
      %v5698 = vrot.slane %v5696, 4
      %v5699 = vor.u32 %v5698, %v5694
      %v5700 = vrot.slane %v5699, 4
      %v5702 = vshll.u32 %v5168, 16
      %v5704 = vrot.slane %v5702, 5
      %v5705 = vsel %vm2127, %v5700, %v5704
      %v5707 = vshrl.u32 %v5169, 16
      %v5709 = vrot.slane %v5707, 4
      %v5710 = vshll.u32 %v5169, 16
      %v5712 = vrot.slane %v5710, 5
      %v5713 = vor.u32 %v5709, %v5712
      %v5714 = vrot.slane %v5713, 4
      %v5716 = vshll.u32 %v5170, 16
      %v5718 = vrot.slane %v5716, 5
      %v5719 = vsel %vm2127, %v5714, %v5718
      %v5720 = vshrl.u32 %v5170, 16
      %v5722 = vrot.slane %v5720, 4
      %v5723 = vor.u32 %v5722, %v5718
      %v5724 = vrot.slane %v5723, 4
      %v5726 = vshll.u32 %v5171, 16
      %v5728 = vrot.slane %v5726, 5
      %v5729 = vsel %vm2127, %v5724, %v5728
      %v5731 = vshrl.u32 %v5172, 16
      %v5733 = vrot.slane %v5731, 4
      %v5734 = vshll.u32 %v5172, 16
      %v5736 = vrot.slane %v5734, 5
      %v5737 = vor.u32 %v5733, %v5736
      %v5738 = vrot.slane %v5737, 4
      %v5740 = vshll.u32 %v5173, 16
      %v5742 = vrot.slane %v5740, 5
      %v5743 = vsel %vm2127, %v5738, %v5742
      %v5744 = vshrl.u32 %v5173, 16
      %v5746 = vrot.slane %v5744, 4
      %v5747 = vor.u32 %v5746, %v5742
      %v5748 = vrot.slane %v5747, 4
      %v5750 = vshll.u32 %v5174, 16
      %v5752 = vrot.slane %v5750, 5
      %v5753 = vsel %vm2127, %v5748, %v5752
      %v5755 = vshrl.u32 %v5175, 16
      %v5757 = vrot.slane %v5755, 4
      %v5758 = vshll.u32 %v5175, 16
      %v5760 = vrot.slane %v5758, 5
      %v5761 = vor.u32 %v5757, %v5760
      %v5762 = vrot.slane %v5761, 4
      %v5764 = vshll.u32 %v5176, 16
      %v5766 = vrot.slane %v5764, 5
      %v5767 = vsel %vm2127, %v5762, %v5766
      %v5768 = vshrl.u32 %v5176, 16
      %v5770 = vrot.slane %v5768, 4
      %v5771 = vor.u32 %v5770, %v5766
      %v5772 = vrot.slane %v5771, 4
      %v5774 = vshll.u32 %v5177, 16
      %v5776 = vrot.slane %v5774, 5
      %v5777 = vsel %vm2127, %v5772, %v5776
      %v5779 = vshrl.u32 %v5178, 16
      %v5781 = vrot.slane %v5779, 4
      %v5782 = vshll.u32 %v5178, 16
      %v5784 = vrot.slane %v5782, 5
      %v5785 = vor.u32 %v5781, %v5784
      %v5786 = vrot.slane %v5785, 4
      %v5788 = vshll.u32 %v5179, 16
      %v5790 = vrot.slane %v5788, 5
      %v5791 = vsel %vm2127, %v5786, %v5790
      %v5792 = vshrl.u32 %v5179, 16
      %v5794 = vrot.slane %v5792, 4
      %v5795 = vor.u32 %v5794, %v5790
      %v5796 = vrot.slane %v5795, 4
      %v5798 = vshll.u32 %v5180, 16
      %v5800 = vrot.slane %v5798, 5
      %v5801 = vsel %vm2127, %v5796, %v5800
      %v5803 = vshrl.u32 %v5181, 16
      %v5805 = vrot.slane %v5803, 4
      %v5806 = vshll.u32 %v5181, 16
      %v5808 = vrot.slane %v5806, 5
      %v5809 = vor.u32 %v5805, %v5808
      %v5810 = vrot.slane %v5809, 4
      %v5812 = vshll.u32 %v5182, 16
      %v5814 = vrot.slane %v5812, 5
      %v5815 = vsel %vm2127, %v5810, %v5814
      %v5816 = vshrl.u32 %v5182, 16
      %v5818 = vrot.slane %v5816, 4
      %v5819 = vor.u32 %v5818, %v5814
      %v5820 = vrot.slane %v5819, 4
      %v5822 = vshll.u32 %v5183, 16
      %v5824 = vrot.slane %v5822, 5
      %v5825 = vsel %vm2127, %v5820, %v5824
      %v5827 = vshrl.u32 %v5184, 16
      %v5829 = vrot.slane %v5827, 4
      %v5830 = vshll.u32 %v5184, 16
      %v5832 = vrot.slane %v5830, 5
      %v5833 = vor.u32 %v5829, %v5832
      %v5834 = vrot.slane %v5833, 4
      %v5836 = vshll.u32 %v5185, 16
      %v5838 = vrot.slane %v5836, 5
      %v5839 = vsel %vm2127, %v5834, %v5838
      %v5840 = vshrl.u32 %v5185, 16
      %v5842 = vrot.slane %v5840, 4
      %v5843 = vor.u32 %v5842, %v5838
      %v5844 = vrot.slane %v5843, 4
      %v5846 = vshll.u32 %v5186, 16
      %v5848 = vrot.slane %v5846, 5
      %v5849 = vsel %vm2127, %v5844, %v5848
      %v5851 = vshrl.u32 %v5187, 16
      %v5853 = vrot.slane %v5851, 4
      %v5854 = vshll.u32 %v5187, 16
      %v5856 = vrot.slane %v5854, 5
      %v5857 = vor.u32 %v5853, %v5856
      %v5858 = vrot.slane %v5857, 4
      %v5860 = vshll.u32 %v5188, 16
      %v5862 = vrot.slane %v5860, 5
      %v5863 = vsel %vm2127, %v5858, %v5862
      %v5864 = vshrl.u32 %v5188, 16
      %v5866 = vrot.slane %v5864, 4
      %v5867 = vor.u32 %v5866, %v5862
      %v5868 = vrot.slane %v5867, 4
      %v5870 = vshll.u32 %v5189, 16
      %v5872 = vrot.slane %v5870, 5
      %v5873 = vsel %vm2127, %v5868, %v5872
      %v5875 = vshrl.u32 %v5190, 16
      %v5877 = vrot.slane %v5875, 4
      %v5878 = vshll.u32 %v5190, 16
      %v5880 = vrot.slane %v5878, 5
      %v5881 = vor.u32 %v5877, %v5880
      %v5882 = vrot.slane %v5881, 4
      %v5884 = vshll.u32 %v5191, 16
      %v5886 = vrot.slane %v5884, 5
      %v5887 = vsel %vm2127, %v5882, %v5886
      %v5888 = vshrl.u32 %v5191, 16
      %v5890 = vrot.slane %v5888, 4
      %v5891 = vor.u32 %v5890, %v5886
      %v5892 = vrot.slane %v5891, 4
      %v5894 = vshll.u32 %v5192, 16
      %v5896 = vrot.slane %v5894, 5
      %v5897 = vsel %vm2127, %v5892, %v5896
      %v5899 = vshrl.u32 %v5193, 16
      %v5901 = vrot.slane %v5899, 4
      %v5902 = vshll.u32 %v5193, 16
      %v5904 = vrot.slane %v5902, 5
      %v5905 = vor.u32 %v5901, %v5904
      %v5906 = vrot.slane %v5905, 4
      %v5908 = vshll.u32 %v5194, 16
      %v5910 = vrot.slane %v5908, 5
      %v5911 = vsel %vm2127, %v5906, %v5910
      %v5912 = vshrl.u32 %v5194, 16
      %v5914 = vrot.slane %v5912, 4
      %v5915 = vor.u32 %v5914, %v5910
      %v5916 = vrot.slane %v5915, 4
      %v5918 = vshll.u32 %v5195, 16
      %v5920 = vrot.slane %v5918, 5
      %v5921 = vsel %vm2127, %v5916, %v5920
      %v5923 = vshrl.u32 %v5196, 16
      %v5925 = vrot.slane %v5923, 4
      %v5926 = vshll.u32 %v5196, 16
      %v5928 = vrot.slane %v5926, 5
      %v5929 = vor.u32 %v5925, %v5928
      %v5930 = vrot.slane %v5929, 4
      %v5932 = vshll.u32 %v5197, 16
      %v5934 = vrot.slane %v5932, 5
      %v5935 = vsel %vm2127, %v5930, %v5934
      %v5936 = vshrl.u32 %v5197, 16
      %v5938 = vrot.slane %v5936, 4
      %v5939 = vor.u32 %v5938, %v5934
      %v5940 = vrot.slane %v5939, 4
      %v5942 = vshll.u32 %v5198, 16
      %v5944 = vrot.slane %v5942, 5
      %v5945 = vsel %vm2127, %v5940, %v5944
      %v5947 = vshrl.u32 %v5199, 16
      %v5949 = vrot.slane %v5947, 4
      %v5950 = vshll.u32 %v5199, 16
      %v5952 = vrot.slane %v5950, 5
      %v5953 = vor.u32 %v5949, %v5952
      %v5954 = vrot.slane %v5953, 4
      %v5956 = vshll.u32 %v5200, 16
      %v5958 = vrot.slane %v5956, 5
      %v5959 = vsel %vm2127, %v5954, %v5958
      %v5960 = vshrl.u32 %v5200, 16
      %v5962 = vrot.slane %v5960, 4
      %v5963 = vor.u32 %v5962, %v5958
      %v5964 = vrot.slane %v5963, 4
      %v5966 = vshll.u32 %v5201, 16
      %v5968 = vrot.slane %v5966, 5
      %v5969 = vsel %vm2127, %v5964, %v5968
      %s5970 = scalar_lea.vmem %s3, 128
      %v5971 = vld [vmem:[%s5970] sm:$0xf]
      %v5972 = vld [vmem:[%s5970 + $0x4] sm:$0xf]
      %v5973 = vld [vmem:[%s5970 + $0x8] sm:$0xf]
      %v5974 = vld [vmem:[%s5970 + $0xc] sm:$0xf]
      %v5975 = vld [vmem:[%s5970 + $0x10] sm:$0xf]
      %v5976 = vld [vmem:[%s5970 + $0x14] sm:$0xf]
      %v5977 = vld [vmem:[%s5970 + $0x18] sm:$0xf]
      %v5978 = vld [vmem:[%s5970 + $0x1c] sm:$0xf]
      %v5979 = vunpack.c.l.b16 %v5215
      %v5980 = vunpack.c.l.b16 %v5225
      %v5981 = vunpack.c.l.b16 %v5239
      %v5982 = vunpack.c.l.b16 %v5249
      %v5983 = vunpack.c.l.b16 %v5263
      %v5984 = vunpack.c.l.b16 %v5273
      %v5985 = vunpack.c.l.b16 %v5287
      %v5986 = vunpack.c.l.b16 %v5297
      %v5987 = vunpack.c.l.b16 %v5311
      %v5988 = vunpack.c.l.b16 %v5321
      %v5989 = vunpack.c.l.b16 %v5335
      %v5990 = vunpack.c.l.b16 %v5345
      %v5991 = vunpack.c.l.b16 %v5359
      %v5992 = vunpack.c.l.b16 %v5369
      %v5993 = vunpack.c.l.b16 %v5383
      %v5994 = vunpack.c.l.b16 %v5393
      %v5995 = vunpack.c.l.b16 %v5407
      %v5996 = vunpack.c.l.b16 %v5417
      %v5997 = vunpack.c.l.b16 %v5431
      %v5998 = vunpack.c.l.b16 %v5441
      %v5999 = vunpack.c.l.b16 %v5455
      %v6000 = vunpack.c.l.b16 %v5465
      %v6001 = vunpack.c.l.b16 %v5479
      %v6002 = vunpack.c.l.b16 %v5489
      %v6003 = vunpack.c.l.b16 %v5503
      %v6004 = vunpack.c.l.b16 %v5513
      %v6005 = vunpack.c.l.b16 %v5527
      %v6006 = vunpack.c.l.b16 %v5537
      %v6007 = vunpack.c.l.b16 %v5551
      %v6008 = vunpack.c.l.b16 %v5561
      %v6009 = vunpack.c.l.b16 %v5575
      %v6010 = vunpack.c.l.b16 %v5585
      %v6011 = vunpack.c.l.b16 %v5599
      %v6012 = vunpack.c.l.b16 %v5609
      %v6013 = vunpack.c.l.b16 %v5623
      %v6014 = vunpack.c.l.b16 %v5633
      %v6015 = vunpack.c.l.b16 %v5647
      %v6016 = vunpack.c.l.b16 %v5657
      %v6017 = vunpack.c.l.b16 %v5671
      %v6018 = vunpack.c.l.b16 %v5681
      %v6019 = vunpack.c.l.b16 %v5695
      %v6020 = vunpack.c.l.b16 %v5705
      %v6021 = vunpack.c.l.b16 %v5719
      %v6022 = vunpack.c.l.b16 %v5729
      %v6023 = vunpack.c.l.b16 %v5743
      %v6024 = vunpack.c.l.b16 %v5753
      %v6025 = vunpack.c.l.b16 %v5767
      %v6026 = vunpack.c.l.b16 %v5777
      %v6027 = vunpack.c.l.b16 %v5791
      %v6028 = vunpack.c.l.b16 %v5801
      %v6029 = vunpack.c.l.b16 %v5815
      %v6030 = vunpack.c.l.b16 %v5825
      %v6031 = vunpack.c.l.b16 %v5839
      %v6032 = vunpack.c.l.b16 %v5849
      %v6033 = vunpack.c.l.b16 %v5863
      %v6034 = vunpack.c.l.b16 %v5873
      %v6035 = vunpack.c.l.b16 %v5887
      %v6036 = vunpack.c.l.b16 %v5897
      %v6037 = vunpack.c.l.b16 %v5911
      %v6038 = vunpack.c.l.b16 %v5921
      %v6039 = vunpack.c.l.b16 %v5935
      %v6040 = vunpack.c.l.b16 %v5945
      %v6041 = vunpack.c.l.b16 %v5959
      %v6042 = vunpack.c.l.b16 %v5969
      %v6043 = vpack.c.b16 %v5980, %v5979
      %v6044 = vpack.c.b16 %v5982, %v5981
      %v6045 = vpack.c.b16 %v5984, %v5983
      %v6046 = vpack.c.b16 %v5986, %v5985
      %v6047 = vpack.c.b16 %v5988, %v5987
      %v6048 = vpack.c.b16 %v5990, %v5989
      %v6049 = vpack.c.b16 %v5992, %v5991
      %v6050 = vpack.c.b16 %v5994, %v5993
      %v6051 = vpack.c.b16 %v5996, %v5995
      %v6052 = vpack.c.b16 %v5998, %v5997
      %v6053 = vpack.c.b16 %v6000, %v5999
      %v6054 = vpack.c.b16 %v6002, %v6001
      %v6055 = vpack.c.b16 %v6004, %v6003
      %v6056 = vpack.c.b16 %v6006, %v6005
      %v6057 = vpack.c.b16 %v6008, %v6007
      %v6058 = vpack.c.b16 %v6010, %v6009
      %v6059 = vpack.c.b16 %v6012, %v6011
      %v6060 = vpack.c.b16 %v6014, %v6013
      %v6061 = vpack.c.b16 %v6016, %v6015
      %v6062 = vpack.c.b16 %v6018, %v6017
      %v6063 = vpack.c.b16 %v6020, %v6019
      %v6064 = vpack.c.b16 %v6022, %v6021
      %v6065 = vpack.c.b16 %v6024, %v6023
      %v6066 = vpack.c.b16 %v6026, %v6025
      %v6067 = vpack.c.b16 %v6028, %v6027
      %v6068 = vpack.c.b16 %v6030, %v6029
      %v6069 = vpack.c.b16 %v6032, %v6031
      %v6070 = vpack.c.b16 %v6034, %v6033
      %v6071 = vpack.c.b16 %v6036, %v6035
      %v6072 = vpack.c.b16 %v6038, %v6037
      %v6073 = vpack.c.b16 %v6040, %v6039
      %v6074 = vpack.c.b16 %v6042, %v6041
      %v6083 = vunpack.c.l.b16 %v5971
      %v6084 = vunpack.c.l.b16 %v5972
      %v6085 = vunpack.c.l.b16 %v5973
      %v6086 = vunpack.c.l.b16 %v5974
      %v6087 = vunpack.c.l.b16 %v5975
      %v6088 = vunpack.c.l.b16 %v5976
      %v6089 = vunpack.c.l.b16 %v5977
      %v6090 = vunpack.c.l.b16 %v5978
      %v6091 = vpack.c.b16 %v6084, %v6083
      %v6092 = vpack.c.b16 %v6086, %v6085
      %v6093 = vpack.c.b16 %v6088, %v6087
      %v6094 = vpack.c.b16 %v6090, %v6089
      %v6100 = vsel %vm548, %v6043, 0
      %v6103 = vsel %vm548, %v6044, 0
      %v6106 = vsel %vm548, %v6045, 0
      %v6109 = vsel %vm548, %v6046, 0
      %v6112 = vsel %vm548, %v6047, 0
      %v6115 = vsel %vm548, %v6048, 0
      %v6118 = vsel %vm548, %v6049, 0
      %v6121 = vsel %vm548, %v6050, 0
      %v6124 = vsel %vm548, %v6051, 0
      %v6127 = vsel %vm548, %v6052, 0
      %v6130 = vsel %vm548, %v6053, 0
      %v6133 = vsel %vm548, %v6054, 0
      %v6136 = vsel %vm548, %v6055, 0
      %v6139 = vsel %vm548, %v6056, 0
      %v6142 = vsel %vm548, %v6057, 0
      %v6145 = vsel %vm548, %v6058, 0
      %v6148 = vsel %vm548, %v6059, 0
      %v6151 = vsel %vm548, %v6060, 0
      %v6154 = vsel %vm548, %v6061, 0
      %v6157 = vsel %vm548, %v6062, 0
      %v6160 = vsel %vm548, %v6063, 0
      %v6163 = vsel %vm548, %v6064, 0
      %v6166 = vsel %vm548, %v6065, 0
      %v6169 = vsel %vm548, %v6066, 0
      %v6172 = vsel %vm548, %v6067, 0
      %v6175 = vsel %vm548, %v6068, 0
      %v6178 = vsel %vm548, %v6069, 0
      %v6181 = vsel %vm548, %v6070, 0
      %v6184 = vsel %vm548, %v6071, 0
      %v6187 = vsel %vm548, %v6072, 0
      %v6190 = vsel %vm548, %v6073, 0
      %v6193 = vsel %vm548, %v6074, 0
      %6195 = vmatpush.bf16.msra.mxu0 0
      %6196 = vmatpush.bf16.msra.mxu0 0
      %6197 = vmatpush.bf16.msra.mxu0 0
      %6198 = vmatpush.bf16.msra.mxu0 0
      %6199 = vmatpush.bf16.msra.mxu0 %v6094
      %6200 = vmatpush.bf16.msra.mxu0 %v6093
      %6201 = vmatpush.bf16.msra.mxu0 %v6092
      %6202 = vmatpush.bf16.msra.mxu0 %v6091
      %6203 = vmatmul.bf16.gmra.mxu0 %v6100
      %v6204 = vpop.f32.mrf.mxu0
      %v6205 = vadd.f32 0.0, %v6204
      %v6206 = vpop.f32.mrf.mxu0
      %v6207 = vadd.f32 0.0, %v6206
      %6208 = vmatmul.bf16.gmra.mxu0 %v6103
      %v6209 = vpop.f32.mrf.mxu0
      %v6210 = vadd.f32 0.0, %v6209
      %v6211 = vpop.f32.mrf.mxu0
      %v6212 = vadd.f32 0.0, %v6211
      %6213 = vmatmul.bf16.gmra.mxu0 %v6106
      %v6214 = vpop.f32.mrf.mxu0
      %v6215 = vadd.f32 0.0, %v6214
      %v6216 = vpop.f32.mrf.mxu0
      %v6217 = vadd.f32 0.0, %v6216
      %6218 = vmatmul.bf16.gmra.mxu0 %v6109
      %v6219 = vpop.f32.mrf.mxu0
      %v6220 = vadd.f32 0.0, %v6219
      %v6221 = vpop.f32.mrf.mxu0
      %v6222 = vadd.f32 0.0, %v6221
      %6223 = vmatmul.bf16.gmra.mxu0 %v6112
      %v6224 = vpop.f32.mrf.mxu0
      %v6225 = vadd.f32 0.0, %v6224
      %v6226 = vpop.f32.mrf.mxu0
      %v6227 = vadd.f32 0.0, %v6226
      %6228 = vmatmul.bf16.gmra.mxu0 %v6115
      %v6229 = vpop.f32.mrf.mxu0
      %v6230 = vadd.f32 0.0, %v6229
      %v6231 = vpop.f32.mrf.mxu0
      %v6232 = vadd.f32 0.0, %v6231
      %6233 = vmatmul.bf16.gmra.mxu0 %v6118
      %v6234 = vpop.f32.mrf.mxu0
      %v6235 = vadd.f32 0.0, %v6234
      %v6236 = vpop.f32.mrf.mxu0
      %v6237 = vadd.f32 0.0, %v6236
      %6238 = vmatmul.bf16.gmra.mxu0 %v6121
      %v6239 = vpop.f32.mrf.mxu0
      %v6240 = vadd.f32 0.0, %v6239
      %v6241 = vpop.f32.mrf.mxu0
      %v6242 = vadd.f32 0.0, %v6241
      %6243 = vmatmul.bf16.gmra.mxu0 %v6124
      %v6244 = vpop.f32.mrf.mxu0
      %v6245 = vadd.f32 0.0, %v6244
      %v6246 = vpop.f32.mrf.mxu0
      %v6247 = vadd.f32 0.0, %v6246
      %6248 = vmatmul.bf16.gmra.mxu0 %v6127
      %v6249 = vpop.f32.mrf.mxu0
      %v6250 = vadd.f32 0.0, %v6249
      %v6251 = vpop.f32.mrf.mxu0
      %v6252 = vadd.f32 0.0, %v6251
      %6253 = vmatmul.bf16.gmra.mxu0 %v6130
      %v6254 = vpop.f32.mrf.mxu0
      %v6255 = vadd.f32 0.0, %v6254
      %v6256 = vpop.f32.mrf.mxu0
      %v6257 = vadd.f32 0.0, %v6256
      %6258 = vmatmul.bf16.gmra.mxu0 %v6133
      %v6259 = vpop.f32.mrf.mxu0
      %v6260 = vadd.f32 0.0, %v6259
      %v6261 = vpop.f32.mrf.mxu0
      %v6262 = vadd.f32 0.0, %v6261
      %6263 = vmatmul.bf16.gmra.mxu0 %v6136
      %v6264 = vpop.f32.mrf.mxu0
      %v6265 = vadd.f32 0.0, %v6264
      %v6266 = vpop.f32.mrf.mxu0
      %v6267 = vadd.f32 0.0, %v6266
      %6268 = vmatmul.bf16.gmra.mxu0 %v6139
      %v6269 = vpop.f32.mrf.mxu0
      %v6270 = vadd.f32 0.0, %v6269
      %v6271 = vpop.f32.mrf.mxu0
      %v6272 = vadd.f32 0.0, %v6271
      %6273 = vmatmul.bf16.gmra.mxu0 %v6142
      %v6274 = vpop.f32.mrf.mxu0
      %v6275 = vadd.f32 0.0, %v6274
      %v6276 = vpop.f32.mrf.mxu0
      %v6277 = vadd.f32 0.0, %v6276
      %6278 = vmatmul.bf16.gmra.mxu0 %v6145
      %v6279 = vpop.f32.mrf.mxu0
      %v6280 = vadd.f32 0.0, %v6279
      %v6281 = vpop.f32.mrf.mxu0
      %v6282 = vadd.f32 0.0, %v6281
      %6283 = vmatmul.bf16.gmra.mxu0 %v6148
      %v6284 = vpop.f32.mrf.mxu0
      %v6285 = vadd.f32 0.0, %v6284
      %v6286 = vpop.f32.mrf.mxu0
      %v6287 = vadd.f32 0.0, %v6286
      %6288 = vmatmul.bf16.gmra.mxu0 %v6151
      %v6289 = vpop.f32.mrf.mxu0
      %v6290 = vadd.f32 0.0, %v6289
      %v6291 = vpop.f32.mrf.mxu0
      %v6292 = vadd.f32 0.0, %v6291
      %6293 = vmatmul.bf16.gmra.mxu0 %v6154
      %v6294 = vpop.f32.mrf.mxu0
      %v6295 = vadd.f32 0.0, %v6294
      %v6296 = vpop.f32.mrf.mxu0
      %v6297 = vadd.f32 0.0, %v6296
      %6298 = vmatmul.bf16.gmra.mxu0 %v6157
      %v6299 = vpop.f32.mrf.mxu0
      %v6300 = vadd.f32 0.0, %v6299
      %v6301 = vpop.f32.mrf.mxu0
      %v6302 = vadd.f32 0.0, %v6301
      %6303 = vmatmul.bf16.gmra.mxu0 %v6160
      %v6304 = vpop.f32.mrf.mxu0
      %v6305 = vadd.f32 0.0, %v6304
      %v6306 = vpop.f32.mrf.mxu0
      %v6307 = vadd.f32 0.0, %v6306
      %6308 = vmatmul.bf16.gmra.mxu0 %v6163
      %v6309 = vpop.f32.mrf.mxu0
      %v6310 = vadd.f32 0.0, %v6309
      %v6311 = vpop.f32.mrf.mxu0
      %v6312 = vadd.f32 0.0, %v6311
      %6313 = vmatmul.bf16.gmra.mxu0 %v6166
      %v6314 = vpop.f32.mrf.mxu0
      %v6315 = vadd.f32 0.0, %v6314
      %v6316 = vpop.f32.mrf.mxu0
      %v6317 = vadd.f32 0.0, %v6316
      %6318 = vmatmul.bf16.gmra.mxu0 %v6169
      %v6319 = vpop.f32.mrf.mxu0
      %v6320 = vadd.f32 0.0, %v6319
      %v6321 = vpop.f32.mrf.mxu0
      %v6322 = vadd.f32 0.0, %v6321
      %6323 = vmatmul.bf16.gmra.mxu0 %v6172
      %v6324 = vpop.f32.mrf.mxu0
      %v6325 = vadd.f32 0.0, %v6324
      %v6326 = vpop.f32.mrf.mxu0
      %v6327 = vadd.f32 0.0, %v6326
      %6328 = vmatmul.bf16.gmra.mxu0 %v6175
      %v6329 = vpop.f32.mrf.mxu0
      %v6330 = vadd.f32 0.0, %v6329
      %v6331 = vpop.f32.mrf.mxu0
      %v6332 = vadd.f32 0.0, %v6331
      %6333 = vmatmul.bf16.gmra.mxu0 %v6178
      %v6334 = vpop.f32.mrf.mxu0
      %v6335 = vadd.f32 0.0, %v6334
      %v6336 = vpop.f32.mrf.mxu0
      %v6337 = vadd.f32 0.0, %v6336
      %6338 = vmatmul.bf16.gmra.mxu0 %v6181
      %v6339 = vpop.f32.mrf.mxu0
      %v6340 = vadd.f32 0.0, %v6339
      %v6341 = vpop.f32.mrf.mxu0
      %v6342 = vadd.f32 0.0, %v6341
      %6343 = vmatmul.bf16.gmra.mxu0 %v6184
      %v6344 = vpop.f32.mrf.mxu0
      %v6345 = vadd.f32 0.0, %v6344
      %v6346 = vpop.f32.mrf.mxu0
      %v6347 = vadd.f32 0.0, %v6346
      %6348 = vmatmul.bf16.gmra.mxu0 %v6187
      %v6349 = vpop.f32.mrf.mxu0
      %v6350 = vadd.f32 0.0, %v6349
      %v6351 = vpop.f32.mrf.mxu0
      %v6352 = vadd.f32 0.0, %v6351
      %6353 = vmatmul.bf16.gmra.mxu0 %v6190
      %v6354 = vpop.f32.mrf.mxu0
      %v6355 = vadd.f32 0.0, %v6354
      %v6356 = vpop.f32.mrf.mxu0
      %v6357 = vadd.f32 0.0, %v6356
      %6358 = vmatmul.bf16.gmra.mxu0 %v6193
      %v6359 = vpop.f32.mrf.mxu0
      %v6360 = vadd.f32 0.0, %v6359
      %v6361 = vpop.f32.mrf.mxu0
      %v6362 = vadd.f32 0.0, %v6361
      %6363 = vdwg.mxu0
      %v6364 = vadd.f32 %v5042, %v6205
      %v6365 = vadd.f32 %v5043, %v6207
      %v6366 = vadd.f32 %v5044, %v6210
      %v6367 = vadd.f32 %v5045, %v6212
      %v6368 = vadd.f32 %v5046, %v6215
      %v6369 = vadd.f32 %v5047, %v6217
      %v6370 = vadd.f32 %v5048, %v6220
      %v6371 = vadd.f32 %v5049, %v6222
      %v6372 = vadd.f32 %v5050, %v6225
      %v6373 = vadd.f32 %v5051, %v6227
      %v6374 = vadd.f32 %v5052, %v6230
      %v6375 = vadd.f32 %v5053, %v6232
      %v6376 = vadd.f32 %v5054, %v6235
      %v6377 = vadd.f32 %v5055, %v6237
      %v6378 = vadd.f32 %v5056, %v6240
      %v6379 = vadd.f32 %v5057, %v6242
      %v6380 = vadd.f32 %v5058, %v6245
      %v6381 = vadd.f32 %v5059, %v6247
      %v6382 = vadd.f32 %v5060, %v6250
      %v6383 = vadd.f32 %v5061, %v6252
      %v6384 = vadd.f32 %v5062, %v6255
      %v6385 = vadd.f32 %v5063, %v6257
      %v6386 = vadd.f32 %v5064, %v6260
      %v6387 = vadd.f32 %v5065, %v6262
      %v6388 = vadd.f32 %v5066, %v6265
      %v6389 = vadd.f32 %v5067, %v6267
      %v6390 = vadd.f32 %v5068, %v6270
      %v6391 = vadd.f32 %v5069, %v6272
      %v6392 = vadd.f32 %v5070, %v6275
      %v6393 = vadd.f32 %v5071, %v6277
      %v6394 = vadd.f32 %v5072, %v6280
      %v6395 = vadd.f32 %v5073, %v6282
      %v6396 = vadd.f32 %v5074, %v6285
      %v6397 = vadd.f32 %v5075, %v6287
      %v6398 = vadd.f32 %v5076, %v6290
      %v6399 = vadd.f32 %v5077, %v6292
      %v6400 = vadd.f32 %v5078, %v6295
      %v6401 = vadd.f32 %v5079, %v6297
      %v6402 = vadd.f32 %v5080, %v6300
      %v6403 = vadd.f32 %v5081, %v6302
      %v6404 = vadd.f32 %v5082, %v6305
      %v6405 = vadd.f32 %v5083, %v6307
      %v6406 = vadd.f32 %v5084, %v6310
      %v6407 = vadd.f32 %v5085, %v6312
      %v6408 = vadd.f32 %v5086, %v6315
      %v6409 = vadd.f32 %v5087, %v6317
      %v6410 = vadd.f32 %v5088, %v6320
      %v6411 = vadd.f32 %v5089, %v6322
      %v6412 = vadd.f32 %v5090, %v6325
      %v6413 = vadd.f32 %v5091, %v6327
      %v6414 = vadd.f32 %v5092, %v6330
      %v6415 = vadd.f32 %v5093, %v6332
      %v6416 = vadd.f32 %v5094, %v6335
      %v6417 = vadd.f32 %v5095, %v6337
      %v6418 = vadd.f32 %v5096, %v6340
      %v6419 = vadd.f32 %v5097, %v6342
      %v6420 = vadd.f32 %v5098, %v6345
      %v6421 = vadd.f32 %v5099, %v6347
      %v6422 = vadd.f32 %v5100, %v6350
      %v6423 = vadd.f32 %v5101, %v6352
      %v6424 = vadd.f32 %v5102, %v6355
      %v6425 = vadd.f32 %v5103, %v6357
      %v6426 = vadd.f32 %v5104, %v6360
      %v6427 = vadd.f32 %v5105, %v6362
      %v6428 = vld [vmem:[%s892] sm:$0xe]
      %v6429 = vld [vmem:[%s892 + $0xc] sm:$0xe]
      %v6430 = vld [vmem:[%s892 + $0x18] sm:$0xe]
      %v6431 = vld [vmem:[%s892 + $0x24] sm:$0xe]
      %v6432 = vld [vmem:[%s892 + $0x30] sm:$0xe]
      %v6433 = vld [vmem:[%s892 + $0x3c] sm:$0xe]
      %v6434 = vld [vmem:[%s892 + $0x48] sm:$0xe]
      %v6435 = vld [vmem:[%s892 + $0x54] sm:$0xe]
      %v6436 = vld [vmem:[%s892 + $0x60] sm:$0xe]
      %v6437 = vld [vmem:[%s892 + $0x6c] sm:$0xe]
      %v6438 = vld [vmem:[%s892 + $0x78] sm:$0xe]
      %v6439 = vld [vmem:[%s892 + $0x84] sm:$0xe]
      %v6440 = vld [vmem:[%s892 + $0x90] sm:$0xe]
      %v6441 = vld [vmem:[%s892 + $0x9c] sm:$0xe]
      %v6442 = vld [vmem:[%s892 + $0xa8] sm:$0xe]
      %v6443 = vld [vmem:[%s892 + $0xb4] sm:$0xe]
      %v6444 = vld [vmem:[%s892 + $0xd8] sm:$0xe]
      %v6445 = vld [vmem:[%s892 + $0xe4] sm:$0xe]
      %v6446 = vld [vmem:[%s892 + $0xf0] sm:$0xe]
      %v6447 = vld [vmem:[%s892 + $0xfc] sm:$0xe]
      %v6448 = vld [vmem:[%s892 + $0x108] sm:$0xe]
      %v6449 = vld [vmem:[%s892 + $0x114] sm:$0xe]
      %v6450 = vld [vmem:[%s892 + $0x120] sm:$0xe]
      %v6451 = vld [vmem:[%s892 + $0x12c] sm:$0xe]
      %v6452 = vld [vmem:[%s892 + $0x138] sm:$0xe]
      %v6453 = vld [vmem:[%s892 + $0x144] sm:$0xe]
      %v6454 = vld [vmem:[%s892 + $0x150] sm:$0xe]
      %v6455 = vld [vmem:[%s892 + $0x15c] sm:$0xe]
      %v6456 = vld [vmem:[%s892 + $0x168] sm:$0xe]
      %v6457 = vld [vmem:[%s892 + $0x174] sm:$0xe]
      %v6458 = vld [vmem:[%s892 + $0x180] sm:$0xe]
      %v6459 = vld [vmem:[%s892 + $0x18c] sm:$0xe]
      %v6556 = vrot.slane %v6428, 5
      %v6557 = vrot.slane %v6556, 4
      %v6558 = vrot.slane %v5107, 5
      %v6559 = vsel %vm3837, %v6557, %v6558
      %v6560 = vrot.slane %v6558, 4
      %v6561 = vrot.slane %v5108, 5
      %v6562 = vsel %vm3837, %v6560, %v6561
      %v6563 = vrot.slane %v6429, 5
      %v6564 = vrot.slane %v6563, 4
      %v6565 = vrot.slane %v5110, 5
      %v6566 = vsel %vm3837, %v6564, %v6565
      %v6567 = vrot.slane %v6565, 4
      %v6568 = vrot.slane %v5111, 5
      %v6569 = vsel %vm3837, %v6567, %v6568
      %v6570 = vrot.slane %v6430, 5
      %v6571 = vrot.slane %v6570, 4
      %v6572 = vrot.slane %v5113, 5
      %v6573 = vsel %vm3837, %v6571, %v6572
      %v6574 = vrot.slane %v6572, 4
      %v6575 = vrot.slane %v5114, 5
      %v6576 = vsel %vm3837, %v6574, %v6575
      %v6577 = vrot.slane %v6431, 5
      %v6578 = vrot.slane %v6577, 4
      %v6579 = vrot.slane %v5116, 5
      %v6580 = vsel %vm3837, %v6578, %v6579
      %v6581 = vrot.slane %v6579, 4
      %v6582 = vrot.slane %v5117, 5
      %v6583 = vsel %vm3837, %v6581, %v6582
      %v6584 = vrot.slane %v6432, 5
      %v6585 = vrot.slane %v6584, 4
      %v6586 = vrot.slane %v5119, 5
      %v6587 = vsel %vm3837, %v6585, %v6586
      %v6588 = vrot.slane %v6586, 4
      %v6589 = vrot.slane %v5120, 5
      %v6590 = vsel %vm3837, %v6588, %v6589
      %v6591 = vrot.slane %v6433, 5
      %v6592 = vrot.slane %v6591, 4
      %v6593 = vrot.slane %v5122, 5
      %v6594 = vsel %vm3837, %v6592, %v6593
      %v6595 = vrot.slane %v6593, 4
      %v6596 = vrot.slane %v5123, 5
      %v6597 = vsel %vm3837, %v6595, %v6596
      %v6598 = vrot.slane %v6434, 5
      %v6599 = vrot.slane %v6598, 4
      %v6600 = vrot.slane %v5125, 5
      %v6601 = vsel %vm3837, %v6599, %v6600
      %v6602 = vrot.slane %v6600, 4
      %v6603 = vrot.slane %v5126, 5
      %v6604 = vsel %vm3837, %v6602, %v6603
      %v6605 = vrot.slane %v6435, 5
      %v6606 = vrot.slane %v6605, 4
      %v6607 = vrot.slane %v5128, 5
      %v6608 = vsel %vm3837, %v6606, %v6607
      %v6609 = vrot.slane %v6607, 4
      %v6610 = vrot.slane %v5129, 5
      %v6611 = vsel %vm3837, %v6609, %v6610
      %v6612 = vrot.slane %v6436, 5
      %v6613 = vrot.slane %v6612, 4
      %v6614 = vrot.slane %v5131, 5
      %v6615 = vsel %vm3837, %v6613, %v6614
      %v6616 = vrot.slane %v6614, 4
      %v6617 = vrot.slane %v5132, 5
      %v6618 = vsel %vm3837, %v6616, %v6617
      %v6619 = vrot.slane %v6437, 5
      %v6620 = vrot.slane %v6619, 4
      %v6621 = vrot.slane %v5134, 5
      %v6622 = vsel %vm3837, %v6620, %v6621
      %v6623 = vrot.slane %v6621, 4
      %v6624 = vrot.slane %v5135, 5
      %v6625 = vsel %vm3837, %v6623, %v6624
      %v6626 = vrot.slane %v6438, 5
      %v6627 = vrot.slane %v6626, 4
      %v6628 = vrot.slane %v5137, 5
      %v6629 = vsel %vm3837, %v6627, %v6628
      %v6630 = vrot.slane %v6628, 4
      %v6631 = vrot.slane %v5138, 5
      %v6632 = vsel %vm3837, %v6630, %v6631
      %v6633 = vrot.slane %v6439, 5
      %v6634 = vrot.slane %v6633, 4
      %v6635 = vrot.slane %v5140, 5
      %v6636 = vsel %vm3837, %v6634, %v6635
      %v6637 = vrot.slane %v6635, 4
      %v6638 = vrot.slane %v5141, 5
      %v6639 = vsel %vm3837, %v6637, %v6638
      %v6640 = vrot.slane %v6440, 5
      %v6641 = vrot.slane %v6640, 4
      %v6642 = vrot.slane %v5143, 5
      %v6643 = vsel %vm3837, %v6641, %v6642
      %v6644 = vrot.slane %v6642, 4
      %v6645 = vrot.slane %v5144, 5
      %v6646 = vsel %vm3837, %v6644, %v6645
      %v6647 = vrot.slane %v6441, 5
      %v6648 = vrot.slane %v6647, 4
      %v6649 = vrot.slane %v5146, 5
      %v6650 = vsel %vm3837, %v6648, %v6649
      %v6651 = vrot.slane %v6649, 4
      %v6652 = vrot.slane %v5147, 5
      %v6653 = vsel %vm3837, %v6651, %v6652
      %v6654 = vrot.slane %v6442, 5
      %v6655 = vrot.slane %v6654, 4
      %v6656 = vrot.slane %v5149, 5
      %v6657 = vsel %vm3837, %v6655, %v6656
      %v6658 = vrot.slane %v6656, 4
      %v6659 = vrot.slane %v5150, 5
      %v6660 = vsel %vm3837, %v6658, %v6659
      %v6661 = vrot.slane %v6443, 5
      %v6662 = vrot.slane %v6661, 4
      %v6663 = vrot.slane %v5152, 5
      %v6664 = vsel %vm3837, %v6662, %v6663
      %v6665 = vrot.slane %v6663, 4
      %v6666 = vrot.slane %v5153, 5
      %v6667 = vsel %vm3837, %v6665, %v6666
      %v6668 = vrot.slane %v6444, 5
      %v6669 = vrot.slane %v6668, 4
      %v6670 = vrot.slane %v5155, 5
      %v6671 = vsel %vm3837, %v6669, %v6670
      %v6672 = vrot.slane %v6670, 4
      %v6673 = vrot.slane %v5156, 5
      %v6674 = vsel %vm3837, %v6672, %v6673
      %v6675 = vrot.slane %v6445, 5
      %v6676 = vrot.slane %v6675, 4
      %v6677 = vrot.slane %v5158, 5
      %v6678 = vsel %vm3837, %v6676, %v6677
      %v6679 = vrot.slane %v6677, 4
      %v6680 = vrot.slane %v5159, 5
      %v6681 = vsel %vm3837, %v6679, %v6680
      %v6682 = vrot.slane %v6446, 5
      %v6683 = vrot.slane %v6682, 4
      %v6684 = vrot.slane %v5161, 5
      %v6685 = vsel %vm3837, %v6683, %v6684
      %v6686 = vrot.slane %v6684, 4
      %v6687 = vrot.slane %v5162, 5
      %v6688 = vsel %vm3837, %v6686, %v6687
      %v6689 = vrot.slane %v6447, 5
      %v6690 = vrot.slane %v6689, 4
      %v6691 = vrot.slane %v5164, 5
      %v6692 = vsel %vm3837, %v6690, %v6691
      %v6693 = vrot.slane %v6691, 4
      %v6694 = vrot.slane %v5165, 5
      %v6695 = vsel %vm3837, %v6693, %v6694
      %v6696 = vrot.slane %v6448, 5
      %v6697 = vrot.slane %v6696, 4
      %v6698 = vrot.slane %v5167, 5
      %v6699 = vsel %vm3837, %v6697, %v6698
      %v6700 = vrot.slane %v6698, 4
      %v6701 = vrot.slane %v5168, 5
      %v6702 = vsel %vm3837, %v6700, %v6701
      %v6703 = vrot.slane %v6449, 5
      %v6704 = vrot.slane %v6703, 4
      %v6705 = vrot.slane %v5170, 5
      %v6706 = vsel %vm3837, %v6704, %v6705
      %v6707 = vrot.slane %v6705, 4
      %v6708 = vrot.slane %v5171, 5
      %v6709 = vsel %vm3837, %v6707, %v6708
      %v6710 = vrot.slane %v6450, 5
      %v6711 = vrot.slane %v6710, 4
      %v6712 = vrot.slane %v5173, 5
      %v6713 = vsel %vm3837, %v6711, %v6712
      %v6714 = vrot.slane %v6712, 4
      %v6715 = vrot.slane %v5174, 5
      %v6716 = vsel %vm3837, %v6714, %v6715
      %v6717 = vrot.slane %v6451, 5
      %v6718 = vrot.slane %v6717, 4
      %v6719 = vrot.slane %v5176, 5
      %v6720 = vsel %vm3837, %v6718, %v6719
      %v6721 = vrot.slane %v6719, 4
      %v6722 = vrot.slane %v5177, 5
      %v6723 = vsel %vm3837, %v6721, %v6722
      %v6724 = vrot.slane %v6452, 5
      %v6725 = vrot.slane %v6724, 4
      %v6726 = vrot.slane %v5179, 5
      %v6727 = vsel %vm3837, %v6725, %v6726
      %v6728 = vrot.slane %v6726, 4
      %v6729 = vrot.slane %v5180, 5
      %v6730 = vsel %vm3837, %v6728, %v6729
      %v6731 = vrot.slane %v6453, 5
      %v6732 = vrot.slane %v6731, 4
      %v6733 = vrot.slane %v5182, 5
      %v6734 = vsel %vm3837, %v6732, %v6733
      %v6735 = vrot.slane %v6733, 4
      %v6736 = vrot.slane %v5183, 5
      %v6737 = vsel %vm3837, %v6735, %v6736
      %v6738 = vrot.slane %v6454, 5
      %v6739 = vrot.slane %v6738, 4
      %v6740 = vrot.slane %v5185, 5
      %v6741 = vsel %vm3837, %v6739, %v6740
      %v6742 = vrot.slane %v6740, 4
      %v6743 = vrot.slane %v5186, 5
      %v6744 = vsel %vm3837, %v6742, %v6743
      %v6745 = vrot.slane %v6455, 5
      %v6746 = vrot.slane %v6745, 4
      %v6747 = vrot.slane %v5188, 5
      %v6748 = vsel %vm3837, %v6746, %v6747
      %v6749 = vrot.slane %v6747, 4
      %v6750 = vrot.slane %v5189, 5
      %v6751 = vsel %vm3837, %v6749, %v6750
      %v6752 = vrot.slane %v6456, 5
      %v6753 = vrot.slane %v6752, 4
      %v6754 = vrot.slane %v5191, 5
      %v6755 = vsel %vm3837, %v6753, %v6754
      %v6756 = vrot.slane %v6754, 4
      %v6757 = vrot.slane %v5192, 5
      %v6758 = vsel %vm3837, %v6756, %v6757
      %v6759 = vrot.slane %v6457, 5
      %v6760 = vrot.slane %v6759, 4
      %v6761 = vrot.slane %v5194, 5
      %v6762 = vsel %vm3837, %v6760, %v6761
      %v6763 = vrot.slane %v6761, 4
      %v6764 = vrot.slane %v5195, 5
      %v6765 = vsel %vm3837, %v6763, %v6764
      %v6766 = vrot.slane %v6458, 5
      %v6767 = vrot.slane %v6766, 4
      %v6768 = vrot.slane %v5197, 5
      %v6769 = vsel %vm3837, %v6767, %v6768
      %v6770 = vrot.slane %v6768, 4
      %v6771 = vrot.slane %v5198, 5
      %v6772 = vsel %vm3837, %v6770, %v6771
      %v6773 = vrot.slane %v6459, 5
      %v6774 = vrot.slane %v6773, 4
      %v6775 = vrot.slane %v5200, 5
      %v6776 = vsel %vm3837, %v6774, %v6775
      %v6777 = vrot.slane %v6775, 4
      %v6778 = vrot.slane %v5201, 5
      %v6779 = vsel %vm3837, %v6777, %v6778
      %s6780 = scalar_lea.vmem %s3, 160
      %v6781 = vld [vmem:[%s6780] sm:$0xf]
      %v6782 = vld [vmem:[%s6780 + $0x4] sm:$0xf]
      %v6783 = vld [vmem:[%s6780 + $0x8] sm:$0xf]
      %v6784 = vld [vmem:[%s6780 + $0xc] sm:$0xf]
      %v6785 = vld [vmem:[%s6780 + $0x10] sm:$0xf]
      %v6786 = vld [vmem:[%s6780 + $0x14] sm:$0xf]
      %v6787 = vld [vmem:[%s6780 + $0x18] sm:$0xf]
      %v6788 = vld [vmem:[%s6780 + $0x1c] sm:$0xf]
      %v6789 = vunpack.c.l.b16 %v6559
      %v6790 = vunpack.c.l.b16 %v6562
      %v6791 = vunpack.c.l.b16 %v6566
      %v6792 = vunpack.c.l.b16 %v6569
      %v6793 = vunpack.c.l.b16 %v6573
      %v6794 = vunpack.c.l.b16 %v6576
      %v6795 = vunpack.c.l.b16 %v6580
      %v6796 = vunpack.c.l.b16 %v6583
      %v6797 = vunpack.c.l.b16 %v6587
      %v6798 = vunpack.c.l.b16 %v6590
      %v6799 = vunpack.c.l.b16 %v6594
      %v6800 = vunpack.c.l.b16 %v6597
      %v6801 = vunpack.c.l.b16 %v6601
      %v6802 = vunpack.c.l.b16 %v6604
      %v6803 = vunpack.c.l.b16 %v6608
      %v6804 = vunpack.c.l.b16 %v6611
      %v6805 = vunpack.c.l.b16 %v6615
      %v6806 = vunpack.c.l.b16 %v6618
      %v6807 = vunpack.c.l.b16 %v6622
      %v6808 = vunpack.c.l.b16 %v6625
      %v6809 = vunpack.c.l.b16 %v6629
      %v6810 = vunpack.c.l.b16 %v6632
      %v6811 = vunpack.c.l.b16 %v6636
      %v6812 = vunpack.c.l.b16 %v6639
      %v6813 = vunpack.c.l.b16 %v6643
      %v6814 = vunpack.c.l.b16 %v6646
      %v6815 = vunpack.c.l.b16 %v6650
      %v6816 = vunpack.c.l.b16 %v6653
      %v6817 = vunpack.c.l.b16 %v6657
      %v6818 = vunpack.c.l.b16 %v6660
      %v6819 = vunpack.c.l.b16 %v6664
      %v6820 = vunpack.c.l.b16 %v6667
      %v6821 = vunpack.c.l.b16 %v6671
      %v6822 = vunpack.c.l.b16 %v6674
      %v6823 = vunpack.c.l.b16 %v6678
      %v6824 = vunpack.c.l.b16 %v6681
      %v6825 = vunpack.c.l.b16 %v6685
      %v6826 = vunpack.c.l.b16 %v6688
      %v6827 = vunpack.c.l.b16 %v6692
      %v6828 = vunpack.c.l.b16 %v6695
      %v6829 = vunpack.c.l.b16 %v6699
      %v6830 = vunpack.c.l.b16 %v6702
      %v6831 = vunpack.c.l.b16 %v6706
      %v6832 = vunpack.c.l.b16 %v6709
      %v6833 = vunpack.c.l.b16 %v6713
      %v6834 = vunpack.c.l.b16 %v6716
      %v6835 = vunpack.c.l.b16 %v6720
      %v6836 = vunpack.c.l.b16 %v6723
      %v6837 = vunpack.c.l.b16 %v6727
      %v6838 = vunpack.c.l.b16 %v6730
      %v6839 = vunpack.c.l.b16 %v6734
      %v6840 = vunpack.c.l.b16 %v6737
      %v6841 = vunpack.c.l.b16 %v6741
      %v6842 = vunpack.c.l.b16 %v6744
      %v6843 = vunpack.c.l.b16 %v6748
      %v6844 = vunpack.c.l.b16 %v6751
      %v6845 = vunpack.c.l.b16 %v6755
      %v6846 = vunpack.c.l.b16 %v6758
      %v6847 = vunpack.c.l.b16 %v6762
      %v6848 = vunpack.c.l.b16 %v6765
      %v6849 = vunpack.c.l.b16 %v6769
      %v6850 = vunpack.c.l.b16 %v6772
      %v6851 = vunpack.c.l.b16 %v6776
      %v6852 = vunpack.c.l.b16 %v6779
      %v6853 = vpack.c.b16 %v6790, %v6789
      %v6854 = vpack.c.b16 %v6792, %v6791
      %v6855 = vpack.c.b16 %v6794, %v6793
      %v6856 = vpack.c.b16 %v6796, %v6795
      %v6857 = vpack.c.b16 %v6798, %v6797
      %v6858 = vpack.c.b16 %v6800, %v6799
      %v6859 = vpack.c.b16 %v6802, %v6801
      %v6860 = vpack.c.b16 %v6804, %v6803
      %v6861 = vpack.c.b16 %v6806, %v6805
      %v6862 = vpack.c.b16 %v6808, %v6807
      %v6863 = vpack.c.b16 %v6810, %v6809
      %v6864 = vpack.c.b16 %v6812, %v6811
      %v6865 = vpack.c.b16 %v6814, %v6813
      %v6866 = vpack.c.b16 %v6816, %v6815
      %v6867 = vpack.c.b16 %v6818, %v6817
      %v6868 = vpack.c.b16 %v6820, %v6819
      %v6869 = vpack.c.b16 %v6822, %v6821
      %v6870 = vpack.c.b16 %v6824, %v6823
      %v6871 = vpack.c.b16 %v6826, %v6825
      %v6872 = vpack.c.b16 %v6828, %v6827
      %v6873 = vpack.c.b16 %v6830, %v6829
      %v6874 = vpack.c.b16 %v6832, %v6831
      %v6875 = vpack.c.b16 %v6834, %v6833
      %v6876 = vpack.c.b16 %v6836, %v6835
      %v6877 = vpack.c.b16 %v6838, %v6837
      %v6878 = vpack.c.b16 %v6840, %v6839
      %v6879 = vpack.c.b16 %v6842, %v6841
      %v6880 = vpack.c.b16 %v6844, %v6843
      %v6881 = vpack.c.b16 %v6846, %v6845
      %v6882 = vpack.c.b16 %v6848, %v6847
      %v6883 = vpack.c.b16 %v6850, %v6849
      %v6884 = vpack.c.b16 %v6852, %v6851
      %v6893 = vunpack.c.l.b16 %v6781
      %v6894 = vunpack.c.l.b16 %v6782
      %v6895 = vunpack.c.l.b16 %v6783
      %v6896 = vunpack.c.l.b16 %v6784
      %v6897 = vunpack.c.l.b16 %v6785
      %v6898 = vunpack.c.l.b16 %v6786
      %v6899 = vunpack.c.l.b16 %v6787
      %v6900 = vunpack.c.l.b16 %v6788
      %v6901 = vpack.c.b16 %v6894, %v6893
      %v6902 = vpack.c.b16 %v6896, %v6895
      %v6903 = vpack.c.b16 %v6898, %v6897
      %v6904 = vpack.c.b16 %v6900, %v6899
      %v6910 = vsel %vm548, %v6853, 0
      %v6913 = vsel %vm548, %v6854, 0
      %v6916 = vsel %vm548, %v6855, 0
      %v6919 = vsel %vm548, %v6856, 0
      %v6922 = vsel %vm548, %v6857, 0
      %v6925 = vsel %vm548, %v6858, 0
      %v6928 = vsel %vm548, %v6859, 0
      %v6931 = vsel %vm548, %v6860, 0
      %v6934 = vsel %vm548, %v6861, 0
      %v6937 = vsel %vm548, %v6862, 0
      %v6940 = vsel %vm548, %v6863, 0
      %v6943 = vsel %vm548, %v6864, 0
      %v6946 = vsel %vm548, %v6865, 0
      %v6949 = vsel %vm548, %v6866, 0
      %v6952 = vsel %vm548, %v6867, 0
      %v6955 = vsel %vm548, %v6868, 0
      %v6958 = vsel %vm548, %v6869, 0
      %v6961 = vsel %vm548, %v6870, 0
      %v6964 = vsel %vm548, %v6871, 0
      %v6967 = vsel %vm548, %v6872, 0
      %v6970 = vsel %vm548, %v6873, 0
      %v6973 = vsel %vm548, %v6874, 0
      %v6976 = vsel %vm548, %v6875, 0
      %v6979 = vsel %vm548, %v6876, 0
      %v6982 = vsel %vm548, %v6877, 0
      %v6985 = vsel %vm548, %v6878, 0
      %v6988 = vsel %vm548, %v6879, 0
      %v6991 = vsel %vm548, %v6880, 0
      %v6994 = vsel %vm548, %v6881, 0
      %v6997 = vsel %vm548, %v6882, 0
      %v7000 = vsel %vm548, %v6883, 0
      %v7003 = vsel %vm548, %v6884, 0
      %7005 = vmatpush.bf16.msra.mxu0 0
      %7006 = vmatpush.bf16.msra.mxu0 0
      %7007 = vmatpush.bf16.msra.mxu0 0
      %7008 = vmatpush.bf16.msra.mxu0 0
      %7009 = vmatpush.bf16.msra.mxu0 %v6904
      %7010 = vmatpush.bf16.msra.mxu0 %v6903
      %7011 = vmatpush.bf16.msra.mxu0 %v6902
      %7012 = vmatpush.bf16.msra.mxu0 %v6901
      %7013 = vmatmul.bf16.gmra.mxu0 %v6910
      %v7014 = vpop.f32.mrf.mxu0
      %v7015 = vadd.f32 0.0, %v7014
      %v7016 = vpop.f32.mrf.mxu0
      %v7017 = vadd.f32 0.0, %v7016
      %7018 = vmatmul.bf16.gmra.mxu0 %v6913
      %v7019 = vpop.f32.mrf.mxu0
      %v7020 = vadd.f32 0.0, %v7019
      %v7021 = vpop.f32.mrf.mxu0
      %v7022 = vadd.f32 0.0, %v7021
      %7023 = vmatmul.bf16.gmra.mxu0 %v6916
      %v7024 = vpop.f32.mrf.mxu0
      %v7025 = vadd.f32 0.0, %v7024
      %v7026 = vpop.f32.mrf.mxu0
      %v7027 = vadd.f32 0.0, %v7026
      %7028 = vmatmul.bf16.gmra.mxu0 %v6919
      %v7029 = vpop.f32.mrf.mxu0
      %v7030 = vadd.f32 0.0, %v7029
      %v7031 = vpop.f32.mrf.mxu0
      %v7032 = vadd.f32 0.0, %v7031
      %7033 = vmatmul.bf16.gmra.mxu0 %v6922
      %v7034 = vpop.f32.mrf.mxu0
      %v7035 = vadd.f32 0.0, %v7034
      %v7036 = vpop.f32.mrf.mxu0
      %v7037 = vadd.f32 0.0, %v7036
      %7038 = vmatmul.bf16.gmra.mxu0 %v6925
      %v7039 = vpop.f32.mrf.mxu0
      %v7040 = vadd.f32 0.0, %v7039
      %v7041 = vpop.f32.mrf.mxu0
      %v7042 = vadd.f32 0.0, %v7041
      %7043 = vmatmul.bf16.gmra.mxu0 %v6928
      %v7044 = vpop.f32.mrf.mxu0
      %v7045 = vadd.f32 0.0, %v7044
      %v7046 = vpop.f32.mrf.mxu0
      %v7047 = vadd.f32 0.0, %v7046
      %7048 = vmatmul.bf16.gmra.mxu0 %v6931
      %v7049 = vpop.f32.mrf.mxu0
      %v7050 = vadd.f32 0.0, %v7049
      %v7051 = vpop.f32.mrf.mxu0
      %v7052 = vadd.f32 0.0, %v7051
      %7053 = vmatmul.bf16.gmra.mxu0 %v6934
      %v7054 = vpop.f32.mrf.mxu0
      %v7055 = vadd.f32 0.0, %v7054
      %v7056 = vpop.f32.mrf.mxu0
      %v7057 = vadd.f32 0.0, %v7056
      %7058 = vmatmul.bf16.gmra.mxu0 %v6937
      %v7059 = vpop.f32.mrf.mxu0
      %v7060 = vadd.f32 0.0, %v7059
      %v7061 = vpop.f32.mrf.mxu0
      %v7062 = vadd.f32 0.0, %v7061
      %7063 = vmatmul.bf16.gmra.mxu0 %v6940
      %v7064 = vpop.f32.mrf.mxu0
      %v7065 = vadd.f32 0.0, %v7064
      %v7066 = vpop.f32.mrf.mxu0
      %v7067 = vadd.f32 0.0, %v7066
      %7068 = vmatmul.bf16.gmra.mxu0 %v6943
      %v7069 = vpop.f32.mrf.mxu0
      %v7070 = vadd.f32 0.0, %v7069
      %v7071 = vpop.f32.mrf.mxu0
      %v7072 = vadd.f32 0.0, %v7071
      %7073 = vmatmul.bf16.gmra.mxu0 %v6946
      %v7074 = vpop.f32.mrf.mxu0
      %v7075 = vadd.f32 0.0, %v7074
      %v7076 = vpop.f32.mrf.mxu0
      %v7077 = vadd.f32 0.0, %v7076
      %7078 = vmatmul.bf16.gmra.mxu0 %v6949
      %v7079 = vpop.f32.mrf.mxu0
      %v7080 = vadd.f32 0.0, %v7079
      %v7081 = vpop.f32.mrf.mxu0
      %v7082 = vadd.f32 0.0, %v7081
      %7083 = vmatmul.bf16.gmra.mxu0 %v6952
      %v7084 = vpop.f32.mrf.mxu0
      %v7085 = vadd.f32 0.0, %v7084
      %v7086 = vpop.f32.mrf.mxu0
      %v7087 = vadd.f32 0.0, %v7086
      %7088 = vmatmul.bf16.gmra.mxu0 %v6955
      %v7089 = vpop.f32.mrf.mxu0
      %v7090 = vadd.f32 0.0, %v7089
      %v7091 = vpop.f32.mrf.mxu0
      %v7092 = vadd.f32 0.0, %v7091
      %7093 = vmatmul.bf16.gmra.mxu0 %v6958
      %v7094 = vpop.f32.mrf.mxu0
      %v7095 = vadd.f32 0.0, %v7094
      %v7096 = vpop.f32.mrf.mxu0
      %v7097 = vadd.f32 0.0, %v7096
      %7098 = vmatmul.bf16.gmra.mxu0 %v6961
      %v7099 = vpop.f32.mrf.mxu0
      %v7100 = vadd.f32 0.0, %v7099
      %v7101 = vpop.f32.mrf.mxu0
      %v7102 = vadd.f32 0.0, %v7101
      %7103 = vmatmul.bf16.gmra.mxu0 %v6964
      %v7104 = vpop.f32.mrf.mxu0
      %v7105 = vadd.f32 0.0, %v7104
      %v7106 = vpop.f32.mrf.mxu0
      %v7107 = vadd.f32 0.0, %v7106
      %7108 = vmatmul.bf16.gmra.mxu0 %v6967
      %v7109 = vpop.f32.mrf.mxu0
      %v7110 = vadd.f32 0.0, %v7109
      %v7111 = vpop.f32.mrf.mxu0
      %v7112 = vadd.f32 0.0, %v7111
      %7113 = vmatmul.bf16.gmra.mxu0 %v6970
      %v7114 = vpop.f32.mrf.mxu0
      %v7115 = vadd.f32 0.0, %v7114
      %v7116 = vpop.f32.mrf.mxu0
      %v7117 = vadd.f32 0.0, %v7116
      %7118 = vmatmul.bf16.gmra.mxu0 %v6973
      %v7119 = vpop.f32.mrf.mxu0
      %v7120 = vadd.f32 0.0, %v7119
      %v7121 = vpop.f32.mrf.mxu0
      %v7122 = vadd.f32 0.0, %v7121
      %7123 = vmatmul.bf16.gmra.mxu0 %v6976
      %v7124 = vpop.f32.mrf.mxu0
      %v7125 = vadd.f32 0.0, %v7124
      %v7126 = vpop.f32.mrf.mxu0
      %v7127 = vadd.f32 0.0, %v7126
      %7128 = vmatmul.bf16.gmra.mxu0 %v6979
      %v7129 = vpop.f32.mrf.mxu0
      %v7130 = vadd.f32 0.0, %v7129
      %v7131 = vpop.f32.mrf.mxu0
      %v7132 = vadd.f32 0.0, %v7131
      %7133 = vmatmul.bf16.gmra.mxu0 %v6982
      %v7134 = vpop.f32.mrf.mxu0
      %v7135 = vadd.f32 0.0, %v7134
      %v7136 = vpop.f32.mrf.mxu0
      %v7137 = vadd.f32 0.0, %v7136
      %7138 = vmatmul.bf16.gmra.mxu0 %v6985
      %v7139 = vpop.f32.mrf.mxu0
      %v7140 = vadd.f32 0.0, %v7139
      %v7141 = vpop.f32.mrf.mxu0
      %v7142 = vadd.f32 0.0, %v7141
      %7143 = vmatmul.bf16.gmra.mxu0 %v6988
      %v7144 = vpop.f32.mrf.mxu0
      %v7145 = vadd.f32 0.0, %v7144
      %v7146 = vpop.f32.mrf.mxu0
      %v7147 = vadd.f32 0.0, %v7146
      %7148 = vmatmul.bf16.gmra.mxu0 %v6991
      %v7149 = vpop.f32.mrf.mxu0
      %v7150 = vadd.f32 0.0, %v7149
      %v7151 = vpop.f32.mrf.mxu0
      %v7152 = vadd.f32 0.0, %v7151
      %7153 = vmatmul.bf16.gmra.mxu0 %v6994
      %v7154 = vpop.f32.mrf.mxu0
      %v7155 = vadd.f32 0.0, %v7154
      %v7156 = vpop.f32.mrf.mxu0
      %v7157 = vadd.f32 0.0, %v7156
      %7158 = vmatmul.bf16.gmra.mxu0 %v6997
      %v7159 = vpop.f32.mrf.mxu0
      %v7160 = vadd.f32 0.0, %v7159
      %v7161 = vpop.f32.mrf.mxu0
      %v7162 = vadd.f32 0.0, %v7161
      %7163 = vmatmul.bf16.gmra.mxu0 %v7000
      %v7164 = vpop.f32.mrf.mxu0
      %v7165 = vadd.f32 0.0, %v7164
      %v7166 = vpop.f32.mrf.mxu0
      %v7167 = vadd.f32 0.0, %v7166
      %7168 = vmatmul.bf16.gmra.mxu0 %v7003
      %v7169 = vpop.f32.mrf.mxu0
      %v7170 = vadd.f32 0.0, %v7169
      %v7171 = vpop.f32.mrf.mxu0
      %v7172 = vadd.f32 0.0, %v7171
      %7173 = vdwg.mxu0
      %v7174 = vadd.f32 %v6364, %v7015
      %v7175 = vadd.f32 %v6365, %v7017
      %v7176 = vadd.f32 %v6366, %v7020
      %v7177 = vadd.f32 %v6367, %v7022
      %v7178 = vadd.f32 %v6368, %v7025
      %v7179 = vadd.f32 %v6369, %v7027
      %v7180 = vadd.f32 %v6370, %v7030
      %v7181 = vadd.f32 %v6371, %v7032
      %v7182 = vadd.f32 %v6372, %v7035
      %v7183 = vadd.f32 %v6373, %v7037
      %v7184 = vadd.f32 %v6374, %v7040
      %v7185 = vadd.f32 %v6375, %v7042
      %v7186 = vadd.f32 %v6376, %v7045
      %v7187 = vadd.f32 %v6377, %v7047
      %v7188 = vadd.f32 %v6378, %v7050
      %v7189 = vadd.f32 %v6379, %v7052
      %v7190 = vadd.f32 %v6380, %v7055
      %v7191 = vadd.f32 %v6381, %v7057
      %v7192 = vadd.f32 %v6382, %v7060
      %v7193 = vadd.f32 %v6383, %v7062
      %v7194 = vadd.f32 %v6384, %v7065
      %v7195 = vadd.f32 %v6385, %v7067
      %v7196 = vadd.f32 %v6386, %v7070
      %v7197 = vadd.f32 %v6387, %v7072
      %v7198 = vadd.f32 %v6388, %v7075
      %v7199 = vadd.f32 %v6389, %v7077
      %v7200 = vadd.f32 %v6390, %v7080
      %v7201 = vadd.f32 %v6391, %v7082
      %v7202 = vadd.f32 %v6392, %v7085
      %v7203 = vadd.f32 %v6393, %v7087
      %v7204 = vadd.f32 %v6394, %v7090
      %v7205 = vadd.f32 %v6395, %v7092
      %v7206 = vadd.f32 %v6396, %v7095
      %v7207 = vadd.f32 %v6397, %v7097
      %v7208 = vadd.f32 %v6398, %v7100
      %v7209 = vadd.f32 %v6399, %v7102
      %v7210 = vadd.f32 %v6400, %v7105
      %v7211 = vadd.f32 %v6401, %v7107
      %v7212 = vadd.f32 %v6402, %v7110
      %v7213 = vadd.f32 %v6403, %v7112
      %v7214 = vadd.f32 %v6404, %v7115
      %v7215 = vadd.f32 %v6405, %v7117
      %v7216 = vadd.f32 %v6406, %v7120
      %v7217 = vadd.f32 %v6407, %v7122
      %v7218 = vadd.f32 %v6408, %v7125
      %v7219 = vadd.f32 %v6409, %v7127
      %v7220 = vadd.f32 %v6410, %v7130
      %v7221 = vadd.f32 %v6411, %v7132
      %v7222 = vadd.f32 %v6412, %v7135
      %v7223 = vadd.f32 %v6413, %v7137
      %v7224 = vadd.f32 %v6414, %v7140
      %v7225 = vadd.f32 %v6415, %v7142
      %v7226 = vadd.f32 %v6416, %v7145
      %v7227 = vadd.f32 %v6417, %v7147
      %v7228 = vadd.f32 %v6418, %v7150
      %v7229 = vadd.f32 %v6419, %v7152
      %v7230 = vadd.f32 %v6420, %v7155
      %v7231 = vadd.f32 %v6421, %v7157
      %v7232 = vadd.f32 %v6422, %v7160
      %v7233 = vadd.f32 %v6423, %v7162
      %v7234 = vadd.f32 %v6424, %v7165
      %v7235 = vadd.f32 %v6425, %v7167
      %v7236 = vadd.f32 %v6426, %v7170
      %v7237 = vadd.f32 %v6427, %v7172
      %s7238 = scalar_lea.vmem [#allocation2], 24
      %v7239 = vld [vmem:[%s7238] sm:$0xf]
      %v7240 = vld [vmem:[%s7238 + $0x4] sm:$0xf]
      %v7241 = vld [vmem:[%s7238 + $0xc] sm:$0xf]
      %v7242 = vld [vmem:[%s7238 + $0x10] sm:$0xf]
      %v7243 = vld [vmem:[%s7238 + $0x18] sm:$0xf]
      %v7244 = vld [vmem:[%s7238 + $0x1c] sm:$0xf]
      %v7245 = vld [vmem:[%s7238 + $0x24] sm:$0xf]
      %v7246 = vld [vmem:[%s7238 + $0x28] sm:$0xf]
      %v7247 = vld [vmem:[%s7238 + $0x30] sm:$0xf]
      %v7248 = vld [vmem:[%s7238 + $0x34] sm:$0xf]
      %v7249 = vld [vmem:[%s7238 + $0x3c] sm:$0xf]
      %v7250 = vld [vmem:[%s7238 + $0x40] sm:$0xf]
      %v7251 = vld [vmem:[%s7238 + $0x48] sm:$0xf]
      %v7252 = vld [vmem:[%s7238 + $0x4c] sm:$0xf]
      %v7253 = vld [vmem:[%s7238 + $0x54] sm:$0xf]
      %v7254 = vld [vmem:[%s7238 + $0x58] sm:$0xf]
      %v7255 = vld [vmem:[%s7238 + $0x60] sm:$0xf]
      %v7256 = vld [vmem:[%s7238 + $0x64] sm:$0xf]
      %v7257 = vld [vmem:[%s7238 + $0x6c] sm:$0xf]
      %v7258 = vld [vmem:[%s7238 + $0x70] sm:$0xf]
      %v7259 = vld [vmem:[%s7238 + $0x78] sm:$0xf]
      %v7260 = vld [vmem:[%s7238 + $0x7c] sm:$0xf]
      %v7261 = vld [vmem:[%s7238 + $0x84] sm:$0xf]
      %v7262 = vld [vmem:[%s7238 + $0x88] sm:$0xf]
      %v7263 = vld [vmem:[%s7238 + $0x90] sm:$0xf]
      %v7264 = vld [vmem:[%s7238 + $0x94] sm:$0xf]
      %v7265 = vld [vmem:[%s7238 + $0x9c] sm:$0xf]
      %v7266 = vld [vmem:[%s7238 + $0xa0] sm:$0xf]
      %v7267 = vld [vmem:[%s7238 + $0xa8] sm:$0xf]
      %v7268 = vld [vmem:[%s7238 + $0xac] sm:$0xf]
      %v7269 = vld [vmem:[%s7238 + $0xb4] sm:$0xf]
      %v7270 = vld [vmem:[%s7238 + $0xb8] sm:$0xf]
      %v7271 = vld [vmem:[%s7238 + $0xd8] sm:$0xf]
      %v7272 = vld [vmem:[%s7238 + $0xdc] sm:$0xf]
      %v7273 = vld [vmem:[%s7238 + $0xe4] sm:$0xf]
      %v7274 = vld [vmem:[%s7238 + $0xe8] sm:$0xf]
      %v7275 = vld [vmem:[%s7238 + $0xf0] sm:$0xf]
      %v7276 = vld [vmem:[%s7238 + $0xf4] sm:$0xf]
      %v7277 = vld [vmem:[%s7238 + $0xfc] sm:$0xf]
      %v7278 = vld [vmem:[%s7238 + $0x100] sm:$0xf]
      %v7279 = vld [vmem:[%s7238 + $0x108] sm:$0xf]
      %v7280 = vld [vmem:[%s7238 + $0x10c] sm:$0xf]
      %v7281 = vld [vmem:[%s7238 + $0x114] sm:$0xf]
      %v7282 = vld [vmem:[%s7238 + $0x118] sm:$0xf]
      %v7283 = vld [vmem:[%s7238 + $0x120] sm:$0xf]
      %v7284 = vld [vmem:[%s7238 + $0x124] sm:$0xf]
      %v7285 = vld [vmem:[%s7238 + $0x12c] sm:$0xf]
      %v7286 = vld [vmem:[%s7238 + $0x130] sm:$0xf]
      %v7287 = vld [vmem:[%s7238 + $0x138] sm:$0xf]
      %v7288 = vld [vmem:[%s7238 + $0x13c] sm:$0xf]
      %v7289 = vld [vmem:[%s7238 + $0x144] sm:$0xf]
      %v7290 = vld [vmem:[%s7238 + $0x148] sm:$0xf]
      %v7291 = vld [vmem:[%s7238 + $0x150] sm:$0xf]
      %v7292 = vld [vmem:[%s7238 + $0x154] sm:$0xf]
      %v7293 = vld [vmem:[%s7238 + $0x15c] sm:$0xf]
      %v7294 = vld [vmem:[%s7238 + $0x160] sm:$0xf]
      %v7295 = vld [vmem:[%s7238 + $0x168] sm:$0xf]
      %v7296 = vld [vmem:[%s7238 + $0x16c] sm:$0xf]
      %v7297 = vld [vmem:[%s7238 + $0x174] sm:$0xf]
      %v7298 = vld [vmem:[%s7238 + $0x178] sm:$0xf]
      %v7299 = vld [vmem:[%s7238 + $0x180] sm:$0xf]
      %v7300 = vld [vmem:[%s7238 + $0x184] sm:$0xf]
      %v7301 = vld [vmem:[%s7238 + $0x18c] sm:$0xf]
      %v7302 = vld [vmem:[%s7238 + $0x190] sm:$0xf]
      %s7303 = scalar_lea.vmem %s3, 192
      %v7304 = vld [vmem:[%s7303] sm:$0xf]
      %v7305 = vld [vmem:[%s7303 + $0x4] sm:$0xf]
      %v7306 = vld [vmem:[%s7303 + $0x8] sm:$0xf]
      %v7307 = vld [vmem:[%s7303 + $0xc] sm:$0xf]
      %v7308 = vld [vmem:[%s7303 + $0x10] sm:$0xf]
      %v7309 = vld [vmem:[%s7303 + $0x14] sm:$0xf]
      %v7310 = vld [vmem:[%s7303 + $0x18] sm:$0xf]
      %v7311 = vld [vmem:[%s7303 + $0x1c] sm:$0xf]
      %v7376 = vunpack.c.l.b16 %v7239
      %v7377 = vunpack.c.l.b16 %v7240
      %v7378 = vunpack.c.l.b16 %v7241
      %v7379 = vunpack.c.l.b16 %v7242
      %v7380 = vunpack.c.l.b16 %v7243
      %v7381 = vunpack.c.l.b16 %v7244
      %v7382 = vunpack.c.l.b16 %v7245
      %v7383 = vunpack.c.l.b16 %v7246
      %v7384 = vunpack.c.l.b16 %v7247
      %v7385 = vunpack.c.l.b16 %v7248
      %v7386 = vunpack.c.l.b16 %v7249
      %v7387 = vunpack.c.l.b16 %v7250
      %v7388 = vunpack.c.l.b16 %v7251
      %v7389 = vunpack.c.l.b16 %v7252
      %v7390 = vunpack.c.l.b16 %v7253
      %v7391 = vunpack.c.l.b16 %v7254
      %v7392 = vunpack.c.l.b16 %v7255
      %v7393 = vunpack.c.l.b16 %v7256
      %v7394 = vunpack.c.l.b16 %v7257
      %v7395 = vunpack.c.l.b16 %v7258
      %v7396 = vunpack.c.l.b16 %v7259
      %v7397 = vunpack.c.l.b16 %v7260
      %v7398 = vunpack.c.l.b16 %v7261
      %v7399 = vunpack.c.l.b16 %v7262
      %v7400 = vunpack.c.l.b16 %v7263
      %v7401 = vunpack.c.l.b16 %v7264
      %v7402 = vunpack.c.l.b16 %v7265
      %v7403 = vunpack.c.l.b16 %v7266
      %v7404 = vunpack.c.l.b16 %v7267
      %v7405 = vunpack.c.l.b16 %v7268
      %v7406 = vunpack.c.l.b16 %v7269
      %v7407 = vunpack.c.l.b16 %v7270
      %v7408 = vunpack.c.l.b16 %v7271
      %v7409 = vunpack.c.l.b16 %v7272
      %v7410 = vunpack.c.l.b16 %v7273
      %v7411 = vunpack.c.l.b16 %v7274
      %v7412 = vunpack.c.l.b16 %v7275
      %v7413 = vunpack.c.l.b16 %v7276
      %v7414 = vunpack.c.l.b16 %v7277
      %v7415 = vunpack.c.l.b16 %v7278
      %v7416 = vunpack.c.l.b16 %v7279
      %v7417 = vunpack.c.l.b16 %v7280
      %v7418 = vunpack.c.l.b16 %v7281
      %v7419 = vunpack.c.l.b16 %v7282
      %v7420 = vunpack.c.l.b16 %v7283
      %v7421 = vunpack.c.l.b16 %v7284
      %v7422 = vunpack.c.l.b16 %v7285
      %v7423 = vunpack.c.l.b16 %v7286
      %v7424 = vunpack.c.l.b16 %v7287
      %v7425 = vunpack.c.l.b16 %v7288
      %v7426 = vunpack.c.l.b16 %v7289
      %v7427 = vunpack.c.l.b16 %v7290
      %v7428 = vunpack.c.l.b16 %v7291
      %v7429 = vunpack.c.l.b16 %v7292
      %v7430 = vunpack.c.l.b16 %v7293
      %v7431 = vunpack.c.l.b16 %v7294
      %v7432 = vunpack.c.l.b16 %v7295
      %v7433 = vunpack.c.l.b16 %v7296
      %v7434 = vunpack.c.l.b16 %v7297
      %v7435 = vunpack.c.l.b16 %v7298
      %v7436 = vunpack.c.l.b16 %v7299
      %v7437 = vunpack.c.l.b16 %v7300
      %v7438 = vunpack.c.l.b16 %v7301
      %v7439 = vunpack.c.l.b16 %v7302
      %v7440 = vpack.c.b16 %v7377, %v7376
      %v7441 = vpack.c.b16 %v7379, %v7378
      %v7442 = vpack.c.b16 %v7381, %v7380
      %v7443 = vpack.c.b16 %v7383, %v7382
      %v7444 = vpack.c.b16 %v7385, %v7384
      %v7445 = vpack.c.b16 %v7387, %v7386
      %v7446 = vpack.c.b16 %v7389, %v7388
      %v7447 = vpack.c.b16 %v7391, %v7390
      %v7448 = vpack.c.b16 %v7393, %v7392
      %v7449 = vpack.c.b16 %v7395, %v7394
      %v7450 = vpack.c.b16 %v7397, %v7396
      %v7451 = vpack.c.b16 %v7399, %v7398
      %v7452 = vpack.c.b16 %v7401, %v7400
      %v7453 = vpack.c.b16 %v7403, %v7402
      %v7454 = vpack.c.b16 %v7405, %v7404
      %v7455 = vpack.c.b16 %v7407, %v7406
      %v7456 = vpack.c.b16 %v7409, %v7408
      %v7457 = vpack.c.b16 %v7411, %v7410
      %v7458 = vpack.c.b16 %v7413, %v7412
      %v7459 = vpack.c.b16 %v7415, %v7414
      %v7460 = vpack.c.b16 %v7417, %v7416
      %v7461 = vpack.c.b16 %v7419, %v7418
      %v7462 = vpack.c.b16 %v7421, %v7420
      %v7463 = vpack.c.b16 %v7423, %v7422
      %v7464 = vpack.c.b16 %v7425, %v7424
      %v7465 = vpack.c.b16 %v7427, %v7426
      %v7466 = vpack.c.b16 %v7429, %v7428
      %v7467 = vpack.c.b16 %v7431, %v7430
      %v7468 = vpack.c.b16 %v7433, %v7432
      %v7469 = vpack.c.b16 %v7435, %v7434
      %v7470 = vpack.c.b16 %v7437, %v7436
      %v7471 = vpack.c.b16 %v7439, %v7438
      %v7480 = vunpack.c.l.b16 %v7304
      %v7481 = vunpack.c.l.b16 %v7305
      %v7482 = vunpack.c.l.b16 %v7306
      %v7483 = vunpack.c.l.b16 %v7307
      %v7484 = vunpack.c.l.b16 %v7308
      %v7485 = vunpack.c.l.b16 %v7309
      %v7486 = vunpack.c.l.b16 %v7310
      %v7487 = vunpack.c.l.b16 %v7311
      %v7488 = vpack.c.b16 %v7481, %v7480
      %v7489 = vpack.c.b16 %v7483, %v7482
      %v7490 = vpack.c.b16 %v7485, %v7484
      %v7491 = vpack.c.b16 %v7487, %v7486
      %v7497 = vsel %vm548, %v7440, 0
      %v7500 = vsel %vm548, %v7441, 0
      %v7503 = vsel %vm548, %v7442, 0
      %v7506 = vsel %vm548, %v7443, 0
      %v7509 = vsel %vm548, %v7444, 0
      %v7512 = vsel %vm548, %v7445, 0
      %v7515 = vsel %vm548, %v7446, 0
      %v7518 = vsel %vm548, %v7447, 0
      %v7521 = vsel %vm548, %v7448, 0
      %v7524 = vsel %vm548, %v7449, 0
      %v7527 = vsel %vm548, %v7450, 0
      %v7530 = vsel %vm548, %v7451, 0
      %v7533 = vsel %vm548, %v7452, 0
      %v7536 = vsel %vm548, %v7453, 0
      %v7539 = vsel %vm548, %v7454, 0
      %v7542 = vsel %vm548, %v7455, 0
      %v7545 = vsel %vm548, %v7456, 0
      %v7548 = vsel %vm548, %v7457, 0
      %v7551 = vsel %vm548, %v7458, 0
      %v7554 = vsel %vm548, %v7459, 0
      %v7557 = vsel %vm548, %v7460, 0
      %v7560 = vsel %vm548, %v7461, 0
      %v7563 = vsel %vm548, %v7462, 0
      %v7566 = vsel %vm548, %v7463, 0
      %v7569 = vsel %vm548, %v7464, 0
      %v7572 = vsel %vm548, %v7465, 0
      %v7575 = vsel %vm548, %v7466, 0
      %v7578 = vsel %vm548, %v7467, 0
      %v7581 = vsel %vm548, %v7468, 0
      %v7584 = vsel %vm548, %v7469, 0
      %v7587 = vsel %vm548, %v7470, 0
      %v7590 = vsel %vm548, %v7471, 0
      %7592 = vmatpush.bf16.msra.mxu0 0
      %7593 = vmatpush.bf16.msra.mxu0 0
      %7594 = vmatpush.bf16.msra.mxu0 0
      %7595 = vmatpush.bf16.msra.mxu0 0
      %7596 = vmatpush.bf16.msra.mxu0 %v7491
      %7597 = vmatpush.bf16.msra.mxu0 %v7490
      %7598 = vmatpush.bf16.msra.mxu0 %v7489
      %7599 = vmatpush.bf16.msra.mxu0 %v7488
      %7600 = vmatmul.bf16.gmra.mxu0 %v7497
      %v7601 = vpop.f32.mrf.mxu0
      %v7602 = vadd.f32 0.0, %v7601
      %v7603 = vpop.f32.mrf.mxu0
      %v7604 = vadd.f32 0.0, %v7603
      %7605 = vmatmul.bf16.gmra.mxu0 %v7500
      %v7606 = vpop.f32.mrf.mxu0
      %v7607 = vadd.f32 0.0, %v7606
      %v7608 = vpop.f32.mrf.mxu0
      %v7609 = vadd.f32 0.0, %v7608
      %7610 = vmatmul.bf16.gmra.mxu0 %v7503
      %v7611 = vpop.f32.mrf.mxu0
      %v7612 = vadd.f32 0.0, %v7611
      %v7613 = vpop.f32.mrf.mxu0
      %v7614 = vadd.f32 0.0, %v7613
      %7615 = vmatmul.bf16.gmra.mxu0 %v7506
      %v7616 = vpop.f32.mrf.mxu0
      %v7617 = vadd.f32 0.0, %v7616
      %v7618 = vpop.f32.mrf.mxu0
      %v7619 = vadd.f32 0.0, %v7618
      %7620 = vmatmul.bf16.gmra.mxu0 %v7509
      %v7621 = vpop.f32.mrf.mxu0
      %v7622 = vadd.f32 0.0, %v7621
      %v7623 = vpop.f32.mrf.mxu0
      %v7624 = vadd.f32 0.0, %v7623
      %7625 = vmatmul.bf16.gmra.mxu0 %v7512
      %v7626 = vpop.f32.mrf.mxu0
      %v7627 = vadd.f32 0.0, %v7626
      %v7628 = vpop.f32.mrf.mxu0
      %v7629 = vadd.f32 0.0, %v7628
      %7630 = vmatmul.bf16.gmra.mxu0 %v7515
      %v7631 = vpop.f32.mrf.mxu0
      %v7632 = vadd.f32 0.0, %v7631
      %v7633 = vpop.f32.mrf.mxu0
      %v7634 = vadd.f32 0.0, %v7633
      %7635 = vmatmul.bf16.gmra.mxu0 %v7518
      %v7636 = vpop.f32.mrf.mxu0
      %v7637 = vadd.f32 0.0, %v7636
      %v7638 = vpop.f32.mrf.mxu0
      %v7639 = vadd.f32 0.0, %v7638
      %7640 = vmatmul.bf16.gmra.mxu0 %v7521
      %v7641 = vpop.f32.mrf.mxu0
      %v7642 = vadd.f32 0.0, %v7641
      %v7643 = vpop.f32.mrf.mxu0
      %v7644 = vadd.f32 0.0, %v7643
      %7645 = vmatmul.bf16.gmra.mxu0 %v7524
      %v7646 = vpop.f32.mrf.mxu0
      %v7647 = vadd.f32 0.0, %v7646
      %v7648 = vpop.f32.mrf.mxu0
      %v7649 = vadd.f32 0.0, %v7648
      %7650 = vmatmul.bf16.gmra.mxu0 %v7527
      %v7651 = vpop.f32.mrf.mxu0
      %v7652 = vadd.f32 0.0, %v7651
      %v7653 = vpop.f32.mrf.mxu0
      %v7654 = vadd.f32 0.0, %v7653
      %7655 = vmatmul.bf16.gmra.mxu0 %v7530
      %v7656 = vpop.f32.mrf.mxu0
      %v7657 = vadd.f32 0.0, %v7656
      %v7658 = vpop.f32.mrf.mxu0
      %v7659 = vadd.f32 0.0, %v7658
      %7660 = vmatmul.bf16.gmra.mxu0 %v7533
      %v7661 = vpop.f32.mrf.mxu0
      %v7662 = vadd.f32 0.0, %v7661
      %v7663 = vpop.f32.mrf.mxu0
      %v7664 = vadd.f32 0.0, %v7663
      %7665 = vmatmul.bf16.gmra.mxu0 %v7536
      %v7666 = vpop.f32.mrf.mxu0
      %v7667 = vadd.f32 0.0, %v7666
      %v7668 = vpop.f32.mrf.mxu0
      %v7669 = vadd.f32 0.0, %v7668
      %7670 = vmatmul.bf16.gmra.mxu0 %v7539
      %v7671 = vpop.f32.mrf.mxu0
      %v7672 = vadd.f32 0.0, %v7671
      %v7673 = vpop.f32.mrf.mxu0
      %v7674 = vadd.f32 0.0, %v7673
      %7675 = vmatmul.bf16.gmra.mxu0 %v7542
      %v7676 = vpop.f32.mrf.mxu0
      %v7677 = vadd.f32 0.0, %v7676
      %v7678 = vpop.f32.mrf.mxu0
      %v7679 = vadd.f32 0.0, %v7678
      %7680 = vmatmul.bf16.gmra.mxu0 %v7545
      %v7681 = vpop.f32.mrf.mxu0
      %v7682 = vadd.f32 0.0, %v7681
      %v7683 = vpop.f32.mrf.mxu0
      %v7684 = vadd.f32 0.0, %v7683
      %7685 = vmatmul.bf16.gmra.mxu0 %v7548
      %v7686 = vpop.f32.mrf.mxu0
      %v7687 = vadd.f32 0.0, %v7686
      %v7688 = vpop.f32.mrf.mxu0
      %v7689 = vadd.f32 0.0, %v7688
      %7690 = vmatmul.bf16.gmra.mxu0 %v7551
      %v7691 = vpop.f32.mrf.mxu0
      %v7692 = vadd.f32 0.0, %v7691
      %v7693 = vpop.f32.mrf.mxu0
      %v7694 = vadd.f32 0.0, %v7693
      %7695 = vmatmul.bf16.gmra.mxu0 %v7554
      %v7696 = vpop.f32.mrf.mxu0
      %v7697 = vadd.f32 0.0, %v7696
      %v7698 = vpop.f32.mrf.mxu0
      %v7699 = vadd.f32 0.0, %v7698
      %7700 = vmatmul.bf16.gmra.mxu0 %v7557
      %v7701 = vpop.f32.mrf.mxu0
      %v7702 = vadd.f32 0.0, %v7701
      %v7703 = vpop.f32.mrf.mxu0
      %v7704 = vadd.f32 0.0, %v7703
      %7705 = vmatmul.bf16.gmra.mxu0 %v7560
      %v7706 = vpop.f32.mrf.mxu0
      %v7707 = vadd.f32 0.0, %v7706
      %v7708 = vpop.f32.mrf.mxu0
      %v7709 = vadd.f32 0.0, %v7708
      %7710 = vmatmul.bf16.gmra.mxu0 %v7563
      %v7711 = vpop.f32.mrf.mxu0
      %v7712 = vadd.f32 0.0, %v7711
      %v7713 = vpop.f32.mrf.mxu0
      %v7714 = vadd.f32 0.0, %v7713
      %7715 = vmatmul.bf16.gmra.mxu0 %v7566
      %v7716 = vpop.f32.mrf.mxu0
      %v7717 = vadd.f32 0.0, %v7716
      %v7718 = vpop.f32.mrf.mxu0
      %v7719 = vadd.f32 0.0, %v7718
      %7720 = vmatmul.bf16.gmra.mxu0 %v7569
      %v7721 = vpop.f32.mrf.mxu0
      %v7722 = vadd.f32 0.0, %v7721
      %v7723 = vpop.f32.mrf.mxu0
      %v7724 = vadd.f32 0.0, %v7723
      %7725 = vmatmul.bf16.gmra.mxu0 %v7572
      %v7726 = vpop.f32.mrf.mxu0
      %v7727 = vadd.f32 0.0, %v7726
      %v7728 = vpop.f32.mrf.mxu0
      %v7729 = vadd.f32 0.0, %v7728
      %7730 = vmatmul.bf16.gmra.mxu0 %v7575
      %v7731 = vpop.f32.mrf.mxu0
      %v7732 = vadd.f32 0.0, %v7731
      %v7733 = vpop.f32.mrf.mxu0
      %v7734 = vadd.f32 0.0, %v7733
      %7735 = vmatmul.bf16.gmra.mxu0 %v7578
      %v7736 = vpop.f32.mrf.mxu0
      %v7737 = vadd.f32 0.0, %v7736
      %v7738 = vpop.f32.mrf.mxu0
      %v7739 = vadd.f32 0.0, %v7738
      %7740 = vmatmul.bf16.gmra.mxu0 %v7581
      %v7741 = vpop.f32.mrf.mxu0
      %v7742 = vadd.f32 0.0, %v7741
      %v7743 = vpop.f32.mrf.mxu0
      %v7744 = vadd.f32 0.0, %v7743
      %7745 = vmatmul.bf16.gmra.mxu0 %v7584
      %v7746 = vpop.f32.mrf.mxu0
      %v7747 = vadd.f32 0.0, %v7746
      %v7748 = vpop.f32.mrf.mxu0
      %v7749 = vadd.f32 0.0, %v7748
      %7750 = vmatmul.bf16.gmra.mxu0 %v7587
      %v7751 = vpop.f32.mrf.mxu0
      %v7752 = vadd.f32 0.0, %v7751
      %v7753 = vpop.f32.mrf.mxu0
      %v7754 = vadd.f32 0.0, %v7753
      %7755 = vmatmul.bf16.gmra.mxu0 %v7590
      %v7756 = vpop.f32.mrf.mxu0
      %v7757 = vadd.f32 0.0, %v7756
      %v7758 = vpop.f32.mrf.mxu0
      %v7759 = vadd.f32 0.0, %v7758
      %7760 = vdwg.mxu0
      %v7761 = vadd.f32 %v7174, %v7602
      %v7762 = vadd.f32 %v7175, %v7604
      %v7763 = vadd.f32 %v7176, %v7607
      %v7764 = vadd.f32 %v7177, %v7609
      %v7765 = vadd.f32 %v7178, %v7612
      %v7766 = vadd.f32 %v7179, %v7614
      %v7767 = vadd.f32 %v7180, %v7617
      %v7768 = vadd.f32 %v7181, %v7619
      %v7769 = vadd.f32 %v7182, %v7622
      %v7770 = vadd.f32 %v7183, %v7624
      %v7771 = vadd.f32 %v7184, %v7627
      %v7772 = vadd.f32 %v7185, %v7629
      %v7773 = vadd.f32 %v7186, %v7632
      %v7774 = vadd.f32 %v7187, %v7634
      %v7775 = vadd.f32 %v7188, %v7637
      %v7776 = vadd.f32 %v7189, %v7639
      %v7777 = vadd.f32 %v7190, %v7642
      %v7778 = vadd.f32 %v7191, %v7644
      %v7779 = vadd.f32 %v7192, %v7647
      %v7780 = vadd.f32 %v7193, %v7649
      %v7781 = vadd.f32 %v7194, %v7652
      %v7782 = vadd.f32 %v7195, %v7654
      %v7783 = vadd.f32 %v7196, %v7657
      %v7784 = vadd.f32 %v7197, %v7659
      %v7785 = vadd.f32 %v7198, %v7662
      %v7786 = vadd.f32 %v7199, %v7664
      %v7787 = vadd.f32 %v7200, %v7667
      %v7788 = vadd.f32 %v7201, %v7669
      %v7789 = vadd.f32 %v7202, %v7672
      %v7790 = vadd.f32 %v7203, %v7674
      %v7791 = vadd.f32 %v7204, %v7677
      %v7792 = vadd.f32 %v7205, %v7679
      %v7793 = vadd.f32 %v7206, %v7682
      %v7794 = vadd.f32 %v7207, %v7684
      %v7795 = vadd.f32 %v7208, %v7687
      %v7796 = vadd.f32 %v7209, %v7689
      %v7797 = vadd.f32 %v7210, %v7692
      %v7798 = vadd.f32 %v7211, %v7694
      %v7799 = vadd.f32 %v7212, %v7697
      %v7800 = vadd.f32 %v7213, %v7699
      %v7801 = vadd.f32 %v7214, %v7702
      %v7802 = vadd.f32 %v7215, %v7704
      %v7803 = vadd.f32 %v7216, %v7707
      %v7804 = vadd.f32 %v7217, %v7709
      %v7805 = vadd.f32 %v7218, %v7712
      %v7806 = vadd.f32 %v7219, %v7714
      %v7807 = vadd.f32 %v7220, %v7717
      %v7808 = vadd.f32 %v7221, %v7719
      %v7809 = vadd.f32 %v7222, %v7722
      %v7810 = vadd.f32 %v7223, %v7724
      %v7811 = vadd.f32 %v7224, %v7727
      %v7812 = vadd.f32 %v7225, %v7729
      %v7813 = vadd.f32 %v7226, %v7732
      %v7814 = vadd.f32 %v7227, %v7734
      %v7815 = vadd.f32 %v7228, %v7737
      %v7816 = vadd.f32 %v7229, %v7739
      %v7817 = vadd.f32 %v7230, %v7742
      %v7818 = vadd.f32 %v7231, %v7744
      %v7819 = vadd.f32 %v7232, %v7747
      %v7820 = vadd.f32 %v7233, %v7749
      %v7821 = vadd.f32 %v7234, %v7752
      %v7822 = vadd.f32 %v7235, %v7754
      %v7823 = vadd.f32 %v7236, %v7757
      %v7824 = vadd.f32 %v7237, %v7759
      %v7825 = vld [vmem:[%s7238] sm:$0xf]
      %v7826 = vld [vmem:[%s7238 + $0x4] sm:$0xf]
      %v7827 = vld [vmem:[%s7238 + $0x8] sm:$0x1]
      %v7828 = vld [vmem:[%s7238 + $0xc] sm:$0xf]
      %v7829 = vld [vmem:[%s7238 + $0x10] sm:$0xf]
      %v7830 = vld [vmem:[%s7238 + $0x14] sm:$0x1]
      %v7831 = vld [vmem:[%s7238 + $0x18] sm:$0xf]
      %v7832 = vld [vmem:[%s7238 + $0x1c] sm:$0xf]
      %v7833 = vld [vmem:[%s7238 + $0x20] sm:$0x1]
      %v7834 = vld [vmem:[%s7238 + $0x24] sm:$0xf]
      %v7835 = vld [vmem:[%s7238 + $0x28] sm:$0xf]
      %v7836 = vld [vmem:[%s7238 + $0x2c] sm:$0x1]
      %v7837 = vld [vmem:[%s7238 + $0x30] sm:$0xf]
      %v7838 = vld [vmem:[%s7238 + $0x34] sm:$0xf]
      %v7839 = vld [vmem:[%s7238 + $0x38] sm:$0x1]
      %v7840 = vld [vmem:[%s7238 + $0x3c] sm:$0xf]
      %v7841 = vld [vmem:[%s7238 + $0x40] sm:$0xf]
      %v7842 = vld [vmem:[%s7238 + $0x44] sm:$0x1]
      %v7843 = vld [vmem:[%s7238 + $0x48] sm:$0xf]
      %v7844 = vld [vmem:[%s7238 + $0x4c] sm:$0xf]
      %v7845 = vld [vmem:[%s7238 + $0x50] sm:$0x1]
      %v7846 = vld [vmem:[%s7238 + $0x54] sm:$0xf]
      %v7847 = vld [vmem:[%s7238 + $0x58] sm:$0xf]
      %v7848 = vld [vmem:[%s7238 + $0x5c] sm:$0x1]
      %v7849 = vld [vmem:[%s7238 + $0x60] sm:$0xf]
      %v7850 = vld [vmem:[%s7238 + $0x64] sm:$0xf]
      %v7851 = vld [vmem:[%s7238 + $0x68] sm:$0x1]
      %v7852 = vld [vmem:[%s7238 + $0x6c] sm:$0xf]
      %v7853 = vld [vmem:[%s7238 + $0x70] sm:$0xf]
      %v7854 = vld [vmem:[%s7238 + $0x74] sm:$0x1]
      %v7855 = vld [vmem:[%s7238 + $0x78] sm:$0xf]
      %v7856 = vld [vmem:[%s7238 + $0x7c] sm:$0xf]
      %v7857 = vld [vmem:[%s7238 + $0x80] sm:$0x1]
      %v7858 = vld [vmem:[%s7238 + $0x84] sm:$0xf]
      %v7859 = vld [vmem:[%s7238 + $0x88] sm:$0xf]
      %v7860 = vld [vmem:[%s7238 + $0x8c] sm:$0x1]
      %v7861 = vld [vmem:[%s7238 + $0x90] sm:$0xf]
      %v7862 = vld [vmem:[%s7238 + $0x94] sm:$0xf]
      %v7863 = vld [vmem:[%s7238 + $0x98] sm:$0x1]
      %v7864 = vld [vmem:[%s7238 + $0x9c] sm:$0xf]
      %v7865 = vld [vmem:[%s7238 + $0xa0] sm:$0xf]
      %v7866 = vld [vmem:[%s7238 + $0xa4] sm:$0x1]
      %v7867 = vld [vmem:[%s7238 + $0xa8] sm:$0xf]
      %v7868 = vld [vmem:[%s7238 + $0xac] sm:$0xf]
      %v7869 = vld [vmem:[%s7238 + $0xb0] sm:$0x1]
      %v7870 = vld [vmem:[%s7238 + $0xb4] sm:$0xf]
      %v7871 = vld [vmem:[%s7238 + $0xb8] sm:$0xf]
      %v7872 = vld [vmem:[%s7238 + $0xbc] sm:$0x1]
      %v7873 = vld [vmem:[%s7238 + $0xd8] sm:$0xf]
      %v7874 = vld [vmem:[%s7238 + $0xdc] sm:$0xf]
      %v7875 = vld [vmem:[%s7238 + $0xe0] sm:$0x1]
      %v7876 = vld [vmem:[%s7238 + $0xe4] sm:$0xf]
      %v7877 = vld [vmem:[%s7238 + $0xe8] sm:$0xf]
      %v7878 = vld [vmem:[%s7238 + $0xec] sm:$0x1]
      %v7879 = vld [vmem:[%s7238 + $0xf0] sm:$0xf]
      %v7880 = vld [vmem:[%s7238 + $0xf4] sm:$0xf]
      %v7881 = vld [vmem:[%s7238 + $0xf8] sm:$0x1]
      %v7882 = vld [vmem:[%s7238 + $0xfc] sm:$0xf]
      %v7883 = vld [vmem:[%s7238 + $0x100] sm:$0xf]
      %v7884 = vld [vmem:[%s7238 + $0x104] sm:$0x1]
      %v7885 = vld [vmem:[%s7238 + $0x108] sm:$0xf]
      %v7886 = vld [vmem:[%s7238 + $0x10c] sm:$0xf]
      %v7887 = vld [vmem:[%s7238 + $0x110] sm:$0x1]
      %v7888 = vld [vmem:[%s7238 + $0x114] sm:$0xf]
      %v7889 = vld [vmem:[%s7238 + $0x118] sm:$0xf]
      %v7890 = vld [vmem:[%s7238 + $0x11c] sm:$0x1]
      %v7891 = vld [vmem:[%s7238 + $0x120] sm:$0xf]
      %v7892 = vld [vmem:[%s7238 + $0x124] sm:$0xf]
      %v7893 = vld [vmem:[%s7238 + $0x128] sm:$0x1]
      %v7894 = vld [vmem:[%s7238 + $0x12c] sm:$0xf]
      %v7895 = vld [vmem:[%s7238 + $0x130] sm:$0xf]
      %v7896 = vld [vmem:[%s7238 + $0x134] sm:$0x1]
      %v7897 = vld [vmem:[%s7238 + $0x138] sm:$0xf]
      %v7898 = vld [vmem:[%s7238 + $0x13c] sm:$0xf]
      %v7899 = vld [vmem:[%s7238 + $0x140] sm:$0x1]
      %v7900 = vld [vmem:[%s7238 + $0x144] sm:$0xf]
      %v7901 = vld [vmem:[%s7238 + $0x148] sm:$0xf]
      %v7902 = vld [vmem:[%s7238 + $0x14c] sm:$0x1]
      %v7903 = vld [vmem:[%s7238 + $0x150] sm:$0xf]
      %v7904 = vld [vmem:[%s7238 + $0x154] sm:$0xf]
      %v7905 = vld [vmem:[%s7238 + $0x158] sm:$0x1]
      %v7906 = vld [vmem:[%s7238 + $0x15c] sm:$0xf]
      %v7907 = vld [vmem:[%s7238 + $0x160] sm:$0xf]
      %v7908 = vld [vmem:[%s7238 + $0x164] sm:$0x1]
      %v7909 = vld [vmem:[%s7238 + $0x168] sm:$0xf]
      %v7910 = vld [vmem:[%s7238 + $0x16c] sm:$0xf]
      %v7911 = vld [vmem:[%s7238 + $0x170] sm:$0x1]
      %v7912 = vld [vmem:[%s7238 + $0x174] sm:$0xf]
      %v7913 = vld [vmem:[%s7238 + $0x178] sm:$0xf]
      %v7914 = vld [vmem:[%s7238 + $0x17c] sm:$0x1]
      %v7915 = vld [vmem:[%s7238 + $0x180] sm:$0xf]
      %v7916 = vld [vmem:[%s7238 + $0x184] sm:$0xf]
      %v7917 = vld [vmem:[%s7238 + $0x188] sm:$0x1]
      %v7918 = vld [vmem:[%s7238 + $0x18c] sm:$0xf]
      %v7919 = vld [vmem:[%s7238 + $0x190] sm:$0xf]
      %v7920 = vld [vmem:[%s7238 + $0x194] sm:$0x1]
      %v7922 = vshrl.u32 %v7825, 16
      %v7924 = vrot.slane %v7922, 4
      %v7925 = vshll.u32 %v7825, 16
      %v7927 = vrot.slane %v7925, 5
      %v7928 = vor.u32 %v7924, %v7927
      %v7929 = vrot.slane %v7928, 4
      %v7931 = vshll.u32 %v7826, 16
      %v7933 = vrot.slane %v7931, 5
      %v7934 = vsel %vm2127, %v7929, %v7933
      %v7935 = vshrl.u32 %v7826, 16
      %v7937 = vrot.slane %v7935, 4
      %v7938 = vor.u32 %v7937, %v7933
      %v7939 = vrot.slane %v7938, 4
      %v7941 = vshll.u32 %v7827, 16
      %v7943 = vrot.slane %v7941, 5
      %v7944 = vsel %vm2127, %v7939, %v7943
      %v7946 = vshrl.u32 %v7828, 16
      %v7948 = vrot.slane %v7946, 4
      %v7949 = vshll.u32 %v7828, 16
      %v7951 = vrot.slane %v7949, 5
      %v7952 = vor.u32 %v7948, %v7951
      %v7953 = vrot.slane %v7952, 4
      %v7955 = vshll.u32 %v7829, 16
      %v7957 = vrot.slane %v7955, 5
      %v7958 = vsel %vm2127, %v7953, %v7957
      %v7959 = vshrl.u32 %v7829, 16
      %v7961 = vrot.slane %v7959, 4
      %v7962 = vor.u32 %v7961, %v7957
      %v7963 = vrot.slane %v7962, 4
      %v7965 = vshll.u32 %v7830, 16
      %v7967 = vrot.slane %v7965, 5
      %v7968 = vsel %vm2127, %v7963, %v7967
      %v7970 = vshrl.u32 %v7831, 16
      %v7972 = vrot.slane %v7970, 4
      %v7973 = vshll.u32 %v7831, 16
      %v7975 = vrot.slane %v7973, 5
      %v7976 = vor.u32 %v7972, %v7975
      %v7977 = vrot.slane %v7976, 4
      %v7979 = vshll.u32 %v7832, 16
      %v7981 = vrot.slane %v7979, 5
      %v7982 = vsel %vm2127, %v7977, %v7981
      %v7983 = vshrl.u32 %v7832, 16
      %v7985 = vrot.slane %v7983, 4
      %v7986 = vor.u32 %v7985, %v7981
      %v7987 = vrot.slane %v7986, 4
      %v7989 = vshll.u32 %v7833, 16
      %v7991 = vrot.slane %v7989, 5
      %v7992 = vsel %vm2127, %v7987, %v7991
      %v7994 = vshrl.u32 %v7834, 16
      %v7996 = vrot.slane %v7994, 4
      %v7997 = vshll.u32 %v7834, 16
      %v7999 = vrot.slane %v7997, 5
      %v8000 = vor.u32 %v7996, %v7999
      %v8001 = vrot.slane %v8000, 4
      %v8003 = vshll.u32 %v7835, 16
      %v8005 = vrot.slane %v8003, 5
      %v8006 = vsel %vm2127, %v8001, %v8005
      %v8007 = vshrl.u32 %v7835, 16
      %v8009 = vrot.slane %v8007, 4
      %v8010 = vor.u32 %v8009, %v8005
      %v8011 = vrot.slane %v8010, 4
      %v8013 = vshll.u32 %v7836, 16
      %v8015 = vrot.slane %v8013, 5
      %v8016 = vsel %vm2127, %v8011, %v8015
      %v8018 = vshrl.u32 %v7837, 16
      %v8020 = vrot.slane %v8018, 4
      %v8021 = vshll.u32 %v7837, 16
      %v8023 = vrot.slane %v8021, 5
      %v8024 = vor.u32 %v8020, %v8023
      %v8025 = vrot.slane %v8024, 4
      %v8027 = vshll.u32 %v7838, 16
      %v8029 = vrot.slane %v8027, 5
      %v8030 = vsel %vm2127, %v8025, %v8029
      %v8031 = vshrl.u32 %v7838, 16
      %v8033 = vrot.slane %v8031, 4
      %v8034 = vor.u32 %v8033, %v8029
      %v8035 = vrot.slane %v8034, 4
      %v8037 = vshll.u32 %v7839, 16
      %v8039 = vrot.slane %v8037, 5
      %v8040 = vsel %vm2127, %v8035, %v8039
      %v8042 = vshrl.u32 %v7840, 16
      %v8044 = vrot.slane %v8042, 4
      %v8045 = vshll.u32 %v7840, 16
      %v8047 = vrot.slane %v8045, 5
      %v8048 = vor.u32 %v8044, %v8047
      %v8049 = vrot.slane %v8048, 4
      %v8051 = vshll.u32 %v7841, 16
      %v8053 = vrot.slane %v8051, 5
      %v8054 = vsel %vm2127, %v8049, %v8053
      %v8055 = vshrl.u32 %v7841, 16
      %v8057 = vrot.slane %v8055, 4
      %v8058 = vor.u32 %v8057, %v8053
      %v8059 = vrot.slane %v8058, 4
      %v8061 = vshll.u32 %v7842, 16
      %v8063 = vrot.slane %v8061, 5
      %v8064 = vsel %vm2127, %v8059, %v8063
      %v8066 = vshrl.u32 %v7843, 16
      %v8068 = vrot.slane %v8066, 4
      %v8069 = vshll.u32 %v7843, 16
      %v8071 = vrot.slane %v8069, 5
      %v8072 = vor.u32 %v8068, %v8071
      %v8073 = vrot.slane %v8072, 4
      %v8075 = vshll.u32 %v7844, 16
      %v8077 = vrot.slane %v8075, 5
      %v8078 = vsel %vm2127, %v8073, %v8077
      %v8079 = vshrl.u32 %v7844, 16
      %v8081 = vrot.slane %v8079, 4
      %v8082 = vor.u32 %v8081, %v8077
      %v8083 = vrot.slane %v8082, 4
      %v8085 = vshll.u32 %v7845, 16
      %v8087 = vrot.slane %v8085, 5
      %v8088 = vsel %vm2127, %v8083, %v8087
      %v8090 = vshrl.u32 %v7846, 16
      %v8092 = vrot.slane %v8090, 4
      %v8093 = vshll.u32 %v7846, 16
      %v8095 = vrot.slane %v8093, 5
      %v8096 = vor.u32 %v8092, %v8095
      %v8097 = vrot.slane %v8096, 4
      %v8099 = vshll.u32 %v7847, 16
      %v8101 = vrot.slane %v8099, 5
      %v8102 = vsel %vm2127, %v8097, %v8101
      %v8103 = vshrl.u32 %v7847, 16
      %v8105 = vrot.slane %v8103, 4
      %v8106 = vor.u32 %v8105, %v8101
      %v8107 = vrot.slane %v8106, 4
      %v8109 = vshll.u32 %v7848, 16
      %v8111 = vrot.slane %v8109, 5
      %v8112 = vsel %vm2127, %v8107, %v8111
      %v8114 = vshrl.u32 %v7849, 16
      %v8116 = vrot.slane %v8114, 4
      %v8117 = vshll.u32 %v7849, 16
      %v8119 = vrot.slane %v8117, 5
      %v8120 = vor.u32 %v8116, %v8119
      %v8121 = vrot.slane %v8120, 4
      %v8123 = vshll.u32 %v7850, 16
      %v8125 = vrot.slane %v8123, 5
      %v8126 = vsel %vm2127, %v8121, %v8125
      %v8127 = vshrl.u32 %v7850, 16
      %v8129 = vrot.slane %v8127, 4
      %v8130 = vor.u32 %v8129, %v8125
      %v8131 = vrot.slane %v8130, 4
      %v8133 = vshll.u32 %v7851, 16
      %v8135 = vrot.slane %v8133, 5
      %v8136 = vsel %vm2127, %v8131, %v8135
      %v8138 = vshrl.u32 %v7852, 16
      %v8140 = vrot.slane %v8138, 4
      %v8141 = vshll.u32 %v7852, 16
      %v8143 = vrot.slane %v8141, 5
      %v8144 = vor.u32 %v8140, %v8143
      %v8145 = vrot.slane %v8144, 4
      %v8147 = vshll.u32 %v7853, 16
      %v8149 = vrot.slane %v8147, 5
      %v8150 = vsel %vm2127, %v8145, %v8149
      %v8151 = vshrl.u32 %v7853, 16
      %v8153 = vrot.slane %v8151, 4
      %v8154 = vor.u32 %v8153, %v8149
      %v8155 = vrot.slane %v8154, 4
      %v8157 = vshll.u32 %v7854, 16
      %v8159 = vrot.slane %v8157, 5
      %v8160 = vsel %vm2127, %v8155, %v8159
      %v8162 = vshrl.u32 %v7855, 16
      %v8164 = vrot.slane %v8162, 4
      %v8165 = vshll.u32 %v7855, 16
      %v8167 = vrot.slane %v8165, 5
      %v8168 = vor.u32 %v8164, %v8167
      %v8169 = vrot.slane %v8168, 4
      %v8171 = vshll.u32 %v7856, 16
      %v8173 = vrot.slane %v8171, 5
      %v8174 = vsel %vm2127, %v8169, %v8173
      %v8175 = vshrl.u32 %v7856, 16
      %v8177 = vrot.slane %v8175, 4
      %v8178 = vor.u32 %v8177, %v8173
      %v8179 = vrot.slane %v8178, 4
      %v8181 = vshll.u32 %v7857, 16
      %v8183 = vrot.slane %v8181, 5
      %v8184 = vsel %vm2127, %v8179, %v8183
      %v8186 = vshrl.u32 %v7858, 16
      %v8188 = vrot.slane %v8186, 4
      %v8189 = vshll.u32 %v7858, 16
      %v8191 = vrot.slane %v8189, 5
      %v8192 = vor.u32 %v8188, %v8191
      %v8193 = vrot.slane %v8192, 4
      %v8195 = vshll.u32 %v7859, 16
      %v8197 = vrot.slane %v8195, 5
      %v8198 = vsel %vm2127, %v8193, %v8197
      %v8199 = vshrl.u32 %v7859, 16
      %v8201 = vrot.slane %v8199, 4
      %v8202 = vor.u32 %v8201, %v8197
      %v8203 = vrot.slane %v8202, 4
      %v8205 = vshll.u32 %v7860, 16
      %v8207 = vrot.slane %v8205, 5
      %v8208 = vsel %vm2127, %v8203, %v8207
      %v8210 = vshrl.u32 %v7861, 16
      %v8212 = vrot.slane %v8210, 4
      %v8213 = vshll.u32 %v7861, 16
      %v8215 = vrot.slane %v8213, 5
      %v8216 = vor.u32 %v8212, %v8215
      %v8217 = vrot.slane %v8216, 4
      %v8219 = vshll.u32 %v7862, 16
      %v8221 = vrot.slane %v8219, 5
      %v8222 = vsel %vm2127, %v8217, %v8221
      %v8223 = vshrl.u32 %v7862, 16
      %v8225 = vrot.slane %v8223, 4
      %v8226 = vor.u32 %v8225, %v8221
      %v8227 = vrot.slane %v8226, 4
      %v8229 = vshll.u32 %v7863, 16
      %v8231 = vrot.slane %v8229, 5
      %v8232 = vsel %vm2127, %v8227, %v8231
      %v8234 = vshrl.u32 %v7864, 16
      %v8236 = vrot.slane %v8234, 4
      %v8237 = vshll.u32 %v7864, 16
      %v8239 = vrot.slane %v8237, 5
      %v8240 = vor.u32 %v8236, %v8239
      %v8241 = vrot.slane %v8240, 4
      %v8243 = vshll.u32 %v7865, 16
      %v8245 = vrot.slane %v8243, 5
      %v8246 = vsel %vm2127, %v8241, %v8245
      %v8247 = vshrl.u32 %v7865, 16
      %v8249 = vrot.slane %v8247, 4
      %v8250 = vor.u32 %v8249, %v8245
      %v8251 = vrot.slane %v8250, 4
      %v8253 = vshll.u32 %v7866, 16
      %v8255 = vrot.slane %v8253, 5
      %v8256 = vsel %vm2127, %v8251, %v8255
      %v8258 = vshrl.u32 %v7867, 16
      %v8260 = vrot.slane %v8258, 4
      %v8261 = vshll.u32 %v7867, 16
      %v8263 = vrot.slane %v8261, 5
      %v8264 = vor.u32 %v8260, %v8263
      %v8265 = vrot.slane %v8264, 4
      %v8267 = vshll.u32 %v7868, 16
      %v8269 = vrot.slane %v8267, 5
      %v8270 = vsel %vm2127, %v8265, %v8269
      %v8271 = vshrl.u32 %v7868, 16
      %v8273 = vrot.slane %v8271, 4
      %v8274 = vor.u32 %v8273, %v8269
      %v8275 = vrot.slane %v8274, 4
      %v8277 = vshll.u32 %v7869, 16
      %v8279 = vrot.slane %v8277, 5
      %v8280 = vsel %vm2127, %v8275, %v8279
      %v8282 = vshrl.u32 %v7870, 16
      %v8284 = vrot.slane %v8282, 4
      %v8285 = vshll.u32 %v7870, 16
      %v8287 = vrot.slane %v8285, 5
      %v8288 = vor.u32 %v8284, %v8287
      %v8289 = vrot.slane %v8288, 4
      %v8291 = vshll.u32 %v7871, 16
      %v8293 = vrot.slane %v8291, 5
      %v8294 = vsel %vm2127, %v8289, %v8293
      %v8295 = vshrl.u32 %v7871, 16
      %v8297 = vrot.slane %v8295, 4
      %v8298 = vor.u32 %v8297, %v8293
      %v8299 = vrot.slane %v8298, 4
      %v8301 = vshll.u32 %v7872, 16
      %v8303 = vrot.slane %v8301, 5
      %v8304 = vsel %vm2127, %v8299, %v8303
      %v8306 = vshrl.u32 %v7873, 16
      %v8308 = vrot.slane %v8306, 4
      %v8309 = vshll.u32 %v7873, 16
      %v8311 = vrot.slane %v8309, 5
      %v8312 = vor.u32 %v8308, %v8311
      %v8313 = vrot.slane %v8312, 4
      %v8315 = vshll.u32 %v7874, 16
      %v8317 = vrot.slane %v8315, 5
      %v8318 = vsel %vm2127, %v8313, %v8317
      %v8319 = vshrl.u32 %v7874, 16
      %v8321 = vrot.slane %v8319, 4
      %v8322 = vor.u32 %v8321, %v8317
      %v8323 = vrot.slane %v8322, 4
      %v8325 = vshll.u32 %v7875, 16
      %v8327 = vrot.slane %v8325, 5
      %v8328 = vsel %vm2127, %v8323, %v8327
      %v8330 = vshrl.u32 %v7876, 16
      %v8332 = vrot.slane %v8330, 4
      %v8333 = vshll.u32 %v7876, 16
      %v8335 = vrot.slane %v8333, 5
      %v8336 = vor.u32 %v8332, %v8335
      %v8337 = vrot.slane %v8336, 4
      %v8339 = vshll.u32 %v7877, 16
      %v8341 = vrot.slane %v8339, 5
      %v8342 = vsel %vm2127, %v8337, %v8341
      %v8343 = vshrl.u32 %v7877, 16
      %v8345 = vrot.slane %v8343, 4
      %v8346 = vor.u32 %v8345, %v8341
      %v8347 = vrot.slane %v8346, 4
      %v8349 = vshll.u32 %v7878, 16
      %v8351 = vrot.slane %v8349, 5
      %v8352 = vsel %vm2127, %v8347, %v8351
      %v8354 = vshrl.u32 %v7879, 16
      %v8356 = vrot.slane %v8354, 4
      %v8357 = vshll.u32 %v7879, 16
      %v8359 = vrot.slane %v8357, 5
      %v8360 = vor.u32 %v8356, %v8359
      %v8361 = vrot.slane %v8360, 4
      %v8363 = vshll.u32 %v7880, 16
      %v8365 = vrot.slane %v8363, 5
      %v8366 = vsel %vm2127, %v8361, %v8365
      %v8367 = vshrl.u32 %v7880, 16
      %v8369 = vrot.slane %v8367, 4
      %v8370 = vor.u32 %v8369, %v8365
      %v8371 = vrot.slane %v8370, 4
      %v8373 = vshll.u32 %v7881, 16
      %v8375 = vrot.slane %v8373, 5
      %v8376 = vsel %vm2127, %v8371, %v8375
      %v8378 = vshrl.u32 %v7882, 16
      %v8380 = vrot.slane %v8378, 4
      %v8381 = vshll.u32 %v7882, 16
      %v8383 = vrot.slane %v8381, 5
      %v8384 = vor.u32 %v8380, %v8383
      %v8385 = vrot.slane %v8384, 4
      %v8387 = vshll.u32 %v7883, 16
      %v8389 = vrot.slane %v8387, 5
      %v8390 = vsel %vm2127, %v8385, %v8389
      %v8391 = vshrl.u32 %v7883, 16
      %v8393 = vrot.slane %v8391, 4
      %v8394 = vor.u32 %v8393, %v8389
      %v8395 = vrot.slane %v8394, 4
      %v8397 = vshll.u32 %v7884, 16
      %v8399 = vrot.slane %v8397, 5
      %v8400 = vsel %vm2127, %v8395, %v8399
      %v8402 = vshrl.u32 %v7885, 16
      %v8404 = vrot.slane %v8402, 4
      %v8405 = vshll.u32 %v7885, 16
      %v8407 = vrot.slane %v8405, 5
      %v8408 = vor.u32 %v8404, %v8407
      %v8409 = vrot.slane %v8408, 4
      %v8411 = vshll.u32 %v7886, 16
      %v8413 = vrot.slane %v8411, 5
      %v8414 = vsel %vm2127, %v8409, %v8413
      %v8415 = vshrl.u32 %v7886, 16
      %v8417 = vrot.slane %v8415, 4
      %v8418 = vor.u32 %v8417, %v8413
      %v8419 = vrot.slane %v8418, 4
      %v8421 = vshll.u32 %v7887, 16
      %v8423 = vrot.slane %v8421, 5
      %v8424 = vsel %vm2127, %v8419, %v8423
      %v8426 = vshrl.u32 %v7888, 16
      %v8428 = vrot.slane %v8426, 4
      %v8429 = vshll.u32 %v7888, 16
      %v8431 = vrot.slane %v8429, 5
      %v8432 = vor.u32 %v8428, %v8431
      %v8433 = vrot.slane %v8432, 4
      %v8435 = vshll.u32 %v7889, 16
      %v8437 = vrot.slane %v8435, 5
      %v8438 = vsel %vm2127, %v8433, %v8437
      %v8439 = vshrl.u32 %v7889, 16
      %v8441 = vrot.slane %v8439, 4
      %v8442 = vor.u32 %v8441, %v8437
      %v8443 = vrot.slane %v8442, 4
      %v8445 = vshll.u32 %v7890, 16
      %v8447 = vrot.slane %v8445, 5
      %v8448 = vsel %vm2127, %v8443, %v8447
      %v8450 = vshrl.u32 %v7891, 16
      %v8452 = vrot.slane %v8450, 4
      %v8453 = vshll.u32 %v7891, 16
      %v8455 = vrot.slane %v8453, 5
      %v8456 = vor.u32 %v8452, %v8455
      %v8457 = vrot.slane %v8456, 4
      %v8459 = vshll.u32 %v7892, 16
      %v8461 = vrot.slane %v8459, 5
      %v8462 = vsel %vm2127, %v8457, %v8461
      %v8463 = vshrl.u32 %v7892, 16
      %v8465 = vrot.slane %v8463, 4
      %v8466 = vor.u32 %v8465, %v8461
      %v8467 = vrot.slane %v8466, 4
      %v8469 = vshll.u32 %v7893, 16
      %v8471 = vrot.slane %v8469, 5
      %v8472 = vsel %vm2127, %v8467, %v8471
      %v8474 = vshrl.u32 %v7894, 16
      %v8476 = vrot.slane %v8474, 4
      %v8477 = vshll.u32 %v7894, 16
      %v8479 = vrot.slane %v8477, 5
      %v8480 = vor.u32 %v8476, %v8479
      %v8481 = vrot.slane %v8480, 4
      %v8483 = vshll.u32 %v7895, 16
      %v8485 = vrot.slane %v8483, 5
      %v8486 = vsel %vm2127, %v8481, %v8485
      %v8487 = vshrl.u32 %v7895, 16
      %v8489 = vrot.slane %v8487, 4
      %v8490 = vor.u32 %v8489, %v8485
      %v8491 = vrot.slane %v8490, 4
      %v8493 = vshll.u32 %v7896, 16
      %v8495 = vrot.slane %v8493, 5
      %v8496 = vsel %vm2127, %v8491, %v8495
      %v8498 = vshrl.u32 %v7897, 16
      %v8500 = vrot.slane %v8498, 4
      %v8501 = vshll.u32 %v7897, 16
      %v8503 = vrot.slane %v8501, 5
      %v8504 = vor.u32 %v8500, %v8503
      %v8505 = vrot.slane %v8504, 4
      %v8507 = vshll.u32 %v7898, 16
      %v8509 = vrot.slane %v8507, 5
      %v8510 = vsel %vm2127, %v8505, %v8509
      %v8511 = vshrl.u32 %v7898, 16
      %v8513 = vrot.slane %v8511, 4
      %v8514 = vor.u32 %v8513, %v8509
      %v8515 = vrot.slane %v8514, 4
      %v8517 = vshll.u32 %v7899, 16
      %v8519 = vrot.slane %v8517, 5
      %v8520 = vsel %vm2127, %v8515, %v8519
      %v8522 = vshrl.u32 %v7900, 16
      %v8524 = vrot.slane %v8522, 4
      %v8525 = vshll.u32 %v7900, 16
      %v8527 = vrot.slane %v8525, 5
      %v8528 = vor.u32 %v8524, %v8527
      %v8529 = vrot.slane %v8528, 4
      %v8531 = vshll.u32 %v7901, 16
      %v8533 = vrot.slane %v8531, 5
      %v8534 = vsel %vm2127, %v8529, %v8533
      %v8535 = vshrl.u32 %v7901, 16
      %v8537 = vrot.slane %v8535, 4
      %v8538 = vor.u32 %v8537, %v8533
      %v8539 = vrot.slane %v8538, 4
      %v8541 = vshll.u32 %v7902, 16
      %v8543 = vrot.slane %v8541, 5
      %v8544 = vsel %vm2127, %v8539, %v8543
      %v8546 = vshrl.u32 %v7903, 16
      %v8548 = vrot.slane %v8546, 4
      %v8549 = vshll.u32 %v7903, 16
      %v8551 = vrot.slane %v8549, 5
      %v8552 = vor.u32 %v8548, %v8551
      %v8553 = vrot.slane %v8552, 4
      %v8555 = vshll.u32 %v7904, 16
      %v8557 = vrot.slane %v8555, 5
      %v8558 = vsel %vm2127, %v8553, %v8557
      %v8559 = vshrl.u32 %v7904, 16
      %v8561 = vrot.slane %v8559, 4
      %v8562 = vor.u32 %v8561, %v8557
      %v8563 = vrot.slane %v8562, 4
      %v8565 = vshll.u32 %v7905, 16
      %v8567 = vrot.slane %v8565, 5
      %v8568 = vsel %vm2127, %v8563, %v8567
      %v8570 = vshrl.u32 %v7906, 16
      %v8572 = vrot.slane %v8570, 4
      %v8573 = vshll.u32 %v7906, 16
      %v8575 = vrot.slane %v8573, 5
      %v8576 = vor.u32 %v8572, %v8575
      %v8577 = vrot.slane %v8576, 4
      %v8579 = vshll.u32 %v7907, 16
      %v8581 = vrot.slane %v8579, 5
      %v8582 = vsel %vm2127, %v8577, %v8581
      %v8583 = vshrl.u32 %v7907, 16
      %v8585 = vrot.slane %v8583, 4
      %v8586 = vor.u32 %v8585, %v8581
      %v8587 = vrot.slane %v8586, 4
      %v8589 = vshll.u32 %v7908, 16
      %v8591 = vrot.slane %v8589, 5
      %v8592 = vsel %vm2127, %v8587, %v8591
      %v8594 = vshrl.u32 %v7909, 16
      %v8596 = vrot.slane %v8594, 4
      %v8597 = vshll.u32 %v7909, 16
      %v8599 = vrot.slane %v8597, 5
      %v8600 = vor.u32 %v8596, %v8599
      %v8601 = vrot.slane %v8600, 4
      %v8603 = vshll.u32 %v7910, 16
      %v8605 = vrot.slane %v8603, 5
      %v8606 = vsel %vm2127, %v8601, %v8605
      %v8607 = vshrl.u32 %v7910, 16
      %v8609 = vrot.slane %v8607, 4
      %v8610 = vor.u32 %v8609, %v8605
      %v8611 = vrot.slane %v8610, 4
      %v8613 = vshll.u32 %v7911, 16
      %v8615 = vrot.slane %v8613, 5
      %v8616 = vsel %vm2127, %v8611, %v8615
      %v8618 = vshrl.u32 %v7912, 16
      %v8620 = vrot.slane %v8618, 4
      %v8621 = vshll.u32 %v7912, 16
      %v8623 = vrot.slane %v8621, 5
      %v8624 = vor.u32 %v8620, %v8623
      %v8625 = vrot.slane %v8624, 4
      %v8627 = vshll.u32 %v7913, 16
      %v8629 = vrot.slane %v8627, 5
      %v8630 = vsel %vm2127, %v8625, %v8629
      %v8631 = vshrl.u32 %v7913, 16
      %v8633 = vrot.slane %v8631, 4
      %v8634 = vor.u32 %v8633, %v8629
      %v8635 = vrot.slane %v8634, 4
      %v8637 = vshll.u32 %v7914, 16
      %v8639 = vrot.slane %v8637, 5
      %v8640 = vsel %vm2127, %v8635, %v8639
      %v8642 = vshrl.u32 %v7915, 16
      %v8644 = vrot.slane %v8642, 4
      %v8645 = vshll.u32 %v7915, 16
      %v8647 = vrot.slane %v8645, 5
      %v8648 = vor.u32 %v8644, %v8647
      %v8649 = vrot.slane %v8648, 4
      %v8651 = vshll.u32 %v7916, 16
      %v8653 = vrot.slane %v8651, 5
      %v8654 = vsel %vm2127, %v8649, %v8653
      %v8655 = vshrl.u32 %v7916, 16
      %v8657 = vrot.slane %v8655, 4
      %v8658 = vor.u32 %v8657, %v8653
      %v8659 = vrot.slane %v8658, 4
      %v8661 = vshll.u32 %v7917, 16
      %v8663 = vrot.slane %v8661, 5
      %v8664 = vsel %vm2127, %v8659, %v8663
      %v8666 = vshrl.u32 %v7918, 16
      %v8668 = vrot.slane %v8666, 4
      %v8669 = vshll.u32 %v7918, 16
      %v8671 = vrot.slane %v8669, 5
      %v8672 = vor.u32 %v8668, %v8671
      %v8673 = vrot.slane %v8672, 4
      %v8675 = vshll.u32 %v7919, 16
      %v8677 = vrot.slane %v8675, 5
      %v8678 = vsel %vm2127, %v8673, %v8677
      %v8679 = vshrl.u32 %v7919, 16
      %v8681 = vrot.slane %v8679, 4
      %v8682 = vor.u32 %v8681, %v8677
      %v8683 = vrot.slane %v8682, 4
      %v8685 = vshll.u32 %v7920, 16
      %v8687 = vrot.slane %v8685, 5
      %v8688 = vsel %vm2127, %v8683, %v8687
      %s8689 = scalar_lea.vmem %s3, 224
      %v8690 = vld [vmem:[%s8689] sm:$0xf]
      %v8691 = vld [vmem:[%s8689 + $0x4] sm:$0xf]
      %v8692 = vld [vmem:[%s8689 + $0x8] sm:$0xf]
      %v8693 = vld [vmem:[%s8689 + $0xc] sm:$0xf]
      %v8694 = vld [vmem:[%s8689 + $0x10] sm:$0xf]
      %v8695 = vld [vmem:[%s8689 + $0x14] sm:$0xf]
      %v8696 = vld [vmem:[%s8689 + $0x18] sm:$0xf]
      %v8697 = vld [vmem:[%s8689 + $0x1c] sm:$0xf]
      %v8698 = vunpack.c.l.b16 %v7934
      %v8699 = vunpack.c.l.b16 %v7944
      %v8700 = vunpack.c.l.b16 %v7958
      %v8701 = vunpack.c.l.b16 %v7968
      %v8702 = vunpack.c.l.b16 %v7982
      %v8703 = vunpack.c.l.b16 %v7992
      %v8704 = vunpack.c.l.b16 %v8006
      %v8705 = vunpack.c.l.b16 %v8016
      %v8706 = vunpack.c.l.b16 %v8030
      %v8707 = vunpack.c.l.b16 %v8040
      %v8708 = vunpack.c.l.b16 %v8054
      %v8709 = vunpack.c.l.b16 %v8064
      %v8710 = vunpack.c.l.b16 %v8078
      %v8711 = vunpack.c.l.b16 %v8088
      %v8712 = vunpack.c.l.b16 %v8102
      %v8713 = vunpack.c.l.b16 %v8112
      %v8714 = vunpack.c.l.b16 %v8126
      %v8715 = vunpack.c.l.b16 %v8136
      %v8716 = vunpack.c.l.b16 %v8150
      %v8717 = vunpack.c.l.b16 %v8160
      %v8718 = vunpack.c.l.b16 %v8174
      %v8719 = vunpack.c.l.b16 %v8184
      %v8720 = vunpack.c.l.b16 %v8198
      %v8721 = vunpack.c.l.b16 %v8208
      %v8722 = vunpack.c.l.b16 %v8222
      %v8723 = vunpack.c.l.b16 %v8232
      %v8724 = vunpack.c.l.b16 %v8246
      %v8725 = vunpack.c.l.b16 %v8256
      %v8726 = vunpack.c.l.b16 %v8270
      %v8727 = vunpack.c.l.b16 %v8280
      %v8728 = vunpack.c.l.b16 %v8294
      %v8729 = vunpack.c.l.b16 %v8304
      %v8730 = vunpack.c.l.b16 %v8318
      %v8731 = vunpack.c.l.b16 %v8328
      %v8732 = vunpack.c.l.b16 %v8342
      %v8733 = vunpack.c.l.b16 %v8352
      %v8734 = vunpack.c.l.b16 %v8366
      %v8735 = vunpack.c.l.b16 %v8376
      %v8736 = vunpack.c.l.b16 %v8390
      %v8737 = vunpack.c.l.b16 %v8400
      %v8738 = vunpack.c.l.b16 %v8414
      %v8739 = vunpack.c.l.b16 %v8424
      %v8740 = vunpack.c.l.b16 %v8438
      %v8741 = vunpack.c.l.b16 %v8448
      %v8742 = vunpack.c.l.b16 %v8462
      %v8743 = vunpack.c.l.b16 %v8472
      %v8744 = vunpack.c.l.b16 %v8486
      %v8745 = vunpack.c.l.b16 %v8496
      %v8746 = vunpack.c.l.b16 %v8510
      %v8747 = vunpack.c.l.b16 %v8520
      %v8748 = vunpack.c.l.b16 %v8534
      %v8749 = vunpack.c.l.b16 %v8544
      %v8750 = vunpack.c.l.b16 %v8558
      %v8751 = vunpack.c.l.b16 %v8568
      %v8752 = vunpack.c.l.b16 %v8582
      %v8753 = vunpack.c.l.b16 %v8592
      %v8754 = vunpack.c.l.b16 %v8606
      %v8755 = vunpack.c.l.b16 %v8616
      %v8756 = vunpack.c.l.b16 %v8630
      %v8757 = vunpack.c.l.b16 %v8640
      %v8758 = vunpack.c.l.b16 %v8654
      %v8759 = vunpack.c.l.b16 %v8664
      %v8760 = vunpack.c.l.b16 %v8678
      %v8761 = vunpack.c.l.b16 %v8688
      %v8762 = vpack.c.b16 %v8699, %v8698
      %v8763 = vpack.c.b16 %v8701, %v8700
      %v8764 = vpack.c.b16 %v8703, %v8702
      %v8765 = vpack.c.b16 %v8705, %v8704
      %v8766 = vpack.c.b16 %v8707, %v8706
      %v8767 = vpack.c.b16 %v8709, %v8708
      %v8768 = vpack.c.b16 %v8711, %v8710
      %v8769 = vpack.c.b16 %v8713, %v8712
      %v8770 = vpack.c.b16 %v8715, %v8714
      %v8771 = vpack.c.b16 %v8717, %v8716
      %v8772 = vpack.c.b16 %v8719, %v8718
      %v8773 = vpack.c.b16 %v8721, %v8720
      %v8774 = vpack.c.b16 %v8723, %v8722
      %v8775 = vpack.c.b16 %v8725, %v8724
      %v8776 = vpack.c.b16 %v8727, %v8726
      %v8777 = vpack.c.b16 %v8729, %v8728
      %v8778 = vpack.c.b16 %v8731, %v8730
      %v8779 = vpack.c.b16 %v8733, %v8732
      %v8780 = vpack.c.b16 %v8735, %v8734
      %v8781 = vpack.c.b16 %v8737, %v8736
      %v8782 = vpack.c.b16 %v8739, %v8738
      %v8783 = vpack.c.b16 %v8741, %v8740
      %v8784 = vpack.c.b16 %v8743, %v8742
      %v8785 = vpack.c.b16 %v8745, %v8744
      %v8786 = vpack.c.b16 %v8747, %v8746
      %v8787 = vpack.c.b16 %v8749, %v8748
      %v8788 = vpack.c.b16 %v8751, %v8750
      %v8789 = vpack.c.b16 %v8753, %v8752
      %v8790 = vpack.c.b16 %v8755, %v8754
      %v8791 = vpack.c.b16 %v8757, %v8756
      %v8792 = vpack.c.b16 %v8759, %v8758
      %v8793 = vpack.c.b16 %v8761, %v8760
      %v8802 = vunpack.c.l.b16 %v8690
      %v8803 = vunpack.c.l.b16 %v8691
      %v8804 = vunpack.c.l.b16 %v8692
      %v8805 = vunpack.c.l.b16 %v8693
      %v8806 = vunpack.c.l.b16 %v8694
      %v8807 = vunpack.c.l.b16 %v8695
      %v8808 = vunpack.c.l.b16 %v8696
      %v8809 = vunpack.c.l.b16 %v8697
      %v8810 = vpack.c.b16 %v8803, %v8802
      %v8811 = vpack.c.b16 %v8805, %v8804
      %v8812 = vpack.c.b16 %v8807, %v8806
      %v8813 = vpack.c.b16 %v8809, %v8808
      %v8819 = vsel %vm548, %v8762, 0
      %v8822 = vsel %vm548, %v8763, 0
      %v8825 = vsel %vm548, %v8764, 0
      %v8828 = vsel %vm548, %v8765, 0
      %v8831 = vsel %vm548, %v8766, 0
      %v8834 = vsel %vm548, %v8767, 0
      %v8837 = vsel %vm548, %v8768, 0
      %v8840 = vsel %vm548, %v8769, 0
      %v8843 = vsel %vm548, %v8770, 0
      %v8846 = vsel %vm548, %v8771, 0
      %v8849 = vsel %vm548, %v8772, 0
      %v8852 = vsel %vm548, %v8773, 0
      %v8855 = vsel %vm548, %v8774, 0
      %v8858 = vsel %vm548, %v8775, 0
      %v8861 = vsel %vm548, %v8776, 0
      %v8864 = vsel %vm548, %v8777, 0
      %v8867 = vsel %vm548, %v8778, 0
      %v8870 = vsel %vm548, %v8779, 0
      %v8873 = vsel %vm548, %v8780, 0
      %v8876 = vsel %vm548, %v8781, 0
      %v8879 = vsel %vm548, %v8782, 0
      %v8882 = vsel %vm548, %v8783, 0
      %v8885 = vsel %vm548, %v8784, 0
      %v8888 = vsel %vm548, %v8785, 0
      %v8891 = vsel %vm548, %v8786, 0
      %v8894 = vsel %vm548, %v8787, 0
      %v8897 = vsel %vm548, %v8788, 0
      %v8900 = vsel %vm548, %v8789, 0
      %v8903 = vsel %vm548, %v8790, 0
      %v8906 = vsel %vm548, %v8791, 0
      %v8909 = vsel %vm548, %v8792, 0
      %v8912 = vsel %vm548, %v8793, 0
      %8914 = vmatpush.bf16.msra.mxu0 0
      %8915 = vmatpush.bf16.msra.mxu0 0
      %8916 = vmatpush.bf16.msra.mxu0 0
      %8917 = vmatpush.bf16.msra.mxu0 0
      %8918 = vmatpush.bf16.msra.mxu0 %v8813
      %8919 = vmatpush.bf16.msra.mxu0 %v8812
      %8920 = vmatpush.bf16.msra.mxu0 %v8811
      %8921 = vmatpush.bf16.msra.mxu0 %v8810
      %8922 = vmatmul.bf16.gmra.mxu0 %v8819
      %v8923 = vpop.f32.mrf.mxu0
      %v8924 = vadd.f32 0.0, %v8923
      %v8925 = vpop.f32.mrf.mxu0
      %v8926 = vadd.f32 0.0, %v8925
      %8927 = vmatmul.bf16.gmra.mxu0 %v8822
      %v8928 = vpop.f32.mrf.mxu0
      %v8929 = vadd.f32 0.0, %v8928
      %v8930 = vpop.f32.mrf.mxu0
      %v8931 = vadd.f32 0.0, %v8930
      %8932 = vmatmul.bf16.gmra.mxu0 %v8825
      %v8933 = vpop.f32.mrf.mxu0
      %v8934 = vadd.f32 0.0, %v8933
      %v8935 = vpop.f32.mrf.mxu0
      %v8936 = vadd.f32 0.0, %v8935
      %8937 = vmatmul.bf16.gmra.mxu0 %v8828
      %v8938 = vpop.f32.mrf.mxu0
      %v8939 = vadd.f32 0.0, %v8938
      %v8940 = vpop.f32.mrf.mxu0
      %v8941 = vadd.f32 0.0, %v8940
      %8942 = vmatmul.bf16.gmra.mxu0 %v8831
      %v8943 = vpop.f32.mrf.mxu0
      %v8944 = vadd.f32 0.0, %v8943
      %v8945 = vpop.f32.mrf.mxu0
      %v8946 = vadd.f32 0.0, %v8945
      %8947 = vmatmul.bf16.gmra.mxu0 %v8834
      %v8948 = vpop.f32.mrf.mxu0
      %v8949 = vadd.f32 0.0, %v8948
      %v8950 = vpop.f32.mrf.mxu0
      %v8951 = vadd.f32 0.0, %v8950
      %8952 = vmatmul.bf16.gmra.mxu0 %v8837
      %v8953 = vpop.f32.mrf.mxu0
      %v8954 = vadd.f32 0.0, %v8953
      %v8955 = vpop.f32.mrf.mxu0
      %v8956 = vadd.f32 0.0, %v8955
      %8957 = vmatmul.bf16.gmra.mxu0 %v8840
      %v8958 = vpop.f32.mrf.mxu0
      %v8959 = vadd.f32 0.0, %v8958
      %v8960 = vpop.f32.mrf.mxu0
      %v8961 = vadd.f32 0.0, %v8960
      %8962 = vmatmul.bf16.gmra.mxu0 %v8843
      %v8963 = vpop.f32.mrf.mxu0
      %v8964 = vadd.f32 0.0, %v8963
      %v8965 = vpop.f32.mrf.mxu0
      %v8966 = vadd.f32 0.0, %v8965
      %8967 = vmatmul.bf16.gmra.mxu0 %v8846
      %v8968 = vpop.f32.mrf.mxu0
      %v8969 = vadd.f32 0.0, %v8968
      %v8970 = vpop.f32.mrf.mxu0
      %v8971 = vadd.f32 0.0, %v8970
      %8972 = vmatmul.bf16.gmra.mxu0 %v8849
      %v8973 = vpop.f32.mrf.mxu0
      %v8974 = vadd.f32 0.0, %v8973
      %v8975 = vpop.f32.mrf.mxu0
      %v8976 = vadd.f32 0.0, %v8975
      %8977 = vmatmul.bf16.gmra.mxu0 %v8852
      %v8978 = vpop.f32.mrf.mxu0
      %v8979 = vadd.f32 0.0, %v8978
      %v8980 = vpop.f32.mrf.mxu0
      %v8981 = vadd.f32 0.0, %v8980
      %8982 = vmatmul.bf16.gmra.mxu0 %v8855
      %v8983 = vpop.f32.mrf.mxu0
      %v8984 = vadd.f32 0.0, %v8983
      %v8985 = vpop.f32.mrf.mxu0
      %v8986 = vadd.f32 0.0, %v8985
      %8987 = vmatmul.bf16.gmra.mxu0 %v8858
      %v8988 = vpop.f32.mrf.mxu0
      %v8989 = vadd.f32 0.0, %v8988
      %v8990 = vpop.f32.mrf.mxu0
      %v8991 = vadd.f32 0.0, %v8990
      %8992 = vmatmul.bf16.gmra.mxu0 %v8861
      %v8993 = vpop.f32.mrf.mxu0
      %v8994 = vadd.f32 0.0, %v8993
      %v8995 = vpop.f32.mrf.mxu0
      %v8996 = vadd.f32 0.0, %v8995
      %8997 = vmatmul.bf16.gmra.mxu0 %v8864
      %v8998 = vpop.f32.mrf.mxu0
      %v8999 = vadd.f32 0.0, %v8998
      %v9000 = vpop.f32.mrf.mxu0
      %v9001 = vadd.f32 0.0, %v9000
      %9002 = vmatmul.bf16.gmra.mxu0 %v8867
      %v9003 = vpop.f32.mrf.mxu0
      %v9004 = vadd.f32 0.0, %v9003
      %v9005 = vpop.f32.mrf.mxu0
      %v9006 = vadd.f32 0.0, %v9005
      %9007 = vmatmul.bf16.gmra.mxu0 %v8870
      %v9008 = vpop.f32.mrf.mxu0
      %v9009 = vadd.f32 0.0, %v9008
      %v9010 = vpop.f32.mrf.mxu0
      %v9011 = vadd.f32 0.0, %v9010
      %9012 = vmatmul.bf16.gmra.mxu0 %v8873
      %v9013 = vpop.f32.mrf.mxu0
      %v9014 = vadd.f32 0.0, %v9013
      %v9015 = vpop.f32.mrf.mxu0
      %v9016 = vadd.f32 0.0, %v9015
      %9017 = vmatmul.bf16.gmra.mxu0 %v8876
      %v9018 = vpop.f32.mrf.mxu0
      %v9019 = vadd.f32 0.0, %v9018
      %v9020 = vpop.f32.mrf.mxu0
      %v9021 = vadd.f32 0.0, %v9020
      %9022 = vmatmul.bf16.gmra.mxu0 %v8879
      %v9023 = vpop.f32.mrf.mxu0
      %v9024 = vadd.f32 0.0, %v9023
      %v9025 = vpop.f32.mrf.mxu0
      %v9026 = vadd.f32 0.0, %v9025
      %9027 = vmatmul.bf16.gmra.mxu0 %v8882
      %v9028 = vpop.f32.mrf.mxu0
      %v9029 = vadd.f32 0.0, %v9028
      %v9030 = vpop.f32.mrf.mxu0
      %v9031 = vadd.f32 0.0, %v9030
      %9032 = vmatmul.bf16.gmra.mxu0 %v8885
      %v9033 = vpop.f32.mrf.mxu0
      %v9034 = vadd.f32 0.0, %v9033
      %v9035 = vpop.f32.mrf.mxu0
      %v9036 = vadd.f32 0.0, %v9035
      %9037 = vmatmul.bf16.gmra.mxu0 %v8888
      %v9038 = vpop.f32.mrf.mxu0
      %v9039 = vadd.f32 0.0, %v9038
      %v9040 = vpop.f32.mrf.mxu0
      %v9041 = vadd.f32 0.0, %v9040
      %9042 = vmatmul.bf16.gmra.mxu0 %v8891
      %v9043 = vpop.f32.mrf.mxu0
      %v9044 = vadd.f32 0.0, %v9043
      %v9045 = vpop.f32.mrf.mxu0
      %v9046 = vadd.f32 0.0, %v9045
      %9047 = vmatmul.bf16.gmra.mxu0 %v8894
      %v9048 = vpop.f32.mrf.mxu0
      %v9049 = vadd.f32 0.0, %v9048
      %v9050 = vpop.f32.mrf.mxu0
      %v9051 = vadd.f32 0.0, %v9050
      %9052 = vmatmul.bf16.gmra.mxu0 %v8897
      %v9053 = vpop.f32.mrf.mxu0
      %v9054 = vadd.f32 0.0, %v9053
      %v9055 = vpop.f32.mrf.mxu0
      %v9056 = vadd.f32 0.0, %v9055
      %9057 = vmatmul.bf16.gmra.mxu0 %v8900
      %v9058 = vpop.f32.mrf.mxu0
      %v9059 = vadd.f32 0.0, %v9058
      %v9060 = vpop.f32.mrf.mxu0
      %v9061 = vadd.f32 0.0, %v9060
      %9062 = vmatmul.bf16.gmra.mxu0 %v8903
      %v9063 = vpop.f32.mrf.mxu0
      %v9064 = vadd.f32 0.0, %v9063
      %v9065 = vpop.f32.mrf.mxu0
      %v9066 = vadd.f32 0.0, %v9065
      %9067 = vmatmul.bf16.gmra.mxu0 %v8906
      %v9068 = vpop.f32.mrf.mxu0
      %v9069 = vadd.f32 0.0, %v9068
      %v9070 = vpop.f32.mrf.mxu0
      %v9071 = vadd.f32 0.0, %v9070
      %9072 = vmatmul.bf16.gmra.mxu0 %v8909
      %v9073 = vpop.f32.mrf.mxu0
      %v9074 = vadd.f32 0.0, %v9073
      %v9075 = vpop.f32.mrf.mxu0
      %v9076 = vadd.f32 0.0, %v9075
      %9077 = vmatmul.bf16.gmra.mxu0 %v8912
      %v9078 = vpop.f32.mrf.mxu0
      %v9079 = vadd.f32 0.0, %v9078
      %v9080 = vpop.f32.mrf.mxu0
      %v9081 = vadd.f32 0.0, %v9080
      %9082 = vdwg.mxu0
      %v9083 = vadd.f32 %v7761, %v8924
      %v9084 = vadd.f32 %v7762, %v8926
      %v9085 = vadd.f32 %v7763, %v8929
      %v9086 = vadd.f32 %v7764, %v8931
      %v9087 = vadd.f32 %v7765, %v8934
      %v9088 = vadd.f32 %v7766, %v8936
      %v9089 = vadd.f32 %v7767, %v8939
      %v9090 = vadd.f32 %v7768, %v8941
      %v9091 = vadd.f32 %v7769, %v8944
      %v9092 = vadd.f32 %v7770, %v8946
      %v9093 = vadd.f32 %v7771, %v8949
      %v9094 = vadd.f32 %v7772, %v8951
      %v9095 = vadd.f32 %v7773, %v8954
      %v9096 = vadd.f32 %v7774, %v8956
      %v9097 = vadd.f32 %v7775, %v8959
      %v9098 = vadd.f32 %v7776, %v8961
      %v9099 = vadd.f32 %v7777, %v8964
      %v9100 = vadd.f32 %v7778, %v8966
      %v9101 = vadd.f32 %v7779, %v8969
      %v9102 = vadd.f32 %v7780, %v8971
      %v9103 = vadd.f32 %v7781, %v8974
      %v9104 = vadd.f32 %v7782, %v8976
      %v9105 = vadd.f32 %v7783, %v8979
      %v9106 = vadd.f32 %v7784, %v8981
      %v9107 = vadd.f32 %v7785, %v8984
      %v9108 = vadd.f32 %v7786, %v8986
      %v9109 = vadd.f32 %v7787, %v8989
      %v9110 = vadd.f32 %v7788, %v8991
      %v9111 = vadd.f32 %v7789, %v8994
      %v9112 = vadd.f32 %v7790, %v8996
      %v9113 = vadd.f32 %v7791, %v8999
      %v9114 = vadd.f32 %v7792, %v9001
      %v9115 = vadd.f32 %v7793, %v9004
      %v9116 = vadd.f32 %v7794, %v9006
      %v9117 = vadd.f32 %v7795, %v9009
      %v9118 = vadd.f32 %v7796, %v9011
      %v9119 = vadd.f32 %v7797, %v9014
      %v9120 = vadd.f32 %v7798, %v9016
      %v9121 = vadd.f32 %v7799, %v9019
      %v9122 = vadd.f32 %v7800, %v9021
      %v9123 = vadd.f32 %v7801, %v9024
      %v9124 = vadd.f32 %v7802, %v9026
      %v9125 = vadd.f32 %v7803, %v9029
      %v9126 = vadd.f32 %v7804, %v9031
      %v9127 = vadd.f32 %v7805, %v9034
      %v9128 = vadd.f32 %v7806, %v9036
      %v9129 = vadd.f32 %v7807, %v9039
      %v9130 = vadd.f32 %v7808, %v9041
      %v9131 = vadd.f32 %v7809, %v9044
      %v9132 = vadd.f32 %v7810, %v9046
      %v9133 = vadd.f32 %v7811, %v9049
      %v9134 = vadd.f32 %v7812, %v9051
      %v9135 = vadd.f32 %v7813, %v9054
      %v9136 = vadd.f32 %v7814, %v9056
      %v9137 = vadd.f32 %v7815, %v9059
      %v9138 = vadd.f32 %v7816, %v9061
      %v9139 = vadd.f32 %v7817, %v9064
      %v9140 = vadd.f32 %v7818, %v9066
      %v9141 = vadd.f32 %v7819, %v9069
      %v9142 = vadd.f32 %v7820, %v9071
      %v9143 = vadd.f32 %v7821, %v9074
      %v9144 = vadd.f32 %v7822, %v9076
      %v9145 = vadd.f32 %v7823, %v9079
      %v9146 = vadd.f32 %v7824, %v9081
      %v9147 = vld [vmem:[%s7238] sm:$0xe]
      %v9148 = vld [vmem:[%s7238 + $0xc] sm:$0xe]
      %v9149 = vld [vmem:[%s7238 + $0x18] sm:$0xe]
      %v9150 = vld [vmem:[%s7238 + $0x24] sm:$0xe]
      %v9151 = vld [vmem:[%s7238 + $0x30] sm:$0xe]
      %v9152 = vld [vmem:[%s7238 + $0x3c] sm:$0xe]
      %v9153 = vld [vmem:[%s7238 + $0x48] sm:$0xe]
      %v9154 = vld [vmem:[%s7238 + $0x54] sm:$0xe]
      %v9155 = vld [vmem:[%s7238 + $0x60] sm:$0xe]
      %v9156 = vld [vmem:[%s7238 + $0x6c] sm:$0xe]
      %v9157 = vld [vmem:[%s7238 + $0x78] sm:$0xe]
      %v9158 = vld [vmem:[%s7238 + $0x84] sm:$0xe]
      %v9159 = vld [vmem:[%s7238 + $0x90] sm:$0xe]
      %v9160 = vld [vmem:[%s7238 + $0x9c] sm:$0xe]
      %v9161 = vld [vmem:[%s7238 + $0xa8] sm:$0xe]
      %v9162 = vld [vmem:[%s7238 + $0xb4] sm:$0xe]
      %v9163 = vld [vmem:[%s7238 + $0xd8] sm:$0xe]
      %v9164 = vld [vmem:[%s7238 + $0xe4] sm:$0xe]
      %v9165 = vld [vmem:[%s7238 + $0xf0] sm:$0xe]
      %v9166 = vld [vmem:[%s7238 + $0xfc] sm:$0xe]
      %v9167 = vld [vmem:[%s7238 + $0x108] sm:$0xe]
      %v9168 = vld [vmem:[%s7238 + $0x114] sm:$0xe]
      %v9169 = vld [vmem:[%s7238 + $0x120] sm:$0xe]
      %v9170 = vld [vmem:[%s7238 + $0x12c] sm:$0xe]
      %v9171 = vld [vmem:[%s7238 + $0x138] sm:$0xe]
      %v9172 = vld [vmem:[%s7238 + $0x144] sm:$0xe]
      %v9173 = vld [vmem:[%s7238 + $0x150] sm:$0xe]
      %v9174 = vld [vmem:[%s7238 + $0x15c] sm:$0xe]
      %v9175 = vld [vmem:[%s7238 + $0x168] sm:$0xe]
      %v9176 = vld [vmem:[%s7238 + $0x174] sm:$0xe]
      %v9177 = vld [vmem:[%s7238 + $0x180] sm:$0xe]
      %v9178 = vld [vmem:[%s7238 + $0x18c] sm:$0xe]
      %v9275 = vrot.slane %v9147, 5
      %v9276 = vrot.slane %v9275, 4
      %v9277 = vrot.slane %v7826, 5
      %v9278 = vsel %vm3837, %v9276, %v9277
      %v9279 = vrot.slane %v9277, 4
      %v9280 = vrot.slane %v7827, 5
      %v9281 = vsel %vm3837, %v9279, %v9280
      %v9282 = vrot.slane %v9148, 5
      %v9283 = vrot.slane %v9282, 4
      %v9284 = vrot.slane %v7829, 5
      %v9285 = vsel %vm3837, %v9283, %v9284
      %v9286 = vrot.slane %v9284, 4
      %v9287 = vrot.slane %v7830, 5
      %v9288 = vsel %vm3837, %v9286, %v9287
      %v9289 = vrot.slane %v9149, 5
      %v9290 = vrot.slane %v9289, 4
      %v9291 = vrot.slane %v7832, 5
      %v9292 = vsel %vm3837, %v9290, %v9291
      %v9293 = vrot.slane %v9291, 4
      %v9294 = vrot.slane %v7833, 5
      %v9295 = vsel %vm3837, %v9293, %v9294
      %v9296 = vrot.slane %v9150, 5
      %v9297 = vrot.slane %v9296, 4
      %v9298 = vrot.slane %v7835, 5
      %v9299 = vsel %vm3837, %v9297, %v9298
      %v9300 = vrot.slane %v9298, 4
      %v9301 = vrot.slane %v7836, 5
      %v9302 = vsel %vm3837, %v9300, %v9301
      %v9303 = vrot.slane %v9151, 5
      %v9304 = vrot.slane %v9303, 4
      %v9305 = vrot.slane %v7838, 5
      %v9306 = vsel %vm3837, %v9304, %v9305
      %v9307 = vrot.slane %v9305, 4
      %v9308 = vrot.slane %v7839, 5
      %v9309 = vsel %vm3837, %v9307, %v9308
      %v9310 = vrot.slane %v9152, 5
      %v9311 = vrot.slane %v9310, 4
      %v9312 = vrot.slane %v7841, 5
      %v9313 = vsel %vm3837, %v9311, %v9312
      %v9314 = vrot.slane %v9312, 4
      %v9315 = vrot.slane %v7842, 5
      %v9316 = vsel %vm3837, %v9314, %v9315
      %v9317 = vrot.slane %v9153, 5
      %v9318 = vrot.slane %v9317, 4
      %v9319 = vrot.slane %v7844, 5
      %v9320 = vsel %vm3837, %v9318, %v9319
      %v9321 = vrot.slane %v9319, 4
      %v9322 = vrot.slane %v7845, 5
      %v9323 = vsel %vm3837, %v9321, %v9322
      %v9324 = vrot.slane %v9154, 5
      %v9325 = vrot.slane %v9324, 4
      %v9326 = vrot.slane %v7847, 5
      %v9327 = vsel %vm3837, %v9325, %v9326
      %v9328 = vrot.slane %v9326, 4
      %v9329 = vrot.slane %v7848, 5
      %v9330 = vsel %vm3837, %v9328, %v9329
      %v9331 = vrot.slane %v9155, 5
      %v9332 = vrot.slane %v9331, 4
      %v9333 = vrot.slane %v7850, 5
      %v9334 = vsel %vm3837, %v9332, %v9333
      %v9335 = vrot.slane %v9333, 4
      %v9336 = vrot.slane %v7851, 5
      %v9337 = vsel %vm3837, %v9335, %v9336
      %v9338 = vrot.slane %v9156, 5
      %v9339 = vrot.slane %v9338, 4
      %v9340 = vrot.slane %v7853, 5
      %v9341 = vsel %vm3837, %v9339, %v9340
      %v9342 = vrot.slane %v9340, 4
      %v9343 = vrot.slane %v7854, 5
      %v9344 = vsel %vm3837, %v9342, %v9343
      %v9345 = vrot.slane %v9157, 5
      %v9346 = vrot.slane %v9345, 4
      %v9347 = vrot.slane %v7856, 5
      %v9348 = vsel %vm3837, %v9346, %v9347
      %v9349 = vrot.slane %v9347, 4
      %v9350 = vrot.slane %v7857, 5
      %v9351 = vsel %vm3837, %v9349, %v9350
      %v9352 = vrot.slane %v9158, 5
      %v9353 = vrot.slane %v9352, 4
      %v9354 = vrot.slane %v7859, 5
      %v9355 = vsel %vm3837, %v9353, %v9354
      %v9356 = vrot.slane %v9354, 4
      %v9357 = vrot.slane %v7860, 5
      %v9358 = vsel %vm3837, %v9356, %v9357
      %v9359 = vrot.slane %v9159, 5
      %v9360 = vrot.slane %v9359, 4
      %v9361 = vrot.slane %v7862, 5
      %v9362 = vsel %vm3837, %v9360, %v9361
      %v9363 = vrot.slane %v9361, 4
      %v9364 = vrot.slane %v7863, 5
      %v9365 = vsel %vm3837, %v9363, %v9364
      %v9366 = vrot.slane %v9160, 5
      %v9367 = vrot.slane %v9366, 4
      %v9368 = vrot.slane %v7865, 5
      %v9369 = vsel %vm3837, %v9367, %v9368
      %v9370 = vrot.slane %v9368, 4
      %v9371 = vrot.slane %v7866, 5
      %v9372 = vsel %vm3837, %v9370, %v9371
      %v9373 = vrot.slane %v9161, 5
      %v9374 = vrot.slane %v9373, 4
      %v9375 = vrot.slane %v7868, 5
      %v9376 = vsel %vm3837, %v9374, %v9375
      %v9377 = vrot.slane %v9375, 4
      %v9378 = vrot.slane %v7869, 5
      %v9379 = vsel %vm3837, %v9377, %v9378
      %v9380 = vrot.slane %v9162, 5
      %v9381 = vrot.slane %v9380, 4
      %v9382 = vrot.slane %v7871, 5
      %v9383 = vsel %vm3837, %v9381, %v9382
      %v9384 = vrot.slane %v9382, 4
      %v9385 = vrot.slane %v7872, 5
      %v9386 = vsel %vm3837, %v9384, %v9385
      %v9387 = vrot.slane %v9163, 5
      %v9388 = vrot.slane %v9387, 4
      %v9389 = vrot.slane %v7874, 5
      %v9390 = vsel %vm3837, %v9388, %v9389
      %v9391 = vrot.slane %v9389, 4
      %v9392 = vrot.slane %v7875, 5
      %v9393 = vsel %vm3837, %v9391, %v9392
      %v9394 = vrot.slane %v9164, 5
      %v9395 = vrot.slane %v9394, 4
      %v9396 = vrot.slane %v7877, 5
      %v9397 = vsel %vm3837, %v9395, %v9396
      %v9398 = vrot.slane %v9396, 4
      %v9399 = vrot.slane %v7878, 5
      %v9400 = vsel %vm3837, %v9398, %v9399
      %v9401 = vrot.slane %v9165, 5
      %v9402 = vrot.slane %v9401, 4
      %v9403 = vrot.slane %v7880, 5
      %v9404 = vsel %vm3837, %v9402, %v9403
      %v9405 = vrot.slane %v9403, 4
      %v9406 = vrot.slane %v7881, 5
      %v9407 = vsel %vm3837, %v9405, %v9406
      %v9408 = vrot.slane %v9166, 5
      %v9409 = vrot.slane %v9408, 4
      %v9410 = vrot.slane %v7883, 5
      %v9411 = vsel %vm3837, %v9409, %v9410
      %v9412 = vrot.slane %v9410, 4
      %v9413 = vrot.slane %v7884, 5
      %v9414 = vsel %vm3837, %v9412, %v9413
      %v9415 = vrot.slane %v9167, 5
      %v9416 = vrot.slane %v9415, 4
      %v9417 = vrot.slane %v7886, 5
      %v9418 = vsel %vm3837, %v9416, %v9417
      %v9419 = vrot.slane %v9417, 4
      %v9420 = vrot.slane %v7887, 5
      %v9421 = vsel %vm3837, %v9419, %v9420
      %v9422 = vrot.slane %v9168, 5
      %v9423 = vrot.slane %v9422, 4
      %v9424 = vrot.slane %v7889, 5
      %v9425 = vsel %vm3837, %v9423, %v9424
      %v9426 = vrot.slane %v9424, 4
      %v9427 = vrot.slane %v7890, 5
      %v9428 = vsel %vm3837, %v9426, %v9427
      %v9429 = vrot.slane %v9169, 5
      %v9430 = vrot.slane %v9429, 4
      %v9431 = vrot.slane %v7892, 5
      %v9432 = vsel %vm3837, %v9430, %v9431
      %v9433 = vrot.slane %v9431, 4
      %v9434 = vrot.slane %v7893, 5
      %v9435 = vsel %vm3837, %v9433, %v9434
      %v9436 = vrot.slane %v9170, 5
      %v9437 = vrot.slane %v9436, 4
      %v9438 = vrot.slane %v7895, 5
      %v9439 = vsel %vm3837, %v9437, %v9438
      %v9440 = vrot.slane %v9438, 4
      %v9441 = vrot.slane %v7896, 5
      %v9442 = vsel %vm3837, %v9440, %v9441
      %v9443 = vrot.slane %v9171, 5
      %v9444 = vrot.slane %v9443, 4
      %v9445 = vrot.slane %v7898, 5
      %v9446 = vsel %vm3837, %v9444, %v9445
      %v9447 = vrot.slane %v9445, 4
      %v9448 = vrot.slane %v7899, 5
      %v9449 = vsel %vm3837, %v9447, %v9448
      %v9450 = vrot.slane %v9172, 5
      %v9451 = vrot.slane %v9450, 4
      %v9452 = vrot.slane %v7901, 5
      %v9453 = vsel %vm3837, %v9451, %v9452
      %v9454 = vrot.slane %v9452, 4
      %v9455 = vrot.slane %v7902, 5
      %v9456 = vsel %vm3837, %v9454, %v9455
      %v9457 = vrot.slane %v9173, 5
      %v9458 = vrot.slane %v9457, 4
      %v9459 = vrot.slane %v7904, 5
      %v9460 = vsel %vm3837, %v9458, %v9459
      %v9461 = vrot.slane %v9459, 4
      %v9462 = vrot.slane %v7905, 5
      %v9463 = vsel %vm3837, %v9461, %v9462
      %v9464 = vrot.slane %v9174, 5
      %v9465 = vrot.slane %v9464, 4
      %v9466 = vrot.slane %v7907, 5
      %v9467 = vsel %vm3837, %v9465, %v9466
      %v9468 = vrot.slane %v9466, 4
      %v9469 = vrot.slane %v7908, 5
      %v9470 = vsel %vm3837, %v9468, %v9469
      %v9471 = vrot.slane %v9175, 5
      %v9472 = vrot.slane %v9471, 4
      %v9473 = vrot.slane %v7910, 5
      %v9474 = vsel %vm3837, %v9472, %v9473
      %v9475 = vrot.slane %v9473, 4
      %v9476 = vrot.slane %v7911, 5
      %v9477 = vsel %vm3837, %v9475, %v9476
      %v9478 = vrot.slane %v9176, 5
      %v9479 = vrot.slane %v9478, 4
      %v9480 = vrot.slane %v7913, 5
      %v9481 = vsel %vm3837, %v9479, %v9480
      %v9482 = vrot.slane %v9480, 4
      %v9483 = vrot.slane %v7914, 5
      %v9484 = vsel %vm3837, %v9482, %v9483
      %v9485 = vrot.slane %v9177, 5
      %v9486 = vrot.slane %v9485, 4
      %v9487 = vrot.slane %v7916, 5
      %v9488 = vsel %vm3837, %v9486, %v9487
      %v9489 = vrot.slane %v9487, 4
      %v9490 = vrot.slane %v7917, 5
      %v9491 = vsel %vm3837, %v9489, %v9490
      %v9492 = vrot.slane %v9178, 5
      %v9493 = vrot.slane %v9492, 4
      %v9494 = vrot.slane %v7919, 5
      %v9495 = vsel %vm3837, %v9493, %v9494
      %v9496 = vrot.slane %v9494, 4
      %v9497 = vrot.slane %v7920, 5
      %v9498 = vsel %vm3837, %v9496, %v9497
      %s9499 = scalar_lea.vmem %s3, 256
      %v9500 = vld [vmem:[%s9499] sm:$0xf]
      %v9501 = vld [vmem:[%s9499 + $0x4] sm:$0xf]
      %v9502 = vld [vmem:[%s9499 + $0x8] sm:$0xf]
      %v9503 = vld [vmem:[%s9499 + $0xc] sm:$0xf]
      %v9504 = vld [vmem:[%s9499 + $0x10] sm:$0xf]
      %v9505 = vld [vmem:[%s9499 + $0x14] sm:$0xf]
      %v9506 = vld [vmem:[%s9499 + $0x18] sm:$0xf]
      %v9507 = vld [vmem:[%s9499 + $0x1c] sm:$0xf]
      %v9508 = vunpack.c.l.b16 %v9278
      %v9509 = vunpack.c.l.b16 %v9281
      %v9510 = vunpack.c.l.b16 %v9285
      %v9511 = vunpack.c.l.b16 %v9288
      %v9512 = vunpack.c.l.b16 %v9292
      %v9513 = vunpack.c.l.b16 %v9295
      %v9514 = vunpack.c.l.b16 %v9299
      %v9515 = vunpack.c.l.b16 %v9302
      %v9516 = vunpack.c.l.b16 %v9306
      %v9517 = vunpack.c.l.b16 %v9309
      %v9518 = vunpack.c.l.b16 %v9313
      %v9519 = vunpack.c.l.b16 %v9316
      %v9520 = vunpack.c.l.b16 %v9320
      %v9521 = vunpack.c.l.b16 %v9323
      %v9522 = vunpack.c.l.b16 %v9327
      %v9523 = vunpack.c.l.b16 %v9330
      %v9524 = vunpack.c.l.b16 %v9334
      %v9525 = vunpack.c.l.b16 %v9337
      %v9526 = vunpack.c.l.b16 %v9341
      %v9527 = vunpack.c.l.b16 %v9344
      %v9528 = vunpack.c.l.b16 %v9348
      %v9529 = vunpack.c.l.b16 %v9351
      %v9530 = vunpack.c.l.b16 %v9355
      %v9531 = vunpack.c.l.b16 %v9358
      %v9532 = vunpack.c.l.b16 %v9362
      %v9533 = vunpack.c.l.b16 %v9365
      %v9534 = vunpack.c.l.b16 %v9369
      %v9535 = vunpack.c.l.b16 %v9372
      %v9536 = vunpack.c.l.b16 %v9376
      %v9537 = vunpack.c.l.b16 %v9379
      %v9538 = vunpack.c.l.b16 %v9383
      %v9539 = vunpack.c.l.b16 %v9386
      %v9540 = vunpack.c.l.b16 %v9390
      %v9541 = vunpack.c.l.b16 %v9393
      %v9542 = vunpack.c.l.b16 %v9397
      %v9543 = vunpack.c.l.b16 %v9400
      %v9544 = vunpack.c.l.b16 %v9404
      %v9545 = vunpack.c.l.b16 %v9407
      %v9546 = vunpack.c.l.b16 %v9411
      %v9547 = vunpack.c.l.b16 %v9414
      %v9548 = vunpack.c.l.b16 %v9418
      %v9549 = vunpack.c.l.b16 %v9421
      %v9550 = vunpack.c.l.b16 %v9425
      %v9551 = vunpack.c.l.b16 %v9428
      %v9552 = vunpack.c.l.b16 %v9432
      %v9553 = vunpack.c.l.b16 %v9435
      %v9554 = vunpack.c.l.b16 %v9439
      %v9555 = vunpack.c.l.b16 %v9442
      %v9556 = vunpack.c.l.b16 %v9446
      %v9557 = vunpack.c.l.b16 %v9449
      %v9558 = vunpack.c.l.b16 %v9453
      %v9559 = vunpack.c.l.b16 %v9456
      %v9560 = vunpack.c.l.b16 %v9460
      %v9561 = vunpack.c.l.b16 %v9463
      %v9562 = vunpack.c.l.b16 %v9467
      %v9563 = vunpack.c.l.b16 %v9470
      %v9564 = vunpack.c.l.b16 %v9474
      %v9565 = vunpack.c.l.b16 %v9477
      %v9566 = vunpack.c.l.b16 %v9481
      %v9567 = vunpack.c.l.b16 %v9484
      %v9568 = vunpack.c.l.b16 %v9488
      %v9569 = vunpack.c.l.b16 %v9491
      %v9570 = vunpack.c.l.b16 %v9495
      %v9571 = vunpack.c.l.b16 %v9498
      %v9572 = vpack.c.b16 %v9509, %v9508
      %v9573 = vpack.c.b16 %v9511, %v9510
      %v9574 = vpack.c.b16 %v9513, %v9512
      %v9575 = vpack.c.b16 %v9515, %v9514
      %v9576 = vpack.c.b16 %v9517, %v9516
      %v9577 = vpack.c.b16 %v9519, %v9518
      %v9578 = vpack.c.b16 %v9521, %v9520
      %v9579 = vpack.c.b16 %v9523, %v9522
      %v9580 = vpack.c.b16 %v9525, %v9524
      %v9581 = vpack.c.b16 %v9527, %v9526
      %v9582 = vpack.c.b16 %v9529, %v9528
      %v9583 = vpack.c.b16 %v9531, %v9530
      %v9584 = vpack.c.b16 %v9533, %v9532
      %v9585 = vpack.c.b16 %v9535, %v9534
      %v9586 = vpack.c.b16 %v9537, %v9536
      %v9587 = vpack.c.b16 %v9539, %v9538
      %v9588 = vpack.c.b16 %v9541, %v9540
      %v9589 = vpack.c.b16 %v9543, %v9542
      %v9590 = vpack.c.b16 %v9545, %v9544
      %v9591 = vpack.c.b16 %v9547, %v9546
      %v9592 = vpack.c.b16 %v9549, %v9548
      %v9593 = vpack.c.b16 %v9551, %v9550
      %v9594 = vpack.c.b16 %v9553, %v9552
      %v9595 = vpack.c.b16 %v9555, %v9554
      %v9596 = vpack.c.b16 %v9557, %v9556
      %v9597 = vpack.c.b16 %v9559, %v9558
      %v9598 = vpack.c.b16 %v9561, %v9560
      %v9599 = vpack.c.b16 %v9563, %v9562
      %v9600 = vpack.c.b16 %v9565, %v9564
      %v9601 = vpack.c.b16 %v9567, %v9566
      %v9602 = vpack.c.b16 %v9569, %v9568
      %v9603 = vpack.c.b16 %v9571, %v9570
      %v9612 = vunpack.c.l.b16 %v9500
      %v9613 = vunpack.c.l.b16 %v9501
      %v9614 = vunpack.c.l.b16 %v9502
      %v9615 = vunpack.c.l.b16 %v9503
      %v9616 = vunpack.c.l.b16 %v9504
      %v9617 = vunpack.c.l.b16 %v9505
      %v9618 = vunpack.c.l.b16 %v9506
      %v9619 = vunpack.c.l.b16 %v9507
      %v9620 = vpack.c.b16 %v9613, %v9612
      %v9621 = vpack.c.b16 %v9615, %v9614
      %v9622 = vpack.c.b16 %v9617, %v9616
      %v9623 = vpack.c.b16 %v9619, %v9618
      %v9629 = vsel %vm548, %v9572, 0
      %v9632 = vsel %vm548, %v9573, 0
      %v9635 = vsel %vm548, %v9574, 0
      %v9638 = vsel %vm548, %v9575, 0
      %v9641 = vsel %vm548, %v9576, 0
      %v9644 = vsel %vm548, %v9577, 0
      %v9647 = vsel %vm548, %v9578, 0
      %v9650 = vsel %vm548, %v9579, 0
      %v9653 = vsel %vm548, %v9580, 0
      %v9656 = vsel %vm548, %v9581, 0
      %v9659 = vsel %vm548, %v9582, 0
      %v9662 = vsel %vm548, %v9583, 0
      %v9665 = vsel %vm548, %v9584, 0
      %v9668 = vsel %vm548, %v9585, 0
      %v9671 = vsel %vm548, %v9586, 0
      %v9674 = vsel %vm548, %v9587, 0
      %v9677 = vsel %vm548, %v9588, 0
      %v9680 = vsel %vm548, %v9589, 0
      %v9683 = vsel %vm548, %v9590, 0
      %v9686 = vsel %vm548, %v9591, 0
      %v9689 = vsel %vm548, %v9592, 0
      %v9692 = vsel %vm548, %v9593, 0
      %v9695 = vsel %vm548, %v9594, 0
      %v9698 = vsel %vm548, %v9595, 0
      %v9701 = vsel %vm548, %v9596, 0
      %v9704 = vsel %vm548, %v9597, 0
      %v9707 = vsel %vm548, %v9598, 0
      %v9710 = vsel %vm548, %v9599, 0
      %v9713 = vsel %vm548, %v9600, 0
      %v9716 = vsel %vm548, %v9601, 0
      %v9719 = vsel %vm548, %v9602, 0
      %v9722 = vsel %vm548, %v9603, 0
      %9724 = vmatpush.bf16.msra.mxu0 0
      %9725 = vmatpush.bf16.msra.mxu0 0
      %9726 = vmatpush.bf16.msra.mxu0 0
      %9727 = vmatpush.bf16.msra.mxu0 0
      %9728 = vmatpush.bf16.msra.mxu0 %v9623
      %9729 = vmatpush.bf16.msra.mxu0 %v9622
      %9730 = vmatpush.bf16.msra.mxu0 %v9621
      %9731 = vmatpush.bf16.msra.mxu0 %v9620
      %9732 = vmatmul.bf16.gmra.mxu0 %v9629
      %v9733 = vpop.f32.mrf.mxu0
      %v9734 = vadd.f32 0.0, %v9733
      %v9735 = vpop.f32.mrf.mxu0
      %v9736 = vadd.f32 0.0, %v9735
      %9737 = vmatmul.bf16.gmra.mxu0 %v9632
      %v9738 = vpop.f32.mrf.mxu0
      %v9739 = vadd.f32 0.0, %v9738
      %v9740 = vpop.f32.mrf.mxu0
      %v9741 = vadd.f32 0.0, %v9740
      %9742 = vmatmul.bf16.gmra.mxu0 %v9635
      %v9743 = vpop.f32.mrf.mxu0
      %v9744 = vadd.f32 0.0, %v9743
      %v9745 = vpop.f32.mrf.mxu0
      %v9746 = vadd.f32 0.0, %v9745
      %9747 = vmatmul.bf16.gmra.mxu0 %v9638
      %v9748 = vpop.f32.mrf.mxu0
      %v9749 = vadd.f32 0.0, %v9748
      %v9750 = vpop.f32.mrf.mxu0
      %v9751 = vadd.f32 0.0, %v9750
      %9752 = vmatmul.bf16.gmra.mxu0 %v9641
      %v9753 = vpop.f32.mrf.mxu0
      %v9754 = vadd.f32 0.0, %v9753
      %v9755 = vpop.f32.mrf.mxu0
      %v9756 = vadd.f32 0.0, %v9755
      %9757 = vmatmul.bf16.gmra.mxu0 %v9644
      %v9758 = vpop.f32.mrf.mxu0
      %v9759 = vadd.f32 0.0, %v9758
      %v9760 = vpop.f32.mrf.mxu0
      %v9761 = vadd.f32 0.0, %v9760
      %9762 = vmatmul.bf16.gmra.mxu0 %v9647
      %v9763 = vpop.f32.mrf.mxu0
      %v9764 = vadd.f32 0.0, %v9763
      %v9765 = vpop.f32.mrf.mxu0
      %v9766 = vadd.f32 0.0, %v9765
      %9767 = vmatmul.bf16.gmra.mxu0 %v9650
      %v9768 = vpop.f32.mrf.mxu0
      %v9769 = vadd.f32 0.0, %v9768
      %v9770 = vpop.f32.mrf.mxu0
      %v9771 = vadd.f32 0.0, %v9770
      %9772 = vmatmul.bf16.gmra.mxu0 %v9653
      %v9773 = vpop.f32.mrf.mxu0
      %v9774 = vadd.f32 0.0, %v9773
      %v9775 = vpop.f32.mrf.mxu0
      %v9776 = vadd.f32 0.0, %v9775
      %9777 = vmatmul.bf16.gmra.mxu0 %v9656
      %v9778 = vpop.f32.mrf.mxu0
      %v9779 = vadd.f32 0.0, %v9778
      %v9780 = vpop.f32.mrf.mxu0
      %v9781 = vadd.f32 0.0, %v9780
      %9782 = vmatmul.bf16.gmra.mxu0 %v9659
      %v9783 = vpop.f32.mrf.mxu0
      %v9784 = vadd.f32 0.0, %v9783
      %v9785 = vpop.f32.mrf.mxu0
      %v9786 = vadd.f32 0.0, %v9785
      %9787 = vmatmul.bf16.gmra.mxu0 %v9662
      %v9788 = vpop.f32.mrf.mxu0
      %v9789 = vadd.f32 0.0, %v9788
      %v9790 = vpop.f32.mrf.mxu0
      %v9791 = vadd.f32 0.0, %v9790
      %9792 = vmatmul.bf16.gmra.mxu0 %v9665
      %v9793 = vpop.f32.mrf.mxu0
      %v9794 = vadd.f32 0.0, %v9793
      %v9795 = vpop.f32.mrf.mxu0
      %v9796 = vadd.f32 0.0, %v9795
      %9797 = vmatmul.bf16.gmra.mxu0 %v9668
      %v9798 = vpop.f32.mrf.mxu0
      %v9799 = vadd.f32 0.0, %v9798
      %v9800 = vpop.f32.mrf.mxu0
      %v9801 = vadd.f32 0.0, %v9800
      %9802 = vmatmul.bf16.gmra.mxu0 %v9671
      %v9803 = vpop.f32.mrf.mxu0
      %v9804 = vadd.f32 0.0, %v9803
      %v9805 = vpop.f32.mrf.mxu0
      %v9806 = vadd.f32 0.0, %v9805
      %9807 = vmatmul.bf16.gmra.mxu0 %v9674
      %v9808 = vpop.f32.mrf.mxu0
      %v9809 = vadd.f32 0.0, %v9808
      %v9810 = vpop.f32.mrf.mxu0
      %v9811 = vadd.f32 0.0, %v9810
      %9812 = vmatmul.bf16.gmra.mxu0 %v9677
      %v9813 = vpop.f32.mrf.mxu0
      %v9814 = vadd.f32 0.0, %v9813
      %v9815 = vpop.f32.mrf.mxu0
      %v9816 = vadd.f32 0.0, %v9815
      %9817 = vmatmul.bf16.gmra.mxu0 %v9680
      %v9818 = vpop.f32.mrf.mxu0
      %v9819 = vadd.f32 0.0, %v9818
      %v9820 = vpop.f32.mrf.mxu0
      %v9821 = vadd.f32 0.0, %v9820
      %9822 = vmatmul.bf16.gmra.mxu0 %v9683
      %v9823 = vpop.f32.mrf.mxu0
      %v9824 = vadd.f32 0.0, %v9823
      %v9825 = vpop.f32.mrf.mxu0
      %v9826 = vadd.f32 0.0, %v9825
      %9827 = vmatmul.bf16.gmra.mxu0 %v9686
      %v9828 = vpop.f32.mrf.mxu0
      %v9829 = vadd.f32 0.0, %v9828
      %v9830 = vpop.f32.mrf.mxu0
      %v9831 = vadd.f32 0.0, %v9830
      %9832 = vmatmul.bf16.gmra.mxu0 %v9689
      %v9833 = vpop.f32.mrf.mxu0
      %v9834 = vadd.f32 0.0, %v9833
      %v9835 = vpop.f32.mrf.mxu0
      %v9836 = vadd.f32 0.0, %v9835
      %9837 = vmatmul.bf16.gmra.mxu0 %v9692
      %v9838 = vpop.f32.mrf.mxu0
      %v9839 = vadd.f32 0.0, %v9838
      %v9840 = vpop.f32.mrf.mxu0
      %v9841 = vadd.f32 0.0, %v9840
      %9842 = vmatmul.bf16.gmra.mxu0 %v9695
      %v9843 = vpop.f32.mrf.mxu0
      %v9844 = vadd.f32 0.0, %v9843
      %v9845 = vpop.f32.mrf.mxu0
      %v9846 = vadd.f32 0.0, %v9845
      %9847 = vmatmul.bf16.gmra.mxu0 %v9698
      %v9848 = vpop.f32.mrf.mxu0
      %v9849 = vadd.f32 0.0, %v9848
      %v9850 = vpop.f32.mrf.mxu0
      %v9851 = vadd.f32 0.0, %v9850
      %9852 = vmatmul.bf16.gmra.mxu0 %v9701
      %v9853 = vpop.f32.mrf.mxu0
      %v9854 = vadd.f32 0.0, %v9853
      %v9855 = vpop.f32.mrf.mxu0
      %v9856 = vadd.f32 0.0, %v9855
      %9857 = vmatmul.bf16.gmra.mxu0 %v9704
      %v9858 = vpop.f32.mrf.mxu0
      %v9859 = vadd.f32 0.0, %v9858
      %v9860 = vpop.f32.mrf.mxu0
      %v9861 = vadd.f32 0.0, %v9860
      %9862 = vmatmul.bf16.gmra.mxu0 %v9707
      %v9863 = vpop.f32.mrf.mxu0
      %v9864 = vadd.f32 0.0, %v9863
      %v9865 = vpop.f32.mrf.mxu0
      %v9866 = vadd.f32 0.0, %v9865
      %9867 = vmatmul.bf16.gmra.mxu0 %v9710
      %v9868 = vpop.f32.mrf.mxu0
      %v9869 = vadd.f32 0.0, %v9868
      %v9870 = vpop.f32.mrf.mxu0
      %v9871 = vadd.f32 0.0, %v9870
      %9872 = vmatmul.bf16.gmra.mxu0 %v9713
      %v9873 = vpop.f32.mrf.mxu0
      %v9874 = vadd.f32 0.0, %v9873
      %v9875 = vpop.f32.mrf.mxu0
      %v9876 = vadd.f32 0.0, %v9875
      %9877 = vmatmul.bf16.gmra.mxu0 %v9716
      %v9878 = vpop.f32.mrf.mxu0
      %v9879 = vadd.f32 0.0, %v9878
      %v9880 = vpop.f32.mrf.mxu0
      %v9881 = vadd.f32 0.0, %v9880
      %9882 = vmatmul.bf16.gmra.mxu0 %v9719
      %v9883 = vpop.f32.mrf.mxu0
      %v9884 = vadd.f32 0.0, %v9883
      %v9885 = vpop.f32.mrf.mxu0
      %v9886 = vadd.f32 0.0, %v9885
      %9887 = vmatmul.bf16.gmra.mxu0 %v9722
      %v9888 = vpop.f32.mrf.mxu0
      %v9889 = vadd.f32 0.0, %v9888
      %v9890 = vpop.f32.mrf.mxu0
      %v9891 = vadd.f32 0.0, %v9890
      %9892 = vdwg.mxu0
      %v9893 = vadd.f32 %v9083, %v9734
      %v9894 = vadd.f32 %v9084, %v9736
      %v9895 = vadd.f32 %v9085, %v9739
      %v9896 = vadd.f32 %v9086, %v9741
      %v9897 = vadd.f32 %v9087, %v9744
      %v9898 = vadd.f32 %v9088, %v9746
      %v9899 = vadd.f32 %v9089, %v9749
      %v9900 = vadd.f32 %v9090, %v9751
      %v9901 = vadd.f32 %v9091, %v9754
      %v9902 = vadd.f32 %v9092, %v9756
      %v9903 = vadd.f32 %v9093, %v9759
      %v9904 = vadd.f32 %v9094, %v9761
      %v9905 = vadd.f32 %v9095, %v9764
      %v9906 = vadd.f32 %v9096, %v9766
      %v9907 = vadd.f32 %v9097, %v9769
      %v9908 = vadd.f32 %v9098, %v9771
      %v9909 = vadd.f32 %v9099, %v9774
      %v9910 = vadd.f32 %v9100, %v9776
      %v9911 = vadd.f32 %v9101, %v9779
      %v9912 = vadd.f32 %v9102, %v9781
      %v9913 = vadd.f32 %v9103, %v9784
      %v9914 = vadd.f32 %v9104, %v9786
      %v9915 = vadd.f32 %v9105, %v9789
      %v9916 = vadd.f32 %v9106, %v9791
      %v9917 = vadd.f32 %v9107, %v9794
      %v9918 = vadd.f32 %v9108, %v9796
      %v9919 = vadd.f32 %v9109, %v9799
      %v9920 = vadd.f32 %v9110, %v9801
      %v9921 = vadd.f32 %v9111, %v9804
      %v9922 = vadd.f32 %v9112, %v9806
      %v9923 = vadd.f32 %v9113, %v9809
      %v9924 = vadd.f32 %v9114, %v9811
      %v9925 = vadd.f32 %v9115, %v9814
      %v9926 = vadd.f32 %v9116, %v9816
      %v9927 = vadd.f32 %v9117, %v9819
      %v9928 = vadd.f32 %v9118, %v9821
      %v9929 = vadd.f32 %v9119, %v9824
      %v9930 = vadd.f32 %v9120, %v9826
      %v9931 = vadd.f32 %v9121, %v9829
      %v9932 = vadd.f32 %v9122, %v9831
      %v9933 = vadd.f32 %v9123, %v9834
      %v9934 = vadd.f32 %v9124, %v9836
      %v9935 = vadd.f32 %v9125, %v9839
      %v9936 = vadd.f32 %v9126, %v9841
      %v9937 = vadd.f32 %v9127, %v9844
      %v9938 = vadd.f32 %v9128, %v9846
      %v9939 = vadd.f32 %v9129, %v9849
      %v9940 = vadd.f32 %v9130, %v9851
      %v9941 = vadd.f32 %v9131, %v9854
      %v9942 = vadd.f32 %v9132, %v9856
      %v9943 = vadd.f32 %v9133, %v9859
      %v9944 = vadd.f32 %v9134, %v9861
      %v9945 = vadd.f32 %v9135, %v9864
      %v9946 = vadd.f32 %v9136, %v9866
      %v9947 = vadd.f32 %v9137, %v9869
      %v9948 = vadd.f32 %v9138, %v9871
      %v9949 = vadd.f32 %v9139, %v9874
      %v9950 = vadd.f32 %v9140, %v9876
      %v9951 = vadd.f32 %v9141, %v9879
      %v9952 = vadd.f32 %v9142, %v9881
      %v9953 = vadd.f32 %v9143, %v9884
      %v9954 = vadd.f32 %v9144, %v9886
      %v9955 = vadd.f32 %v9145, %v9889
      %v9956 = vadd.f32 %v9146, %v9891
      %v9957 = vld [vmem:[%s4] sm:$0x1]
      %v9959 = vperm.slane %v9957, 0
      %v9961 = vadd.f32 %v9893, %v9959
      %v9962 = vadd.f32 %v9894, %v9959
      %v9963 = vadd.f32 %v9895, %v9959
      %v9964 = vadd.f32 %v9896, %v9959
      %v9965 = vadd.f32 %v9897, %v9959
      %v9966 = vadd.f32 %v9898, %v9959
      %v9967 = vadd.f32 %v9899, %v9959
      %v9968 = vadd.f32 %v9900, %v9959
      %v9969 = vadd.f32 %v9901, %v9959
      %v9970 = vadd.f32 %v9902, %v9959
      %v9971 = vadd.f32 %v9903, %v9959
      %v9972 = vadd.f32 %v9904, %v9959
      %v9973 = vadd.f32 %v9905, %v9959
      %v9974 = vadd.f32 %v9906, %v9959
      %v9975 = vadd.f32 %v9907, %v9959
      %v9976 = vadd.f32 %v9908, %v9959
      %v9977 = vadd.f32 %v9909, %v9959
      %v9978 = vadd.f32 %v9910, %v9959
      %v9979 = vadd.f32 %v9911, %v9959
      %v9980 = vadd.f32 %v9912, %v9959
      %v9981 = vadd.f32 %v9913, %v9959
      %v9982 = vadd.f32 %v9914, %v9959
      %v9983 = vadd.f32 %v9915, %v9959
      %v9984 = vadd.f32 %v9916, %v9959
      %v9985 = vadd.f32 %v9917, %v9959
      %v9986 = vadd.f32 %v9918, %v9959
      %v9987 = vadd.f32 %v9919, %v9959
      %v9988 = vadd.f32 %v9920, %v9959
      %v9989 = vadd.f32 %v9921, %v9959
      %v9990 = vadd.f32 %v9922, %v9959
      %v9991 = vadd.f32 %v9923, %v9959
      %v9992 = vadd.f32 %v9924, %v9959
      %v9993 = vadd.f32 %v9925, %v9959
      %v9994 = vadd.f32 %v9926, %v9959
      %v9995 = vadd.f32 %v9927, %v9959
      %v9996 = vadd.f32 %v9928, %v9959
      %v9997 = vadd.f32 %v9929, %v9959
      %v9998 = vadd.f32 %v9930, %v9959
      %v9999 = vadd.f32 %v9931, %v9959
      %v10000 = vadd.f32 %v9932, %v9959
      %v10001 = vadd.f32 %v9933, %v9959
      %v10002 = vadd.f32 %v9934, %v9959
      %v10003 = vadd.f32 %v9935, %v9959
      %v10004 = vadd.f32 %v9936, %v9959
      %v10005 = vadd.f32 %v9937, %v9959
      %v10006 = vadd.f32 %v9938, %v9959
      %v10007 = vadd.f32 %v9939, %v9959
      %v10008 = vadd.f32 %v9940, %v9959
      %v10009 = vadd.f32 %v9941, %v9959
      %v10010 = vadd.f32 %v9942, %v9959
      %v10011 = vadd.f32 %v9943, %v9959
      %v10012 = vadd.f32 %v9944, %v9959
      %v10013 = vadd.f32 %v9945, %v9959
      %v10014 = vadd.f32 %v9946, %v9959
      %v10015 = vadd.f32 %v9947, %v9959
      %v10016 = vadd.f32 %v9948, %v9959
      %v10017 = vadd.f32 %v9949, %v9959
      %v10018 = vadd.f32 %v9950, %v9959
      %v10019 = vadd.f32 %v9951, %v9959
      %v10020 = vadd.f32 %v9952, %v9959
      %v10021 = vadd.f32 %v9953, %v9959
      %v10022 = vadd.f32 %v9954, %v9959
      %v10023 = vadd.f32 %v9955, %v9959
      %v10024 = vadd.f32 %v9956, %v9959
      %v10025 = vmax.f32 %v9961, 0.0
      %v10026 = vmax.f32 %v9962, 0.0
      %v10027 = vmax.f32 %v9963, 0.0
      %v10028 = vmax.f32 %v9964, 0.0
      %v10029 = vmax.f32 %v9965, 0.0
      %v10030 = vmax.f32 %v9966, 0.0
      %v10031 = vmax.f32 %v9967, 0.0
      %v10032 = vmax.f32 %v9968, 0.0
      %v10033 = vmax.f32 %v9969, 0.0
      %v10034 = vmax.f32 %v9970, 0.0
      %v10035 = vmax.f32 %v9971, 0.0
      %v10036 = vmax.f32 %v9972, 0.0
      %v10037 = vmax.f32 %v9973, 0.0
      %v10038 = vmax.f32 %v9974, 0.0
      %v10039 = vmax.f32 %v9975, 0.0
      %v10040 = vmax.f32 %v9976, 0.0
      %v10041 = vmax.f32 %v9977, 0.0
      %v10042 = vmax.f32 %v9978, 0.0
      %v10043 = vmax.f32 %v9979, 0.0
      %v10044 = vmax.f32 %v9980, 0.0
      %v10045 = vmax.f32 %v9981, 0.0
      %v10046 = vmax.f32 %v9982, 0.0
      %v10047 = vmax.f32 %v9983, 0.0
      %v10048 = vmax.f32 %v9984, 0.0
      %v10049 = vmax.f32 %v9985, 0.0
      %v10050 = vmax.f32 %v9986, 0.0
      %v10051 = vmax.f32 %v9987, 0.0
      %v10052 = vmax.f32 %v9988, 0.0
      %v10053 = vmax.f32 %v9989, 0.0
      %v10054 = vmax.f32 %v9990, 0.0
      %v10055 = vmax.f32 %v9991, 0.0
      %v10056 = vmax.f32 %v9992, 0.0
      %v10057 = vmax.f32 %v9993, 0.0
      %v10058 = vmax.f32 %v9994, 0.0
      %v10059 = vmax.f32 %v9995, 0.0
      %v10060 = vmax.f32 %v9996, 0.0
      %v10061 = vmax.f32 %v9997, 0.0
      %v10062 = vmax.f32 %v9998, 0.0
      %v10063 = vmax.f32 %v9999, 0.0
      %v10064 = vmax.f32 %v10000, 0.0
      %v10065 = vmax.f32 %v10001, 0.0
      %v10066 = vmax.f32 %v10002, 0.0
      %v10067 = vmax.f32 %v10003, 0.0
      %v10068 = vmax.f32 %v10004, 0.0
      %v10069 = vmax.f32 %v10005, 0.0
      %v10070 = vmax.f32 %v10006, 0.0
      %v10071 = vmax.f32 %v10007, 0.0
      %v10072 = vmax.f32 %v10008, 0.0
      %v10073 = vmax.f32 %v10009, 0.0
      %v10074 = vmax.f32 %v10010, 0.0
      %v10075 = vmax.f32 %v10011, 0.0
      %v10076 = vmax.f32 %v10012, 0.0
      %v10077 = vmax.f32 %v10013, 0.0
      %v10078 = vmax.f32 %v10014, 0.0
      %v10079 = vmax.f32 %v10015, 0.0
      %v10080 = vmax.f32 %v10016, 0.0
      %v10081 = vmax.f32 %v10017, 0.0
      %v10082 = vmax.f32 %v10018, 0.0
      %v10083 = vmax.f32 %v10019, 0.0
      %v10084 = vmax.f32 %v10020, 0.0
      %v10085 = vmax.f32 %v10021, 0.0
      %v10086 = vmax.f32 %v10022, 0.0
      %v10087 = vmax.f32 %v10023, 0.0
      %v10088 = vmax.f32 %v10024, 0.0
      %v10089 = vpack.c.bf16 %v10026, %v10025
      %v10090 = vpack.c.bf16 %v10028, %v10027
      %v10091 = vpack.c.bf16 %v10030, %v10029
      %v10092 = vpack.c.bf16 %v10032, %v10031
      %v10093 = vpack.c.bf16 %v10034, %v10033
      %v10094 = vpack.c.bf16 %v10036, %v10035
      %v10095 = vpack.c.bf16 %v10038, %v10037
      %v10096 = vpack.c.bf16 %v10040, %v10039
      %v10097 = vpack.c.bf16 %v10042, %v10041
      %v10098 = vpack.c.bf16 %v10044, %v10043
      %v10099 = vpack.c.bf16 %v10046, %v10045
      %v10100 = vpack.c.bf16 %v10048, %v10047
      %v10101 = vpack.c.bf16 %v10050, %v10049
      %v10102 = vpack.c.bf16 %v10052, %v10051
      %v10103 = vpack.c.bf16 %v10054, %v10053
      %v10104 = vpack.c.bf16 %v10056, %v10055
      %v10105 = vpack.c.bf16 %v10058, %v10057
      %v10106 = vpack.c.bf16 %v10060, %v10059
      %v10107 = vpack.c.bf16 %v10062, %v10061
      %v10108 = vpack.c.bf16 %v10064, %v10063
      %v10109 = vpack.c.bf16 %v10066, %v10065
      %v10110 = vpack.c.bf16 %v10068, %v10067
      %v10111 = vpack.c.bf16 %v10070, %v10069
      %v10112 = vpack.c.bf16 %v10072, %v10071
      %v10113 = vpack.c.bf16 %v10074, %v10073
      %v10114 = vpack.c.bf16 %v10076, %v10075
      %v10115 = vpack.c.bf16 %v10078, %v10077
      %v10116 = vpack.c.bf16 %v10080, %v10079
      %v10117 = vpack.c.bf16 %v10082, %v10081
      %v10118 = vpack.c.bf16 %v10084, %v10083
      %v10119 = vpack.c.bf16 %v10086, %v10085
      %v10120 = vpack.c.bf16 %v10088, %v10087
      %v10121 = vld [vmem:[%s5] sm:$0xf]
      %v10122 = vld [vmem:[%s5 + $0x4] sm:$0xf]
      %v10123 = vld [vmem:[%s5 + $0x8] sm:$0xf]
      %v10124 = vld [vmem:[%s5 + $0xc] sm:$0xf]
      %v10125 = vld [vmem:[%s5 + $0x10] sm:$0xf]
      %v10126 = vld [vmem:[%s5 + $0x14] sm:$0xf]
      %v10127 = vld [vmem:[%s5 + $0x18] sm:$0xf]
      %v10128 = vld [vmem:[%s5 + $0x1c] sm:$0xf]
      %v10129 = vld [vmem:[%s6] sm:$0x1]
      %v10131 = vperm.slane %v10129, 0
      %v10141 = vunpack.c.l.b16 %v10121
      %v10142 = vunpack.c.l.b16 %v10122
      %v10143 = vunpack.c.l.b16 %v10123
      %v10144 = vunpack.c.l.b16 %v10124
      %v10145 = vunpack.c.l.b16 %v10125
      %v10146 = vunpack.c.l.b16 %v10126
      %v10147 = vunpack.c.l.b16 %v10127
      %v10148 = vunpack.c.l.b16 %v10128
      %v10149 = vpack.c.b16 %v10142, %v10141
      %v10150 = vpack.c.b16 %v10144, %v10143
      %v10151 = vpack.c.b16 %v10146, %v10145
      %v10152 = vpack.c.b16 %v10148, %v10147
      %v10158 = vsel %vm548, %v10089, 0
      %v10161 = vsel %vm548, %v10090, 0
      %v10164 = vsel %vm548, %v10091, 0
      %v10167 = vsel %vm548, %v10092, 0
      %v10170 = vsel %vm548, %v10093, 0
      %v10173 = vsel %vm548, %v10094, 0
      %v10176 = vsel %vm548, %v10095, 0
      %v10179 = vsel %vm548, %v10096, 0
      %v10182 = vsel %vm548, %v10097, 0
      %v10185 = vsel %vm548, %v10098, 0
      %v10188 = vsel %vm548, %v10099, 0
      %v10191 = vsel %vm548, %v10100, 0
      %v10194 = vsel %vm548, %v10101, 0
      %v10197 = vsel %vm548, %v10102, 0
      %v10200 = vsel %vm548, %v10103, 0
      %v10203 = vsel %vm548, %v10104, 0
      %v10206 = vsel %vm548, %v10105, 0
      %v10209 = vsel %vm548, %v10106, 0
      %v10212 = vsel %vm548, %v10107, 0
      %v10215 = vsel %vm548, %v10108, 0
      %v10218 = vsel %vm548, %v10109, 0
      %v10221 = vsel %vm548, %v10110, 0
      %v10224 = vsel %vm548, %v10111, 0
      %v10227 = vsel %vm548, %v10112, 0
      %v10230 = vsel %vm548, %v10113, 0
      %v10233 = vsel %vm548, %v10114, 0
      %v10236 = vsel %vm548, %v10115, 0
      %v10239 = vsel %vm548, %v10116, 0
      %v10242 = vsel %vm548, %v10117, 0
      %v10245 = vsel %vm548, %v10118, 0
      %v10248 = vsel %vm548, %v10119, 0
      %v10251 = vsel %vm548, %v10120, 0
      %10253 = vmatpush.bf16.msra.mxu0 0
      %10254 = vmatpush.bf16.msra.mxu0 0
      %10255 = vmatpush.bf16.msra.mxu0 0
      %10256 = vmatpush.bf16.msra.mxu0 0
      %10257 = vmatpush.bf16.msra.mxu0 %v10152
      %10258 = vmatpush.bf16.msra.mxu0 %v10151
      %10259 = vmatpush.bf16.msra.mxu0 %v10150
      %10260 = vmatpush.bf16.msra.mxu0 %v10149
      %10261 = vmatmul.bf16.gmra.mxu0 %v10158
      %v10262 = vpop.f32.mrf.mxu0
      %v10263 = vadd.f32 %v10131, %v10262
      %v10264 = vpop.f32.mrf.mxu0
      %v10265 = vadd.f32 %v10131, %v10264
      %10266 = vmatmul.bf16.gmra.mxu0 %v10161
      %v10267 = vpop.f32.mrf.mxu0
      %v10268 = vadd.f32 %v10131, %v10267
      %v10269 = vpop.f32.mrf.mxu0
      %v10270 = vadd.f32 %v10131, %v10269
      %10271 = vmatmul.bf16.gmra.mxu0 %v10164
      %v10272 = vpop.f32.mrf.mxu0
      %v10273 = vadd.f32 %v10131, %v10272
      %v10274 = vpop.f32.mrf.mxu0
      %v10275 = vadd.f32 %v10131, %v10274
      %10276 = vmatmul.bf16.gmra.mxu0 %v10167
      %v10277 = vpop.f32.mrf.mxu0
      %v10278 = vadd.f32 %v10131, %v10277
      %v10279 = vpop.f32.mrf.mxu0
      %v10280 = vadd.f32 %v10131, %v10279
      %10281 = vmatmul.bf16.gmra.mxu0 %v10170
      %v10282 = vpop.f32.mrf.mxu0
      %v10283 = vadd.f32 %v10131, %v10282
      %v10284 = vpop.f32.mrf.mxu0
      %v10285 = vadd.f32 %v10131, %v10284
      %10286 = vmatmul.bf16.gmra.mxu0 %v10173
      %v10287 = vpop.f32.mrf.mxu0
      %v10288 = vadd.f32 %v10131, %v10287
      %v10289 = vpop.f32.mrf.mxu0
      %v10290 = vadd.f32 %v10131, %v10289
      %10291 = vmatmul.bf16.gmra.mxu0 %v10176
      %v10292 = vpop.f32.mrf.mxu0
      %v10293 = vadd.f32 %v10131, %v10292
      %v10294 = vpop.f32.mrf.mxu0
      %v10295 = vadd.f32 %v10131, %v10294
      %10296 = vmatmul.bf16.gmra.mxu0 %v10179
      %v10297 = vpop.f32.mrf.mxu0
      %v10298 = vadd.f32 %v10131, %v10297
      %v10299 = vpop.f32.mrf.mxu0
      %v10300 = vadd.f32 %v10131, %v10299
      %10301 = vmatmul.bf16.gmra.mxu0 %v10182
      %v10302 = vpop.f32.mrf.mxu0
      %v10303 = vadd.f32 %v10131, %v10302
      %v10304 = vpop.f32.mrf.mxu0
      %v10305 = vadd.f32 %v10131, %v10304
      %10306 = vmatmul.bf16.gmra.mxu0 %v10185
      %v10307 = vpop.f32.mrf.mxu0
      %v10308 = vadd.f32 %v10131, %v10307
      %v10309 = vpop.f32.mrf.mxu0
      %v10310 = vadd.f32 %v10131, %v10309
      %10311 = vmatmul.bf16.gmra.mxu0 %v10188
      %v10312 = vpop.f32.mrf.mxu0
      %v10313 = vadd.f32 %v10131, %v10312
      %v10314 = vpop.f32.mrf.mxu0
      %v10315 = vadd.f32 %v10131, %v10314
      %10316 = vmatmul.bf16.gmra.mxu0 %v10191
      %v10317 = vpop.f32.mrf.mxu0
      %v10318 = vadd.f32 %v10131, %v10317
      %v10319 = vpop.f32.mrf.mxu0
      %v10320 = vadd.f32 %v10131, %v10319
      %10321 = vmatmul.bf16.gmra.mxu0 %v10194
      %v10322 = vpop.f32.mrf.mxu0
      %v10323 = vadd.f32 %v10131, %v10322
      %v10324 = vpop.f32.mrf.mxu0
      %v10325 = vadd.f32 %v10131, %v10324
      %10326 = vmatmul.bf16.gmra.mxu0 %v10197
      %v10327 = vpop.f32.mrf.mxu0
      %v10328 = vadd.f32 %v10131, %v10327
      %v10329 = vpop.f32.mrf.mxu0
      %v10330 = vadd.f32 %v10131, %v10329
      %10331 = vmatmul.bf16.gmra.mxu0 %v10200
      %v10332 = vpop.f32.mrf.mxu0
      %v10333 = vadd.f32 %v10131, %v10332
      %v10334 = vpop.f32.mrf.mxu0
      %v10335 = vadd.f32 %v10131, %v10334
      %10336 = vmatmul.bf16.gmra.mxu0 %v10203
      %v10337 = vpop.f32.mrf.mxu0
      %v10338 = vadd.f32 %v10131, %v10337
      %v10339 = vpop.f32.mrf.mxu0
      %v10340 = vadd.f32 %v10131, %v10339
      %10341 = vmatmul.bf16.gmra.mxu0 %v10206
      %v10342 = vpop.f32.mrf.mxu0
      %v10343 = vadd.f32 %v10131, %v10342
      %v10344 = vpop.f32.mrf.mxu0
      %v10345 = vadd.f32 %v10131, %v10344
      %10346 = vmatmul.bf16.gmra.mxu0 %v10209
      %v10347 = vpop.f32.mrf.mxu0
      %v10348 = vadd.f32 %v10131, %v10347
      %v10349 = vpop.f32.mrf.mxu0
      %v10350 = vadd.f32 %v10131, %v10349
      %10351 = vmatmul.bf16.gmra.mxu0 %v10212
      %v10352 = vpop.f32.mrf.mxu0
      %v10353 = vadd.f32 %v10131, %v10352
      %v10354 = vpop.f32.mrf.mxu0
      %v10355 = vadd.f32 %v10131, %v10354
      %10356 = vmatmul.bf16.gmra.mxu0 %v10215
      %v10357 = vpop.f32.mrf.mxu0
      %v10358 = vadd.f32 %v10131, %v10357
      %v10359 = vpop.f32.mrf.mxu0
      %v10360 = vadd.f32 %v10131, %v10359
      %10361 = vmatmul.bf16.gmra.mxu0 %v10218
      %v10362 = vpop.f32.mrf.mxu0
      %v10363 = vadd.f32 %v10131, %v10362
      %v10364 = vpop.f32.mrf.mxu0
      %v10365 = vadd.f32 %v10131, %v10364
      %10366 = vmatmul.bf16.gmra.mxu0 %v10221
      %v10367 = vpop.f32.mrf.mxu0
      %v10368 = vadd.f32 %v10131, %v10367
      %v10369 = vpop.f32.mrf.mxu0
      %v10370 = vadd.f32 %v10131, %v10369
      %10371 = vmatmul.bf16.gmra.mxu0 %v10224
      %v10372 = vpop.f32.mrf.mxu0
      %v10373 = vadd.f32 %v10131, %v10372
      %v10374 = vpop.f32.mrf.mxu0
      %v10375 = vadd.f32 %v10131, %v10374
      %10376 = vmatmul.bf16.gmra.mxu0 %v10227
      %v10377 = vpop.f32.mrf.mxu0
      %v10378 = vadd.f32 %v10131, %v10377
      %v10379 = vpop.f32.mrf.mxu0
      %v10380 = vadd.f32 %v10131, %v10379
      %10381 = vmatmul.bf16.gmra.mxu0 %v10230
      %v10382 = vpop.f32.mrf.mxu0
      %v10383 = vadd.f32 %v10131, %v10382
      %v10384 = vpop.f32.mrf.mxu0
      %v10385 = vadd.f32 %v10131, %v10384
      %10386 = vmatmul.bf16.gmra.mxu0 %v10233
      %v10387 = vpop.f32.mrf.mxu0
      %v10388 = vadd.f32 %v10131, %v10387
      %v10389 = vpop.f32.mrf.mxu0
      %v10390 = vadd.f32 %v10131, %v10389
      %10391 = vmatmul.bf16.gmra.mxu0 %v10236
      %v10392 = vpop.f32.mrf.mxu0
      %v10393 = vadd.f32 %v10131, %v10392
      %v10394 = vpop.f32.mrf.mxu0
      %v10395 = vadd.f32 %v10131, %v10394
      %10396 = vmatmul.bf16.gmra.mxu0 %v10239
      %v10397 = vpop.f32.mrf.mxu0
      %v10398 = vadd.f32 %v10131, %v10397
      %v10399 = vpop.f32.mrf.mxu0
      %v10400 = vadd.f32 %v10131, %v10399
      %10401 = vmatmul.bf16.gmra.mxu0 %v10242
      %v10402 = vpop.f32.mrf.mxu0
      %v10403 = vadd.f32 %v10131, %v10402
      %v10404 = vpop.f32.mrf.mxu0
      %v10405 = vadd.f32 %v10131, %v10404
      %10406 = vmatmul.bf16.gmra.mxu0 %v10245
      %v10407 = vpop.f32.mrf.mxu0
      %v10408 = vadd.f32 %v10131, %v10407
      %v10409 = vpop.f32.mrf.mxu0
      %v10410 = vadd.f32 %v10131, %v10409
      %10411 = vmatmul.bf16.gmra.mxu0 %v10248
      %v10412 = vpop.f32.mrf.mxu0
      %v10413 = vadd.f32 %v10131, %v10412
      %v10414 = vpop.f32.mrf.mxu0
      %v10415 = vadd.f32 %v10131, %v10414
      %10416 = vmatmul.bf16.gmra.mxu0 %v10251
      %v10417 = vpop.f32.mrf.mxu0
      %v10418 = vadd.f32 %v10131, %v10417
      %v10419 = vpop.f32.mrf.mxu0
      %v10420 = vadd.f32 %v10131, %v10419
      %10421 = vdwg.mxu0
      %v10422 = vunpack.c.l.bf16 %v288
      %v10423 = vunpack.c.l.bf16 %v289
      %v10424 = vunpack.c.l.bf16 %v290
      %v10425 = vunpack.c.l.bf16 %v291
      %v10426 = vunpack.c.l.bf16 %v292
      %v10427 = vunpack.c.l.bf16 %v293
      %v10428 = vunpack.c.l.bf16 %v294
      %v10429 = vunpack.c.l.bf16 %v295
      %v10430 = vunpack.c.l.bf16 %v296
      %v10431 = vunpack.c.l.bf16 %v297
      %v10432 = vunpack.c.l.bf16 %v298
      %v10433 = vunpack.c.l.bf16 %v299
      %v10434 = vunpack.c.l.bf16 %v300
      %v10435 = vunpack.c.l.bf16 %v301
      %v10436 = vunpack.c.l.bf16 %v302
      %v10437 = vunpack.c.l.bf16 %v303
      %v10438 = vunpack.c.l.bf16 %v304
      %v10439 = vunpack.c.l.bf16 %v305
      %v10440 = vunpack.c.l.bf16 %v306
      %v10441 = vunpack.c.l.bf16 %v307
      %v10442 = vunpack.c.l.bf16 %v308
      %v10443 = vunpack.c.l.bf16 %v309
      %v10444 = vunpack.c.l.bf16 %v310
      %v10445 = vunpack.c.l.bf16 %v311
      %v10446 = vunpack.c.l.bf16 %v312
      %v10447 = vunpack.c.l.bf16 %v313
      %v10448 = vunpack.c.l.bf16 %v314
      %v10449 = vunpack.c.l.bf16 %v315
      %v10450 = vunpack.c.l.bf16 %v316
      %v10451 = vunpack.c.l.bf16 %v317
      %v10452 = vunpack.c.l.bf16 %v318
      %v10453 = vunpack.c.l.bf16 %v319
      %v10454 = vunpack.c.l.bf16 %v320
      %v10455 = vunpack.c.l.bf16 %v321
      %v10456 = vunpack.c.l.bf16 %v322
      %v10457 = vunpack.c.l.bf16 %v323
      %v10458 = vunpack.c.l.bf16 %v324
      %v10459 = vunpack.c.l.bf16 %v325
      %v10460 = vunpack.c.l.bf16 %v326
      %v10461 = vunpack.c.l.bf16 %v327
      %v10462 = vunpack.c.l.bf16 %v328
      %v10463 = vunpack.c.l.bf16 %v329
      %v10464 = vunpack.c.l.bf16 %v330
      %v10465 = vunpack.c.l.bf16 %v331
      %v10466 = vunpack.c.l.bf16 %v332
      %v10467 = vunpack.c.l.bf16 %v333
      %v10468 = vunpack.c.l.bf16 %v334
      %v10469 = vunpack.c.l.bf16 %v335
      %v10470 = vunpack.c.l.bf16 %v336
      %v10471 = vunpack.c.l.bf16 %v337
      %v10472 = vunpack.c.l.bf16 %v338
      %v10473 = vunpack.c.l.bf16 %v339
      %v10474 = vunpack.c.l.bf16 %v340
      %v10475 = vunpack.c.l.bf16 %v341
      %v10476 = vunpack.c.l.bf16 %v342
      %v10477 = vunpack.c.l.bf16 %v343
      %v10478 = vunpack.c.l.bf16 %v344
      %v10479 = vunpack.c.l.bf16 %v345
      %v10480 = vunpack.c.l.bf16 %v346
      %v10481 = vunpack.c.l.bf16 %v347
      %v10482 = vunpack.c.l.bf16 %v348
      %v10483 = vunpack.c.l.bf16 %v349
      %v10484 = vunpack.c.l.bf16 %v350
      %v10485 = vunpack.c.l.bf16 %v351
      %v10486 = vadd.f32 %v10263, %v10422
      %v10487 = vadd.f32 %v10265, %v10423
      %v10488 = vadd.f32 %v10268, %v10424
      %v10489 = vadd.f32 %v10270, %v10425
      %v10490 = vadd.f32 %v10273, %v10426
      %v10491 = vadd.f32 %v10275, %v10427
      %v10492 = vadd.f32 %v10278, %v10428
      %v10493 = vadd.f32 %v10280, %v10429
      %v10494 = vadd.f32 %v10283, %v10430
      %v10495 = vadd.f32 %v10285, %v10431
      %v10496 = vadd.f32 %v10288, %v10432
      %v10497 = vadd.f32 %v10290, %v10433
      %v10498 = vadd.f32 %v10293, %v10434
      %v10499 = vadd.f32 %v10295, %v10435
      %v10500 = vadd.f32 %v10298, %v10436
      %v10501 = vadd.f32 %v10300, %v10437
      %v10502 = vadd.f32 %v10303, %v10438
      %v10503 = vadd.f32 %v10305, %v10439
      %v10504 = vadd.f32 %v10308, %v10440
      %v10505 = vadd.f32 %v10310, %v10441
      %v10506 = vadd.f32 %v10313, %v10442
      %v10507 = vadd.f32 %v10315, %v10443
      %v10508 = vadd.f32 %v10318, %v10444
      %v10509 = vadd.f32 %v10320, %v10445
      %v10510 = vadd.f32 %v10323, %v10446
      %v10511 = vadd.f32 %v10325, %v10447
      %v10512 = vadd.f32 %v10328, %v10448
      %v10513 = vadd.f32 %v10330, %v10449
      %v10514 = vadd.f32 %v10333, %v10450
      %v10515 = vadd.f32 %v10335, %v10451
      %v10516 = vadd.f32 %v10338, %v10452
      %v10517 = vadd.f32 %v10340, %v10453
      %v10518 = vadd.f32 %v10343, %v10454
      %v10519 = vadd.f32 %v10345, %v10455
      %v10520 = vadd.f32 %v10348, %v10456
      %v10521 = vadd.f32 %v10350, %v10457
      %v10522 = vadd.f32 %v10353, %v10458
      %v10523 = vadd.f32 %v10355, %v10459
      %v10524 = vadd.f32 %v10358, %v10460
      %v10525 = vadd.f32 %v10360, %v10461
      %v10526 = vadd.f32 %v10363, %v10462
      %v10527 = vadd.f32 %v10365, %v10463
      %v10528 = vadd.f32 %v10368, %v10464
      %v10529 = vadd.f32 %v10370, %v10465
      %v10530 = vadd.f32 %v10373, %v10466
      %v10531 = vadd.f32 %v10375, %v10467
      %v10532 = vadd.f32 %v10378, %v10468
      %v10533 = vadd.f32 %v10380, %v10469
      %v10534 = vadd.f32 %v10383, %v10470
      %v10535 = vadd.f32 %v10385, %v10471
      %v10536 = vadd.f32 %v10388, %v10472
      %v10537 = vadd.f32 %v10390, %v10473
      %v10538 = vadd.f32 %v10393, %v10474
      %v10539 = vadd.f32 %v10395, %v10475
      %v10540 = vadd.f32 %v10398, %v10476
      %v10541 = vadd.f32 %v10400, %v10477
      %v10542 = vadd.f32 %v10403, %v10478
      %v10543 = vadd.f32 %v10405, %v10479
      %v10544 = vadd.f32 %v10408, %v10480
      %v10545 = vadd.f32 %v10410, %v10481
      %v10546 = vadd.f32 %v10413, %v10482
      %v10547 = vadd.f32 %v10415, %v10483
      %v10548 = vadd.f32 %v10418, %v10484
      %v10549 = vadd.f32 %v10420, %v10485
      %v10550 = vmax.f32 %v10486, 0.0
      %v10551 = vmax.f32 %v10487, 0.0
      %v10552 = vmax.f32 %v10488, 0.0
      %v10553 = vmax.f32 %v10489, 0.0
      %v10554 = vmax.f32 %v10490, 0.0
      %v10555 = vmax.f32 %v10491, 0.0
      %v10556 = vmax.f32 %v10492, 0.0
      %v10557 = vmax.f32 %v10493, 0.0
      %v10558 = vmax.f32 %v10494, 0.0
      %v10559 = vmax.f32 %v10495, 0.0
      %v10560 = vmax.f32 %v10496, 0.0
      %v10561 = vmax.f32 %v10497, 0.0
      %v10562 = vmax.f32 %v10498, 0.0
      %v10563 = vmax.f32 %v10499, 0.0
      %v10564 = vmax.f32 %v10500, 0.0
      %v10565 = vmax.f32 %v10501, 0.0
      %v10566 = vmax.f32 %v10502, 0.0
      %v10567 = vmax.f32 %v10503, 0.0
      %v10568 = vmax.f32 %v10504, 0.0
      %v10569 = vmax.f32 %v10505, 0.0
      %v10570 = vmax.f32 %v10506, 0.0
      %v10571 = vmax.f32 %v10507, 0.0
      %v10572 = vmax.f32 %v10508, 0.0
      %v10573 = vmax.f32 %v10509, 0.0
      %v10574 = vmax.f32 %v10510, 0.0
      %v10575 = vmax.f32 %v10511, 0.0
      %v10576 = vmax.f32 %v10512, 0.0
      %v10577 = vmax.f32 %v10513, 0.0
      %v10578 = vmax.f32 %v10514, 0.0
      %v10579 = vmax.f32 %v10515, 0.0
      %v10580 = vmax.f32 %v10516, 0.0
      %v10581 = vmax.f32 %v10517, 0.0
      %v10582 = vmax.f32 %v10518, 0.0
      %v10583 = vmax.f32 %v10519, 0.0
      %v10584 = vmax.f32 %v10520, 0.0
      %v10585 = vmax.f32 %v10521, 0.0
      %v10586 = vmax.f32 %v10522, 0.0
      %v10587 = vmax.f32 %v10523, 0.0
      %v10588 = vmax.f32 %v10524, 0.0
      %v10589 = vmax.f32 %v10525, 0.0
      %v10590 = vmax.f32 %v10526, 0.0
      %v10591 = vmax.f32 %v10527, 0.0
      %v10592 = vmax.f32 %v10528, 0.0
      %v10593 = vmax.f32 %v10529, 0.0
      %v10594 = vmax.f32 %v10530, 0.0
      %v10595 = vmax.f32 %v10531, 0.0
      %v10596 = vmax.f32 %v10532, 0.0
      %v10597 = vmax.f32 %v10533, 0.0
      %v10598 = vmax.f32 %v10534, 0.0
      %v10599 = vmax.f32 %v10535, 0.0
      %v10600 = vmax.f32 %v10536, 0.0
      %v10601 = vmax.f32 %v10537, 0.0
      %v10602 = vmax.f32 %v10538, 0.0
      %v10603 = vmax.f32 %v10539, 0.0
      %v10604 = vmax.f32 %v10540, 0.0
      %v10605 = vmax.f32 %v10541, 0.0
      %v10606 = vmax.f32 %v10542, 0.0
      %v10607 = vmax.f32 %v10543, 0.0
      %v10608 = vmax.f32 %v10544, 0.0
      %v10609 = vmax.f32 %v10545, 0.0
      %v10610 = vmax.f32 %v10546, 0.0
      %v10611 = vmax.f32 %v10547, 0.0
      %v10612 = vmax.f32 %v10548, 0.0
      %v10613 = vmax.f32 %v10549, 0.0
      %v10614 = vpack.c.bf16 %v10550, %v10550
      %v10615 = vpack.c.bf16 %v10551, %v10551
      %v10616 = vpack.c.bf16 %v10552, %v10552
      %v10617 = vpack.c.bf16 %v10553, %v10553
      %v10618 = vpack.c.bf16 %v10554, %v10554
      %v10619 = vpack.c.bf16 %v10555, %v10555
      %v10620 = vpack.c.bf16 %v10556, %v10556
      %v10621 = vpack.c.bf16 %v10557, %v10557
      %v10622 = vpack.c.bf16 %v10558, %v10558
      %v10623 = vpack.c.bf16 %v10559, %v10559
      %v10624 = vpack.c.bf16 %v10560, %v10560
      %v10625 = vpack.c.bf16 %v10561, %v10561
      %v10626 = vpack.c.bf16 %v10562, %v10562
      %v10627 = vpack.c.bf16 %v10563, %v10563
      %v10628 = vpack.c.bf16 %v10564, %v10564
      %v10629 = vpack.c.bf16 %v10565, %v10565
      %v10630 = vpack.c.bf16 %v10566, %v10566
      %v10631 = vpack.c.bf16 %v10567, %v10567
      %v10632 = vpack.c.bf16 %v10568, %v10568
      %v10633 = vpack.c.bf16 %v10569, %v10569
      %v10634 = vpack.c.bf16 %v10570, %v10570
      %v10635 = vpack.c.bf16 %v10571, %v10571
      %v10636 = vpack.c.bf16 %v10572, %v10572
      %v10637 = vpack.c.bf16 %v10573, %v10573
      %v10638 = vpack.c.bf16 %v10574, %v10574
      %v10639 = vpack.c.bf16 %v10575, %v10575
      %v10640 = vpack.c.bf16 %v10576, %v10576
      %v10641 = vpack.c.bf16 %v10577, %v10577
      %v10642 = vpack.c.bf16 %v10578, %v10578
      %v10643 = vpack.c.bf16 %v10579, %v10579
      %v10644 = vpack.c.bf16 %v10580, %v10580
      %v10645 = vpack.c.bf16 %v10581, %v10581
      %v10646 = vpack.c.bf16 %v10582, %v10582
      %v10647 = vpack.c.bf16 %v10583, %v10583
      %v10648 = vpack.c.bf16 %v10584, %v10584
      %v10649 = vpack.c.bf16 %v10585, %v10585
      %v10650 = vpack.c.bf16 %v10586, %v10586
      %v10651 = vpack.c.bf16 %v10587, %v10587
      %v10652 = vpack.c.bf16 %v10588, %v10588
      %v10653 = vpack.c.bf16 %v10589, %v10589
      %v10654 = vpack.c.bf16 %v10590, %v10590
      %v10655 = vpack.c.bf16 %v10591, %v10591
      %v10656 = vpack.c.bf16 %v10592, %v10592
      %v10657 = vpack.c.bf16 %v10593, %v10593
      %v10658 = vpack.c.bf16 %v10594, %v10594
      %v10659 = vpack.c.bf16 %v10595, %v10595
      %v10660 = vpack.c.bf16 %v10596, %v10596
      %v10661 = vpack.c.bf16 %v10597, %v10597
      %v10662 = vpack.c.bf16 %v10598, %v10598
      %v10663 = vpack.c.bf16 %v10599, %v10599
      %v10664 = vpack.c.bf16 %v10600, %v10600
      %v10665 = vpack.c.bf16 %v10601, %v10601
      %v10666 = vpack.c.bf16 %v10602, %v10602
      %v10667 = vpack.c.bf16 %v10603, %v10603
      %v10668 = vpack.c.bf16 %v10604, %v10604
      %v10669 = vpack.c.bf16 %v10605, %v10605
      %v10670 = vpack.c.bf16 %v10606, %v10606
      %v10671 = vpack.c.bf16 %v10607, %v10607
      %v10672 = vpack.c.bf16 %v10608, %v10608
      %v10673 = vpack.c.bf16 %v10609, %v10609
      %v10674 = vpack.c.bf16 %v10610, %v10610
      %v10675 = vpack.c.bf16 %v10611, %v10611
      %v10676 = vpack.c.bf16 %v10612, %v10612
      %v10677 = vpack.c.bf16 %v10613, %v10613
      %10678 = vst.msk [vmem:[%s285] sm:$0xf] %vm878, %v10614
      %10679 = vst.msk [vmem:[%s285 + $0x4] sm:$0xf] %vm878, %v10615
      %10680 = vst.msk [vmem:[%s285 + $0x8] sm:$0xf] %vm878, %v10616
      %10681 = vst.msk [vmem:[%s285 + $0xc] sm:$0xf] %vm878, %v10617
      %10682 = vst.msk [vmem:[%s285 + $0x10] sm:$0xf] %vm878, %v10618
      %10683 = vst.msk [vmem:[%s285 + $0x14] sm:$0xf] %vm878, %v10619
      %10684 = vst.msk [vmem:[%s285 + $0x18] sm:$0xf] %vm878, %v10620
      %10685 = vst.msk [vmem:[%s285 + $0x1c] sm:$0xf] %vm878, %v10621
      %10686 = vst.msk [vmem:[%s285 + $0x20] sm:$0xf] %vm878, %v10622
      %10687 = vst.msk [vmem:[%s285 + $0x24] sm:$0xf] %vm878, %v10623
      %10688 = vst.msk [vmem:[%s285 + $0x28] sm:$0xf] %vm878, %v10624
      %10689 = vst.msk [vmem:[%s285 + $0x2c] sm:$0xf] %vm878, %v10625
      %10690 = vst.msk [vmem:[%s285 + $0x30] sm:$0xf] %vm878, %v10626
      %10691 = vst.msk [vmem:[%s285 + $0x34] sm:$0xf] %vm878, %v10627
      %10692 = vst.msk [vmem:[%s285 + $0x38] sm:$0xf] %vm878, %v10628
      %10693 = vst.msk [vmem:[%s285 + $0x3c] sm:$0xf] %vm878, %v10629
      %10694 = vst.msk [vmem:[%s285 + $0x40] sm:$0xf] %vm878, %v10630
      %10695 = vst.msk [vmem:[%s285 + $0x44] sm:$0xf] %vm878, %v10631
      %10696 = vst.msk [vmem:[%s285 + $0x48] sm:$0xf] %vm878, %v10632
      %10697 = vst.msk [vmem:[%s285 + $0x4c] sm:$0xf] %vm878, %v10633
      %10698 = vst.msk [vmem:[%s285 + $0x50] sm:$0xf] %vm878, %v10634
      %10699 = vst.msk [vmem:[%s285 + $0x54] sm:$0xf] %vm878, %v10635
      %10700 = vst.msk [vmem:[%s285 + $0x58] sm:$0xf] %vm878, %v10636
      %10701 = vst.msk [vmem:[%s285 + $0x5c] sm:$0xf] %vm878, %v10637
      %10702 = vst.msk [vmem:[%s285 + $0x60] sm:$0xf] %vm878, %v10638
      %10703 = vst.msk [vmem:[%s285 + $0x64] sm:$0xf] %vm878, %v10639
      %10704 = vst.msk [vmem:[%s285 + $0x68] sm:$0xf] %vm878, %v10640
      %10705 = vst.msk [vmem:[%s285 + $0x6c] sm:$0xf] %vm878, %v10641
      %10706 = vst.msk [vmem:[%s285 + $0x70] sm:$0xf] %vm878, %v10642
      %10707 = vst.msk [vmem:[%s285 + $0x74] sm:$0xf] %vm878, %v10643
      %10708 = vst.msk [vmem:[%s285 + $0x78] sm:$0xf] %vm878, %v10644
      %10709 = vst.msk [vmem:[%s285 + $0x7c] sm:$0xf] %vm878, %v10645
      %10710 = vst.msk [vmem:[%s285 + $0x80] sm:$0xf] %vm878, %v10646
      %10711 = vst.msk [vmem:[%s285 + $0x84] sm:$0xf] %vm878, %v10647
      %10712 = vst.msk [vmem:[%s285 + $0x88] sm:$0xf] %vm878, %v10648
      %10713 = vst.msk [vmem:[%s285 + $0x8c] sm:$0xf] %vm878, %v10649
      %10714 = vst.msk [vmem:[%s285 + $0x90] sm:$0xf] %vm878, %v10650
      %10715 = vst.msk [vmem:[%s285 + $0x94] sm:$0xf] %vm878, %v10651
      %10716 = vst.msk [vmem:[%s285 + $0x98] sm:$0xf] %vm878, %v10652
      %10717 = vst.msk [vmem:[%s285 + $0x9c] sm:$0xf] %vm878, %v10653
      %10718 = vst.msk [vmem:[%s285 + $0xa0] sm:$0xf] %vm878, %v10654
      %10719 = vst.msk [vmem:[%s285 + $0xa4] sm:$0xf] %vm878, %v10655
      %10720 = vst.msk [vmem:[%s285 + $0xa8] sm:$0xf] %vm878, %v10656
      %10721 = vst.msk [vmem:[%s285 + $0xac] sm:$0xf] %vm878, %v10657
      %10722 = vst.msk [vmem:[%s285 + $0xb0] sm:$0xf] %vm878, %v10658
      %10723 = vst.msk [vmem:[%s285 + $0xb4] sm:$0xf] %vm878, %v10659
      %10724 = vst.msk [vmem:[%s285 + $0xb8] sm:$0xf] %vm878, %v10660
      %10725 = vst.msk [vmem:[%s285 + $0xbc] sm:$0xf] %vm878, %v10661
      %10726 = vst.msk [vmem:[%s285 + $0xc0] sm:$0xf] %vm878, %v10662
      %10727 = vst.msk [vmem:[%s285 + $0xc4] sm:$0xf] %vm878, %v10663
      %10728 = vst.msk [vmem:[%s285 + $0xc8] sm:$0xf] %vm878, %v10664
      %10729 = vst.msk [vmem:[%s285 + $0xcc] sm:$0xf] %vm878, %v10665
      %10730 = vst.msk [vmem:[%s285 + $0xd0] sm:$0xf] %vm878, %v10666
      %10731 = vst.msk [vmem:[%s285 + $0xd4] sm:$0xf] %vm878, %v10667
      %10732 = vst.msk [vmem:[%s285 + $0xd8] sm:$0xf] %vm878, %v10668
      %10733 = vst.msk [vmem:[%s285 + $0xdc] sm:$0xf] %vm878, %v10669
      %10734 = vst.msk [vmem:[%s285 + $0xe0] sm:$0xf] %vm878, %v10670
      %10735 = vst.msk [vmem:[%s285 + $0xe4] sm:$0xf] %vm878, %v10671
      %10736 = vst.msk [vmem:[%s285 + $0xe8] sm:$0xf] %vm878, %v10672
      %10737 = vst.msk [vmem:[%s285 + $0xec] sm:$0xf] %vm878, %v10673
      %10738 = vst.msk [vmem:[%s285 + $0xf0] sm:$0xf] %vm878, %v10674
      %10739 = vst.msk [vmem:[%s285 + $0xf4] sm:$0xf] %vm878, %v10675
      %10740 = vst.msk [vmem:[%s285 + $0xf8] sm:$0xf] %vm878, %v10676
      %10741 = vst.msk [vmem:[%s285 + $0xfc] sm:$0xf] %vm878, %v10677
      %s10742 = smul.u32 2, %s18
      %p10743 = scmp.lt.s32.totalorder %s10742, 3
      %s10744 = scalar_select %p10743, %s10742, 3
      %s10745 = smul.addr %s10744, 32
      %s10746 = smul.addr %s10745, 4
      %s10747 = scalar_lea.vmem %s7, %s10746
      // Predicated region
      $region49: #{tpu_custom_call.1} parent=47 // pred_check
        %p10748 = pneg %p188
      $region50: #{tpu_custom_call.1} parent=47 // pred_check_branch
        %10750 = sbr.rel (%p10748) target = $region52
      $region51: #{tpu_custom_call.1} parent=47 // pred_region
        %s10751 = smul.u32 2, %s18
      $region52: #{tpu_custom_call.1} parent=47 // pred_fallthru
        _
    $region48: #{tpu_custom_call.1} parent=5 // pred_fallthru
      _
    %p10752 = scmp.le.s32.totalorder 2, %s13
    // Predicated region
    $region53: #{tpu_custom_call.1} parent=5 // pred_check
      %p10753 = pneg %p10752
    $region54: #{tpu_custom_call.1} parent=5 // pred_check_branch
      %10755 = sbr.rel (%p10753) target = $region56
    $region55: #{tpu_custom_call.1} parent=5 // pred_region
      %s10756 = ssub.s32 %s13, 2
      // Predicated region
      $region57: #{tpu_custom_call.1} parent=55 // pred_check
        %p10757 = pneg %p194
      $region58: #{tpu_custom_call.1} parent=55 // pred_check_branch
        %10759 = sbr.rel (%p10757) target = $region60
      $region59: #{tpu_custom_call.1} parent=55 // pred_region
        %s10760 = smul.u32 2, %s19
        %p10761 = scmp.lt.s32.totalorder %s10760, 3
        %s10762 = scalar_select %p10761, %s10760, 3
        %s10763 = smul.addr %s10762, 32
        %s10764 = smul.addr %s10763, 4
        %s10765 = scalar_lea.vmem %s7, %s10764
      $region60: #{tpu_custom_call.1} parent=55 // pred_fallthru
        _
    $region56: #{tpu_custom_call.1} parent=5 // pred_fallthru
      _
  $region6: #{tpu_custom_call.1} parent=0 // loop_footer
    %s17 = sadd.s32 1, %s13
  $region7: #{tpu_custom_call.1} parent=0 // loop_footer_branch
    %12 = sbr.rel target = $region3
  $region8: #{tpu_custom_call.1} parent=0 // loop_exit
    _

</llo_original>
